<compile_context>
chip_gen: v7x
topology: tpu7x:2x2x1
jax: 0.10.0
libtpu: 0.0.40
codegen_flags: <defaults>
</compile_context>

<pallas_src>
import jax
import jax.numpy as jnp
import numpy as np
from jax.experimental import pallas as pl
from jax.experimental.pallas import tpu as pltpu


def _activation(v, act):
    if act == 'relu':
        return jnp.maximum(v, 0.0)
    if act == 'lrelu':
        return jnp.where(v > 0, v, 0.01 * v)
    if act == 'sigmoid':
        return jax.nn.sigmoid(v)
    return v  # act is None -> dummy_act (identity)


def _make_double_conv_kernel(H, W, C_in, C_mid, C_out, M, act):
    Hp, Wp = H + 2, W + 2
    Pp = Hp * Wp          # pixels of one spatially padded image
    L2 = H * Wp           # conv-2 output slab: interior rows x all (padded) cols
    taps = [(ky - 1) * Wp + (kx - 1) for ky in range(3) for kx in range(3)]

    def kernel(x_ref, mask_ref, w1_ref, b1_ref, w2_ref, b2_ref, out_ref, h_ref):
        # x_ref   : (2M + Pp, C_in)   zero margin + padded image, (pixel, channel)
        # mask_ref: (Pp, 1)           1.0 on real pixels, 0.0 on the padding ring
        # w1_ref  : (9, C_in, C_mid)  conv-1 taps (BN folded); w2_ref analogous
        # h_ref   : (2M + Pp, C_mid)  VMEM scratch: padded intermediate activation
        # out_ref : (L2, C_out)       conv-2 output slab

        # ---- ConvBlock 1: 3x3 conv (+ folded BN) + activation ----------------
        acc1 = jnp.zeros((Pp, C_mid), jnp.float32)
        for t, d in enumerate(taps):
            xs = x_ref[M + d: M + d + Pp, :]                       # (Pp, C_in)
            acc1 = acc1 + jnp.dot(xs, w1_ref[t],
                                  preferred_element_type=jnp.float32)
        h1 = _activation(acc1 + b1_ref[...], act)
        # Zero the spatial padding ring so it acts as conv-2's zero padding.
        h1 = h1 * mask_ref[...]

        h_ref[...] = jnp.zeros_like(h_ref)        # margins must read as zeros
        h_ref[M: M + Pp, :] = h1

        # ---- ConvBlock 2: 3x3 conv (+ folded BN) + activation ----------------
        base = M + Wp                              # first interior row (flat)
        acc2 = jnp.zeros((L2, C_out), jnp.float32)
        for t, d in enumerate(taps):
            hs = h_ref[base + d: base + d + L2, :]                 # (L2, C_mid)
            acc2 = acc2 + jnp.dot(hs, w2_ref[t],
                                  preferred_element_type=jnp.float32)
        out_ref[...] = _activation(acc2 + b2_ref[...], act)

    return kernel


def _fold_bn(w, b, gamma, beta, mean, var, eps=1e-5):
    """Fold eval-mode BatchNorm into a conv. w: (C_out, C_in, 3, 3), b: (C_out,).

    Returns per-tap weights (9, C_in, C_out) and bias (1, C_out)."""
    scale = gamma / jnp.sqrt(var + eps)
    w_f = w * scale[:, None, None, None]
    b_f = (b - mean) * scale + beta
    c_out, c_in = w.shape[0], w.shape[1]
    w_taps = jnp.transpose(w_f, (2, 3, 1, 0)).reshape(9, c_in, c_out)
    return w_taps.astype(jnp.float32), b_f.reshape(1, c_out).astype(jnp.float32)


def double_conv(x_nchw, params, act='relu'):
    """DoubleConv forward (eval-mode BatchNorm), NCHW in / NCHW out."""
    N, C_in, H, W = x_nchw.shape
    p1, p2 = params
    C_mid = p1[0].shape[0]
    C_out = p2[0].shape[0]

    Hp, Wp = H + 2, W + 2
    Pp = Hp * Wp
    M = max(8, ((Wp + 1 + 7) // 8) * 8)   # sublane-aligned margin >= Wp + 1
    P_ext = Pp + 2 * M
    L2 = H * Wp

    # NCHW -> (pixel, channel) slab: pad spatially, flatten, add a zero margin
    # so every conv tap is an in-bounds static slice.  (In a full network the
    # activations would stay in this layout between layers.)
    x = jnp.transpose(x_nchw, (0, 2, 3, 1)).astype(jnp.float32)   # (N, H, W, C)
    x = jnp.pad(x, ((0, 0), (1, 1), (1, 1), (0, 0)))              # (N, Hp, Wp, C)
    x = x.reshape(N, Pp, C_in)
    x = jnp.pad(x, ((0, 0), (M, M), (0, 0)))                      # (N, P_ext, C)

    mask = jnp.pad(jnp.ones((H, W), jnp.float32),
                   ((1, 1), (1, 1))).reshape(Pp, 1)

    w1_t, b1_t = _fold_bn(*p1)
    w2_t, b2_t = _fold_bn(*p2)

    kernel = _make_double_conv_kernel(H, W, C_in, C_mid, C_out, M, act)

    out = pl.pallas_call(
        kernel,
        out_shape=jax.ShapeDtypeStruct((N, L2, C_out), jnp.float32),
        grid_spec=pltpu.PrefetchScalarGridSpec(
            num_scalar_prefetch=0,
            grid=(N,),
            in_specs=[
                pl.BlockSpec((None, P_ext, C_in), lambda n: (n, 0, 0)),  # image
                pl.BlockSpec((Pp, 1), lambda n: (0, 0)),                 # pad mask
                pl.BlockSpec((9, C_in, C_mid), lambda n: (0, 0, 0)),     # conv1 W
                pl.BlockSpec((1, C_mid), lambda n: (0, 0)),              # conv1 b
                pl.BlockSpec((9, C_mid, C_out), lambda n: (0, 0, 0)),    # conv2 W
                pl.BlockSpec((1, C_out), lambda n: (0, 0)),              # conv2 b
            ],
            out_specs=pl.BlockSpec((None, L2, C_out), lambda n: (n, 0, 0)),
            scratch_shapes=[pltpu.VMEM((P_ext, C_mid), jnp.float32)],
        ),
        compiler_params=pltpu.CompilerParams(
            dimension_semantics=("parallel",)),
    )(x, mask, w1_t, b1_t, w2_t, b2_t)

    # (N, H*Wp, C_out) -> drop the left/right padding columns -> NCHW.
    out = out.reshape(N, H, Wp, C_out)[:, :, 1:W + 1, :]
    return jnp.transpose(out, (0, 3, 1, 2))


def reference_double_conv(x, params, act='relu', eps=1e-5):
    """Pure-JAX/XLA reference mirroring the PyTorch module in eval mode."""
    def conv_block(v, w, b, gamma, beta, mean, var):
        y = jax.lax.conv_general_dilated(
            v, w, window_strides=(1, 1), padding=((1, 1), (1, 1)),
            dimension_numbers=('NCHW', 'OIHW', 'NCHW'),
            precision=jax.lax.Precision.HIGHEST)
        y = y + b[None, :, None, None]
        scale = (gamma / jnp.sqrt(var + eps))[None, :, None, None]
        y = (y - mean[None, :, None, None]) * scale + beta[None, :, None, None]
        return _activation(y, act)

    p1, p2 = params
    return conv_block(conv_block(x, *p1), *p2)


def make_params(key, c_in, c_mid, c_out):
    """Deterministic synthetic Conv2d + BatchNorm2d parameters."""
    def conv_bn(k, ci, co):
        ks = jax.random.split(k, 6)
        w = 0.2 * jax.random.normal(ks[0], (co, ci, 3, 3), jnp.float32)
        b = 0.1 * jax.random.normal(ks[1], (co,), jnp.float32)
        gamma = 1.0 + 0.2 * jax.random.normal(ks[2], (co,), jnp.float32)
        beta = 0.1 * jax.random.normal(ks[3], (co,), jnp.float32)
        mean = 0.1 * jax.random.normal(ks[4], (co,), jnp.float32)
        var = 0.5 + jnp.abs(jax.random.normal(ks[5], (co,), jnp.float32))
        return (w, b, gamma, beta, mean, var)

    k1, k2 = jax.random.split(key)
    return (conv_bn(k1, c_in, c_mid), conv_bn(k2, c_mid, c_out))


if __name__ == "__main__":
    # DoubleConv(in_channels=4, out_channels=8, act='relu'), batch=2, 16x16.
    N, C_in, C_out, H, W = 2, 4, 8, 16, 16
    act = 'relu'

    key = jax.random.PRNGKey(0)
    k_x, k_p = jax.random.split(key)
    x = jax.random.normal(k_x, (N, C_in, H, W), jnp.float32)
    params = make_params(k_p, C_in, C_out, C_out)

    out = jax.block_until_ready(double_conv(x, params, act=act))
    ref = reference_double_conv(x, params, act=act)

    # Tolerance allows for MXU f32 pass-decomposition differences between the
    # Pallas matmul path and the XLA convolution reference.
    np.testing.assert_allclose(np.asarray(out), np.asarray(ref),
                               rtol=1e-2, atol=1e-2)
    assert out.shape == (N, C_out, H, W)
    print("KERNEL_OK")
</pallas_src>

<mosaic_0001>
module attributes {stable_mosaic.version = 11 : i64} {
  func.func @kernel(%arg0: i32, %arg1: memref<1x372x4xf32, #tpu.memory_space<vmem>>, %arg2: memref<324x1xf32, #tpu.memory_space<vmem>>, %arg3: memref<9x4x8xf32, #tpu.memory_space<vmem>>, %arg4: memref<1x8xf32, #tpu.memory_space<vmem>>, %arg5: memref<9x8x8xf32, #tpu.memory_space<vmem>>, %arg6: memref<1x8xf32, #tpu.memory_space<vmem>>, %arg7: memref<1x288x8xf32, #tpu.memory_space<vmem>>, %arg8: memref<372x8xf32, #tpu.memory_space<vmem>>) attributes {dimension_semantics = [#tpu.dimension_semantics<parallel>], iteration_bounds = array<i64: 2>, scalar_prefetch = 0 : i64, scratch_operands = 1 : i64, tpu.core_type = #tpu.core_type<tc>, window_params = [{transform_indices = @transform_0, window_bounds = array<i64: 1, 372, 4>}, {pipeline_mode = #tpu.pipeline_mode<synchronous>, transform_indices = @transform_1, window_bounds = array<i64: 324, 1>}, {pipeline_mode = #tpu.pipeline_mode<synchronous>, transform_indices = @transform_2, window_bounds = array<i64: 9, 4, 8>}, {pipeline_mode = #tpu.pipeline_mode<synchronous>, transform_indices = @transform_3, window_bounds = array<i64: 1, 8>}, {pipeline_mode = #tpu.pipeline_mode<synchronous>, transform_indices = @transform_4, window_bounds = array<i64: 9, 8, 8>}, {pipeline_mode = #tpu.pipeline_mode<synchronous>, transform_indices = @transform_5, window_bounds = array<i64: 1, 8>}, {transform_indices = @transform_6, window_bounds = array<i64: 1, 288, 8>}]} {
    %cst = arith.constant 0.000000e+00 : f32
    %0 = vector.broadcast %cst : f32 to vector<324x8xf32>
    %c0 = arith.constant 0 : index
    %c5 = arith.constant 5 : index
    %c0_0 = arith.constant 0 : index
    %1 = vector.load %arg1[%c0, %c5, %c0_0] : memref<1x372x4xf32, #tpu.memory_space<vmem>>, vector<1x324x4xf32>
    %2 = vector.shape_cast %1 : vector<1x324x4xf32> to vector<324x4xf32>
    %c0_1 = arith.constant 0 : index
    %c0_2 = arith.constant 0 : index
    %c0_3 = arith.constant 0 : index
    %3 = vector.load %arg3[%c0_1, %c0_2, %c0_3] : memref<9x4x8xf32, #tpu.memory_space<vmem>>, vector<1x4x8xf32>
    %4 = vector.shape_cast %3 : vector<1x4x8xf32> to vector<4x8xf32>
    %cst_4 = arith.constant dense<0.000000e+00> : vector<324x8xf32>
    %5 = tpu.matmul %2, %4, %cst_4 {dimension_numbers = #tpu.dot_dimension_numbers<[1], [0], [0], [1], [0, 0, 1, 1], [], []>} : vector<324x4xf32>, vector<4x8xf32>, vector<324x8xf32> -> vector<324x8xf32>
    %6 = arith.addf %0, %5 : vector<324x8xf32>
    %c0_5 = arith.constant 0 : index
    %c6 = arith.constant 6 : index
    %c0_6 = arith.constant 0 : index
    %7 = vector.load %arg1[%c0_5, %c6, %c0_6] : memref<1x372x4xf32, #tpu.memory_space<vmem>>, vector<1x324x4xf32>
    %8 = vector.shape_cast %7 : vector<1x324x4xf32> to vector<324x4xf32>
    %c1 = arith.constant 1 : index
    %c0_7 = arith.constant 0 : index
    %c0_8 = arith.constant 0 : index
    %9 = vector.load %arg3[%c1, %c0_7, %c0_8] : memref<9x4x8xf32, #tpu.memory_space<vmem>>, vector<1x4x8xf32>
    %10 = vector.shape_cast %9 : vector<1x4x8xf32> to vector<4x8xf32>
    %cst_9 = arith.constant dense<0.000000e+00> : vector<324x8xf32>
    %11 = tpu.matmul %8, %10, %cst_9 {dimension_numbers = #tpu.dot_dimension_numbers<[1], [0], [0], [1], [0, 0, 1, 1], [], []>} : vector<324x4xf32>, vector<4x8xf32>, vector<324x8xf32> -> vector<324x8xf32>
    %12 = arith.addf %6, %11 : vector<324x8xf32>
    %c0_10 = arith.constant 0 : index
    %c7 = arith.constant 7 : index
    %c0_11 = arith.constant 0 : index
    %13 = vector.load %arg1[%c0_10, %c7, %c0_11] : memref<1x372x4xf32, #tpu.memory_space<vmem>>, vector<1x324x4xf32>
    %14 = vector.shape_cast %13 : vector<1x324x4xf32> to vector<324x4xf32>
    %c2 = arith.constant 2 : index
    %c0_12 = arith.constant 0 : index
    %c0_13 = arith.constant 0 : index
    %15 = vector.load %arg3[%c2, %c0_12, %c0_13] : memref<9x4x8xf32, #tpu.memory_space<vmem>>, vector<1x4x8xf32>
    %16 = vector.shape_cast %15 : vector<1x4x8xf32> to vector<4x8xf32>
    %cst_14 = arith.constant dense<0.000000e+00> : vector<324x8xf32>
    %17 = tpu.matmul %14, %16, %cst_14 {dimension_numbers = #tpu.dot_dimension_numbers<[1], [0], [0], [1], [0, 0, 1, 1], [], []>} : vector<324x4xf32>, vector<4x8xf32>, vector<324x8xf32> -> vector<324x8xf32>
    %18 = arith.addf %12, %17 : vector<324x8xf32>
    %c0_15 = arith.constant 0 : index
    %c23 = arith.constant 23 : index
    %c0_16 = arith.constant 0 : index
    %19 = vector.load %arg1[%c0_15, %c23, %c0_16] : memref<1x372x4xf32, #tpu.memory_space<vmem>>, vector<1x324x4xf32>
    %20 = vector.shape_cast %19 : vector<1x324x4xf32> to vector<324x4xf32>
    %c3 = arith.constant 3 : index
    %c0_17 = arith.constant 0 : index
    %c0_18 = arith.constant 0 : index
    %21 = vector.load %arg3[%c3, %c0_17, %c0_18] : memref<9x4x8xf32, #tpu.memory_space<vmem>>, vector<1x4x8xf32>
    %22 = vector.shape_cast %21 : vector<1x4x8xf32> to vector<4x8xf32>
    %cst_19 = arith.constant dense<0.000000e+00> : vector<324x8xf32>
    %23 = tpu.matmul %20, %22, %cst_19 {dimension_numbers = #tpu.dot_dimension_numbers<[1], [0], [0], [1], [0, 0, 1, 1], [], []>} : vector<324x4xf32>, vector<4x8xf32>, vector<324x8xf32> -> vector<324x8xf32>
    %24 = arith.addf %18, %23 : vector<324x8xf32>
    %c0_20 = arith.constant 0 : index
    %c24 = arith.constant 24 : index
    %c0_21 = arith.constant 0 : index
    %25 = vector.load %arg1[%c0_20, %c24, %c0_21] : memref<1x372x4xf32, #tpu.memory_space<vmem>>, vector<1x324x4xf32>
    %26 = vector.shape_cast %25 : vector<1x324x4xf32> to vector<324x4xf32>
    %c4 = arith.constant 4 : index
    %c0_22 = arith.constant 0 : index
    %c0_23 = arith.constant 0 : index
    %27 = vector.load %arg3[%c4, %c0_22, %c0_23] : memref<9x4x8xf32, #tpu.memory_space<vmem>>, vector<1x4x8xf32>
    %28 = vector.shape_cast %27 : vector<1x4x8xf32> to vector<4x8xf32>
    %cst_24 = arith.constant dense<0.000000e+00> : vector<324x8xf32>
    %29 = tpu.matmul %26, %28, %cst_24 {dimension_numbers = #tpu.dot_dimension_numbers<[1], [0], [0], [1], [0, 0, 1, 1], [], []>} : vector<324x4xf32>, vector<4x8xf32>, vector<324x8xf32> -> vector<324x8xf32>
    %30 = arith.addf %24, %29 : vector<324x8xf32>
    %c0_25 = arith.constant 0 : index
    %c25 = arith.constant 25 : index
    %c0_26 = arith.constant 0 : index
    %31 = vector.load %arg1[%c0_25, %c25, %c0_26] : memref<1x372x4xf32, #tpu.memory_space<vmem>>, vector<1x324x4xf32>
    %32 = vector.shape_cast %31 : vector<1x324x4xf32> to vector<324x4xf32>
    %c5_27 = arith.constant 5 : index
    %c0_28 = arith.constant 0 : index
    %c0_29 = arith.constant 0 : index
    %33 = vector.load %arg3[%c5_27, %c0_28, %c0_29] : memref<9x4x8xf32, #tpu.memory_space<vmem>>, vector<1x4x8xf32>
    %34 = vector.shape_cast %33 : vector<1x4x8xf32> to vector<4x8xf32>
    %cst_30 = arith.constant dense<0.000000e+00> : vector<324x8xf32>
    %35 = tpu.matmul %32, %34, %cst_30 {dimension_numbers = #tpu.dot_dimension_numbers<[1], [0], [0], [1], [0, 0, 1, 1], [], []>} : vector<324x4xf32>, vector<4x8xf32>, vector<324x8xf32> -> vector<324x8xf32>
    %36 = arith.addf %30, %35 : vector<324x8xf32>
    %c0_31 = arith.constant 0 : index
    %c41 = arith.constant 41 : index
    %c0_32 = arith.constant 0 : index
    %37 = vector.load %arg1[%c0_31, %c41, %c0_32] : memref<1x372x4xf32, #tpu.memory_space<vmem>>, vector<1x324x4xf32>
    %38 = vector.shape_cast %37 : vector<1x324x4xf32> to vector<324x4xf32>
    %c6_33 = arith.constant 6 : index
    %c0_34 = arith.constant 0 : index
    %c0_35 = arith.constant 0 : index
    %39 = vector.load %arg3[%c6_33, %c0_34, %c0_35] : memref<9x4x8xf32, #tpu.memory_space<vmem>>, vector<1x4x8xf32>
    %40 = vector.shape_cast %39 : vector<1x4x8xf32> to vector<4x8xf32>
    %cst_36 = arith.constant dense<0.000000e+00> : vector<324x8xf32>
    %41 = tpu.matmul %38, %40, %cst_36 {dimension_numbers = #tpu.dot_dimension_numbers<[1], [0], [0], [1], [0, 0, 1, 1], [], []>} : vector<324x4xf32>, vector<4x8xf32>, vector<324x8xf32> -> vector<324x8xf32>
    %42 = arith.addf %36, %41 : vector<324x8xf32>
    %c0_37 = arith.constant 0 : index
    %c42 = arith.constant 42 : index
    %c0_38 = arith.constant 0 : index
    %43 = vector.load %arg1[%c0_37, %c42, %c0_38] : memref<1x372x4xf32, #tpu.memory_space<vmem>>, vector<1x324x4xf32>
    %44 = vector.shape_cast %43 : vector<1x324x4xf32> to vector<324x4xf32>
    %c7_39 = arith.constant 7 : index
    %c0_40 = arith.constant 0 : index
    %c0_41 = arith.constant 0 : index
    %45 = vector.load %arg3[%c7_39, %c0_40, %c0_41] : memref<9x4x8xf32, #tpu.memory_space<vmem>>, vector<1x4x8xf32>
    %46 = vector.shape_cast %45 : vector<1x4x8xf32> to vector<4x8xf32>
    %cst_42 = arith.constant dense<0.000000e+00> : vector<324x8xf32>
    %47 = tpu.matmul %44, %46, %cst_42 {dimension_numbers = #tpu.dot_dimension_numbers<[1], [0], [0], [1], [0, 0, 1, 1], [], []>} : vector<324x4xf32>, vector<4x8xf32>, vector<324x8xf32> -> vector<324x8xf32>
    %48 = arith.addf %42, %47 : vector<324x8xf32>
    %c0_43 = arith.constant 0 : index
    %c43 = arith.constant 43 : index
    %c0_44 = arith.constant 0 : index
    %49 = vector.load %arg1[%c0_43, %c43, %c0_44] : memref<1x372x4xf32, #tpu.memory_space<vmem>>, vector<1x324x4xf32>
    %50 = vector.shape_cast %49 : vector<1x324x4xf32> to vector<324x4xf32>
    %c8 = arith.constant 8 : index
    %c0_45 = arith.constant 0 : index
    %c0_46 = arith.constant 0 : index
    %51 = vector.load %arg3[%c8, %c0_45, %c0_46] : memref<9x4x8xf32, #tpu.memory_space<vmem>>, vector<1x4x8xf32>
    %52 = vector.shape_cast %51 : vector<1x4x8xf32> to vector<4x8xf32>
    %cst_47 = arith.constant dense<0.000000e+00> : vector<324x8xf32>
    %53 = tpu.matmul %50, %52, %cst_47 {dimension_numbers = #tpu.dot_dimension_numbers<[1], [0], [0], [1], [0, 0, 1, 1], [], []>} : vector<324x4xf32>, vector<4x8xf32>, vector<324x8xf32> -> vector<324x8xf32>
    %54 = arith.addf %48, %53 : vector<324x8xf32>
    %c0_48 = arith.constant 0 : index
    %c0_49 = arith.constant 0 : index
    %55 = vector.load %arg4[%c0_48, %c0_49] : memref<1x8xf32, #tpu.memory_space<vmem>>, vector<1x8xf32>
    %56 = vector.broadcast %55 : vector<1x8xf32> to vector<324x8xf32>
    %57 = arith.addf %54, %56 : vector<324x8xf32>
    %cst_50 = arith.constant 0.000000e+00 : f32
    %58 = vector.broadcast %cst_50 : f32 to vector<324x8xf32>
    %59 = arith.maximumf %57, %58 : vector<324x8xf32>
    %c0_51 = arith.constant 0 : index
    %c0_52 = arith.constant 0 : index
    %60 = vector.load %arg2[%c0_51, %c0_52] : memref<324x1xf32, #tpu.memory_space<vmem>>, vector<324x1xf32>
    %61 = vector.broadcast %60 : vector<324x1xf32> to vector<324x8xf32>
    %62 = arith.mulf %59, %61 : vector<324x8xf32>
    %cst_53 = arith.constant 0.000000e+00 : f32
    %63 = vector.broadcast %cst_53 : f32 to vector<372x8xf32>
    %c0_54 = arith.constant 0 : index
    %c0_55 = arith.constant 0 : index
    %64 = vector.load %arg8[%c0_54, %c0_55] : memref<372x8xf32, #tpu.memory_space<vmem>>, vector<372x8xf32>
    tpu.vector_store %arg8[%c0_54, %c0_55], %63 {strides = array<i32>} : memref<372x8xf32, #tpu.memory_space<vmem>>, vector<372x8xf32>,
    %c24_56 = arith.constant 24 : index
    %c0_57 = arith.constant 0 : index
    %65 = vector.load %arg8[%c24_56, %c0_57] : memref<372x8xf32, #tpu.memory_space<vmem>>, vector<324x8xf32>
    tpu.vector_store %arg8[%c24_56, %c0_57], %62 {strides = array<i32>} : memref<372x8xf32, #tpu.memory_space<vmem>>, vector<324x8xf32>,
    %cst_58 = arith.constant 0.000000e+00 : f32
    %66 = vector.broadcast %cst_58 : f32 to vector<288x8xf32>
    %c23_59 = arith.constant 23 : index
    %c0_60 = arith.constant 0 : index
    %67 = vector.load %arg8[%c23_59, %c0_60] : memref<372x8xf32, #tpu.memory_space<vmem>>, vector<288x8xf32>
    %c0_61 = arith.constant 0 : index
    %c0_62 = arith.constant 0 : index
    %c0_63 = arith.constant 0 : index
    %68 = vector.load %arg5[%c0_61, %c0_62, %c0_63] : memref<9x8x8xf32, #tpu.memory_space<vmem>>, vector<1x8x8xf32>
    %69 = vector.shape_cast %68 : vector<1x8x8xf32> to vector<8x8xf32>
    %cst_64 = arith.constant dense<0.000000e+00> : vector<288x8xf32>
    %70 = tpu.matmul %67, %69, %cst_64 {dimension_numbers = #tpu.dot_dimension_numbers<[1], [0], [0], [1], [0, 0, 1, 1], [], []>} : vector<288x8xf32>, vector<8x8xf32>, vector<288x8xf32> -> vector<288x8xf32>
    %71 = arith.addf %66, %70 : vector<288x8xf32>
    %c24_65 = arith.constant 24 : index
    %c0_66 = arith.constant 0 : index
    %72 = vector.load %arg8[%c24_65, %c0_66] : memref<372x8xf32, #tpu.memory_space<vmem>>, vector<288x8xf32>
    %c1_67 = arith.constant 1 : index
    %c0_68 = arith.constant 0 : index
    %c0_69 = arith.constant 0 : index
    %73 = vector.load %arg5[%c1_67, %c0_68, %c0_69] : memref<9x8x8xf32, #tpu.memory_space<vmem>>, vector<1x8x8xf32>
    %74 = vector.shape_cast %73 : vector<1x8x8xf32> to vector<8x8xf32>
    %cst_70 = arith.constant dense<0.000000e+00> : vector<288x8xf32>
    %75 = tpu.matmul %72, %74, %cst_70 {dimension_numbers = #tpu.dot_dimension_numbers<[1], [0], [0], [1], [0, 0, 1, 1], [], []>} : vector<288x8xf32>, vector<8x8xf32>, vector<288x8xf32> -> vector<288x8xf32>
    %76 = arith.addf %71, %75 : vector<288x8xf32>
    %c25_71 = arith.constant 25 : index
    %c0_72 = arith.constant 0 : index
    %77 = vector.load %arg8[%c25_71, %c0_72] : memref<372x8xf32, #tpu.memory_space<vmem>>, vector<288x8xf32>
    %c2_73 = arith.constant 2 : index
    %c0_74 = arith.constant 0 : index
    %c0_75 = arith.constant 0 : index
    %78 = vector.load %arg5[%c2_73, %c0_74, %c0_75] : memref<9x8x8xf32, #tpu.memory_space<vmem>>, vector<1x8x8xf32>
    %79 = vector.shape_cast %78 : vector<1x8x8xf32> to vector<8x8xf32>
    %cst_76 = arith.constant dense<0.000000e+00> : vector<288x8xf32>
    %80 = tpu.matmul %77, %79, %cst_76 {dimension_numbers = #tpu.dot_dimension_numbers<[1], [0], [0], [1], [0, 0, 1, 1], [], []>} : vector<288x8xf32>, vector<8x8xf32>, vector<288x8xf32> -> vector<288x8xf32>
    %81 = arith.addf %76, %80 : vector<288x8xf32>
    %c41_77 = arith.constant 41 : index
    %c0_78 = arith.constant 0 : index
    %82 = vector.load %arg8[%c41_77, %c0_78] : memref<372x8xf32, #tpu.memory_space<vmem>>, vector<288x8xf32>
    %c3_79 = arith.constant 3 : index
    %c0_80 = arith.constant 0 : index
    %c0_81 = arith.constant 0 : index
    %83 = vector.load %arg5[%c3_79, %c0_80, %c0_81] : memref<9x8x8xf32, #tpu.memory_space<vmem>>, vector<1x8x8xf32>
    %84 = vector.shape_cast %83 : vector<1x8x8xf32> to vector<8x8xf32>
    %cst_82 = arith.constant dense<0.000000e+00> : vector<288x8xf32>
    %85 = tpu.matmul %82, %84, %cst_82 {dimension_numbers = #tpu.dot_dimension_numbers<[1], [0], [0], [1], [0, 0, 1, 1], [], []>} : vector<288x8xf32>, vector<8x8xf32>, vector<288x8xf32> -> vector<288x8xf32>
    %86 = arith.addf %81, %85 : vector<288x8xf32>
    %c42_83 = arith.constant 42 : index
    %c0_84 = arith.constant 0 : index
    %87 = vector.load %arg8[%c42_83, %c0_84] : memref<372x8xf32, #tpu.memory_space<vmem>>, vector<288x8xf32>
    %c4_85 = arith.constant 4 : index
    %c0_86 = arith.constant 0 : index
    %c0_87 = arith.constant 0 : index
    %88 = vector.load %arg5[%c4_85, %c0_86, %c0_87] : memref<9x8x8xf32, #tpu.memory_space<vmem>>, vector<1x8x8xf32>
    %89 = vector.shape_cast %88 : vector<1x8x8xf32> to vector<8x8xf32>
    %cst_88 = arith.constant dense<0.000000e+00> : vector<288x8xf32>
    %90 = tpu.matmul %87, %89, %cst_88 {dimension_numbers = #tpu.dot_dimension_numbers<[1], [0], [0], [1], [0, 0, 1, 1], [], []>} : vector<288x8xf32>, vector<8x8xf32>, vector<288x8xf32> -> vector<288x8xf32>
    %91 = arith.addf %86, %90 : vector<288x8xf32>
    %c43_89 = arith.constant 43 : index
    %c0_90 = arith.constant 0 : index
    %92 = vector.load %arg8[%c43_89, %c0_90] : memref<372x8xf32, #tpu.memory_space<vmem>>, vector<288x8xf32>
    %c5_91 = arith.constant 5 : index
    %c0_92 = arith.constant 0 : index
    %c0_93 = arith.constant 0 : index
    %93 = vector.load %arg5[%c5_91, %c0_92, %c0_93] : memref<9x8x8xf32, #tpu.memory_space<vmem>>, vector<1x8x8xf32>
    %94 = vector.shape_cast %93 : vector<1x8x8xf32> to vector<8x8xf32>
    %cst_94 = arith.constant dense<0.000000e+00> : vector<288x8xf32>
    %95 = tpu.matmul %92, %94, %cst_94 {dimension_numbers = #tpu.dot_dimension_numbers<[1], [0], [0], [1], [0, 0, 1, 1], [], []>} : vector<288x8xf32>, vector<8x8xf32>, vector<288x8xf32> -> vector<288x8xf32>
    %96 = arith.addf %91, %95 : vector<288x8xf32>
    %c59 = arith.constant 59 : index
    %c0_95 = arith.constant 0 : index
    %97 = vector.load %arg8[%c59, %c0_95] : memref<372x8xf32, #tpu.memory_space<vmem>>, vector<288x8xf32>
    %c6_96 = arith.constant 6 : index
    %c0_97 = arith.constant 0 : index
    %c0_98 = arith.constant 0 : index
    %98 = vector.load %arg5[%c6_96, %c0_97, %c0_98] : memref<9x8x8xf32, #tpu.memory_space<vmem>>, vector<1x8x8xf32>
    %99 = vector.shape_cast %98 : vector<1x8x8xf32> to vector<8x8xf32>
    %cst_99 = arith.constant dense<0.000000e+00> : vector<288x8xf32>
    %100 = tpu.matmul %97, %99, %cst_99 {dimension_numbers = #tpu.dot_dimension_numbers<[1], [0], [0], [1], [0, 0, 1, 1], [], []>} : vector<288x8xf32>, vector<8x8xf32>, vector<288x8xf32> -> vector<288x8xf32>
    %101 = arith.addf %96, %100 : vector<288x8xf32>
    %c60 = arith.constant 60 : index
    %c0_100 = arith.constant 0 : index
    %102 = vector.load %arg8[%c60, %c0_100] : memref<372x8xf32, #tpu.memory_space<vmem>>, vector<288x8xf32>
    %c7_101 = arith.constant 7 : index
    %c0_102 = arith.constant 0 : index
    %c0_103 = arith.constant 0 : index
    %103 = vector.load %arg5[%c7_101, %c0_102, %c0_103] : memref<9x8x8xf32, #tpu.memory_space<vmem>>, vector<1x8x8xf32>
    %104 = vector.shape_cast %103 : vector<1x8x8xf32> to vector<8x8xf32>
    %cst_104 = arith.constant dense<0.000000e+00> : vector<288x8xf32>
    %105 = tpu.matmul %102, %104, %cst_104 {dimension_numbers = #tpu.dot_dimension_numbers<[1], [0], [0], [1], [0, 0, 1, 1], [], []>} : vector<288x8xf32>, vector<8x8xf32>, vector<288x8xf32> -> vector<288x8xf32>
    %106 = arith.addf %101, %105 : vector<288x8xf32>
    %c61 = arith.constant 61 : index
    %c0_105 = arith.constant 0 : index
    %107 = vector.load %arg8[%c61, %c0_105] : memref<372x8xf32, #tpu.memory_space<vmem>>, vector<288x8xf32>
    %c8_106 = arith.constant 8 : index
    %c0_107 = arith.constant 0 : index
    %c0_108 = arith.constant 0 : index
    %108 = vector.load %arg5[%c8_106, %c0_107, %c0_108] : memref<9x8x8xf32, #tpu.memory_space<vmem>>, vector<1x8x8xf32>
    %109 = vector.shape_cast %108 : vector<1x8x8xf32> to vector<8x8xf32>
    %cst_109 = arith.constant dense<0.000000e+00> : vector<288x8xf32>
    %110 = tpu.matmul %107, %109, %cst_109 {dimension_numbers = #tpu.dot_dimension_numbers<[1], [0], [0], [1], [0, 0, 1, 1], [], []>} : vector<288x8xf32>, vector<8x8xf32>, vector<288x8xf32> -> vector<288x8xf32>
    %111 = arith.addf %106, %110 : vector<288x8xf32>
    %c0_110 = arith.constant 0 : index
    %c0_111 = arith.constant 0 : index
    %112 = vector.load %arg6[%c0_110, %c0_111] : memref<1x8xf32, #tpu.memory_space<vmem>>, vector<1x8xf32>
    %113 = vector.broadcast %112 : vector<1x8xf32> to vector<288x8xf32>
    %114 = arith.addf %111, %113 : vector<288x8xf32>
    %cst_112 = arith.constant 0.000000e+00 : f32
    %115 = vector.broadcast %cst_112 : f32 to vector<288x8xf32>
    %116 = arith.maximumf %114, %115 : vector<288x8xf32>
    %c0_113 = arith.constant 0 : index
    %c0_114 = arith.constant 0 : index
    %c0_115 = arith.constant 0 : index
    %117 = vector.load %arg7[%c0_113, %c0_114, %c0_115] : memref<1x288x8xf32, #tpu.memory_space<vmem>>, vector<1x288x8xf32>
    %118 = vector.shape_cast %117 : vector<1x288x8xf32> to vector<288x8xf32>
    %119 = vector.shape_cast %116 : vector<288x8xf32> to vector<1x288x8xf32>
    tpu.vector_store %arg7[%c0_113, %c0_114, %c0_115], %119 {strides = array<i32>} : memref<1x288x8xf32, #tpu.memory_space<vmem>>, vector<1x288x8xf32>,
    return
  }
  func.func @transform_0(%arg0: i32) -> (i32, i32, i32) {
    %c0_i32 = arith.constant 0 : i32
    %c0_i32_0 = arith.constant 0 : i32
    %c0_i32_1 = arith.constant 0 : i32
    return %arg0, %c0_i32, %c0_i32_0 : i32, i32, i32
  }
  func.func @transform_1(%arg0: i32) -> (i32, i32) {
    %c0_i32 = arith.constant 0 : i32
    %c0_i32_0 = arith.constant 0 : i32
    %c0_i32_1 = arith.constant 0 : i32
    return %c0_i32, %c0_i32_0 : i32, i32
  }
  func.func @transform_2(%arg0: i32) -> (i32, i32, i32) {
    %c0_i32 = arith.constant 0 : i32
    %c0_i32_0 = arith.constant 0 : i32
    %c0_i32_1 = arith.constant 0 : i32
    %c0_i32_2 = arith.constant 0 : i32
    return %c0_i32, %c0_i32_0, %c0_i32_1 : i32, i32, i32
  }
  func.func @transform_3(%arg0: i32) -> (i32, i32) {
    %c0_i32 = arith.constant 0 : i32
    %c0_i32_0 = arith.constant 0 : i32
    %c0_i32_1 = arith.constant 0 : i32
    return %c0_i32, %c0_i32_0 : i32, i32
  }
  func.func @transform_4(%arg0: i32) -> (i32, i32, i32) {
    %c0_i32 = arith.constant 0 : i32
    %c0_i32_0 = arith.constant 0 : i32
    %c0_i32_1 = arith.constant 0 : i32
    %c0_i32_2 = arith.constant 0 : i32
    return %c0_i32, %c0_i32_0, %c0_i32_1 : i32, i32, i32
  }
  func.func @transform_5(%arg0: i32) -> (i32, i32) {
    %c0_i32 = arith.constant 0 : i32
    %c0_i32_0 = arith.constant 0 : i32
    %c0_i32_1 = arith.constant 0 : i32
    return %c0_i32, %c0_i32_0 : i32, i32
  }
  func.func @transform_6(%arg0: i32) -> (i32, i32, i32) {
    %c0_i32 = arith.constant 0 : i32
    %c0_i32_0 = arith.constant 0 : i32
    %c0_i32_1 = arith.constant 0 : i32
    return %arg0, %c0_i32, %c0_i32_0 : i32, i32, i32
  }
}

</mosaic_0001>

<llo_original>
// kernel: tpu_custom_call.1
$region0: #{tpu_custom_call.1}
  #allocation0 [shape = 'u32[]', space=smem, size = 0x4, offset = 0x4, fixed_abs, tag = 'smem constant byte address 0x4 - core index']
  #allocation1 [shape = 'u32[144,128]{1,0:T(1,128)}', space=vmem, size = 0x12000, scoped, tag = 'internal scratch']
  #allocation2 [shape = 'f32[372,8]{1,0:T(8,128)}', space=vmem, size = 0x2f000, scoped, tag = 'scratch operand']
  %s0 = inlined_call_operand.vmem [shape: f32[2,372,4], index: 0, kind: input, shape index: {}]
  %s1 = inlined_call_operand.vmem [shape: f32[324,1], index: 1, kind: input, shape index: {}]
  %s2 = inlined_call_operand.vmem [shape: f32[9,4,8], index: 2, kind: input, shape index: {}]
  %s3 = inlined_call_operand.vmem [shape: f32[1,8], index: 3, kind: input, shape index: {}]
  %s4 = inlined_call_operand.vmem [shape: f32[9,8,8], index: 4, kind: input, shape index: {}]
  %s5 = inlined_call_operand.vmem [shape: f32[1,8], index: 5, kind: input, shape index: {}]
  %s6 = inlined_call_operand.vmem [shape: f32[2,288,8], index: 6, kind: output, shape index: {}]
  %s7 = sld [smem:[#allocation0]]
  $region57: #{tpu_custom_call.1} parent=0
    _
  %s9 = ssub.s32 1, %s7
  %s10 = scalar_select 0, %s9, %s7
  loop: start=0, step=1, limit=4
  $region2: #{tpu_custom_call.1} parent=0 // loop_pre_header
    _
  $region3: #{tpu_custom_call.1} parent=0 // loop_header
    %s12 = sphi 0, %s16
    %p13 = scmp.ge.s32.totalorder %s12, 4
    %s22 = sphi 0, %s24
    %s25 = sphi 0, %s22
    %s26 = sphi 0, %s25
    %s42 = sphi 0, %s26
    %s46 = sphi 0, %s46
    %s48 = sphi 0, %s46
    %s49 = sphi 0, %s48
    %s63 = sphi 0, %s49
    %s67 = sphi 0, %s67
    %s69 = sphi 0, %s67
    %s70 = sphi 0, %s69
    %s84 = sphi 0, %s70
    %s88 = sphi 0, %s88
    %s90 = sphi 0, %s88
    %s91 = sphi 0, %s90
    %s105 = sphi 0, %s91
    %s109 = sphi 0, %s109
    %s111 = sphi 0, %s109
    %s112 = sphi 0, %s111
    %s126 = sphi 0, %s112
    %s130 = sphi 0, %s130
    %s132 = sphi 0, %s130
    %s133 = sphi 0, %s132
    %s147 = sphi 0, %s133
    %s153 = sphi 0, %s155
    %s156 = sphi 0, %s153
    %s157 = sphi 0, %s156
    %s173 = sphi 0, %s157
  $region4: #{tpu_custom_call.1} parent=0 // loop_header_branch
    %15 = sbr.rel (%p13) target = $region8
  $region5: #{tpu_custom_call.1} parent=0 // loop_body
    %s17 = ssub.s32 %s12, 1
    %s18 = ssub.s32 %s12, 2
    %s19 = sadd.s32 %s12, 1
    %s20 = ssub.s32 %s12, %s19
    %p21 = scmp.eq.s32.totalorder %s20, 0
    %s23 = sadd.s32 %s22, 1
    %s24 = scalar_select %p21, %s22, %s23
    %p27 = pneg %p21
    %p28 = scmp.eq.s32.totalorder %s12, 1
    %p29 = por %p27, %p28
    %p30 = scmp.ne.s32.totalorder %s22, %s25
    %p31 = scmp.eq.s32.totalorder %s12, 0
    %p32 = por %p30, %p31
    %p33 = scmp.ne.s32.totalorder %s22, %s25
    %p34 = scmp.eq.s32.totalorder %s17, 1
    %p35 = por %p33, %p34
    %p36 = scmp.ne.s32.totalorder %s25, %s26
    %p37 = scmp.eq.s32.totalorder %s17, 0
    %p38 = por %p36, %p37
    %p39 = scmp.ne.s32.totalorder %s25, %s26
    %p40 = scmp.eq.s32.totalorder %s18, 1
    %p41 = por %p39, %p40
    %p43 = scmp.ne.s32.totalorder %s26, %s42
    %p44 = scmp.eq.s32.totalorder %s18, 0
    %p45 = por %p43, %p44
    %s47 = sadd.s32 %s46, 1
    %p50 = scmp.eq.s32.totalorder %s12, 1
    %p51 = scmp.ne.s32.totalorder %s46, %s48
    %p52 = scmp.eq.s32.totalorder %s12, 0
    %p53 = por %p51, %p52
    %p54 = scmp.ne.s32.totalorder %s46, %s48
    %p55 = scmp.eq.s32.totalorder %s17, 1
    %p56 = por %p54, %p55
    %p57 = scmp.ne.s32.totalorder %s48, %s49
    %p58 = scmp.eq.s32.totalorder %s17, 0
    %p59 = por %p57, %p58
    %p60 = scmp.ne.s32.totalorder %s48, %s49
    %p61 = scmp.eq.s32.totalorder %s18, 1
    %p62 = por %p60, %p61
    %p64 = scmp.ne.s32.totalorder %s49, %s63
    %p65 = scmp.eq.s32.totalorder %s18, 0
    %p66 = por %p64, %p65
    %s68 = sadd.s32 %s67, 1
    %p71 = scmp.eq.s32.totalorder %s12, 1
    %p72 = scmp.ne.s32.totalorder %s67, %s69
    %p73 = scmp.eq.s32.totalorder %s12, 0
    %p74 = por %p72, %p73
    %p75 = scmp.ne.s32.totalorder %s67, %s69
    %p76 = scmp.eq.s32.totalorder %s17, 1
    %p77 = por %p75, %p76
    %p78 = scmp.ne.s32.totalorder %s69, %s70
    %p79 = scmp.eq.s32.totalorder %s17, 0
    %p80 = por %p78, %p79
    %p81 = scmp.ne.s32.totalorder %s69, %s70
    %p82 = scmp.eq.s32.totalorder %s18, 1
    %p83 = por %p81, %p82
    %p85 = scmp.ne.s32.totalorder %s70, %s84
    %p86 = scmp.eq.s32.totalorder %s18, 0
    %p87 = por %p85, %p86
    %s89 = sadd.s32 %s88, 1
    %p92 = scmp.eq.s32.totalorder %s12, 1
    %p93 = scmp.ne.s32.totalorder %s88, %s90
    %p94 = scmp.eq.s32.totalorder %s12, 0
    %p95 = por %p93, %p94
    %p96 = scmp.ne.s32.totalorder %s88, %s90
    %p97 = scmp.eq.s32.totalorder %s17, 1
    %p98 = por %p96, %p97
    %p99 = scmp.ne.s32.totalorder %s90, %s91
    %p100 = scmp.eq.s32.totalorder %s17, 0
    %p101 = por %p99, %p100
    %p102 = scmp.ne.s32.totalorder %s90, %s91
    %p103 = scmp.eq.s32.totalorder %s18, 1
    %p104 = por %p102, %p103
    %p106 = scmp.ne.s32.totalorder %s91, %s105
    %p107 = scmp.eq.s32.totalorder %s18, 0
    %p108 = por %p106, %p107
    %s110 = sadd.s32 %s109, 1
    %p113 = scmp.eq.s32.totalorder %s12, 1
    %p114 = scmp.ne.s32.totalorder %s109, %s111
    %p115 = scmp.eq.s32.totalorder %s12, 0
    %p116 = por %p114, %p115
    %p117 = scmp.ne.s32.totalorder %s109, %s111
    %p118 = scmp.eq.s32.totalorder %s17, 1
    %p119 = por %p117, %p118
    %p120 = scmp.ne.s32.totalorder %s111, %s112
    %p121 = scmp.eq.s32.totalorder %s17, 0
    %p122 = por %p120, %p121
    %p123 = scmp.ne.s32.totalorder %s111, %s112
    %p124 = scmp.eq.s32.totalorder %s18, 1
    %p125 = por %p123, %p124
    %p127 = scmp.ne.s32.totalorder %s112, %s126
    %p128 = scmp.eq.s32.totalorder %s18, 0
    %p129 = por %p127, %p128
    %s131 = sadd.s32 %s130, 1
    %p134 = scmp.eq.s32.totalorder %s12, 1
    %p135 = scmp.ne.s32.totalorder %s130, %s132
    %p136 = scmp.eq.s32.totalorder %s12, 0
    %p137 = por %p135, %p136
    %p138 = scmp.ne.s32.totalorder %s130, %s132
    %p139 = scmp.eq.s32.totalorder %s17, 1
    %p140 = por %p138, %p139
    %p141 = scmp.ne.s32.totalorder %s132, %s133
    %p142 = scmp.eq.s32.totalorder %s17, 0
    %p143 = por %p141, %p142
    %p144 = scmp.ne.s32.totalorder %s132, %s133
    %p145 = scmp.eq.s32.totalorder %s18, 1
    %p146 = por %p144, %p145
    %p148 = scmp.ne.s32.totalorder %s133, %s147
    %p149 = scmp.eq.s32.totalorder %s18, 0
    %p150 = por %p148, %p149
    %s151 = ssub.s32 %s12, %s19
    %p152 = scmp.eq.s32.totalorder %s151, 0
    %s154 = sadd.s32 %s153, 1
    %s155 = scalar_select %p152, %s153, %s154
    %p158 = pneg %p152
    %p159 = scmp.eq.s32.totalorder %s12, 1
    %p160 = por %p158, %p159
    %p161 = scmp.ne.s32.totalorder %s153, %s156
    %p162 = scmp.eq.s32.totalorder %s12, 0
    %p163 = por %p161, %p162
    %p164 = scmp.ne.s32.totalorder %s153, %s156
    %p165 = scmp.eq.s32.totalorder %s17, 1
    %p166 = por %p164, %p165
    %p167 = scmp.ne.s32.totalorder %s156, %s157
    %p168 = scmp.eq.s32.totalorder %s17, 0
    %p169 = por %p167, %p168
    %p170 = scmp.ne.s32.totalorder %s156, %s157
    %p171 = scmp.eq.s32.totalorder %s18, 1
    %p172 = por %p170, %p171
    %p174 = scmp.ne.s32.totalorder %s157, %s173
    %p175 = scmp.eq.s32.totalorder %s18, 0
    %p176 = por %p174, %p175
    %p177 = scmp.le.s32.totalorder 1, %s12
    %p178 = scmp.lt.s32.totalorder %s12, 3
    %p179 = pnand %p177, %p178
    %p180 = pneg %p179
    // Predicated region
    $region9: #{tpu_custom_call.1} parent=5 // pred_check
      _
    $region10: #{tpu_custom_call.1} parent=5 // pred_check_branch
      %182 = sbr.rel (%p179) target = $region12
    $region11: #{tpu_custom_call.1} parent=5 // pred_region
      %s183 = ssub.s32 %s12, 1
      // Predicated region
      $region13: #{tpu_custom_call.1} parent=11 // pred_check
        %p184 = pneg %p59
      $region14: #{tpu_custom_call.1} parent=11 // pred_check_branch
        %186 = sbr.rel (%p184) target = $region16
      $region15: #{tpu_custom_call.1} parent=11 // pred_region
        _
      $region16: #{tpu_custom_call.1} parent=11 // pred_fallthru
        _
      // Predicated region
      $region17: #{tpu_custom_call.1} parent=11 // pred_check
        %p187 = pneg %p80
      $region18: #{tpu_custom_call.1} parent=11 // pred_check_branch
        %189 = sbr.rel (%p187) target = $region20
      $region19: #{tpu_custom_call.1} parent=11 // pred_region
        _
      $region20: #{tpu_custom_call.1} parent=11 // pred_fallthru
        _
      // Predicated region
      $region21: #{tpu_custom_call.1} parent=11 // pred_check
        %p190 = pneg %p101
      $region22: #{tpu_custom_call.1} parent=11 // pred_check_branch
        %192 = sbr.rel (%p190) target = $region24
      $region23: #{tpu_custom_call.1} parent=11 // pred_region
        _
      $region24: #{tpu_custom_call.1} parent=11 // pred_fallthru
        _
      // Predicated region
      $region25: #{tpu_custom_call.1} parent=11 // pred_check
        %p193 = pneg %p122
      $region26: #{tpu_custom_call.1} parent=11 // pred_check_branch
        %195 = sbr.rel (%p193) target = $region28
      $region27: #{tpu_custom_call.1} parent=11 // pred_region
        _
      $region28: #{tpu_custom_call.1} parent=11 // pred_fallthru
        _
      // Predicated region
      $region29: #{tpu_custom_call.1} parent=11 // pred_check
        %p196 = pneg %p143
      $region30: #{tpu_custom_call.1} parent=11 // pred_check_branch
        %198 = sbr.rel (%p196) target = $region32
      $region31: #{tpu_custom_call.1} parent=11 // pred_region
        _
      $region32: #{tpu_custom_call.1} parent=11 // pred_fallthru
        _
    $region12: #{tpu_custom_call.1} parent=5 // pred_fallthru
      _
    %p199 = scmp.lt.s32.totalorder %s12, 2
    // Predicated region
    $region33: #{tpu_custom_call.1} parent=5 // pred_check
      %p200 = pneg %p199
    $region34: #{tpu_custom_call.1} parent=5 // pred_check_branch
      %202 = sbr.rel (%p200) target = $region36
    $region35: #{tpu_custom_call.1} parent=5 // pred_region
      // Predicated region
      $region37: #{tpu_custom_call.1} parent=35 // pred_check
        %p203 = pneg %p32
      $region38: #{tpu_custom_call.1} parent=35 // pred_check_branch
        %205 = sbr.rel (%p203) target = $region40
      $region39: #{tpu_custom_call.1} parent=35 // pred_region
        %p206 = scmp.lt.s32.totalorder %s12, 1
        %s207 = scalar_select %p206, %s12, 1
        %s208 = smul.addr %s207, 47
        %s209 = smul.addr %s208, 8
        %s210 = scalar_lea.vmem %s0, %s209
      $region40: #{tpu_custom_call.1} parent=35 // pred_fallthru
        _
    $region36: #{tpu_custom_call.1} parent=5 // pred_fallthru
      _
    %p211 = scmp.le.s32.totalorder 1, %s12
    %p212 = scmp.lt.s32.totalorder %s12, 3
    %p213 = pnand %p211, %p212
    %p214 = pneg %p213
    // Predicated region
    $region41: #{tpu_custom_call.1} parent=5 // pred_check
      _
    $region42: #{tpu_custom_call.1} parent=5 // pred_check_branch
      %216 = sbr.rel (%p213) target = $region44
    $region43: #{tpu_custom_call.1} parent=5 // pred_region
      %s217 = ssub.s32 %s12, 1
      %p218 = scmp.lt.s32.totalorder %s17, 1
      %s219 = scalar_select %p218, %s17, 1
      %s220 = smul.addr %s219, 47
      %s221 = smul.addr %s220, 8
      %s222 = scalar_lea.vmem %s0, %s221
      %p223 = pneg %p38
      %p224 = pneg %p35
      %p225 = pneg %p59
      %p226 = pneg %p56
      %p227 = pneg %p80
      %p228 = pneg %p77
      %p229 = pneg %p101
      %p230 = pneg %p98
      %p231 = pneg %p122
      %p232 = pneg %p119
      %p233 = pneg %p143
      %p234 = pneg %p140
      %p235 = pneg %p169
      %p236 = pneg %p166
      %p237 = scmp.lt.s32.totalorder %s17, 1
      %s238 = scalar_select %p237, %s17, 1
      %s239 = smul.addr %s238, 36
      %s240 = smul.addr %s239, 8
      %s241 = scalar_lea.vmem %s6, %s240
      %p242 = scmp.lt.s32.totalorder %s17, 1
      %s243 = scalar_select %p242, %s17, 1
      %s244 = smul.addr %s243, 47
      %s245 = smul.addr %s244, 8
      %s246 = scalar_lea.vmem %s0, %s245
      %p247 = scmp.lt.s32.totalorder %s17, 1
      %s248 = scalar_select %p247, %s17, 1
      %s249 = smul.addr %s248, 36
      %s250 = smul.addr %s249, 8
      %s251 = scalar_lea.vmem %s6, %s250
      %v252 = vld [vmem:[%s246 + $0x5] sm:$0xff]
      %v253 = vld [vmem:[%s246 + $0xd] sm:$0xff]
      %v254 = vld [vmem:[%s246 + $0x15] sm:$0xff]
      %v255 = vld [vmem:[%s246 + $0x1d] sm:$0xff]
      %v256 = vld [vmem:[%s246 + $0x25] sm:$0xff]
      %v257 = vld [vmem:[%s246 + $0x2d] sm:$0xff]
      %v258 = vld [vmem:[%s246 + $0x35] sm:$0xff]
      %v259 = vld [vmem:[%s246 + $0x3d] sm:$0xff]
      %v260 = vld [vmem:[%s246 + $0x45] sm:$0xff]
      %v261 = vld [vmem:[%s246 + $0x4d] sm:$0xff]
      %v262 = vld [vmem:[%s246 + $0x55] sm:$0xff]
      %v263 = vld [vmem:[%s246 + $0x5d] sm:$0xff]
      %v264 = vld [vmem:[%s246 + $0x65] sm:$0xff]
      %v265 = vld [vmem:[%s246 + $0x6d] sm:$0xff]
      %v266 = vld [vmem:[%s246 + $0x75] sm:$0xff]
      %v267 = vld [vmem:[%s246 + $0x7d] sm:$0xff]
      %v268 = vld [vmem:[%s246 + $0x85] sm:$0xff]
      %v269 = vld [vmem:[%s246 + $0x8d] sm:$0xff]
      %v270 = vld [vmem:[%s246 + $0x95] sm:$0xff]
      %v271 = vld [vmem:[%s246 + $0x9d] sm:$0xff]
      %v272 = vld [vmem:[%s246 + $0xa5] sm:$0xff]
      %v273 = vld [vmem:[%s246 + $0xad] sm:$0xff]
      %v274 = vld [vmem:[%s246 + $0xb5] sm:$0xff]
      %v275 = vld [vmem:[%s246 + $0xbd] sm:$0xff]
      %v276 = vld [vmem:[%s246 + $0xc5] sm:$0xff]
      %v277 = vld [vmem:[%s246 + $0xcd] sm:$0xff]
      %v278 = vld [vmem:[%s246 + $0xd5] sm:$0xff]
      %v279 = vld [vmem:[%s246 + $0xdd] sm:$0xff]
      %v280 = vld [vmem:[%s246 + $0xe5] sm:$0xff]
      %v281 = vld [vmem:[%s246 + $0xed] sm:$0xff]
      %v282 = vld [vmem:[%s246 + $0xf5] sm:$0xff]
      %v283 = vld [vmem:[%s246 + $0xfd] sm:$0xff]
      %v284 = vld [vmem:[%s246 + $0x105] sm:$0xff]
      %v285 = vld [vmem:[%s246 + $0x10d] sm:$0xff]
      %v286 = vld [vmem:[%s246 + $0x115] sm:$0xff]
      %v287 = vld [vmem:[%s246 + $0x11d] sm:$0xff]
      %v288 = vld [vmem:[%s246 + $0x125] sm:$0xff]
      %v289 = vld [vmem:[%s246 + $0x12d] sm:$0xff]
      %v290 = vld [vmem:[%s246 + $0x135] sm:$0xff]
      %v291 = vld [vmem:[%s246 + $0x13d] sm:$0xff]
      %v292 = vld [vmem:[%s246 + $0x145] sm:$0xf]
      %v293 = vld [vmem:[%s2] sm:$0xf]
      %v294 = vld [vmem:[%s246 + $0x6] sm:$0xff]
      %v295 = vld [vmem:[%s246 + $0xe] sm:$0xff]
      %v296 = vld [vmem:[%s246 + $0x16] sm:$0xff]
      %v297 = vld [vmem:[%s246 + $0x1e] sm:$0xff]
      %v298 = vld [vmem:[%s246 + $0x26] sm:$0xff]
      %v299 = vld [vmem:[%s246 + $0x2e] sm:$0xff]
      %v300 = vld [vmem:[%s246 + $0x36] sm:$0xff]
      %v301 = vld [vmem:[%s246 + $0x3e] sm:$0xff]
      %v302 = vld [vmem:[%s246 + $0x46] sm:$0xff]
      %v303 = vld [vmem:[%s246 + $0x4e] sm:$0xff]
      %v304 = vld [vmem:[%s246 + $0x56] sm:$0xff]
      %v305 = vld [vmem:[%s246 + $0x5e] sm:$0xff]
      %v306 = vld [vmem:[%s246 + $0x66] sm:$0xff]
      %v307 = vld [vmem:[%s246 + $0x6e] sm:$0xff]
      %v308 = vld [vmem:[%s246 + $0x76] sm:$0xff]
      %v309 = vld [vmem:[%s246 + $0x7e] sm:$0xff]
      %v310 = vld [vmem:[%s246 + $0x86] sm:$0xff]
      %v311 = vld [vmem:[%s246 + $0x8e] sm:$0xff]
      %v312 = vld [vmem:[%s246 + $0x96] sm:$0xff]
      %v313 = vld [vmem:[%s246 + $0x9e] sm:$0xff]
      %v314 = vld [vmem:[%s246 + $0xa6] sm:$0xff]
      %v315 = vld [vmem:[%s246 + $0xae] sm:$0xff]
      %v316 = vld [vmem:[%s246 + $0xb6] sm:$0xff]
      %v317 = vld [vmem:[%s246 + $0xbe] sm:$0xff]
      %v318 = vld [vmem:[%s246 + $0xc6] sm:$0xff]
      %v319 = vld [vmem:[%s246 + $0xce] sm:$0xff]
      %v320 = vld [vmem:[%s246 + $0xd6] sm:$0xff]
      %v321 = vld [vmem:[%s246 + $0xde] sm:$0xff]
      %v322 = vld [vmem:[%s246 + $0xe6] sm:$0xff]
      %v323 = vld [vmem:[%s246 + $0xee] sm:$0xff]
      %v324 = vld [vmem:[%s246 + $0xf6] sm:$0xff]
      %v325 = vld [vmem:[%s246 + $0xfe] sm:$0xff]
      %v326 = vld [vmem:[%s246 + $0x106] sm:$0xff]
      %v327 = vld [vmem:[%s246 + $0x10e] sm:$0xff]
      %v328 = vld [vmem:[%s246 + $0x116] sm:$0xff]
      %v329 = vld [vmem:[%s246 + $0x11e] sm:$0xff]
      %v330 = vld [vmem:[%s246 + $0x126] sm:$0xff]
      %v331 = vld [vmem:[%s246 + $0x12e] sm:$0xff]
      %v332 = vld [vmem:[%s246 + $0x136] sm:$0xff]
      %v333 = vld [vmem:[%s246 + $0x13e] sm:$0xff]
      %v334 = vld [vmem:[%s246 + $0x146] sm:$0xf]
      %s335 = scalar_lea.vmem %s2, 4
      %v336 = vld [vmem:[%s335] sm:$0xf]
      %vm337 = vcmask 31744
      %v339 = vsel %vm337, %v294, 0
      %v342 = vsel %vm337, %v295, 0
      %v345 = vsel %vm337, %v296, 0
      %v348 = vsel %vm337, %v297, 0
      %v351 = vsel %vm337, %v298, 0
      %v354 = vsel %vm337, %v299, 0
      %v357 = vsel %vm337, %v300, 0
      %v360 = vsel %vm337, %v301, 0
      %v363 = vsel %vm337, %v302, 0
      %v366 = vsel %vm337, %v303, 0
      %v369 = vsel %vm337, %v304, 0
      %v372 = vsel %vm337, %v305, 0
      %v375 = vsel %vm337, %v306, 0
      %v378 = vsel %vm337, %v307, 0
      %v381 = vsel %vm337, %v308, 0
      %v384 = vsel %vm337, %v309, 0
      %v387 = vsel %vm337, %v310, 0
      %v390 = vsel %vm337, %v311, 0
      %v393 = vsel %vm337, %v312, 0
      %v396 = vsel %vm337, %v313, 0
      %v399 = vsel %vm337, %v314, 0
      %v402 = vsel %vm337, %v315, 0
      %v405 = vsel %vm337, %v316, 0
      %v408 = vsel %vm337, %v317, 0
      %v411 = vsel %vm337, %v318, 0
      %v414 = vsel %vm337, %v319, 0
      %v417 = vsel %vm337, %v320, 0
      %v420 = vsel %vm337, %v321, 0
      %v423 = vsel %vm337, %v322, 0
      %v426 = vsel %vm337, %v323, 0
      %v429 = vsel %vm337, %v324, 0
      %v432 = vsel %vm337, %v325, 0
      %v435 = vsel %vm337, %v326, 0
      %v438 = vsel %vm337, %v327, 0
      %v441 = vsel %vm337, %v328, 0
      %v444 = vsel %vm337, %v329, 0
      %v447 = vsel %vm337, %v330, 0
      %v450 = vsel %vm337, %v331, 0
      %v453 = vsel %vm337, %v332, 0
      %v456 = vsel %vm337, %v333, 0
      %v459 = vsel %vm337, %v334, 0
      %vm461 = vcmask 1043456
      %v463 = vsel %vm461, %v336, 0
      %465 = vmatprep.subr.mxu0 0.0
      %466 = vmatpush1.msra.mxu0 %v463
      %467 = vmatprep.subr.mxu0 0.0
      %468 = vmatpush1.msra.mxu0 0.0
      %469 = vmatprep.subr.mxu0 0.0
      %470 = vmatpush1.msra.mxu0 0.0
      %471 = vmatprep.subr.mxu0 0.0
      %472 = vmatpush1.msra.mxu0 0.0
      %473 = vmatprep.subr.mxu0 0.0
      %474 = vmatpush1.msra.mxu0 0.0
      %475 = vmatprep.subr.mxu0 0.0
      %476 = vmatpush1.msra.mxu0 0.0
      %477 = vmatprep.subr.mxu0 0.0
      %478 = vmatpush1.msra.mxu0 0.0
      %479 = vmatprep.subr.mxu0 0.0
      %480 = vmatpush1.msra.mxu0 0.0
      %481 = vmatprep.subr.mxu0 0.0
      %482 = vmatpush1.msra.mxu0 0.0
      %483 = vmatprep.subr.mxu0 0.0
      %484 = vmatpush1.msra.mxu0 0.0
      %485 = vmatprep.subr.mxu0 0.0
      %486 = vmatpush1.msra.mxu0 0.0
      %487 = vmatprep.subr.mxu0 0.0
      %488 = vmatpush1.msra.mxu0 0.0
      %489 = vmatprep.subr.mxu0 0.0
      %490 = vmatpush1.msra.mxu0 0.0
      %491 = vmatprep.subr.mxu0 0.0
      %492 = vmatpush1.msra.mxu0 0.0
      %493 = vmatprep.subr.mxu0 0.0
      %494 = vmatpush1.msra.mxu0 0.0
      %495 = vmatprep.subr.mxu0 0.0
      %496 = vmatpush1.msra.mxu0 0.0
      %497 = vmatprep.subr.mxu0 0.0
      %498 = vmatpush1.msra.mxu0 0.0
      %499 = vmatprep.subr.mxu0 0.0
      %500 = vmatpush1.msra.mxu0 0.0
      %501 = vmatprep.subr.mxu0 0.0
      %502 = vmatpush1.msra.mxu0 0.0
      %503 = vmatprep.subr.mxu0 0.0
      %504 = vmatpush1.msra.mxu0 0.0
      %505 = vmatprep.subr.mxu0 0.0
      %506 = vmatpush1.msra.mxu0 0.0
      %507 = vmatprep.subr.mxu0 0.0
      %508 = vmatpush1.msra.mxu0 0.0
      %509 = vmatprep.subr.mxu0 0.0
      %510 = vmatpush1.msra.mxu0 0.0
      %511 = vmatprep.subr.mxu0 0.0
      %512 = vmatpush1.msra.mxu0 0.0
      %513 = vmatprep.subr.mxu0 0.0
      %514 = vmatpush1.msra.mxu0 0.0
      %515 = vmatprep.subr.mxu0 0.0
      %516 = vmatpush1.msra.mxu0 0.0
      %517 = vmatprep.subr.mxu0 0.0
      %518 = vmatpush1.msra.mxu0 0.0
      %519 = vmatprep.subr.mxu0 0.0
      %520 = vmatpush1.msra.mxu0 0.0
      %521 = vmatprep.subr.mxu0 0.0
      %522 = vmatpush1.msra.mxu0 0.0
      %523 = vmatprep.subr.mxu0 0.0
      %524 = vmatpush1.msra.mxu0 0.0
      %525 = vmatprep.subr.mxu0 0.0
      %526 = vmatpush1.msra.mxu0 0.0
      %527 = vmatprep.subr.mxu0 0.0
      %528 = vmatpush1.msra.mxu0 0.0
      %529 = vmatprep.mubr.f32.mxu0 0.0
      %530 = vmatmul.mubr.f32.gmra.mrb[0].mxu0 %v339
      %v531 = vpop.f32.mrb[0].mxu0
      %v532 = vadd.f32 0.0, %v531
      %v533 = vpop.f32.mrb[0].mxu0
      %534 = vmatprep.mubr.f32.mxu0 0.0
      %535 = vmatmul.mubr.f32.gmra.mrb[0].mxu0 %v342
      %v536 = vpop.f32.mrb[0].mxu0
      %v537 = vadd.f32 0.0, %v536
      %v538 = vpop.f32.mrb[0].mxu0
      %539 = vmatprep.mubr.f32.mxu0 0.0
      %540 = vmatmul.mubr.f32.gmra.mrb[0].mxu0 %v345
      %v541 = vpop.f32.mrb[0].mxu0
      %v542 = vadd.f32 0.0, %v541
      %v543 = vpop.f32.mrb[0].mxu0
      %544 = vmatprep.mubr.f32.mxu0 0.0
      %545 = vmatmul.mubr.f32.gmra.mrb[0].mxu0 %v348
      %v546 = vpop.f32.mrb[0].mxu0
      %v547 = vadd.f32 0.0, %v546
      %v548 = vpop.f32.mrb[0].mxu0
      %549 = vmatprep.mubr.f32.mxu0 0.0
      %550 = vmatmul.mubr.f32.gmra.mrb[0].mxu0 %v351
      %v551 = vpop.f32.mrb[0].mxu0
      %v552 = vadd.f32 0.0, %v551
      %v553 = vpop.f32.mrb[0].mxu0
      %554 = vmatprep.mubr.f32.mxu0 0.0
      %555 = vmatmul.mubr.f32.gmra.mrb[0].mxu0 %v354
      %v556 = vpop.f32.mrb[0].mxu0
      %v557 = vadd.f32 0.0, %v556
      %v558 = vpop.f32.mrb[0].mxu0
      %559 = vmatprep.mubr.f32.mxu0 0.0
      %560 = vmatmul.mubr.f32.gmra.mrb[0].mxu0 %v357
      %v561 = vpop.f32.mrb[0].mxu0
      %v562 = vadd.f32 0.0, %v561
      %v563 = vpop.f32.mrb[0].mxu0
      %564 = vmatprep.mubr.f32.mxu0 0.0
      %565 = vmatmul.mubr.f32.gmra.mrb[0].mxu0 %v360
      %v566 = vpop.f32.mrb[0].mxu0
      %v567 = vadd.f32 0.0, %v566
      %v568 = vpop.f32.mrb[0].mxu0
      %569 = vmatprep.mubr.f32.mxu0 0.0
      %570 = vmatmul.mubr.f32.gmra.mrb[0].mxu0 %v363
      %v571 = vpop.f32.mrb[0].mxu0
      %v572 = vadd.f32 0.0, %v571
      %v573 = vpop.f32.mrb[0].mxu0
      %574 = vmatprep.mubr.f32.mxu0 0.0
      %575 = vmatmul.mubr.f32.gmra.mrb[0].mxu0 %v366
      %v576 = vpop.f32.mrb[0].mxu0
      %v577 = vadd.f32 0.0, %v576
      %v578 = vpop.f32.mrb[0].mxu0
      %579 = vmatprep.mubr.f32.mxu0 0.0
      %580 = vmatmul.mubr.f32.gmra.mrb[0].mxu0 %v369
      %v581 = vpop.f32.mrb[0].mxu0
      %v582 = vadd.f32 0.0, %v581
      %v583 = vpop.f32.mrb[0].mxu0
      %584 = vmatprep.mubr.f32.mxu0 0.0
      %585 = vmatmul.mubr.f32.gmra.mrb[0].mxu0 %v372
      %v586 = vpop.f32.mrb[0].mxu0
      %v587 = vadd.f32 0.0, %v586
      %v588 = vpop.f32.mrb[0].mxu0
      %589 = vmatprep.mubr.f32.mxu0 0.0
      %590 = vmatmul.mubr.f32.gmra.mrb[0].mxu0 %v375
      %v591 = vpop.f32.mrb[0].mxu0
      %v592 = vadd.f32 0.0, %v591
      %v593 = vpop.f32.mrb[0].mxu0
      %594 = vmatprep.mubr.f32.mxu0 0.0
      %595 = vmatmul.mubr.f32.gmra.mrb[0].mxu0 %v378
      %v596 = vpop.f32.mrb[0].mxu0
      %v597 = vadd.f32 0.0, %v596
      %v598 = vpop.f32.mrb[0].mxu0
      %599 = vmatprep.mubr.f32.mxu0 0.0
      %600 = vmatmul.mubr.f32.gmra.mrb[0].mxu0 %v381
      %v601 = vpop.f32.mrb[0].mxu0
      %v602 = vadd.f32 0.0, %v601
      %v603 = vpop.f32.mrb[0].mxu0
      %604 = vmatprep.mubr.f32.mxu0 0.0
      %605 = vmatmul.mubr.f32.gmra.mrb[0].mxu0 %v384
      %v606 = vpop.f32.mrb[0].mxu0
      %v607 = vadd.f32 0.0, %v606
      %v608 = vpop.f32.mrb[0].mxu0
      %609 = vmatprep.mubr.f32.mxu0 0.0
      %610 = vmatmul.mubr.f32.gmra.mrb[0].mxu0 %v387
      %v611 = vpop.f32.mrb[0].mxu0
      %v612 = vadd.f32 0.0, %v611
      %v613 = vpop.f32.mrb[0].mxu0
      %614 = vmatprep.mubr.f32.mxu0 0.0
      %615 = vmatmul.mubr.f32.gmra.mrb[0].mxu0 %v390
      %v616 = vpop.f32.mrb[0].mxu0
      %v617 = vadd.f32 0.0, %v616
      %v618 = vpop.f32.mrb[0].mxu0
      %619 = vmatprep.mubr.f32.mxu0 0.0
      %620 = vmatmul.mubr.f32.gmra.mrb[0].mxu0 %v393
      %v621 = vpop.f32.mrb[0].mxu0
      %v622 = vadd.f32 0.0, %v621
      %v623 = vpop.f32.mrb[0].mxu0
      %624 = vmatprep.mubr.f32.mxu0 0.0
      %625 = vmatmul.mubr.f32.gmra.mrb[0].mxu0 %v396
      %v626 = vpop.f32.mrb[0].mxu0
      %v627 = vadd.f32 0.0, %v626
      %v628 = vpop.f32.mrb[0].mxu0
      %629 = vmatprep.mubr.f32.mxu0 0.0
      %630 = vmatmul.mubr.f32.gmra.mrb[0].mxu0 %v399
      %v631 = vpop.f32.mrb[0].mxu0
      %v632 = vadd.f32 0.0, %v631
      %v633 = vpop.f32.mrb[0].mxu0
      %634 = vmatprep.mubr.f32.mxu0 0.0
      %635 = vmatmul.mubr.f32.gmra.mrb[0].mxu0 %v402
      %v636 = vpop.f32.mrb[0].mxu0
      %v637 = vadd.f32 0.0, %v636
      %v638 = vpop.f32.mrb[0].mxu0
      %639 = vmatprep.mubr.f32.mxu0 0.0
      %640 = vmatmul.mubr.f32.gmra.mrb[0].mxu0 %v405
      %v641 = vpop.f32.mrb[0].mxu0
      %v642 = vadd.f32 0.0, %v641
      %v643 = vpop.f32.mrb[0].mxu0
      %644 = vmatprep.mubr.f32.mxu0 0.0
      %645 = vmatmul.mubr.f32.gmra.mrb[0].mxu0 %v408
      %v646 = vpop.f32.mrb[0].mxu0
      %v647 = vadd.f32 0.0, %v646
      %v648 = vpop.f32.mrb[0].mxu0
      %649 = vmatprep.mubr.f32.mxu0 0.0
      %650 = vmatmul.mubr.f32.gmra.mrb[0].mxu0 %v411
      %v651 = vpop.f32.mrb[0].mxu0
      %v652 = vadd.f32 0.0, %v651
      %v653 = vpop.f32.mrb[0].mxu0
      %654 = vmatprep.mubr.f32.mxu0 0.0
      %655 = vmatmul.mubr.f32.gmra.mrb[0].mxu0 %v414
      %v656 = vpop.f32.mrb[0].mxu0
      %v657 = vadd.f32 0.0, %v656
      %v658 = vpop.f32.mrb[0].mxu0
      %659 = vmatprep.mubr.f32.mxu0 0.0
      %660 = vmatmul.mubr.f32.gmra.mrb[0].mxu0 %v417
      %v661 = vpop.f32.mrb[0].mxu0
      %v662 = vadd.f32 0.0, %v661
      %v663 = vpop.f32.mrb[0].mxu0
      %664 = vmatprep.mubr.f32.mxu0 0.0
      %665 = vmatmul.mubr.f32.gmra.mrb[0].mxu0 %v420
      %v666 = vpop.f32.mrb[0].mxu0
      %v667 = vadd.f32 0.0, %v666
      %v668 = vpop.f32.mrb[0].mxu0
      %669 = vmatprep.mubr.f32.mxu0 0.0
      %670 = vmatmul.mubr.f32.gmra.mrb[0].mxu0 %v423
      %v671 = vpop.f32.mrb[0].mxu0
      %v672 = vadd.f32 0.0, %v671
      %v673 = vpop.f32.mrb[0].mxu0
      %674 = vmatprep.mubr.f32.mxu0 0.0
      %675 = vmatmul.mubr.f32.gmra.mrb[0].mxu0 %v426
      %v676 = vpop.f32.mrb[0].mxu0
      %v677 = vadd.f32 0.0, %v676
      %v678 = vpop.f32.mrb[0].mxu0
      %679 = vmatprep.mubr.f32.mxu0 0.0
      %680 = vmatmul.mubr.f32.gmra.mrb[0].mxu0 %v429
      %v681 = vpop.f32.mrb[0].mxu0
      %v682 = vadd.f32 0.0, %v681
      %v683 = vpop.f32.mrb[0].mxu0
      %684 = vmatprep.mubr.f32.mxu0 0.0
      %685 = vmatmul.mubr.f32.gmra.mrb[0].mxu0 %v432
      %v686 = vpop.f32.mrb[0].mxu0
      %v687 = vadd.f32 0.0, %v686
      %v688 = vpop.f32.mrb[0].mxu0
      %689 = vmatprep.mubr.f32.mxu0 0.0
      %690 = vmatmul.mubr.f32.gmra.mrb[0].mxu0 %v435
      %v691 = vpop.f32.mrb[0].mxu0
      %v692 = vadd.f32 0.0, %v691
      %v693 = vpop.f32.mrb[0].mxu0
      %694 = vmatprep.mubr.f32.mxu0 0.0
      %695 = vmatmul.mubr.f32.gmra.mrb[0].mxu0 %v438
      %v696 = vpop.f32.mrb[0].mxu0
      %v697 = vadd.f32 0.0, %v696
      %v698 = vpop.f32.mrb[0].mxu0
      %699 = vmatprep.mubr.f32.mxu0 0.0
      %700 = vmatmul.mubr.f32.gmra.mrb[0].mxu0 %v441
      %v701 = vpop.f32.mrb[0].mxu0
      %v702 = vadd.f32 0.0, %v701
      %v703 = vpop.f32.mrb[0].mxu0
      %704 = vmatprep.mubr.f32.mxu0 0.0
      %705 = vmatmul.mubr.f32.gmra.mrb[0].mxu0 %v444
      %v706 = vpop.f32.mrb[0].mxu0
      %v707 = vadd.f32 0.0, %v706
      %v708 = vpop.f32.mrb[0].mxu0
      %709 = vmatprep.mubr.f32.mxu0 0.0
      %710 = vmatmul.mubr.f32.gmra.mrb[0].mxu0 %v447
      %v711 = vpop.f32.mrb[0].mxu0
      %v712 = vadd.f32 0.0, %v711
      %v713 = vpop.f32.mrb[0].mxu0
      %714 = vmatprep.mubr.f32.mxu0 0.0
      %715 = vmatmul.mubr.f32.gmra.mrb[0].mxu0 %v450
      %v716 = vpop.f32.mrb[0].mxu0
      %v717 = vadd.f32 0.0, %v716
      %v718 = vpop.f32.mrb[0].mxu0
      %719 = vmatprep.mubr.f32.mxu0 0.0
      %720 = vmatmul.mubr.f32.gmra.mrb[0].mxu0 %v453
      %v721 = vpop.f32.mrb[0].mxu0
      %v722 = vadd.f32 0.0, %v721
      %v723 = vpop.f32.mrb[0].mxu0
      %724 = vmatprep.mubr.f32.mxu0 0.0
      %725 = vmatmul.mubr.f32.gmra.mrb[0].mxu0 %v456
      %v726 = vpop.f32.mrb[0].mxu0
      %v727 = vadd.f32 0.0, %v726
      %v728 = vpop.f32.mrb[0].mxu0
      %729 = vmatprep.mubr.f32.mxu0 0.0
      %730 = vmatmul.mubr.f32.gmra.mrb[0].mxu0 %v459
      %v731 = vpop.f32.mrb[0].mxu0
      %v732 = vadd.f32 0.0, %v731
      %v733 = vpop.f32.mrb[0].mxu0
      %734 = vdwg.mxu0
      %v736 = vsel %vm337, %v252, 0
      %v739 = vsel %vm337, %v253, 0
      %v742 = vsel %vm337, %v254, 0
      %v745 = vsel %vm337, %v255, 0
      %v748 = vsel %vm337, %v256, 0
      %v751 = vsel %vm337, %v257, 0
      %v754 = vsel %vm337, %v258, 0
      %v757 = vsel %vm337, %v259, 0
      %v760 = vsel %vm337, %v260, 0
      %v763 = vsel %vm337, %v261, 0
      %v766 = vsel %vm337, %v262, 0
      %v769 = vsel %vm337, %v263, 0
      %v772 = vsel %vm337, %v264, 0
      %v775 = vsel %vm337, %v265, 0
      %v778 = vsel %vm337, %v266, 0
      %v781 = vsel %vm337, %v267, 0
      %v784 = vsel %vm337, %v268, 0
      %v787 = vsel %vm337, %v269, 0
      %v790 = vsel %vm337, %v270, 0
      %v793 = vsel %vm337, %v271, 0
      %v796 = vsel %vm337, %v272, 0
      %v799 = vsel %vm337, %v273, 0
      %v802 = vsel %vm337, %v274, 0
      %v805 = vsel %vm337, %v275, 0
      %v808 = vsel %vm337, %v276, 0
      %v811 = vsel %vm337, %v277, 0
      %v814 = vsel %vm337, %v278, 0
      %v817 = vsel %vm337, %v279, 0
      %v820 = vsel %vm337, %v280, 0
      %v823 = vsel %vm337, %v281, 0
      %v826 = vsel %vm337, %v282, 0
      %v829 = vsel %vm337, %v283, 0
      %v832 = vsel %vm337, %v284, 0
      %v835 = vsel %vm337, %v285, 0
      %v838 = vsel %vm337, %v286, 0
      %v841 = vsel %vm337, %v287, 0
      %v844 = vsel %vm337, %v288, 0
      %v847 = vsel %vm337, %v289, 0
      %v850 = vsel %vm337, %v290, 0
      %v853 = vsel %vm337, %v291, 0
      %v856 = vsel %vm337, %v292, 0
      %v859 = vsel %vm461, %v293, 0
      %861 = vmatprep.subr.mxu0 0.0
      %862 = vmatpush1.msra.mxu0 %v859
      %863 = vmatprep.subr.mxu0 0.0
      %864 = vmatpush1.msra.mxu0 0.0
      %865 = vmatprep.subr.mxu0 0.0
      %866 = vmatpush1.msra.mxu0 0.0
      %867 = vmatprep.subr.mxu0 0.0
      %868 = vmatpush1.msra.mxu0 0.0
      %869 = vmatprep.subr.mxu0 0.0
      %870 = vmatpush1.msra.mxu0 0.0
      %871 = vmatprep.subr.mxu0 0.0
      %872 = vmatpush1.msra.mxu0 0.0
      %873 = vmatprep.subr.mxu0 0.0
      %874 = vmatpush1.msra.mxu0 0.0
      %875 = vmatprep.subr.mxu0 0.0
      %876 = vmatpush1.msra.mxu0 0.0
      %877 = vmatprep.subr.mxu0 0.0
      %878 = vmatpush1.msra.mxu0 0.0
      %879 = vmatprep.subr.mxu0 0.0
      %880 = vmatpush1.msra.mxu0 0.0
      %881 = vmatprep.subr.mxu0 0.0
      %882 = vmatpush1.msra.mxu0 0.0
      %883 = vmatprep.subr.mxu0 0.0
      %884 = vmatpush1.msra.mxu0 0.0
      %885 = vmatprep.subr.mxu0 0.0
      %886 = vmatpush1.msra.mxu0 0.0
      %887 = vmatprep.subr.mxu0 0.0
      %888 = vmatpush1.msra.mxu0 0.0
      %889 = vmatprep.subr.mxu0 0.0
      %890 = vmatpush1.msra.mxu0 0.0
      %891 = vmatprep.subr.mxu0 0.0
      %892 = vmatpush1.msra.mxu0 0.0
      %893 = vmatprep.subr.mxu0 0.0
      %894 = vmatpush1.msra.mxu0 0.0
      %895 = vmatprep.subr.mxu0 0.0
      %896 = vmatpush1.msra.mxu0 0.0
      %897 = vmatprep.subr.mxu0 0.0
      %898 = vmatpush1.msra.mxu0 0.0
      %899 = vmatprep.subr.mxu0 0.0
      %900 = vmatpush1.msra.mxu0 0.0
      %901 = vmatprep.subr.mxu0 0.0
      %902 = vmatpush1.msra.mxu0 0.0
      %903 = vmatprep.subr.mxu0 0.0
      %904 = vmatpush1.msra.mxu0 0.0
      %905 = vmatprep.subr.mxu0 0.0
      %906 = vmatpush1.msra.mxu0 0.0
      %907 = vmatprep.subr.mxu0 0.0
      %908 = vmatpush1.msra.mxu0 0.0
      %909 = vmatprep.subr.mxu0 0.0
      %910 = vmatpush1.msra.mxu0 0.0
      %911 = vmatprep.subr.mxu0 0.0
      %912 = vmatpush1.msra.mxu0 0.0
      %913 = vmatprep.subr.mxu0 0.0
      %914 = vmatpush1.msra.mxu0 0.0
      %915 = vmatprep.subr.mxu0 0.0
      %916 = vmatpush1.msra.mxu0 0.0
      %917 = vmatprep.subr.mxu0 0.0
      %918 = vmatpush1.msra.mxu0 0.0
      %919 = vmatprep.subr.mxu0 0.0
      %920 = vmatpush1.msra.mxu0 0.0
      %921 = vmatprep.subr.mxu0 0.0
      %922 = vmatpush1.msra.mxu0 0.0
      %923 = vmatprep.subr.mxu0 0.0
      %924 = vmatpush1.msra.mxu0 0.0
      %925 = vmatprep.mubr.f32.mxu0 0.0
      %926 = vmatmul.mubr.f32.gmra.mrb[0].mxu0 %v736
      %v927 = vpop.f32.mrb[0].mxu0
      %v928 = vadd.f32 %v532, %v927
      %v929 = vpop.f32.mrb[0].mxu0
      %930 = vmatprep.mubr.f32.mxu0 0.0
      %931 = vmatmul.mubr.f32.gmra.mrb[0].mxu0 %v739
      %v932 = vpop.f32.mrb[0].mxu0
      %v933 = vadd.f32 %v537, %v932
      %v934 = vpop.f32.mrb[0].mxu0
      %935 = vmatprep.mubr.f32.mxu0 0.0
      %936 = vmatmul.mubr.f32.gmra.mrb[0].mxu0 %v742
      %v937 = vpop.f32.mrb[0].mxu0
      %v938 = vadd.f32 %v542, %v937
      %v939 = vpop.f32.mrb[0].mxu0
      %940 = vmatprep.mubr.f32.mxu0 0.0
      %941 = vmatmul.mubr.f32.gmra.mrb[0].mxu0 %v745
      %v942 = vpop.f32.mrb[0].mxu0
      %v943 = vadd.f32 %v547, %v942
      %v944 = vpop.f32.mrb[0].mxu0
      %945 = vmatprep.mubr.f32.mxu0 0.0
      %946 = vmatmul.mubr.f32.gmra.mrb[0].mxu0 %v748
      %v947 = vpop.f32.mrb[0].mxu0
      %v948 = vadd.f32 %v552, %v947
      %v949 = vpop.f32.mrb[0].mxu0
      %950 = vmatprep.mubr.f32.mxu0 0.0
      %951 = vmatmul.mubr.f32.gmra.mrb[0].mxu0 %v751
      %v952 = vpop.f32.mrb[0].mxu0
      %v953 = vadd.f32 %v557, %v952
      %v954 = vpop.f32.mrb[0].mxu0
      %955 = vmatprep.mubr.f32.mxu0 0.0
      %956 = vmatmul.mubr.f32.gmra.mrb[0].mxu0 %v754
      %v957 = vpop.f32.mrb[0].mxu0
      %v958 = vadd.f32 %v562, %v957
      %v959 = vpop.f32.mrb[0].mxu0
      %960 = vmatprep.mubr.f32.mxu0 0.0
      %961 = vmatmul.mubr.f32.gmra.mrb[0].mxu0 %v757
      %v962 = vpop.f32.mrb[0].mxu0
      %v963 = vadd.f32 %v567, %v962
      %v964 = vpop.f32.mrb[0].mxu0
      %965 = vmatprep.mubr.f32.mxu0 0.0
      %966 = vmatmul.mubr.f32.gmra.mrb[0].mxu0 %v760
      %v967 = vpop.f32.mrb[0].mxu0
      %v968 = vadd.f32 %v572, %v967
      %v969 = vpop.f32.mrb[0].mxu0
      %970 = vmatprep.mubr.f32.mxu0 0.0
      %971 = vmatmul.mubr.f32.gmra.mrb[0].mxu0 %v763
      %v972 = vpop.f32.mrb[0].mxu0
      %v973 = vadd.f32 %v577, %v972
      %v974 = vpop.f32.mrb[0].mxu0
      %975 = vmatprep.mubr.f32.mxu0 0.0
      %976 = vmatmul.mubr.f32.gmra.mrb[0].mxu0 %v766
      %v977 = vpop.f32.mrb[0].mxu0
      %v978 = vadd.f32 %v582, %v977
      %v979 = vpop.f32.mrb[0].mxu0
      %980 = vmatprep.mubr.f32.mxu0 0.0
      %981 = vmatmul.mubr.f32.gmra.mrb[0].mxu0 %v769
      %v982 = vpop.f32.mrb[0].mxu0
      %v983 = vadd.f32 %v587, %v982
      %v984 = vpop.f32.mrb[0].mxu0
      %985 = vmatprep.mubr.f32.mxu0 0.0
      %986 = vmatmul.mubr.f32.gmra.mrb[0].mxu0 %v772
      %v987 = vpop.f32.mrb[0].mxu0
      %v988 = vadd.f32 %v592, %v987
      %v989 = vpop.f32.mrb[0].mxu0
      %990 = vmatprep.mubr.f32.mxu0 0.0
      %991 = vmatmul.mubr.f32.gmra.mrb[0].mxu0 %v775
      %v992 = vpop.f32.mrb[0].mxu0
      %v993 = vadd.f32 %v597, %v992
      %v994 = vpop.f32.mrb[0].mxu0
      %995 = vmatprep.mubr.f32.mxu0 0.0
      %996 = vmatmul.mubr.f32.gmra.mrb[0].mxu0 %v778
      %v997 = vpop.f32.mrb[0].mxu0
      %v998 = vadd.f32 %v602, %v997
      %v999 = vpop.f32.mrb[0].mxu0
      %1000 = vmatprep.mubr.f32.mxu0 0.0
      %1001 = vmatmul.mubr.f32.gmra.mrb[0].mxu0 %v781
      %v1002 = vpop.f32.mrb[0].mxu0
      %v1003 = vadd.f32 %v607, %v1002
      %v1004 = vpop.f32.mrb[0].mxu0
      %1005 = vmatprep.mubr.f32.mxu0 0.0
      %1006 = vmatmul.mubr.f32.gmra.mrb[0].mxu0 %v784
      %v1007 = vpop.f32.mrb[0].mxu0
      %v1008 = vadd.f32 %v612, %v1007
      %v1009 = vpop.f32.mrb[0].mxu0
      %1010 = vmatprep.mubr.f32.mxu0 0.0
      %1011 = vmatmul.mubr.f32.gmra.mrb[0].mxu0 %v787
      %v1012 = vpop.f32.mrb[0].mxu0
      %v1013 = vadd.f32 %v617, %v1012
      %v1014 = vpop.f32.mrb[0].mxu0
      %1015 = vmatprep.mubr.f32.mxu0 0.0
      %1016 = vmatmul.mubr.f32.gmra.mrb[0].mxu0 %v790
      %v1017 = vpop.f32.mrb[0].mxu0
      %v1018 = vadd.f32 %v622, %v1017
      %v1019 = vpop.f32.mrb[0].mxu0
      %1020 = vmatprep.mubr.f32.mxu0 0.0
      %1021 = vmatmul.mubr.f32.gmra.mrb[0].mxu0 %v793
      %v1022 = vpop.f32.mrb[0].mxu0
      %v1023 = vadd.f32 %v627, %v1022
      %v1024 = vpop.f32.mrb[0].mxu0
      %1025 = vmatprep.mubr.f32.mxu0 0.0
      %1026 = vmatmul.mubr.f32.gmra.mrb[0].mxu0 %v796
      %v1027 = vpop.f32.mrb[0].mxu0
      %v1028 = vadd.f32 %v632, %v1027
      %v1029 = vpop.f32.mrb[0].mxu0
      %1030 = vmatprep.mubr.f32.mxu0 0.0
      %1031 = vmatmul.mubr.f32.gmra.mrb[0].mxu0 %v799
      %v1032 = vpop.f32.mrb[0].mxu0
      %v1033 = vadd.f32 %v637, %v1032
      %v1034 = vpop.f32.mrb[0].mxu0
      %1035 = vmatprep.mubr.f32.mxu0 0.0
      %1036 = vmatmul.mubr.f32.gmra.mrb[0].mxu0 %v802
      %v1037 = vpop.f32.mrb[0].mxu0
      %v1038 = vadd.f32 %v642, %v1037
      %v1039 = vpop.f32.mrb[0].mxu0
      %1040 = vmatprep.mubr.f32.mxu0 0.0
      %1041 = vmatmul.mubr.f32.gmra.mrb[0].mxu0 %v805
      %v1042 = vpop.f32.mrb[0].mxu0
      %v1043 = vadd.f32 %v647, %v1042
      %v1044 = vpop.f32.mrb[0].mxu0
      %1045 = vmatprep.mubr.f32.mxu0 0.0
      %1046 = vmatmul.mubr.f32.gmra.mrb[0].mxu0 %v808
      %v1047 = vpop.f32.mrb[0].mxu0
      %v1048 = vadd.f32 %v652, %v1047
      %v1049 = vpop.f32.mrb[0].mxu0
      %1050 = vmatprep.mubr.f32.mxu0 0.0
      %1051 = vmatmul.mubr.f32.gmra.mrb[0].mxu0 %v811
      %v1052 = vpop.f32.mrb[0].mxu0
      %v1053 = vadd.f32 %v657, %v1052
      %v1054 = vpop.f32.mrb[0].mxu0
      %1055 = vmatprep.mubr.f32.mxu0 0.0
      %1056 = vmatmul.mubr.f32.gmra.mrb[0].mxu0 %v814
      %v1057 = vpop.f32.mrb[0].mxu0
      %v1058 = vadd.f32 %v662, %v1057
      %v1059 = vpop.f32.mrb[0].mxu0
      %1060 = vmatprep.mubr.f32.mxu0 0.0
      %1061 = vmatmul.mubr.f32.gmra.mrb[0].mxu0 %v817
      %v1062 = vpop.f32.mrb[0].mxu0
      %v1063 = vadd.f32 %v667, %v1062
      %v1064 = vpop.f32.mrb[0].mxu0
      %1065 = vmatprep.mubr.f32.mxu0 0.0
      %1066 = vmatmul.mubr.f32.gmra.mrb[0].mxu0 %v820
      %v1067 = vpop.f32.mrb[0].mxu0
      %v1068 = vadd.f32 %v672, %v1067
      %v1069 = vpop.f32.mrb[0].mxu0
      %1070 = vmatprep.mubr.f32.mxu0 0.0
      %1071 = vmatmul.mubr.f32.gmra.mrb[0].mxu0 %v823
      %v1072 = vpop.f32.mrb[0].mxu0
      %v1073 = vadd.f32 %v677, %v1072
      %v1074 = vpop.f32.mrb[0].mxu0
      %1075 = vmatprep.mubr.f32.mxu0 0.0
      %1076 = vmatmul.mubr.f32.gmra.mrb[0].mxu0 %v826
      %v1077 = vpop.f32.mrb[0].mxu0
      %v1078 = vadd.f32 %v682, %v1077
      %v1079 = vpop.f32.mrb[0].mxu0
      %1080 = vmatprep.mubr.f32.mxu0 0.0
      %1081 = vmatmul.mubr.f32.gmra.mrb[0].mxu0 %v829
      %v1082 = vpop.f32.mrb[0].mxu0
      %v1083 = vadd.f32 %v687, %v1082
      %v1084 = vpop.f32.mrb[0].mxu0
      %1085 = vmatprep.mubr.f32.mxu0 0.0
      %1086 = vmatmul.mubr.f32.gmra.mrb[0].mxu0 %v832
      %v1087 = vpop.f32.mrb[0].mxu0
      %v1088 = vadd.f32 %v692, %v1087
      %v1089 = vpop.f32.mrb[0].mxu0
      %1090 = vmatprep.mubr.f32.mxu0 0.0
      %1091 = vmatmul.mubr.f32.gmra.mrb[0].mxu0 %v835
      %v1092 = vpop.f32.mrb[0].mxu0
      %v1093 = vadd.f32 %v697, %v1092
      %v1094 = vpop.f32.mrb[0].mxu0
      %1095 = vmatprep.mubr.f32.mxu0 0.0
      %1096 = vmatmul.mubr.f32.gmra.mrb[0].mxu0 %v838
      %v1097 = vpop.f32.mrb[0].mxu0
      %v1098 = vadd.f32 %v702, %v1097
      %v1099 = vpop.f32.mrb[0].mxu0
      %1100 = vmatprep.mubr.f32.mxu0 0.0
      %1101 = vmatmul.mubr.f32.gmra.mrb[0].mxu0 %v841
      %v1102 = vpop.f32.mrb[0].mxu0
      %v1103 = vadd.f32 %v707, %v1102
      %v1104 = vpop.f32.mrb[0].mxu0
      %1105 = vmatprep.mubr.f32.mxu0 0.0
      %1106 = vmatmul.mubr.f32.gmra.mrb[0].mxu0 %v844
      %v1107 = vpop.f32.mrb[0].mxu0
      %v1108 = vadd.f32 %v712, %v1107
      %v1109 = vpop.f32.mrb[0].mxu0
      %1110 = vmatprep.mubr.f32.mxu0 0.0
      %1111 = vmatmul.mubr.f32.gmra.mrb[0].mxu0 %v847
      %v1112 = vpop.f32.mrb[0].mxu0
      %v1113 = vadd.f32 %v717, %v1112
      %v1114 = vpop.f32.mrb[0].mxu0
      %1115 = vmatprep.mubr.f32.mxu0 0.0
      %1116 = vmatmul.mubr.f32.gmra.mrb[0].mxu0 %v850
      %v1117 = vpop.f32.mrb[0].mxu0
      %v1118 = vadd.f32 %v722, %v1117
      %v1119 = vpop.f32.mrb[0].mxu0
      %1120 = vmatprep.mubr.f32.mxu0 0.0
      %1121 = vmatmul.mubr.f32.gmra.mrb[0].mxu0 %v853
      %v1122 = vpop.f32.mrb[0].mxu0
      %v1123 = vadd.f32 %v727, %v1122
      %v1124 = vpop.f32.mrb[0].mxu0
      %1125 = vmatprep.mubr.f32.mxu0 0.0
      %1126 = vmatmul.mubr.f32.gmra.mrb[0].mxu0 %v856
      %v1127 = vpop.f32.mrb[0].mxu0
      %v1128 = vadd.f32 %v732, %v1127
      %v1129 = vpop.f32.mrb[0].mxu0
      %1130 = vdwg.mxu0
      %v1131 = vld [vmem:[%s246 + $0x7] sm:$0xff]
      %v1132 = vld [vmem:[%s246 + $0xf] sm:$0xff]
      %v1133 = vld [vmem:[%s246 + $0x17] sm:$0xff]
      %v1134 = vld [vmem:[%s246 + $0x1f] sm:$0xff]
      %v1135 = vld [vmem:[%s246 + $0x27] sm:$0xff]
      %v1136 = vld [vmem:[%s246 + $0x2f] sm:$0xff]
      %v1137 = vld [vmem:[%s246 + $0x37] sm:$0xff]
      %v1138 = vld [vmem:[%s246 + $0x3f] sm:$0xff]
      %v1139 = vld [vmem:[%s246 + $0x47] sm:$0xff]
      %v1140 = vld [vmem:[%s246 + $0x4f] sm:$0xff]
      %v1141 = vld [vmem:[%s246 + $0x57] sm:$0xff]
      %v1142 = vld [vmem:[%s246 + $0x5f] sm:$0xff]
      %v1143 = vld [vmem:[%s246 + $0x67] sm:$0xff]
      %v1144 = vld [vmem:[%s246 + $0x6f] sm:$0xff]
      %v1145 = vld [vmem:[%s246 + $0x77] sm:$0xff]
      %v1146 = vld [vmem:[%s246 + $0x7f] sm:$0xff]
      %v1147 = vld [vmem:[%s246 + $0x87] sm:$0xff]
      %v1148 = vld [vmem:[%s246 + $0x8f] sm:$0xff]
      %v1149 = vld [vmem:[%s246 + $0x97] sm:$0xff]
      %v1150 = vld [vmem:[%s246 + $0x9f] sm:$0xff]
      %v1151 = vld [vmem:[%s246 + $0xa7] sm:$0xff]
      %v1152 = vld [vmem:[%s246 + $0xaf] sm:$0xff]
      %v1153 = vld [vmem:[%s246 + $0xb7] sm:$0xff]
      %v1154 = vld [vmem:[%s246 + $0xbf] sm:$0xff]
      %v1155 = vld [vmem:[%s246 + $0xc7] sm:$0xff]
      %v1156 = vld [vmem:[%s246 + $0xcf] sm:$0xff]
      %v1157 = vld [vmem:[%s246 + $0xd7] sm:$0xff]
      %v1158 = vld [vmem:[%s246 + $0xdf] sm:$0xff]
      %v1159 = vld [vmem:[%s246 + $0xe7] sm:$0xff]
      %v1160 = vld [vmem:[%s246 + $0xef] sm:$0xff]
      %v1161 = vld [vmem:[%s246 + $0xf7] sm:$0xff]
      %v1162 = vld [vmem:[%s246 + $0xff] sm:$0xff]
      %v1163 = vld [vmem:[%s246 + $0x107] sm:$0xff]
      %v1164 = vld [vmem:[%s246 + $0x10f] sm:$0xff]
      %v1165 = vld [vmem:[%s246 + $0x117] sm:$0xff]
      %v1166 = vld [vmem:[%s246 + $0x11f] sm:$0xff]
      %v1167 = vld [vmem:[%s246 + $0x127] sm:$0xff]
      %v1168 = vld [vmem:[%s246 + $0x12f] sm:$0xff]
      %v1169 = vld [vmem:[%s246 + $0x137] sm:$0xff]
      %v1170 = vld [vmem:[%s246 + $0x13f] sm:$0xff]
      %v1171 = vld [vmem:[%s246 + $0x147] sm:$0xf]
      %s1172 = scalar_lea.vmem %s2, 8
      %v1173 = vld [vmem:[%s1172] sm:$0xf]
      %v1175 = vsel %vm337, %v1131, 0
      %v1178 = vsel %vm337, %v1132, 0
      %v1181 = vsel %vm337, %v1133, 0
      %v1184 = vsel %vm337, %v1134, 0
      %v1187 = vsel %vm337, %v1135, 0
      %v1190 = vsel %vm337, %v1136, 0
      %v1193 = vsel %vm337, %v1137, 0
      %v1196 = vsel %vm337, %v1138, 0
      %v1199 = vsel %vm337, %v1139, 0
      %v1202 = vsel %vm337, %v1140, 0
      %v1205 = vsel %vm337, %v1141, 0
      %v1208 = vsel %vm337, %v1142, 0
      %v1211 = vsel %vm337, %v1143, 0
      %v1214 = vsel %vm337, %v1144, 0
      %v1217 = vsel %vm337, %v1145, 0
      %v1220 = vsel %vm337, %v1146, 0
      %v1223 = vsel %vm337, %v1147, 0
      %v1226 = vsel %vm337, %v1148, 0
      %v1229 = vsel %vm337, %v1149, 0
      %v1232 = vsel %vm337, %v1150, 0
      %v1235 = vsel %vm337, %v1151, 0
      %v1238 = vsel %vm337, %v1152, 0
      %v1241 = vsel %vm337, %v1153, 0
      %v1244 = vsel %vm337, %v1154, 0
      %v1247 = vsel %vm337, %v1155, 0
      %v1250 = vsel %vm337, %v1156, 0
      %v1253 = vsel %vm337, %v1157, 0
      %v1256 = vsel %vm337, %v1158, 0
      %v1259 = vsel %vm337, %v1159, 0
      %v1262 = vsel %vm337, %v1160, 0
      %v1265 = vsel %vm337, %v1161, 0
      %v1268 = vsel %vm337, %v1162, 0
      %v1271 = vsel %vm337, %v1163, 0
      %v1274 = vsel %vm337, %v1164, 0
      %v1277 = vsel %vm337, %v1165, 0
      %v1280 = vsel %vm337, %v1166, 0
      %v1283 = vsel %vm337, %v1167, 0
      %v1286 = vsel %vm337, %v1168, 0
      %v1289 = vsel %vm337, %v1169, 0
      %v1292 = vsel %vm337, %v1170, 0
      %v1295 = vsel %vm337, %v1171, 0
      %v1298 = vsel %vm461, %v1173, 0
      %1300 = vmatprep.subr.mxu0 0.0
      %1301 = vmatpush1.msra.mxu0 %v1298
      %1302 = vmatprep.subr.mxu0 0.0
      %1303 = vmatpush1.msra.mxu0 0.0
      %1304 = vmatprep.subr.mxu0 0.0
      %1305 = vmatpush1.msra.mxu0 0.0
      %1306 = vmatprep.subr.mxu0 0.0
      %1307 = vmatpush1.msra.mxu0 0.0
      %1308 = vmatprep.subr.mxu0 0.0
      %1309 = vmatpush1.msra.mxu0 0.0
      %1310 = vmatprep.subr.mxu0 0.0
      %1311 = vmatpush1.msra.mxu0 0.0
      %1312 = vmatprep.subr.mxu0 0.0
      %1313 = vmatpush1.msra.mxu0 0.0
      %1314 = vmatprep.subr.mxu0 0.0
      %1315 = vmatpush1.msra.mxu0 0.0
      %1316 = vmatprep.subr.mxu0 0.0
      %1317 = vmatpush1.msra.mxu0 0.0
      %1318 = vmatprep.subr.mxu0 0.0
      %1319 = vmatpush1.msra.mxu0 0.0
      %1320 = vmatprep.subr.mxu0 0.0
      %1321 = vmatpush1.msra.mxu0 0.0
      %1322 = vmatprep.subr.mxu0 0.0
      %1323 = vmatpush1.msra.mxu0 0.0
      %1324 = vmatprep.subr.mxu0 0.0
      %1325 = vmatpush1.msra.mxu0 0.0
      %1326 = vmatprep.subr.mxu0 0.0
      %1327 = vmatpush1.msra.mxu0 0.0
      %1328 = vmatprep.subr.mxu0 0.0
      %1329 = vmatpush1.msra.mxu0 0.0
      %1330 = vmatprep.subr.mxu0 0.0
      %1331 = vmatpush1.msra.mxu0 0.0
      %1332 = vmatprep.subr.mxu0 0.0
      %1333 = vmatpush1.msra.mxu0 0.0
      %1334 = vmatprep.subr.mxu0 0.0
      %1335 = vmatpush1.msra.mxu0 0.0
      %1336 = vmatprep.subr.mxu0 0.0
      %1337 = vmatpush1.msra.mxu0 0.0
      %1338 = vmatprep.subr.mxu0 0.0
      %1339 = vmatpush1.msra.mxu0 0.0
      %1340 = vmatprep.subr.mxu0 0.0
      %1341 = vmatpush1.msra.mxu0 0.0
      %1342 = vmatprep.subr.mxu0 0.0
      %1343 = vmatpush1.msra.mxu0 0.0
      %1344 = vmatprep.subr.mxu0 0.0
      %1345 = vmatpush1.msra.mxu0 0.0
      %1346 = vmatprep.subr.mxu0 0.0
      %1347 = vmatpush1.msra.mxu0 0.0
      %1348 = vmatprep.subr.mxu0 0.0
      %1349 = vmatpush1.msra.mxu0 0.0
      %1350 = vmatprep.subr.mxu0 0.0
      %1351 = vmatpush1.msra.mxu0 0.0
      %1352 = vmatprep.subr.mxu0 0.0
      %1353 = vmatpush1.msra.mxu0 0.0
      %1354 = vmatprep.subr.mxu0 0.0
      %1355 = vmatpush1.msra.mxu0 0.0
      %1356 = vmatprep.subr.mxu0 0.0
      %1357 = vmatpush1.msra.mxu0 0.0
      %1358 = vmatprep.subr.mxu0 0.0
      %1359 = vmatpush1.msra.mxu0 0.0
      %1360 = vmatprep.subr.mxu0 0.0
      %1361 = vmatpush1.msra.mxu0 0.0
      %1362 = vmatprep.subr.mxu0 0.0
      %1363 = vmatpush1.msra.mxu0 0.0
      %1364 = vmatprep.mubr.f32.mxu0 0.0
      %1365 = vmatmul.mubr.f32.gmra.mrb[0].mxu0 %v1175
      %v1366 = vpop.f32.mrb[0].mxu0
      %v1367 = vadd.f32 0.0, %v1366
      %v1368 = vpop.f32.mrb[0].mxu0
      %1369 = vmatprep.mubr.f32.mxu0 0.0
      %1370 = vmatmul.mubr.f32.gmra.mrb[0].mxu0 %v1178
      %v1371 = vpop.f32.mrb[0].mxu0
      %v1372 = vadd.f32 0.0, %v1371
      %v1373 = vpop.f32.mrb[0].mxu0
      %1374 = vmatprep.mubr.f32.mxu0 0.0
      %1375 = vmatmul.mubr.f32.gmra.mrb[0].mxu0 %v1181
      %v1376 = vpop.f32.mrb[0].mxu0
      %v1377 = vadd.f32 0.0, %v1376
      %v1378 = vpop.f32.mrb[0].mxu0
      %1379 = vmatprep.mubr.f32.mxu0 0.0
      %1380 = vmatmul.mubr.f32.gmra.mrb[0].mxu0 %v1184
      %v1381 = vpop.f32.mrb[0].mxu0
      %v1382 = vadd.f32 0.0, %v1381
      %v1383 = vpop.f32.mrb[0].mxu0
      %1384 = vmatprep.mubr.f32.mxu0 0.0
      %1385 = vmatmul.mubr.f32.gmra.mrb[0].mxu0 %v1187
      %v1386 = vpop.f32.mrb[0].mxu0
      %v1387 = vadd.f32 0.0, %v1386
      %v1388 = vpop.f32.mrb[0].mxu0
      %1389 = vmatprep.mubr.f32.mxu0 0.0
      %1390 = vmatmul.mubr.f32.gmra.mrb[0].mxu0 %v1190
      %v1391 = vpop.f32.mrb[0].mxu0
      %v1392 = vadd.f32 0.0, %v1391
      %v1393 = vpop.f32.mrb[0].mxu0
      %1394 = vmatprep.mubr.f32.mxu0 0.0
      %1395 = vmatmul.mubr.f32.gmra.mrb[0].mxu0 %v1193
      %v1396 = vpop.f32.mrb[0].mxu0
      %v1397 = vadd.f32 0.0, %v1396
      %v1398 = vpop.f32.mrb[0].mxu0
      %1399 = vmatprep.mubr.f32.mxu0 0.0
      %1400 = vmatmul.mubr.f32.gmra.mrb[0].mxu0 %v1196
      %v1401 = vpop.f32.mrb[0].mxu0
      %v1402 = vadd.f32 0.0, %v1401
      %v1403 = vpop.f32.mrb[0].mxu0
      %1404 = vmatprep.mubr.f32.mxu0 0.0
      %1405 = vmatmul.mubr.f32.gmra.mrb[0].mxu0 %v1199
      %v1406 = vpop.f32.mrb[0].mxu0
      %v1407 = vadd.f32 0.0, %v1406
      %v1408 = vpop.f32.mrb[0].mxu0
      %1409 = vmatprep.mubr.f32.mxu0 0.0
      %1410 = vmatmul.mubr.f32.gmra.mrb[0].mxu0 %v1202
      %v1411 = vpop.f32.mrb[0].mxu0
      %v1412 = vadd.f32 0.0, %v1411
      %v1413 = vpop.f32.mrb[0].mxu0
      %1414 = vmatprep.mubr.f32.mxu0 0.0
      %1415 = vmatmul.mubr.f32.gmra.mrb[0].mxu0 %v1205
      %v1416 = vpop.f32.mrb[0].mxu0
      %v1417 = vadd.f32 0.0, %v1416
      %v1418 = vpop.f32.mrb[0].mxu0
      %1419 = vmatprep.mubr.f32.mxu0 0.0
      %1420 = vmatmul.mubr.f32.gmra.mrb[0].mxu0 %v1208
      %v1421 = vpop.f32.mrb[0].mxu0
      %v1422 = vadd.f32 0.0, %v1421
      %v1423 = vpop.f32.mrb[0].mxu0
      %1424 = vmatprep.mubr.f32.mxu0 0.0
      %1425 = vmatmul.mubr.f32.gmra.mrb[0].mxu0 %v1211
      %v1426 = vpop.f32.mrb[0].mxu0
      %v1427 = vadd.f32 0.0, %v1426
      %v1428 = vpop.f32.mrb[0].mxu0
      %1429 = vmatprep.mubr.f32.mxu0 0.0
      %1430 = vmatmul.mubr.f32.gmra.mrb[0].mxu0 %v1214
      %v1431 = vpop.f32.mrb[0].mxu0
      %v1432 = vadd.f32 0.0, %v1431
      %v1433 = vpop.f32.mrb[0].mxu0
      %1434 = vmatprep.mubr.f32.mxu0 0.0
      %1435 = vmatmul.mubr.f32.gmra.mrb[0].mxu0 %v1217
      %v1436 = vpop.f32.mrb[0].mxu0
      %v1437 = vadd.f32 0.0, %v1436
      %v1438 = vpop.f32.mrb[0].mxu0
      %1439 = vmatprep.mubr.f32.mxu0 0.0
      %1440 = vmatmul.mubr.f32.gmra.mrb[0].mxu0 %v1220
      %v1441 = vpop.f32.mrb[0].mxu0
      %v1442 = vadd.f32 0.0, %v1441
      %v1443 = vpop.f32.mrb[0].mxu0
      %1444 = vmatprep.mubr.f32.mxu0 0.0
      %1445 = vmatmul.mubr.f32.gmra.mrb[0].mxu0 %v1223
      %v1446 = vpop.f32.mrb[0].mxu0
      %v1447 = vadd.f32 0.0, %v1446
      %v1448 = vpop.f32.mrb[0].mxu0
      %1449 = vmatprep.mubr.f32.mxu0 0.0
      %1450 = vmatmul.mubr.f32.gmra.mrb[0].mxu0 %v1226
      %v1451 = vpop.f32.mrb[0].mxu0
      %v1452 = vadd.f32 0.0, %v1451
      %v1453 = vpop.f32.mrb[0].mxu0
      %1454 = vmatprep.mubr.f32.mxu0 0.0
      %1455 = vmatmul.mubr.f32.gmra.mrb[0].mxu0 %v1229
      %v1456 = vpop.f32.mrb[0].mxu0
      %v1457 = vadd.f32 0.0, %v1456
      %v1458 = vpop.f32.mrb[0].mxu0
      %1459 = vmatprep.mubr.f32.mxu0 0.0
      %1460 = vmatmul.mubr.f32.gmra.mrb[0].mxu0 %v1232
      %v1461 = vpop.f32.mrb[0].mxu0
      %v1462 = vadd.f32 0.0, %v1461
      %v1463 = vpop.f32.mrb[0].mxu0
      %1464 = vmatprep.mubr.f32.mxu0 0.0
      %1465 = vmatmul.mubr.f32.gmra.mrb[0].mxu0 %v1235
      %v1466 = vpop.f32.mrb[0].mxu0
      %v1467 = vadd.f32 0.0, %v1466
      %v1468 = vpop.f32.mrb[0].mxu0
      %1469 = vmatprep.mubr.f32.mxu0 0.0
      %1470 = vmatmul.mubr.f32.gmra.mrb[0].mxu0 %v1238
      %v1471 = vpop.f32.mrb[0].mxu0
      %v1472 = vadd.f32 0.0, %v1471
      %v1473 = vpop.f32.mrb[0].mxu0
      %1474 = vmatprep.mubr.f32.mxu0 0.0
      %1475 = vmatmul.mubr.f32.gmra.mrb[0].mxu0 %v1241
      %v1476 = vpop.f32.mrb[0].mxu0
      %v1477 = vadd.f32 0.0, %v1476
      %v1478 = vpop.f32.mrb[0].mxu0
      %1479 = vmatprep.mubr.f32.mxu0 0.0
      %1480 = vmatmul.mubr.f32.gmra.mrb[0].mxu0 %v1244
      %v1481 = vpop.f32.mrb[0].mxu0
      %v1482 = vadd.f32 0.0, %v1481
      %v1483 = vpop.f32.mrb[0].mxu0
      %1484 = vmatprep.mubr.f32.mxu0 0.0
      %1485 = vmatmul.mubr.f32.gmra.mrb[0].mxu0 %v1247
      %v1486 = vpop.f32.mrb[0].mxu0
      %v1487 = vadd.f32 0.0, %v1486
      %v1488 = vpop.f32.mrb[0].mxu0
      %1489 = vmatprep.mubr.f32.mxu0 0.0
      %1490 = vmatmul.mubr.f32.gmra.mrb[0].mxu0 %v1250
      %v1491 = vpop.f32.mrb[0].mxu0
      %v1492 = vadd.f32 0.0, %v1491
      %v1493 = vpop.f32.mrb[0].mxu0
      %1494 = vmatprep.mubr.f32.mxu0 0.0
      %1495 = vmatmul.mubr.f32.gmra.mrb[0].mxu0 %v1253
      %v1496 = vpop.f32.mrb[0].mxu0
      %v1497 = vadd.f32 0.0, %v1496
      %v1498 = vpop.f32.mrb[0].mxu0
      %1499 = vmatprep.mubr.f32.mxu0 0.0
      %1500 = vmatmul.mubr.f32.gmra.mrb[0].mxu0 %v1256
      %v1501 = vpop.f32.mrb[0].mxu0
      %v1502 = vadd.f32 0.0, %v1501
      %v1503 = vpop.f32.mrb[0].mxu0
      %1504 = vmatprep.mubr.f32.mxu0 0.0
      %1505 = vmatmul.mubr.f32.gmra.mrb[0].mxu0 %v1259
      %v1506 = vpop.f32.mrb[0].mxu0
      %v1507 = vadd.f32 0.0, %v1506
      %v1508 = vpop.f32.mrb[0].mxu0
      %1509 = vmatprep.mubr.f32.mxu0 0.0
      %1510 = vmatmul.mubr.f32.gmra.mrb[0].mxu0 %v1262
      %v1511 = vpop.f32.mrb[0].mxu0
      %v1512 = vadd.f32 0.0, %v1511
      %v1513 = vpop.f32.mrb[0].mxu0
      %1514 = vmatprep.mubr.f32.mxu0 0.0
      %1515 = vmatmul.mubr.f32.gmra.mrb[0].mxu0 %v1265
      %v1516 = vpop.f32.mrb[0].mxu0
      %v1517 = vadd.f32 0.0, %v1516
      %v1518 = vpop.f32.mrb[0].mxu0
      %1519 = vmatprep.mubr.f32.mxu0 0.0
      %1520 = vmatmul.mubr.f32.gmra.mrb[0].mxu0 %v1268
      %v1521 = vpop.f32.mrb[0].mxu0
      %v1522 = vadd.f32 0.0, %v1521
      %v1523 = vpop.f32.mrb[0].mxu0
      %1524 = vmatprep.mubr.f32.mxu0 0.0
      %1525 = vmatmul.mubr.f32.gmra.mrb[0].mxu0 %v1271
      %v1526 = vpop.f32.mrb[0].mxu0
      %v1527 = vadd.f32 0.0, %v1526
      %v1528 = vpop.f32.mrb[0].mxu0
      %1529 = vmatprep.mubr.f32.mxu0 0.0
      %1530 = vmatmul.mubr.f32.gmra.mrb[0].mxu0 %v1274
      %v1531 = vpop.f32.mrb[0].mxu0
      %v1532 = vadd.f32 0.0, %v1531
      %v1533 = vpop.f32.mrb[0].mxu0
      %1534 = vmatprep.mubr.f32.mxu0 0.0
      %1535 = vmatmul.mubr.f32.gmra.mrb[0].mxu0 %v1277
      %v1536 = vpop.f32.mrb[0].mxu0
      %v1537 = vadd.f32 0.0, %v1536
      %v1538 = vpop.f32.mrb[0].mxu0
      %1539 = vmatprep.mubr.f32.mxu0 0.0
      %1540 = vmatmul.mubr.f32.gmra.mrb[0].mxu0 %v1280
      %v1541 = vpop.f32.mrb[0].mxu0
      %v1542 = vadd.f32 0.0, %v1541
      %v1543 = vpop.f32.mrb[0].mxu0
      %1544 = vmatprep.mubr.f32.mxu0 0.0
      %1545 = vmatmul.mubr.f32.gmra.mrb[0].mxu0 %v1283
      %v1546 = vpop.f32.mrb[0].mxu0
      %v1547 = vadd.f32 0.0, %v1546
      %v1548 = vpop.f32.mrb[0].mxu0
      %1549 = vmatprep.mubr.f32.mxu0 0.0
      %1550 = vmatmul.mubr.f32.gmra.mrb[0].mxu0 %v1286
      %v1551 = vpop.f32.mrb[0].mxu0
      %v1552 = vadd.f32 0.0, %v1551
      %v1553 = vpop.f32.mrb[0].mxu0
      %1554 = vmatprep.mubr.f32.mxu0 0.0
      %1555 = vmatmul.mubr.f32.gmra.mrb[0].mxu0 %v1289
      %v1556 = vpop.f32.mrb[0].mxu0
      %v1557 = vadd.f32 0.0, %v1556
      %v1558 = vpop.f32.mrb[0].mxu0
      %1559 = vmatprep.mubr.f32.mxu0 0.0
      %1560 = vmatmul.mubr.f32.gmra.mrb[0].mxu0 %v1292
      %v1561 = vpop.f32.mrb[0].mxu0
      %v1562 = vadd.f32 0.0, %v1561
      %v1563 = vpop.f32.mrb[0].mxu0
      %1564 = vmatprep.mubr.f32.mxu0 0.0
      %1565 = vmatmul.mubr.f32.gmra.mrb[0].mxu0 %v1295
      %v1566 = vpop.f32.mrb[0].mxu0
      %v1567 = vadd.f32 0.0, %v1566
      %v1568 = vpop.f32.mrb[0].mxu0
      %1569 = vdwg.mxu0
      %v1570 = vadd.f32 %v928, %v1367
      %v1571 = vadd.f32 %v933, %v1372
      %v1572 = vadd.f32 %v938, %v1377
      %v1573 = vadd.f32 %v943, %v1382
      %v1574 = vadd.f32 %v948, %v1387
      %v1575 = vadd.f32 %v953, %v1392
      %v1576 = vadd.f32 %v958, %v1397
      %v1577 = vadd.f32 %v963, %v1402
      %v1578 = vadd.f32 %v968, %v1407
      %v1579 = vadd.f32 %v973, %v1412
      %v1580 = vadd.f32 %v978, %v1417
      %v1581 = vadd.f32 %v983, %v1422
      %v1582 = vadd.f32 %v988, %v1427
      %v1583 = vadd.f32 %v993, %v1432
      %v1584 = vadd.f32 %v998, %v1437
      %v1585 = vadd.f32 %v1003, %v1442
      %v1586 = vadd.f32 %v1008, %v1447
      %v1587 = vadd.f32 %v1013, %v1452
      %v1588 = vadd.f32 %v1018, %v1457
      %v1589 = vadd.f32 %v1023, %v1462
      %v1590 = vadd.f32 %v1028, %v1467
      %v1591 = vadd.f32 %v1033, %v1472
      %v1592 = vadd.f32 %v1038, %v1477
      %v1593 = vadd.f32 %v1043, %v1482
      %v1594 = vadd.f32 %v1048, %v1487
      %v1595 = vadd.f32 %v1053, %v1492
      %v1596 = vadd.f32 %v1058, %v1497
      %v1597 = vadd.f32 %v1063, %v1502
      %v1598 = vadd.f32 %v1068, %v1507
      %v1599 = vadd.f32 %v1073, %v1512
      %v1600 = vadd.f32 %v1078, %v1517
      %v1601 = vadd.f32 %v1083, %v1522
      %v1602 = vadd.f32 %v1088, %v1527
      %v1603 = vadd.f32 %v1093, %v1532
      %v1604 = vadd.f32 %v1098, %v1537
      %v1605 = vadd.f32 %v1103, %v1542
      %v1606 = vadd.f32 %v1108, %v1547
      %v1607 = vadd.f32 %v1113, %v1552
      %v1608 = vadd.f32 %v1118, %v1557
      %v1609 = vadd.f32 %v1123, %v1562
      %v1610 = vadd.f32 %v1128, %v1567
      %v1611 = vld [vmem:[%s246 + $0x17] sm:$0xff]
      %v1612 = vld [vmem:[%s246 + $0x1f] sm:$0xff]
      %v1613 = vld [vmem:[%s246 + $0x27] sm:$0xff]
      %v1614 = vld [vmem:[%s246 + $0x2f] sm:$0xff]
      %v1615 = vld [vmem:[%s246 + $0x37] sm:$0xff]
      %v1616 = vld [vmem:[%s246 + $0x3f] sm:$0xff]
      %v1617 = vld [vmem:[%s246 + $0x47] sm:$0xff]
      %v1618 = vld [vmem:[%s246 + $0x4f] sm:$0xff]
      %v1619 = vld [vmem:[%s246 + $0x57] sm:$0xff]
      %v1620 = vld [vmem:[%s246 + $0x5f] sm:$0xff]
      %v1621 = vld [vmem:[%s246 + $0x67] sm:$0xff]
      %v1622 = vld [vmem:[%s246 + $0x6f] sm:$0xff]
      %v1623 = vld [vmem:[%s246 + $0x77] sm:$0xff]
      %v1624 = vld [vmem:[%s246 + $0x7f] sm:$0xff]
      %v1625 = vld [vmem:[%s246 + $0x87] sm:$0xff]
      %v1626 = vld [vmem:[%s246 + $0x8f] sm:$0xff]
      %v1627 = vld [vmem:[%s246 + $0x97] sm:$0xff]
      %v1628 = vld [vmem:[%s246 + $0x9f] sm:$0xff]
      %v1629 = vld [vmem:[%s246 + $0xa7] sm:$0xff]
      %v1630 = vld [vmem:[%s246 + $0xaf] sm:$0xff]
      %v1631 = vld [vmem:[%s246 + $0xb7] sm:$0xff]
      %v1632 = vld [vmem:[%s246 + $0xbf] sm:$0xff]
      %v1633 = vld [vmem:[%s246 + $0xc7] sm:$0xff]
      %v1634 = vld [vmem:[%s246 + $0xcf] sm:$0xff]
      %v1635 = vld [vmem:[%s246 + $0xd7] sm:$0xff]
      %v1636 = vld [vmem:[%s246 + $0xdf] sm:$0xff]
      %v1637 = vld [vmem:[%s246 + $0xe7] sm:$0xff]
      %v1638 = vld [vmem:[%s246 + $0xef] sm:$0xff]
      %v1639 = vld [vmem:[%s246 + $0xf7] sm:$0xff]
      %v1640 = vld [vmem:[%s246 + $0xff] sm:$0xff]
      %v1641 = vld [vmem:[%s246 + $0x107] sm:$0xff]
      %v1642 = vld [vmem:[%s246 + $0x10f] sm:$0xff]
      %v1643 = vld [vmem:[%s246 + $0x117] sm:$0xff]
      %v1644 = vld [vmem:[%s246 + $0x11f] sm:$0xff]
      %v1645 = vld [vmem:[%s246 + $0x127] sm:$0xff]
      %v1646 = vld [vmem:[%s246 + $0x12f] sm:$0xff]
      %v1647 = vld [vmem:[%s246 + $0x137] sm:$0xff]
      %v1648 = vld [vmem:[%s246 + $0x13f] sm:$0xff]
      %v1649 = vld [vmem:[%s246 + $0x147] sm:$0xff]
      %v1650 = vld [vmem:[%s246 + $0x14f] sm:$0xff]
      %v1651 = vld [vmem:[%s246 + $0x157] sm:$0xf]
      %s1652 = scalar_lea.vmem %s2, 12
      %v1653 = vld [vmem:[%s1652] sm:$0xf]
      %v1655 = vsel %vm337, %v1611, 0
      %v1658 = vsel %vm337, %v1612, 0
      %v1661 = vsel %vm337, %v1613, 0
      %v1664 = vsel %vm337, %v1614, 0
      %v1667 = vsel %vm337, %v1615, 0
      %v1670 = vsel %vm337, %v1616, 0
      %v1673 = vsel %vm337, %v1617, 0
      %v1676 = vsel %vm337, %v1618, 0
      %v1679 = vsel %vm337, %v1619, 0
      %v1682 = vsel %vm337, %v1620, 0
      %v1685 = vsel %vm337, %v1621, 0
      %v1688 = vsel %vm337, %v1622, 0
      %v1691 = vsel %vm337, %v1623, 0
      %v1694 = vsel %vm337, %v1624, 0
      %v1697 = vsel %vm337, %v1625, 0
      %v1700 = vsel %vm337, %v1626, 0
      %v1703 = vsel %vm337, %v1627, 0
      %v1706 = vsel %vm337, %v1628, 0
      %v1709 = vsel %vm337, %v1629, 0
      %v1712 = vsel %vm337, %v1630, 0
      %v1715 = vsel %vm337, %v1631, 0
      %v1718 = vsel %vm337, %v1632, 0
      %v1721 = vsel %vm337, %v1633, 0
      %v1724 = vsel %vm337, %v1634, 0
      %v1727 = vsel %vm337, %v1635, 0
      %v1730 = vsel %vm337, %v1636, 0
      %v1733 = vsel %vm337, %v1637, 0
      %v1736 = vsel %vm337, %v1638, 0
      %v1739 = vsel %vm337, %v1639, 0
      %v1742 = vsel %vm337, %v1640, 0
      %v1745 = vsel %vm337, %v1641, 0
      %v1748 = vsel %vm337, %v1642, 0
      %v1751 = vsel %vm337, %v1643, 0
      %v1754 = vsel %vm337, %v1644, 0
      %v1757 = vsel %vm337, %v1645, 0
      %v1760 = vsel %vm337, %v1646, 0
      %v1763 = vsel %vm337, %v1647, 0
      %v1766 = vsel %vm337, %v1648, 0
      %v1769 = vsel %vm337, %v1649, 0
      %v1772 = vsel %vm337, %v1650, 0
      %v1775 = vsel %vm337, %v1651, 0
      %v1778 = vsel %vm461, %v1653, 0
      %1780 = vmatprep.subr.mxu0 0.0
      %1781 = vmatpush1.msra.mxu0 %v1778
      %1782 = vmatprep.subr.mxu0 0.0
      %1783 = vmatpush1.msra.mxu0 0.0
      %1784 = vmatprep.subr.mxu0 0.0
      %1785 = vmatpush1.msra.mxu0 0.0
      %1786 = vmatprep.subr.mxu0 0.0
      %1787 = vmatpush1.msra.mxu0 0.0
      %1788 = vmatprep.subr.mxu0 0.0
      %1789 = vmatpush1.msra.mxu0 0.0
      %1790 = vmatprep.subr.mxu0 0.0
      %1791 = vmatpush1.msra.mxu0 0.0
      %1792 = vmatprep.subr.mxu0 0.0
      %1793 = vmatpush1.msra.mxu0 0.0
      %1794 = vmatprep.subr.mxu0 0.0
      %1795 = vmatpush1.msra.mxu0 0.0
      %1796 = vmatprep.subr.mxu0 0.0
      %1797 = vmatpush1.msra.mxu0 0.0
      %1798 = vmatprep.subr.mxu0 0.0
      %1799 = vmatpush1.msra.mxu0 0.0
      %1800 = vmatprep.subr.mxu0 0.0
      %1801 = vmatpush1.msra.mxu0 0.0
      %1802 = vmatprep.subr.mxu0 0.0
      %1803 = vmatpush1.msra.mxu0 0.0
      %1804 = vmatprep.subr.mxu0 0.0
      %1805 = vmatpush1.msra.mxu0 0.0
      %1806 = vmatprep.subr.mxu0 0.0
      %1807 = vmatpush1.msra.mxu0 0.0
      %1808 = vmatprep.subr.mxu0 0.0
      %1809 = vmatpush1.msra.mxu0 0.0
      %1810 = vmatprep.subr.mxu0 0.0
      %1811 = vmatpush1.msra.mxu0 0.0
      %1812 = vmatprep.subr.mxu0 0.0
      %1813 = vmatpush1.msra.mxu0 0.0
      %1814 = vmatprep.subr.mxu0 0.0
      %1815 = vmatpush1.msra.mxu0 0.0
      %1816 = vmatprep.subr.mxu0 0.0
      %1817 = vmatpush1.msra.mxu0 0.0
      %1818 = vmatprep.subr.mxu0 0.0
      %1819 = vmatpush1.msra.mxu0 0.0
      %1820 = vmatprep.subr.mxu0 0.0
      %1821 = vmatpush1.msra.mxu0 0.0
      %1822 = vmatprep.subr.mxu0 0.0
      %1823 = vmatpush1.msra.mxu0 0.0
      %1824 = vmatprep.subr.mxu0 0.0
      %1825 = vmatpush1.msra.mxu0 0.0
      %1826 = vmatprep.subr.mxu0 0.0
      %1827 = vmatpush1.msra.mxu0 0.0
      %1828 = vmatprep.subr.mxu0 0.0
      %1829 = vmatpush1.msra.mxu0 0.0
      %1830 = vmatprep.subr.mxu0 0.0
      %1831 = vmatpush1.msra.mxu0 0.0
      %1832 = vmatprep.subr.mxu0 0.0
      %1833 = vmatpush1.msra.mxu0 0.0
      %1834 = vmatprep.subr.mxu0 0.0
      %1835 = vmatpush1.msra.mxu0 0.0
      %1836 = vmatprep.subr.mxu0 0.0
      %1837 = vmatpush1.msra.mxu0 0.0
      %1838 = vmatprep.subr.mxu0 0.0
      %1839 = vmatpush1.msra.mxu0 0.0
      %1840 = vmatprep.subr.mxu0 0.0
      %1841 = vmatpush1.msra.mxu0 0.0
      %1842 = vmatprep.subr.mxu0 0.0
      %1843 = vmatpush1.msra.mxu0 0.0
      %1844 = vmatprep.mubr.f32.mxu0 0.0
      %1845 = vmatmul.mubr.f32.gmra.mrb[0].mxu0 %v1655
      %v1846 = vpop.f32.mrb[0].mxu0
      %v1847 = vadd.f32 0.0, %v1846
      %v1848 = vpop.f32.mrb[0].mxu0
      %1849 = vmatprep.mubr.f32.mxu0 0.0
      %1850 = vmatmul.mubr.f32.gmra.mrb[0].mxu0 %v1658
      %v1851 = vpop.f32.mrb[0].mxu0
      %v1852 = vadd.f32 0.0, %v1851
      %v1853 = vpop.f32.mrb[0].mxu0
      %1854 = vmatprep.mubr.f32.mxu0 0.0
      %1855 = vmatmul.mubr.f32.gmra.mrb[0].mxu0 %v1661
      %v1856 = vpop.f32.mrb[0].mxu0
      %v1857 = vadd.f32 0.0, %v1856
      %v1858 = vpop.f32.mrb[0].mxu0
      %1859 = vmatprep.mubr.f32.mxu0 0.0
      %1860 = vmatmul.mubr.f32.gmra.mrb[0].mxu0 %v1664
      %v1861 = vpop.f32.mrb[0].mxu0
      %v1862 = vadd.f32 0.0, %v1861
      %v1863 = vpop.f32.mrb[0].mxu0
      %1864 = vmatprep.mubr.f32.mxu0 0.0
      %1865 = vmatmul.mubr.f32.gmra.mrb[0].mxu0 %v1667
      %v1866 = vpop.f32.mrb[0].mxu0
      %v1867 = vadd.f32 0.0, %v1866
      %v1868 = vpop.f32.mrb[0].mxu0
      %1869 = vmatprep.mubr.f32.mxu0 0.0
      %1870 = vmatmul.mubr.f32.gmra.mrb[0].mxu0 %v1670
      %v1871 = vpop.f32.mrb[0].mxu0
      %v1872 = vadd.f32 0.0, %v1871
      %v1873 = vpop.f32.mrb[0].mxu0
      %1874 = vmatprep.mubr.f32.mxu0 0.0
      %1875 = vmatmul.mubr.f32.gmra.mrb[0].mxu0 %v1673
      %v1876 = vpop.f32.mrb[0].mxu0
      %v1877 = vadd.f32 0.0, %v1876
      %v1878 = vpop.f32.mrb[0].mxu0
      %1879 = vmatprep.mubr.f32.mxu0 0.0
      %1880 = vmatmul.mubr.f32.gmra.mrb[0].mxu0 %v1676
      %v1881 = vpop.f32.mrb[0].mxu0
      %v1882 = vadd.f32 0.0, %v1881
      %v1883 = vpop.f32.mrb[0].mxu0
      %1884 = vmatprep.mubr.f32.mxu0 0.0
      %1885 = vmatmul.mubr.f32.gmra.mrb[0].mxu0 %v1679
      %v1886 = vpop.f32.mrb[0].mxu0
      %v1887 = vadd.f32 0.0, %v1886
      %v1888 = vpop.f32.mrb[0].mxu0
      %1889 = vmatprep.mubr.f32.mxu0 0.0
      %1890 = vmatmul.mubr.f32.gmra.mrb[0].mxu0 %v1682
      %v1891 = vpop.f32.mrb[0].mxu0
      %v1892 = vadd.f32 0.0, %v1891
      %v1893 = vpop.f32.mrb[0].mxu0
      %1894 = vmatprep.mubr.f32.mxu0 0.0
      %1895 = vmatmul.mubr.f32.gmra.mrb[0].mxu0 %v1685
      %v1896 = vpop.f32.mrb[0].mxu0
      %v1897 = vadd.f32 0.0, %v1896
      %v1898 = vpop.f32.mrb[0].mxu0
      %1899 = vmatprep.mubr.f32.mxu0 0.0
      %1900 = vmatmul.mubr.f32.gmra.mrb[0].mxu0 %v1688
      %v1901 = vpop.f32.mrb[0].mxu0
      %v1902 = vadd.f32 0.0, %v1901
      %v1903 = vpop.f32.mrb[0].mxu0
      %1904 = vmatprep.mubr.f32.mxu0 0.0
      %1905 = vmatmul.mubr.f32.gmra.mrb[0].mxu0 %v1691
      %v1906 = vpop.f32.mrb[0].mxu0
      %v1907 = vadd.f32 0.0, %v1906
      %v1908 = vpop.f32.mrb[0].mxu0
      %1909 = vmatprep.mubr.f32.mxu0 0.0
      %1910 = vmatmul.mubr.f32.gmra.mrb[0].mxu0 %v1694
      %v1911 = vpop.f32.mrb[0].mxu0
      %v1912 = vadd.f32 0.0, %v1911
      %v1913 = vpop.f32.mrb[0].mxu0
      %1914 = vmatprep.mubr.f32.mxu0 0.0
      %1915 = vmatmul.mubr.f32.gmra.mrb[0].mxu0 %v1697
      %v1916 = vpop.f32.mrb[0].mxu0
      %v1917 = vadd.f32 0.0, %v1916
      %v1918 = vpop.f32.mrb[0].mxu0
      %1919 = vmatprep.mubr.f32.mxu0 0.0
      %1920 = vmatmul.mubr.f32.gmra.mrb[0].mxu0 %v1700
      %v1921 = vpop.f32.mrb[0].mxu0
      %v1922 = vadd.f32 0.0, %v1921
      %v1923 = vpop.f32.mrb[0].mxu0
      %1924 = vmatprep.mubr.f32.mxu0 0.0
      %1925 = vmatmul.mubr.f32.gmra.mrb[0].mxu0 %v1703
      %v1926 = vpop.f32.mrb[0].mxu0
      %v1927 = vadd.f32 0.0, %v1926
      %v1928 = vpop.f32.mrb[0].mxu0
      %1929 = vmatprep.mubr.f32.mxu0 0.0
      %1930 = vmatmul.mubr.f32.gmra.mrb[0].mxu0 %v1706
      %v1931 = vpop.f32.mrb[0].mxu0
      %v1932 = vadd.f32 0.0, %v1931
      %v1933 = vpop.f32.mrb[0].mxu0
      %1934 = vmatprep.mubr.f32.mxu0 0.0
      %1935 = vmatmul.mubr.f32.gmra.mrb[0].mxu0 %v1709
      %v1936 = vpop.f32.mrb[0].mxu0
      %v1937 = vadd.f32 0.0, %v1936
      %v1938 = vpop.f32.mrb[0].mxu0
      %1939 = vmatprep.mubr.f32.mxu0 0.0
      %1940 = vmatmul.mubr.f32.gmra.mrb[0].mxu0 %v1712
      %v1941 = vpop.f32.mrb[0].mxu0
      %v1942 = vadd.f32 0.0, %v1941
      %v1943 = vpop.f32.mrb[0].mxu0
      %1944 = vmatprep.mubr.f32.mxu0 0.0
      %1945 = vmatmul.mubr.f32.gmra.mrb[0].mxu0 %v1715
      %v1946 = vpop.f32.mrb[0].mxu0
      %v1947 = vadd.f32 0.0, %v1946
      %v1948 = vpop.f32.mrb[0].mxu0
      %1949 = vmatprep.mubr.f32.mxu0 0.0
      %1950 = vmatmul.mubr.f32.gmra.mrb[0].mxu0 %v1718
      %v1951 = vpop.f32.mrb[0].mxu0
      %v1952 = vadd.f32 0.0, %v1951
      %v1953 = vpop.f32.mrb[0].mxu0
      %1954 = vmatprep.mubr.f32.mxu0 0.0
      %1955 = vmatmul.mubr.f32.gmra.mrb[0].mxu0 %v1721
      %v1956 = vpop.f32.mrb[0].mxu0
      %v1957 = vadd.f32 0.0, %v1956
      %v1958 = vpop.f32.mrb[0].mxu0
      %1959 = vmatprep.mubr.f32.mxu0 0.0
      %1960 = vmatmul.mubr.f32.gmra.mrb[0].mxu0 %v1724
      %v1961 = vpop.f32.mrb[0].mxu0
      %v1962 = vadd.f32 0.0, %v1961
      %v1963 = vpop.f32.mrb[0].mxu0
      %1964 = vmatprep.mubr.f32.mxu0 0.0
      %1965 = vmatmul.mubr.f32.gmra.mrb[0].mxu0 %v1727
      %v1966 = vpop.f32.mrb[0].mxu0
      %v1967 = vadd.f32 0.0, %v1966
      %v1968 = vpop.f32.mrb[0].mxu0
      %1969 = vmatprep.mubr.f32.mxu0 0.0
      %1970 = vmatmul.mubr.f32.gmra.mrb[0].mxu0 %v1730
      %v1971 = vpop.f32.mrb[0].mxu0
      %v1972 = vadd.f32 0.0, %v1971
      %v1973 = vpop.f32.mrb[0].mxu0
      %1974 = vmatprep.mubr.f32.mxu0 0.0
      %1975 = vmatmul.mubr.f32.gmra.mrb[0].mxu0 %v1733
      %v1976 = vpop.f32.mrb[0].mxu0
      %v1977 = vadd.f32 0.0, %v1976
      %v1978 = vpop.f32.mrb[0].mxu0
      %1979 = vmatprep.mubr.f32.mxu0 0.0
      %1980 = vmatmul.mubr.f32.gmra.mrb[0].mxu0 %v1736
      %v1981 = vpop.f32.mrb[0].mxu0
      %v1982 = vadd.f32 0.0, %v1981
      %v1983 = vpop.f32.mrb[0].mxu0
      %1984 = vmatprep.mubr.f32.mxu0 0.0
      %1985 = vmatmul.mubr.f32.gmra.mrb[0].mxu0 %v1739
      %v1986 = vpop.f32.mrb[0].mxu0
      %v1987 = vadd.f32 0.0, %v1986
      %v1988 = vpop.f32.mrb[0].mxu0
      %1989 = vmatprep.mubr.f32.mxu0 0.0
      %1990 = vmatmul.mubr.f32.gmra.mrb[0].mxu0 %v1742
      %v1991 = vpop.f32.mrb[0].mxu0
      %v1992 = vadd.f32 0.0, %v1991
      %v1993 = vpop.f32.mrb[0].mxu0
      %1994 = vmatprep.mubr.f32.mxu0 0.0
      %1995 = vmatmul.mubr.f32.gmra.mrb[0].mxu0 %v1745
      %v1996 = vpop.f32.mrb[0].mxu0
      %v1997 = vadd.f32 0.0, %v1996
      %v1998 = vpop.f32.mrb[0].mxu0
      %1999 = vmatprep.mubr.f32.mxu0 0.0
      %2000 = vmatmul.mubr.f32.gmra.mrb[0].mxu0 %v1748
      %v2001 = vpop.f32.mrb[0].mxu0
      %v2002 = vadd.f32 0.0, %v2001
      %v2003 = vpop.f32.mrb[0].mxu0
      %2004 = vmatprep.mubr.f32.mxu0 0.0
      %2005 = vmatmul.mubr.f32.gmra.mrb[0].mxu0 %v1751
      %v2006 = vpop.f32.mrb[0].mxu0
      %v2007 = vadd.f32 0.0, %v2006
      %v2008 = vpop.f32.mrb[0].mxu0
      %2009 = vmatprep.mubr.f32.mxu0 0.0
      %2010 = vmatmul.mubr.f32.gmra.mrb[0].mxu0 %v1754
      %v2011 = vpop.f32.mrb[0].mxu0
      %v2012 = vadd.f32 0.0, %v2011
      %v2013 = vpop.f32.mrb[0].mxu0
      %2014 = vmatprep.mubr.f32.mxu0 0.0
      %2015 = vmatmul.mubr.f32.gmra.mrb[0].mxu0 %v1757
      %v2016 = vpop.f32.mrb[0].mxu0
      %v2017 = vadd.f32 0.0, %v2016
      %v2018 = vpop.f32.mrb[0].mxu0
      %2019 = vmatprep.mubr.f32.mxu0 0.0
      %2020 = vmatmul.mubr.f32.gmra.mrb[0].mxu0 %v1760
      %v2021 = vpop.f32.mrb[0].mxu0
      %v2022 = vadd.f32 0.0, %v2021
      %v2023 = vpop.f32.mrb[0].mxu0
      %2024 = vmatprep.mubr.f32.mxu0 0.0
      %2025 = vmatmul.mubr.f32.gmra.mrb[0].mxu0 %v1763
      %v2026 = vpop.f32.mrb[0].mxu0
      %v2027 = vadd.f32 0.0, %v2026
      %v2028 = vpop.f32.mrb[0].mxu0
      %2029 = vmatprep.mubr.f32.mxu0 0.0
      %2030 = vmatmul.mubr.f32.gmra.mrb[0].mxu0 %v1766
      %v2031 = vpop.f32.mrb[0].mxu0
      %v2032 = vadd.f32 0.0, %v2031
      %v2033 = vpop.f32.mrb[0].mxu0
      %2034 = vmatprep.mubr.f32.mxu0 0.0
      %2035 = vmatmul.mubr.f32.gmra.mrb[0].mxu0 %v1769
      %v2036 = vpop.f32.mrb[0].mxu0
      %v2037 = vadd.f32 0.0, %v2036
      %v2038 = vpop.f32.mrb[0].mxu0
      %2039 = vmatprep.mubr.f32.mxu0 0.0
      %2040 = vmatmul.mubr.f32.gmra.mrb[0].mxu0 %v1772
      %v2041 = vpop.f32.mrb[0].mxu0
      %v2042 = vadd.f32 0.0, %v2041
      %v2043 = vpop.f32.mrb[0].mxu0
      %2044 = vmatprep.mubr.f32.mxu0 0.0
      %2045 = vmatmul.mubr.f32.gmra.mrb[0].mxu0 %v1775
      %v2046 = vpop.f32.mrb[0].mxu0
      %v2047 = vadd.f32 0.0, %v2046
      %v2048 = vpop.f32.mrb[0].mxu0
      %2049 = vdwg.mxu0
      %v2050 = vadd.f32 %v1570, %v1847
      %v2051 = vadd.f32 %v1571, %v1852
      %v2052 = vadd.f32 %v1572, %v1857
      %v2053 = vadd.f32 %v1573, %v1862
      %v2054 = vadd.f32 %v1574, %v1867
      %v2055 = vadd.f32 %v1575, %v1872
      %v2056 = vadd.f32 %v1576, %v1877
      %v2057 = vadd.f32 %v1577, %v1882
      %v2058 = vadd.f32 %v1578, %v1887
      %v2059 = vadd.f32 %v1579, %v1892
      %v2060 = vadd.f32 %v1580, %v1897
      %v2061 = vadd.f32 %v1581, %v1902
      %v2062 = vadd.f32 %v1582, %v1907
      %v2063 = vadd.f32 %v1583, %v1912
      %v2064 = vadd.f32 %v1584, %v1917
      %v2065 = vadd.f32 %v1585, %v1922
      %v2066 = vadd.f32 %v1586, %v1927
      %v2067 = vadd.f32 %v1587, %v1932
      %v2068 = vadd.f32 %v1588, %v1937
      %v2069 = vadd.f32 %v1589, %v1942
      %v2070 = vadd.f32 %v1590, %v1947
      %v2071 = vadd.f32 %v1591, %v1952
      %v2072 = vadd.f32 %v1592, %v1957
      %v2073 = vadd.f32 %v1593, %v1962
      %v2074 = vadd.f32 %v1594, %v1967
      %v2075 = vadd.f32 %v1595, %v1972
      %v2076 = vadd.f32 %v1596, %v1977
      %v2077 = vadd.f32 %v1597, %v1982
      %v2078 = vadd.f32 %v1598, %v1987
      %v2079 = vadd.f32 %v1599, %v1992
      %v2080 = vadd.f32 %v1600, %v1997
      %v2081 = vadd.f32 %v1601, %v2002
      %v2082 = vadd.f32 %v1602, %v2007
      %v2083 = vadd.f32 %v1603, %v2012
      %v2084 = vadd.f32 %v1604, %v2017
      %v2085 = vadd.f32 %v1605, %v2022
      %v2086 = vadd.f32 %v1606, %v2027
      %v2087 = vadd.f32 %v1607, %v2032
      %v2088 = vadd.f32 %v1608, %v2037
      %v2089 = vadd.f32 %v1609, %v2042
      %v2090 = vadd.f32 %v1610, %v2047
      %v2091 = vld [vmem:[%s246 + $0x18] sm:$0xff]
      %v2092 = vld [vmem:[%s246 + $0x20] sm:$0xff]
      %v2093 = vld [vmem:[%s246 + $0x28] sm:$0xff]
      %v2094 = vld [vmem:[%s246 + $0x30] sm:$0xff]
      %v2095 = vld [vmem:[%s246 + $0x38] sm:$0xff]
      %v2096 = vld [vmem:[%s246 + $0x40] sm:$0xff]
      %v2097 = vld [vmem:[%s246 + $0x48] sm:$0xff]
      %v2098 = vld [vmem:[%s246 + $0x50] sm:$0xff]
      %v2099 = vld [vmem:[%s246 + $0x58] sm:$0xff]
      %v2100 = vld [vmem:[%s246 + $0x60] sm:$0xff]
      %v2101 = vld [vmem:[%s246 + $0x68] sm:$0xff]
      %v2102 = vld [vmem:[%s246 + $0x70] sm:$0xff]
      %v2103 = vld [vmem:[%s246 + $0x78] sm:$0xff]
      %v2104 = vld [vmem:[%s246 + $0x80] sm:$0xff]
      %v2105 = vld [vmem:[%s246 + $0x88] sm:$0xff]
      %v2106 = vld [vmem:[%s246 + $0x90] sm:$0xff]
      %v2107 = vld [vmem:[%s246 + $0x98] sm:$0xff]
      %v2108 = vld [vmem:[%s246 + $0xa0] sm:$0xff]
      %v2109 = vld [vmem:[%s246 + $0xa8] sm:$0xff]
      %v2110 = vld [vmem:[%s246 + $0xb0] sm:$0xff]
      %v2111 = vld [vmem:[%s246 + $0xb8] sm:$0xff]
      %v2112 = vld [vmem:[%s246 + $0xc0] sm:$0xff]
      %v2113 = vld [vmem:[%s246 + $0xc8] sm:$0xff]
      %v2114 = vld [vmem:[%s246 + $0xd0] sm:$0xff]
      %v2115 = vld [vmem:[%s246 + $0xd8] sm:$0xff]
      %v2116 = vld [vmem:[%s246 + $0xe0] sm:$0xff]
      %v2117 = vld [vmem:[%s246 + $0xe8] sm:$0xff]
      %v2118 = vld [vmem:[%s246 + $0xf0] sm:$0xff]
      %v2119 = vld [vmem:[%s246 + $0xf8] sm:$0xff]
      %v2120 = vld [vmem:[%s246 + $0x100] sm:$0xff]
      %v2121 = vld [vmem:[%s246 + $0x108] sm:$0xff]
      %v2122 = vld [vmem:[%s246 + $0x110] sm:$0xff]
      %v2123 = vld [vmem:[%s246 + $0x118] sm:$0xff]
      %v2124 = vld [vmem:[%s246 + $0x120] sm:$0xff]
      %v2125 = vld [vmem:[%s246 + $0x128] sm:$0xff]
      %v2126 = vld [vmem:[%s246 + $0x130] sm:$0xff]
      %v2127 = vld [vmem:[%s246 + $0x138] sm:$0xff]
      %v2128 = vld [vmem:[%s246 + $0x140] sm:$0xff]
      %v2129 = vld [vmem:[%s246 + $0x148] sm:$0xff]
      %v2130 = vld [vmem:[%s246 + $0x150] sm:$0xff]
      %v2131 = vld [vmem:[%s246 + $0x158] sm:$0xf]
      %s2132 = scalar_lea.vmem %s2, 16
      %v2133 = vld [vmem:[%s2132] sm:$0xf]
      %v2135 = vsel %vm337, %v2091, 0
      %v2138 = vsel %vm337, %v2092, 0
      %v2141 = vsel %vm337, %v2093, 0
      %v2144 = vsel %vm337, %v2094, 0
      %v2147 = vsel %vm337, %v2095, 0
      %v2150 = vsel %vm337, %v2096, 0
      %v2153 = vsel %vm337, %v2097, 0
      %v2156 = vsel %vm337, %v2098, 0
      %v2159 = vsel %vm337, %v2099, 0
      %v2162 = vsel %vm337, %v2100, 0
      %v2165 = vsel %vm337, %v2101, 0
      %v2168 = vsel %vm337, %v2102, 0
      %v2171 = vsel %vm337, %v2103, 0
      %v2174 = vsel %vm337, %v2104, 0
      %v2177 = vsel %vm337, %v2105, 0
      %v2180 = vsel %vm337, %v2106, 0
      %v2183 = vsel %vm337, %v2107, 0
      %v2186 = vsel %vm337, %v2108, 0
      %v2189 = vsel %vm337, %v2109, 0
      %v2192 = vsel %vm337, %v2110, 0
      %v2195 = vsel %vm337, %v2111, 0
      %v2198 = vsel %vm337, %v2112, 0
      %v2201 = vsel %vm337, %v2113, 0
      %v2204 = vsel %vm337, %v2114, 0
      %v2207 = vsel %vm337, %v2115, 0
      %v2210 = vsel %vm337, %v2116, 0
      %v2213 = vsel %vm337, %v2117, 0
      %v2216 = vsel %vm337, %v2118, 0
      %v2219 = vsel %vm337, %v2119, 0
      %v2222 = vsel %vm337, %v2120, 0
      %v2225 = vsel %vm337, %v2121, 0
      %v2228 = vsel %vm337, %v2122, 0
      %v2231 = vsel %vm337, %v2123, 0
      %v2234 = vsel %vm337, %v2124, 0
      %v2237 = vsel %vm337, %v2125, 0
      %v2240 = vsel %vm337, %v2126, 0
      %v2243 = vsel %vm337, %v2127, 0
      %v2246 = vsel %vm337, %v2128, 0
      %v2249 = vsel %vm337, %v2129, 0
      %v2252 = vsel %vm337, %v2130, 0
      %v2255 = vsel %vm337, %v2131, 0
      %v2258 = vsel %vm461, %v2133, 0
      %2260 = vmatprep.subr.mxu0 0.0
      %2261 = vmatpush1.msra.mxu0 %v2258
      %2262 = vmatprep.subr.mxu0 0.0
      %2263 = vmatpush1.msra.mxu0 0.0
      %2264 = vmatprep.subr.mxu0 0.0
      %2265 = vmatpush1.msra.mxu0 0.0
      %2266 = vmatprep.subr.mxu0 0.0
      %2267 = vmatpush1.msra.mxu0 0.0
      %2268 = vmatprep.subr.mxu0 0.0
      %2269 = vmatpush1.msra.mxu0 0.0
      %2270 = vmatprep.subr.mxu0 0.0
      %2271 = vmatpush1.msra.mxu0 0.0
      %2272 = vmatprep.subr.mxu0 0.0
      %2273 = vmatpush1.msra.mxu0 0.0
      %2274 = vmatprep.subr.mxu0 0.0
      %2275 = vmatpush1.msra.mxu0 0.0
      %2276 = vmatprep.subr.mxu0 0.0
      %2277 = vmatpush1.msra.mxu0 0.0
      %2278 = vmatprep.subr.mxu0 0.0
      %2279 = vmatpush1.msra.mxu0 0.0
      %2280 = vmatprep.subr.mxu0 0.0
      %2281 = vmatpush1.msra.mxu0 0.0
      %2282 = vmatprep.subr.mxu0 0.0
      %2283 = vmatpush1.msra.mxu0 0.0
      %2284 = vmatprep.subr.mxu0 0.0
      %2285 = vmatpush1.msra.mxu0 0.0
      %2286 = vmatprep.subr.mxu0 0.0
      %2287 = vmatpush1.msra.mxu0 0.0
      %2288 = vmatprep.subr.mxu0 0.0
      %2289 = vmatpush1.msra.mxu0 0.0
      %2290 = vmatprep.subr.mxu0 0.0
      %2291 = vmatpush1.msra.mxu0 0.0
      %2292 = vmatprep.subr.mxu0 0.0
      %2293 = vmatpush1.msra.mxu0 0.0
      %2294 = vmatprep.subr.mxu0 0.0
      %2295 = vmatpush1.msra.mxu0 0.0
      %2296 = vmatprep.subr.mxu0 0.0
      %2297 = vmatpush1.msra.mxu0 0.0
      %2298 = vmatprep.subr.mxu0 0.0
      %2299 = vmatpush1.msra.mxu0 0.0
      %2300 = vmatprep.subr.mxu0 0.0
      %2301 = vmatpush1.msra.mxu0 0.0
      %2302 = vmatprep.subr.mxu0 0.0
      %2303 = vmatpush1.msra.mxu0 0.0
      %2304 = vmatprep.subr.mxu0 0.0
      %2305 = vmatpush1.msra.mxu0 0.0
      %2306 = vmatprep.subr.mxu0 0.0
      %2307 = vmatpush1.msra.mxu0 0.0
      %2308 = vmatprep.subr.mxu0 0.0
      %2309 = vmatpush1.msra.mxu0 0.0
      %2310 = vmatprep.subr.mxu0 0.0
      %2311 = vmatpush1.msra.mxu0 0.0
      %2312 = vmatprep.subr.mxu0 0.0
      %2313 = vmatpush1.msra.mxu0 0.0
      %2314 = vmatprep.subr.mxu0 0.0
      %2315 = vmatpush1.msra.mxu0 0.0
      %2316 = vmatprep.subr.mxu0 0.0
      %2317 = vmatpush1.msra.mxu0 0.0
      %2318 = vmatprep.subr.mxu0 0.0
      %2319 = vmatpush1.msra.mxu0 0.0
      %2320 = vmatprep.subr.mxu0 0.0
      %2321 = vmatpush1.msra.mxu0 0.0
      %2322 = vmatprep.subr.mxu0 0.0
      %2323 = vmatpush1.msra.mxu0 0.0
      %2324 = vmatprep.mubr.f32.mxu0 0.0
      %2325 = vmatmul.mubr.f32.gmra.mrb[0].mxu0 %v2135
      %v2326 = vpop.f32.mrb[0].mxu0
      %v2327 = vadd.f32 0.0, %v2326
      %v2328 = vpop.f32.mrb[0].mxu0
      %2329 = vmatprep.mubr.f32.mxu0 0.0
      %2330 = vmatmul.mubr.f32.gmra.mrb[0].mxu0 %v2138
      %v2331 = vpop.f32.mrb[0].mxu0
      %v2332 = vadd.f32 0.0, %v2331
      %v2333 = vpop.f32.mrb[0].mxu0
      %2334 = vmatprep.mubr.f32.mxu0 0.0
      %2335 = vmatmul.mubr.f32.gmra.mrb[0].mxu0 %v2141
      %v2336 = vpop.f32.mrb[0].mxu0
      %v2337 = vadd.f32 0.0, %v2336
      %v2338 = vpop.f32.mrb[0].mxu0
      %2339 = vmatprep.mubr.f32.mxu0 0.0
      %2340 = vmatmul.mubr.f32.gmra.mrb[0].mxu0 %v2144
      %v2341 = vpop.f32.mrb[0].mxu0
      %v2342 = vadd.f32 0.0, %v2341
      %v2343 = vpop.f32.mrb[0].mxu0
      %2344 = vmatprep.mubr.f32.mxu0 0.0
      %2345 = vmatmul.mubr.f32.gmra.mrb[0].mxu0 %v2147
      %v2346 = vpop.f32.mrb[0].mxu0
      %v2347 = vadd.f32 0.0, %v2346
      %v2348 = vpop.f32.mrb[0].mxu0
      %2349 = vmatprep.mubr.f32.mxu0 0.0
      %2350 = vmatmul.mubr.f32.gmra.mrb[0].mxu0 %v2150
      %v2351 = vpop.f32.mrb[0].mxu0
      %v2352 = vadd.f32 0.0, %v2351
      %v2353 = vpop.f32.mrb[0].mxu0
      %2354 = vmatprep.mubr.f32.mxu0 0.0
      %2355 = vmatmul.mubr.f32.gmra.mrb[0].mxu0 %v2153
      %v2356 = vpop.f32.mrb[0].mxu0
      %v2357 = vadd.f32 0.0, %v2356
      %v2358 = vpop.f32.mrb[0].mxu0
      %2359 = vmatprep.mubr.f32.mxu0 0.0
      %2360 = vmatmul.mubr.f32.gmra.mrb[0].mxu0 %v2156
      %v2361 = vpop.f32.mrb[0].mxu0
      %v2362 = vadd.f32 0.0, %v2361
      %v2363 = vpop.f32.mrb[0].mxu0
      %2364 = vmatprep.mubr.f32.mxu0 0.0
      %2365 = vmatmul.mubr.f32.gmra.mrb[0].mxu0 %v2159
      %v2366 = vpop.f32.mrb[0].mxu0
      %v2367 = vadd.f32 0.0, %v2366
      %v2368 = vpop.f32.mrb[0].mxu0
      %2369 = vmatprep.mubr.f32.mxu0 0.0
      %2370 = vmatmul.mubr.f32.gmra.mrb[0].mxu0 %v2162
      %v2371 = vpop.f32.mrb[0].mxu0
      %v2372 = vadd.f32 0.0, %v2371
      %v2373 = vpop.f32.mrb[0].mxu0
      %2374 = vmatprep.mubr.f32.mxu0 0.0
      %2375 = vmatmul.mubr.f32.gmra.mrb[0].mxu0 %v2165
      %v2376 = vpop.f32.mrb[0].mxu0
      %v2377 = vadd.f32 0.0, %v2376
      %v2378 = vpop.f32.mrb[0].mxu0
      %2379 = vmatprep.mubr.f32.mxu0 0.0
      %2380 = vmatmul.mubr.f32.gmra.mrb[0].mxu0 %v2168
      %v2381 = vpop.f32.mrb[0].mxu0
      %v2382 = vadd.f32 0.0, %v2381
      %v2383 = vpop.f32.mrb[0].mxu0
      %2384 = vmatprep.mubr.f32.mxu0 0.0
      %2385 = vmatmul.mubr.f32.gmra.mrb[0].mxu0 %v2171
      %v2386 = vpop.f32.mrb[0].mxu0
      %v2387 = vadd.f32 0.0, %v2386
      %v2388 = vpop.f32.mrb[0].mxu0
      %2389 = vmatprep.mubr.f32.mxu0 0.0
      %2390 = vmatmul.mubr.f32.gmra.mrb[0].mxu0 %v2174
      %v2391 = vpop.f32.mrb[0].mxu0
      %v2392 = vadd.f32 0.0, %v2391
      %v2393 = vpop.f32.mrb[0].mxu0
      %2394 = vmatprep.mubr.f32.mxu0 0.0
      %2395 = vmatmul.mubr.f32.gmra.mrb[0].mxu0 %v2177
      %v2396 = vpop.f32.mrb[0].mxu0
      %v2397 = vadd.f32 0.0, %v2396
      %v2398 = vpop.f32.mrb[0].mxu0
      %2399 = vmatprep.mubr.f32.mxu0 0.0
      %2400 = vmatmul.mubr.f32.gmra.mrb[0].mxu0 %v2180
      %v2401 = vpop.f32.mrb[0].mxu0
      %v2402 = vadd.f32 0.0, %v2401
      %v2403 = vpop.f32.mrb[0].mxu0
      %2404 = vmatprep.mubr.f32.mxu0 0.0
      %2405 = vmatmul.mubr.f32.gmra.mrb[0].mxu0 %v2183
      %v2406 = vpop.f32.mrb[0].mxu0
      %v2407 = vadd.f32 0.0, %v2406
      %v2408 = vpop.f32.mrb[0].mxu0
      %2409 = vmatprep.mubr.f32.mxu0 0.0
      %2410 = vmatmul.mubr.f32.gmra.mrb[0].mxu0 %v2186
      %v2411 = vpop.f32.mrb[0].mxu0
      %v2412 = vadd.f32 0.0, %v2411
      %v2413 = vpop.f32.mrb[0].mxu0
      %2414 = vmatprep.mubr.f32.mxu0 0.0
      %2415 = vmatmul.mubr.f32.gmra.mrb[0].mxu0 %v2189
      %v2416 = vpop.f32.mrb[0].mxu0
      %v2417 = vadd.f32 0.0, %v2416
      %v2418 = vpop.f32.mrb[0].mxu0
      %2419 = vmatprep.mubr.f32.mxu0 0.0
      %2420 = vmatmul.mubr.f32.gmra.mrb[0].mxu0 %v2192
      %v2421 = vpop.f32.mrb[0].mxu0
      %v2422 = vadd.f32 0.0, %v2421
      %v2423 = vpop.f32.mrb[0].mxu0
      %2424 = vmatprep.mubr.f32.mxu0 0.0
      %2425 = vmatmul.mubr.f32.gmra.mrb[0].mxu0 %v2195
      %v2426 = vpop.f32.mrb[0].mxu0
      %v2427 = vadd.f32 0.0, %v2426
      %v2428 = vpop.f32.mrb[0].mxu0
      %2429 = vmatprep.mubr.f32.mxu0 0.0
      %2430 = vmatmul.mubr.f32.gmra.mrb[0].mxu0 %v2198
      %v2431 = vpop.f32.mrb[0].mxu0
      %v2432 = vadd.f32 0.0, %v2431
      %v2433 = vpop.f32.mrb[0].mxu0
      %2434 = vmatprep.mubr.f32.mxu0 0.0
      %2435 = vmatmul.mubr.f32.gmra.mrb[0].mxu0 %v2201
      %v2436 = vpop.f32.mrb[0].mxu0
      %v2437 = vadd.f32 0.0, %v2436
      %v2438 = vpop.f32.mrb[0].mxu0
      %2439 = vmatprep.mubr.f32.mxu0 0.0
      %2440 = vmatmul.mubr.f32.gmra.mrb[0].mxu0 %v2204
      %v2441 = vpop.f32.mrb[0].mxu0
      %v2442 = vadd.f32 0.0, %v2441
      %v2443 = vpop.f32.mrb[0].mxu0
      %2444 = vmatprep.mubr.f32.mxu0 0.0
      %2445 = vmatmul.mubr.f32.gmra.mrb[0].mxu0 %v2207
      %v2446 = vpop.f32.mrb[0].mxu0
      %v2447 = vadd.f32 0.0, %v2446
      %v2448 = vpop.f32.mrb[0].mxu0
      %2449 = vmatprep.mubr.f32.mxu0 0.0
      %2450 = vmatmul.mubr.f32.gmra.mrb[0].mxu0 %v2210
      %v2451 = vpop.f32.mrb[0].mxu0
      %v2452 = vadd.f32 0.0, %v2451
      %v2453 = vpop.f32.mrb[0].mxu0
      %2454 = vmatprep.mubr.f32.mxu0 0.0
      %2455 = vmatmul.mubr.f32.gmra.mrb[0].mxu0 %v2213
      %v2456 = vpop.f32.mrb[0].mxu0
      %v2457 = vadd.f32 0.0, %v2456
      %v2458 = vpop.f32.mrb[0].mxu0
      %2459 = vmatprep.mubr.f32.mxu0 0.0
      %2460 = vmatmul.mubr.f32.gmra.mrb[0].mxu0 %v2216
      %v2461 = vpop.f32.mrb[0].mxu0
      %v2462 = vadd.f32 0.0, %v2461
      %v2463 = vpop.f32.mrb[0].mxu0
      %2464 = vmatprep.mubr.f32.mxu0 0.0
      %2465 = vmatmul.mubr.f32.gmra.mrb[0].mxu0 %v2219
      %v2466 = vpop.f32.mrb[0].mxu0
      %v2467 = vadd.f32 0.0, %v2466
      %v2468 = vpop.f32.mrb[0].mxu0
      %2469 = vmatprep.mubr.f32.mxu0 0.0
      %2470 = vmatmul.mubr.f32.gmra.mrb[0].mxu0 %v2222
      %v2471 = vpop.f32.mrb[0].mxu0
      %v2472 = vadd.f32 0.0, %v2471
      %v2473 = vpop.f32.mrb[0].mxu0
      %2474 = vmatprep.mubr.f32.mxu0 0.0
      %2475 = vmatmul.mubr.f32.gmra.mrb[0].mxu0 %v2225
      %v2476 = vpop.f32.mrb[0].mxu0
      %v2477 = vadd.f32 0.0, %v2476
      %v2478 = vpop.f32.mrb[0].mxu0
      %2479 = vmatprep.mubr.f32.mxu0 0.0
      %2480 = vmatmul.mubr.f32.gmra.mrb[0].mxu0 %v2228
      %v2481 = vpop.f32.mrb[0].mxu0
      %v2482 = vadd.f32 0.0, %v2481
      %v2483 = vpop.f32.mrb[0].mxu0
      %2484 = vmatprep.mubr.f32.mxu0 0.0
      %2485 = vmatmul.mubr.f32.gmra.mrb[0].mxu0 %v2231
      %v2486 = vpop.f32.mrb[0].mxu0
      %v2487 = vadd.f32 0.0, %v2486
      %v2488 = vpop.f32.mrb[0].mxu0
      %2489 = vmatprep.mubr.f32.mxu0 0.0
      %2490 = vmatmul.mubr.f32.gmra.mrb[0].mxu0 %v2234
      %v2491 = vpop.f32.mrb[0].mxu0
      %v2492 = vadd.f32 0.0, %v2491
      %v2493 = vpop.f32.mrb[0].mxu0
      %2494 = vmatprep.mubr.f32.mxu0 0.0
      %2495 = vmatmul.mubr.f32.gmra.mrb[0].mxu0 %v2237
      %v2496 = vpop.f32.mrb[0].mxu0
      %v2497 = vadd.f32 0.0, %v2496
      %v2498 = vpop.f32.mrb[0].mxu0
      %2499 = vmatprep.mubr.f32.mxu0 0.0
      %2500 = vmatmul.mubr.f32.gmra.mrb[0].mxu0 %v2240
      %v2501 = vpop.f32.mrb[0].mxu0
      %v2502 = vadd.f32 0.0, %v2501
      %v2503 = vpop.f32.mrb[0].mxu0
      %2504 = vmatprep.mubr.f32.mxu0 0.0
      %2505 = vmatmul.mubr.f32.gmra.mrb[0].mxu0 %v2243
      %v2506 = vpop.f32.mrb[0].mxu0
      %v2507 = vadd.f32 0.0, %v2506
      %v2508 = vpop.f32.mrb[0].mxu0
      %2509 = vmatprep.mubr.f32.mxu0 0.0
      %2510 = vmatmul.mubr.f32.gmra.mrb[0].mxu0 %v2246
      %v2511 = vpop.f32.mrb[0].mxu0
      %v2512 = vadd.f32 0.0, %v2511
      %v2513 = vpop.f32.mrb[0].mxu0
      %2514 = vmatprep.mubr.f32.mxu0 0.0
      %2515 = vmatmul.mubr.f32.gmra.mrb[0].mxu0 %v2249
      %v2516 = vpop.f32.mrb[0].mxu0
      %v2517 = vadd.f32 0.0, %v2516
      %v2518 = vpop.f32.mrb[0].mxu0
      %2519 = vmatprep.mubr.f32.mxu0 0.0
      %2520 = vmatmul.mubr.f32.gmra.mrb[0].mxu0 %v2252
      %v2521 = vpop.f32.mrb[0].mxu0
      %v2522 = vadd.f32 0.0, %v2521
      %v2523 = vpop.f32.mrb[0].mxu0
      %2524 = vmatprep.mubr.f32.mxu0 0.0
      %2525 = vmatmul.mubr.f32.gmra.mrb[0].mxu0 %v2255
      %v2526 = vpop.f32.mrb[0].mxu0
      %v2527 = vadd.f32 0.0, %v2526
      %v2528 = vpop.f32.mrb[0].mxu0
      %2529 = vdwg.mxu0
      %v2530 = vadd.f32 %v2050, %v2327
      %v2531 = vadd.f32 %v2051, %v2332
      %v2532 = vadd.f32 %v2052, %v2337
      %v2533 = vadd.f32 %v2053, %v2342
      %v2534 = vadd.f32 %v2054, %v2347
      %v2535 = vadd.f32 %v2055, %v2352
      %v2536 = vadd.f32 %v2056, %v2357
      %v2537 = vadd.f32 %v2057, %v2362
      %v2538 = vadd.f32 %v2058, %v2367
      %v2539 = vadd.f32 %v2059, %v2372
      %v2540 = vadd.f32 %v2060, %v2377
      %v2541 = vadd.f32 %v2061, %v2382
      %v2542 = vadd.f32 %v2062, %v2387
      %v2543 = vadd.f32 %v2063, %v2392
      %v2544 = vadd.f32 %v2064, %v2397
      %v2545 = vadd.f32 %v2065, %v2402
      %v2546 = vadd.f32 %v2066, %v2407
      %v2547 = vadd.f32 %v2067, %v2412
      %v2548 = vadd.f32 %v2068, %v2417
      %v2549 = vadd.f32 %v2069, %v2422
      %v2550 = vadd.f32 %v2070, %v2427
      %v2551 = vadd.f32 %v2071, %v2432
      %v2552 = vadd.f32 %v2072, %v2437
      %v2553 = vadd.f32 %v2073, %v2442
      %v2554 = vadd.f32 %v2074, %v2447
      %v2555 = vadd.f32 %v2075, %v2452
      %v2556 = vadd.f32 %v2076, %v2457
      %v2557 = vadd.f32 %v2077, %v2462
      %v2558 = vadd.f32 %v2078, %v2467
      %v2559 = vadd.f32 %v2079, %v2472
      %v2560 = vadd.f32 %v2080, %v2477
      %v2561 = vadd.f32 %v2081, %v2482
      %v2562 = vadd.f32 %v2082, %v2487
      %v2563 = vadd.f32 %v2083, %v2492
      %v2564 = vadd.f32 %v2084, %v2497
      %v2565 = vadd.f32 %v2085, %v2502
      %v2566 = vadd.f32 %v2086, %v2507
      %v2567 = vadd.f32 %v2087, %v2512
      %v2568 = vadd.f32 %v2088, %v2517
      %v2569 = vadd.f32 %v2089, %v2522
      %v2570 = vadd.f32 %v2090, %v2527
      %v2571 = vld [vmem:[%s246 + $0x19] sm:$0xff]
      %v2572 = vld [vmem:[%s246 + $0x21] sm:$0xff]
      %v2573 = vld [vmem:[%s246 + $0x29] sm:$0xff]
      %v2574 = vld [vmem:[%s246 + $0x31] sm:$0xff]
      %v2575 = vld [vmem:[%s246 + $0x39] sm:$0xff]
      %v2576 = vld [vmem:[%s246 + $0x41] sm:$0xff]
      %v2577 = vld [vmem:[%s246 + $0x49] sm:$0xff]
      %v2578 = vld [vmem:[%s246 + $0x51] sm:$0xff]
      %v2579 = vld [vmem:[%s246 + $0x59] sm:$0xff]
      %v2580 = vld [vmem:[%s246 + $0x61] sm:$0xff]
      %v2581 = vld [vmem:[%s246 + $0x69] sm:$0xff]
      %v2582 = vld [vmem:[%s246 + $0x71] sm:$0xff]
      %v2583 = vld [vmem:[%s246 + $0x79] sm:$0xff]
      %v2584 = vld [vmem:[%s246 + $0x81] sm:$0xff]
      %v2585 = vld [vmem:[%s246 + $0x89] sm:$0xff]
      %v2586 = vld [vmem:[%s246 + $0x91] sm:$0xff]
      %v2587 = vld [vmem:[%s246 + $0x99] sm:$0xff]
      %v2588 = vld [vmem:[%s246 + $0xa1] sm:$0xff]
      %v2589 = vld [vmem:[%s246 + $0xa9] sm:$0xff]
      %v2590 = vld [vmem:[%s246 + $0xb1] sm:$0xff]
      %v2591 = vld [vmem:[%s246 + $0xb9] sm:$0xff]
      %v2592 = vld [vmem:[%s246 + $0xc1] sm:$0xff]
      %v2593 = vld [vmem:[%s246 + $0xc9] sm:$0xff]
      %v2594 = vld [vmem:[%s246 + $0xd1] sm:$0xff]
      %v2595 = vld [vmem:[%s246 + $0xd9] sm:$0xff]
      %v2596 = vld [vmem:[%s246 + $0xe1] sm:$0xff]
      %v2597 = vld [vmem:[%s246 + $0xe9] sm:$0xff]
      %v2598 = vld [vmem:[%s246 + $0xf1] sm:$0xff]
      %v2599 = vld [vmem:[%s246 + $0xf9] sm:$0xff]
      %v2600 = vld [vmem:[%s246 + $0x101] sm:$0xff]
      %v2601 = vld [vmem:[%s246 + $0x109] sm:$0xff]
      %v2602 = vld [vmem:[%s246 + $0x111] sm:$0xff]
      %v2603 = vld [vmem:[%s246 + $0x119] sm:$0xff]
      %v2604 = vld [vmem:[%s246 + $0x121] sm:$0xff]
      %v2605 = vld [vmem:[%s246 + $0x129] sm:$0xff]
      %v2606 = vld [vmem:[%s246 + $0x131] sm:$0xff]
      %v2607 = vld [vmem:[%s246 + $0x139] sm:$0xff]
      %v2608 = vld [vmem:[%s246 + $0x141] sm:$0xff]
      %v2609 = vld [vmem:[%s246 + $0x149] sm:$0xff]
      %v2610 = vld [vmem:[%s246 + $0x151] sm:$0xff]
      %v2611 = vld [vmem:[%s246 + $0x159] sm:$0xf]
      %s2612 = scalar_lea.vmem %s2, 20
      %v2613 = vld [vmem:[%s2612] sm:$0xf]
      %v2615 = vsel %vm337, %v2571, 0
      %v2618 = vsel %vm337, %v2572, 0
      %v2621 = vsel %vm337, %v2573, 0
      %v2624 = vsel %vm337, %v2574, 0
      %v2627 = vsel %vm337, %v2575, 0
      %v2630 = vsel %vm337, %v2576, 0
      %v2633 = vsel %vm337, %v2577, 0
      %v2636 = vsel %vm337, %v2578, 0
      %v2639 = vsel %vm337, %v2579, 0
      %v2642 = vsel %vm337, %v2580, 0
      %v2645 = vsel %vm337, %v2581, 0
      %v2648 = vsel %vm337, %v2582, 0
      %v2651 = vsel %vm337, %v2583, 0
      %v2654 = vsel %vm337, %v2584, 0
      %v2657 = vsel %vm337, %v2585, 0
      %v2660 = vsel %vm337, %v2586, 0
      %v2663 = vsel %vm337, %v2587, 0
      %v2666 = vsel %vm337, %v2588, 0
      %v2669 = vsel %vm337, %v2589, 0
      %v2672 = vsel %vm337, %v2590, 0
      %v2675 = vsel %vm337, %v2591, 0
      %v2678 = vsel %vm337, %v2592, 0
      %v2681 = vsel %vm337, %v2593, 0
      %v2684 = vsel %vm337, %v2594, 0
      %v2687 = vsel %vm337, %v2595, 0
      %v2690 = vsel %vm337, %v2596, 0
      %v2693 = vsel %vm337, %v2597, 0
      %v2696 = vsel %vm337, %v2598, 0
      %v2699 = vsel %vm337, %v2599, 0
      %v2702 = vsel %vm337, %v2600, 0
      %v2705 = vsel %vm337, %v2601, 0
      %v2708 = vsel %vm337, %v2602, 0
      %v2711 = vsel %vm337, %v2603, 0
      %v2714 = vsel %vm337, %v2604, 0
      %v2717 = vsel %vm337, %v2605, 0
      %v2720 = vsel %vm337, %v2606, 0
      %v2723 = vsel %vm337, %v2607, 0
      %v2726 = vsel %vm337, %v2608, 0
      %v2729 = vsel %vm337, %v2609, 0
      %v2732 = vsel %vm337, %v2610, 0
      %v2735 = vsel %vm337, %v2611, 0
      %v2738 = vsel %vm461, %v2613, 0
      %2740 = vmatprep.subr.mxu0 0.0
      %2741 = vmatpush1.msra.mxu0 %v2738
      %2742 = vmatprep.subr.mxu0 0.0
      %2743 = vmatpush1.msra.mxu0 0.0
      %2744 = vmatprep.subr.mxu0 0.0
      %2745 = vmatpush1.msra.mxu0 0.0
      %2746 = vmatprep.subr.mxu0 0.0
      %2747 = vmatpush1.msra.mxu0 0.0
      %2748 = vmatprep.subr.mxu0 0.0
      %2749 = vmatpush1.msra.mxu0 0.0
      %2750 = vmatprep.subr.mxu0 0.0
      %2751 = vmatpush1.msra.mxu0 0.0
      %2752 = vmatprep.subr.mxu0 0.0
      %2753 = vmatpush1.msra.mxu0 0.0
      %2754 = vmatprep.subr.mxu0 0.0
      %2755 = vmatpush1.msra.mxu0 0.0
      %2756 = vmatprep.subr.mxu0 0.0
      %2757 = vmatpush1.msra.mxu0 0.0
      %2758 = vmatprep.subr.mxu0 0.0
      %2759 = vmatpush1.msra.mxu0 0.0
      %2760 = vmatprep.subr.mxu0 0.0
      %2761 = vmatpush1.msra.mxu0 0.0
      %2762 = vmatprep.subr.mxu0 0.0
      %2763 = vmatpush1.msra.mxu0 0.0
      %2764 = vmatprep.subr.mxu0 0.0
      %2765 = vmatpush1.msra.mxu0 0.0
      %2766 = vmatprep.subr.mxu0 0.0
      %2767 = vmatpush1.msra.mxu0 0.0
      %2768 = vmatprep.subr.mxu0 0.0
      %2769 = vmatpush1.msra.mxu0 0.0
      %2770 = vmatprep.subr.mxu0 0.0
      %2771 = vmatpush1.msra.mxu0 0.0
      %2772 = vmatprep.subr.mxu0 0.0
      %2773 = vmatpush1.msra.mxu0 0.0
      %2774 = vmatprep.subr.mxu0 0.0
      %2775 = vmatpush1.msra.mxu0 0.0
      %2776 = vmatprep.subr.mxu0 0.0
      %2777 = vmatpush1.msra.mxu0 0.0
      %2778 = vmatprep.subr.mxu0 0.0
      %2779 = vmatpush1.msra.mxu0 0.0
      %2780 = vmatprep.subr.mxu0 0.0
      %2781 = vmatpush1.msra.mxu0 0.0
      %2782 = vmatprep.subr.mxu0 0.0
      %2783 = vmatpush1.msra.mxu0 0.0
      %2784 = vmatprep.subr.mxu0 0.0
      %2785 = vmatpush1.msra.mxu0 0.0
      %2786 = vmatprep.subr.mxu0 0.0
      %2787 = vmatpush1.msra.mxu0 0.0
      %2788 = vmatprep.subr.mxu0 0.0
      %2789 = vmatpush1.msra.mxu0 0.0
      %2790 = vmatprep.subr.mxu0 0.0
      %2791 = vmatpush1.msra.mxu0 0.0
      %2792 = vmatprep.subr.mxu0 0.0
      %2793 = vmatpush1.msra.mxu0 0.0
      %2794 = vmatprep.subr.mxu0 0.0
      %2795 = vmatpush1.msra.mxu0 0.0
      %2796 = vmatprep.subr.mxu0 0.0
      %2797 = vmatpush1.msra.mxu0 0.0
      %2798 = vmatprep.subr.mxu0 0.0
      %2799 = vmatpush1.msra.mxu0 0.0
      %2800 = vmatprep.subr.mxu0 0.0
      %2801 = vmatpush1.msra.mxu0 0.0
      %2802 = vmatprep.subr.mxu0 0.0
      %2803 = vmatpush1.msra.mxu0 0.0
      %2804 = vmatprep.mubr.f32.mxu0 0.0
      %2805 = vmatmul.mubr.f32.gmra.mrb[0].mxu0 %v2615
      %v2806 = vpop.f32.mrb[0].mxu0
      %v2807 = vadd.f32 0.0, %v2806
      %v2808 = vpop.f32.mrb[0].mxu0
      %2809 = vmatprep.mubr.f32.mxu0 0.0
      %2810 = vmatmul.mubr.f32.gmra.mrb[0].mxu0 %v2618
      %v2811 = vpop.f32.mrb[0].mxu0
      %v2812 = vadd.f32 0.0, %v2811
      %v2813 = vpop.f32.mrb[0].mxu0
      %2814 = vmatprep.mubr.f32.mxu0 0.0
      %2815 = vmatmul.mubr.f32.gmra.mrb[0].mxu0 %v2621
      %v2816 = vpop.f32.mrb[0].mxu0
      %v2817 = vadd.f32 0.0, %v2816
      %v2818 = vpop.f32.mrb[0].mxu0
      %2819 = vmatprep.mubr.f32.mxu0 0.0
      %2820 = vmatmul.mubr.f32.gmra.mrb[0].mxu0 %v2624
      %v2821 = vpop.f32.mrb[0].mxu0
      %v2822 = vadd.f32 0.0, %v2821
      %v2823 = vpop.f32.mrb[0].mxu0
      %2824 = vmatprep.mubr.f32.mxu0 0.0
      %2825 = vmatmul.mubr.f32.gmra.mrb[0].mxu0 %v2627
      %v2826 = vpop.f32.mrb[0].mxu0
      %v2827 = vadd.f32 0.0, %v2826
      %v2828 = vpop.f32.mrb[0].mxu0
      %2829 = vmatprep.mubr.f32.mxu0 0.0
      %2830 = vmatmul.mubr.f32.gmra.mrb[0].mxu0 %v2630
      %v2831 = vpop.f32.mrb[0].mxu0
      %v2832 = vadd.f32 0.0, %v2831
      %v2833 = vpop.f32.mrb[0].mxu0
      %2834 = vmatprep.mubr.f32.mxu0 0.0
      %2835 = vmatmul.mubr.f32.gmra.mrb[0].mxu0 %v2633
      %v2836 = vpop.f32.mrb[0].mxu0
      %v2837 = vadd.f32 0.0, %v2836
      %v2838 = vpop.f32.mrb[0].mxu0
      %2839 = vmatprep.mubr.f32.mxu0 0.0
      %2840 = vmatmul.mubr.f32.gmra.mrb[0].mxu0 %v2636
      %v2841 = vpop.f32.mrb[0].mxu0
      %v2842 = vadd.f32 0.0, %v2841
      %v2843 = vpop.f32.mrb[0].mxu0
      %2844 = vmatprep.mubr.f32.mxu0 0.0
      %2845 = vmatmul.mubr.f32.gmra.mrb[0].mxu0 %v2639
      %v2846 = vpop.f32.mrb[0].mxu0
      %v2847 = vadd.f32 0.0, %v2846
      %v2848 = vpop.f32.mrb[0].mxu0
      %2849 = vmatprep.mubr.f32.mxu0 0.0
      %2850 = vmatmul.mubr.f32.gmra.mrb[0].mxu0 %v2642
      %v2851 = vpop.f32.mrb[0].mxu0
      %v2852 = vadd.f32 0.0, %v2851
      %v2853 = vpop.f32.mrb[0].mxu0
      %2854 = vmatprep.mubr.f32.mxu0 0.0
      %2855 = vmatmul.mubr.f32.gmra.mrb[0].mxu0 %v2645
      %v2856 = vpop.f32.mrb[0].mxu0
      %v2857 = vadd.f32 0.0, %v2856
      %v2858 = vpop.f32.mrb[0].mxu0
      %2859 = vmatprep.mubr.f32.mxu0 0.0
      %2860 = vmatmul.mubr.f32.gmra.mrb[0].mxu0 %v2648
      %v2861 = vpop.f32.mrb[0].mxu0
      %v2862 = vadd.f32 0.0, %v2861
      %v2863 = vpop.f32.mrb[0].mxu0
      %2864 = vmatprep.mubr.f32.mxu0 0.0
      %2865 = vmatmul.mubr.f32.gmra.mrb[0].mxu0 %v2651
      %v2866 = vpop.f32.mrb[0].mxu0
      %v2867 = vadd.f32 0.0, %v2866
      %v2868 = vpop.f32.mrb[0].mxu0
      %2869 = vmatprep.mubr.f32.mxu0 0.0
      %2870 = vmatmul.mubr.f32.gmra.mrb[0].mxu0 %v2654
      %v2871 = vpop.f32.mrb[0].mxu0
      %v2872 = vadd.f32 0.0, %v2871
      %v2873 = vpop.f32.mrb[0].mxu0
      %2874 = vmatprep.mubr.f32.mxu0 0.0
      %2875 = vmatmul.mubr.f32.gmra.mrb[0].mxu0 %v2657
      %v2876 = vpop.f32.mrb[0].mxu0
      %v2877 = vadd.f32 0.0, %v2876
      %v2878 = vpop.f32.mrb[0].mxu0
      %2879 = vmatprep.mubr.f32.mxu0 0.0
      %2880 = vmatmul.mubr.f32.gmra.mrb[0].mxu0 %v2660
      %v2881 = vpop.f32.mrb[0].mxu0
      %v2882 = vadd.f32 0.0, %v2881
      %v2883 = vpop.f32.mrb[0].mxu0
      %2884 = vmatprep.mubr.f32.mxu0 0.0
      %2885 = vmatmul.mubr.f32.gmra.mrb[0].mxu0 %v2663
      %v2886 = vpop.f32.mrb[0].mxu0
      %v2887 = vadd.f32 0.0, %v2886
      %v2888 = vpop.f32.mrb[0].mxu0
      %2889 = vmatprep.mubr.f32.mxu0 0.0
      %2890 = vmatmul.mubr.f32.gmra.mrb[0].mxu0 %v2666
      %v2891 = vpop.f32.mrb[0].mxu0
      %v2892 = vadd.f32 0.0, %v2891
      %v2893 = vpop.f32.mrb[0].mxu0
      %2894 = vmatprep.mubr.f32.mxu0 0.0
      %2895 = vmatmul.mubr.f32.gmra.mrb[0].mxu0 %v2669
      %v2896 = vpop.f32.mrb[0].mxu0
      %v2897 = vadd.f32 0.0, %v2896
      %v2898 = vpop.f32.mrb[0].mxu0
      %2899 = vmatprep.mubr.f32.mxu0 0.0
      %2900 = vmatmul.mubr.f32.gmra.mrb[0].mxu0 %v2672
      %v2901 = vpop.f32.mrb[0].mxu0
      %v2902 = vadd.f32 0.0, %v2901
      %v2903 = vpop.f32.mrb[0].mxu0
      %2904 = vmatprep.mubr.f32.mxu0 0.0
      %2905 = vmatmul.mubr.f32.gmra.mrb[0].mxu0 %v2675
      %v2906 = vpop.f32.mrb[0].mxu0
      %v2907 = vadd.f32 0.0, %v2906
      %v2908 = vpop.f32.mrb[0].mxu0
      %2909 = vmatprep.mubr.f32.mxu0 0.0
      %2910 = vmatmul.mubr.f32.gmra.mrb[0].mxu0 %v2678
      %v2911 = vpop.f32.mrb[0].mxu0
      %v2912 = vadd.f32 0.0, %v2911
      %v2913 = vpop.f32.mrb[0].mxu0
      %2914 = vmatprep.mubr.f32.mxu0 0.0
      %2915 = vmatmul.mubr.f32.gmra.mrb[0].mxu0 %v2681
      %v2916 = vpop.f32.mrb[0].mxu0
      %v2917 = vadd.f32 0.0, %v2916
      %v2918 = vpop.f32.mrb[0].mxu0
      %2919 = vmatprep.mubr.f32.mxu0 0.0
      %2920 = vmatmul.mubr.f32.gmra.mrb[0].mxu0 %v2684
      %v2921 = vpop.f32.mrb[0].mxu0
      %v2922 = vadd.f32 0.0, %v2921
      %v2923 = vpop.f32.mrb[0].mxu0
      %2924 = vmatprep.mubr.f32.mxu0 0.0
      %2925 = vmatmul.mubr.f32.gmra.mrb[0].mxu0 %v2687
      %v2926 = vpop.f32.mrb[0].mxu0
      %v2927 = vadd.f32 0.0, %v2926
      %v2928 = vpop.f32.mrb[0].mxu0
      %2929 = vmatprep.mubr.f32.mxu0 0.0
      %2930 = vmatmul.mubr.f32.gmra.mrb[0].mxu0 %v2690
      %v2931 = vpop.f32.mrb[0].mxu0
      %v2932 = vadd.f32 0.0, %v2931
      %v2933 = vpop.f32.mrb[0].mxu0
      %2934 = vmatprep.mubr.f32.mxu0 0.0
      %2935 = vmatmul.mubr.f32.gmra.mrb[0].mxu0 %v2693
      %v2936 = vpop.f32.mrb[0].mxu0
      %v2937 = vadd.f32 0.0, %v2936
      %v2938 = vpop.f32.mrb[0].mxu0
      %2939 = vmatprep.mubr.f32.mxu0 0.0
      %2940 = vmatmul.mubr.f32.gmra.mrb[0].mxu0 %v2696
      %v2941 = vpop.f32.mrb[0].mxu0
      %v2942 = vadd.f32 0.0, %v2941
      %v2943 = vpop.f32.mrb[0].mxu0
      %2944 = vmatprep.mubr.f32.mxu0 0.0
      %2945 = vmatmul.mubr.f32.gmra.mrb[0].mxu0 %v2699
      %v2946 = vpop.f32.mrb[0].mxu0
      %v2947 = vadd.f32 0.0, %v2946
      %v2948 = vpop.f32.mrb[0].mxu0
      %2949 = vmatprep.mubr.f32.mxu0 0.0
      %2950 = vmatmul.mubr.f32.gmra.mrb[0].mxu0 %v2702
      %v2951 = vpop.f32.mrb[0].mxu0
      %v2952 = vadd.f32 0.0, %v2951
      %v2953 = vpop.f32.mrb[0].mxu0
      %2954 = vmatprep.mubr.f32.mxu0 0.0
      %2955 = vmatmul.mubr.f32.gmra.mrb[0].mxu0 %v2705
      %v2956 = vpop.f32.mrb[0].mxu0
      %v2957 = vadd.f32 0.0, %v2956
      %v2958 = vpop.f32.mrb[0].mxu0
      %2959 = vmatprep.mubr.f32.mxu0 0.0
      %2960 = vmatmul.mubr.f32.gmra.mrb[0].mxu0 %v2708
      %v2961 = vpop.f32.mrb[0].mxu0
      %v2962 = vadd.f32 0.0, %v2961
      %v2963 = vpop.f32.mrb[0].mxu0
      %2964 = vmatprep.mubr.f32.mxu0 0.0
      %2965 = vmatmul.mubr.f32.gmra.mrb[0].mxu0 %v2711
      %v2966 = vpop.f32.mrb[0].mxu0
      %v2967 = vadd.f32 0.0, %v2966
      %v2968 = vpop.f32.mrb[0].mxu0
      %2969 = vmatprep.mubr.f32.mxu0 0.0
      %2970 = vmatmul.mubr.f32.gmra.mrb[0].mxu0 %v2714
      %v2971 = vpop.f32.mrb[0].mxu0
      %v2972 = vadd.f32 0.0, %v2971
      %v2973 = vpop.f32.mrb[0].mxu0
      %2974 = vmatprep.mubr.f32.mxu0 0.0
      %2975 = vmatmul.mubr.f32.gmra.mrb[0].mxu0 %v2717
      %v2976 = vpop.f32.mrb[0].mxu0
      %v2977 = vadd.f32 0.0, %v2976
      %v2978 = vpop.f32.mrb[0].mxu0
      %2979 = vmatprep.mubr.f32.mxu0 0.0
      %2980 = vmatmul.mubr.f32.gmra.mrb[0].mxu0 %v2720
      %v2981 = vpop.f32.mrb[0].mxu0
      %v2982 = vadd.f32 0.0, %v2981
      %v2983 = vpop.f32.mrb[0].mxu0
      %2984 = vmatprep.mubr.f32.mxu0 0.0
      %2985 = vmatmul.mubr.f32.gmra.mrb[0].mxu0 %v2723
      %v2986 = vpop.f32.mrb[0].mxu0
      %v2987 = vadd.f32 0.0, %v2986
      %v2988 = vpop.f32.mrb[0].mxu0
      %2989 = vmatprep.mubr.f32.mxu0 0.0
      %2990 = vmatmul.mubr.f32.gmra.mrb[0].mxu0 %v2726
      %v2991 = vpop.f32.mrb[0].mxu0
      %v2992 = vadd.f32 0.0, %v2991
      %v2993 = vpop.f32.mrb[0].mxu0
      %2994 = vmatprep.mubr.f32.mxu0 0.0
      %2995 = vmatmul.mubr.f32.gmra.mrb[0].mxu0 %v2729
      %v2996 = vpop.f32.mrb[0].mxu0
      %v2997 = vadd.f32 0.0, %v2996
      %v2998 = vpop.f32.mrb[0].mxu0
      %2999 = vmatprep.mubr.f32.mxu0 0.0
      %3000 = vmatmul.mubr.f32.gmra.mrb[0].mxu0 %v2732
      %v3001 = vpop.f32.mrb[0].mxu0
      %v3002 = vadd.f32 0.0, %v3001
      %v3003 = vpop.f32.mrb[0].mxu0
      %3004 = vmatprep.mubr.f32.mxu0 0.0
      %3005 = vmatmul.mubr.f32.gmra.mrb[0].mxu0 %v2735
      %v3006 = vpop.f32.mrb[0].mxu0
      %v3007 = vadd.f32 0.0, %v3006
      %v3008 = vpop.f32.mrb[0].mxu0
      %3009 = vdwg.mxu0
      %v3010 = vadd.f32 %v2530, %v2807
      %v3011 = vadd.f32 %v2531, %v2812
      %v3012 = vadd.f32 %v2532, %v2817
      %v3013 = vadd.f32 %v2533, %v2822
      %v3014 = vadd.f32 %v2534, %v2827
      %v3015 = vadd.f32 %v2535, %v2832
      %v3016 = vadd.f32 %v2536, %v2837
      %v3017 = vadd.f32 %v2537, %v2842
      %v3018 = vadd.f32 %v2538, %v2847
      %v3019 = vadd.f32 %v2539, %v2852
      %v3020 = vadd.f32 %v2540, %v2857
      %v3021 = vadd.f32 %v2541, %v2862
      %v3022 = vadd.f32 %v2542, %v2867
      %v3023 = vadd.f32 %v2543, %v2872
      %v3024 = vadd.f32 %v2544, %v2877
      %v3025 = vadd.f32 %v2545, %v2882
      %v3026 = vadd.f32 %v2546, %v2887
      %v3027 = vadd.f32 %v2547, %v2892
      %v3028 = vadd.f32 %v2548, %v2897
      %v3029 = vadd.f32 %v2549, %v2902
      %v3030 = vadd.f32 %v2550, %v2907
      %v3031 = vadd.f32 %v2551, %v2912
      %v3032 = vadd.f32 %v2552, %v2917
      %v3033 = vadd.f32 %v2553, %v2922
      %v3034 = vadd.f32 %v2554, %v2927
      %v3035 = vadd.f32 %v2555, %v2932
      %v3036 = vadd.f32 %v2556, %v2937
      %v3037 = vadd.f32 %v2557, %v2942
      %v3038 = vadd.f32 %v2558, %v2947
      %v3039 = vadd.f32 %v2559, %v2952
      %v3040 = vadd.f32 %v2560, %v2957
      %v3041 = vadd.f32 %v2561, %v2962
      %v3042 = vadd.f32 %v2562, %v2967
      %v3043 = vadd.f32 %v2563, %v2972
      %v3044 = vadd.f32 %v2564, %v2977
      %v3045 = vadd.f32 %v2565, %v2982
      %v3046 = vadd.f32 %v2566, %v2987
      %v3047 = vadd.f32 %v2567, %v2992
      %v3048 = vadd.f32 %v2568, %v2997
      %v3049 = vadd.f32 %v2569, %v3002
      %v3050 = vadd.f32 %v2570, %v3007
      %v3051 = vld [vmem:[%s246 + $0x29] sm:$0xff]
      %v3052 = vld [vmem:[%s246 + $0x31] sm:$0xff]
      %v3053 = vld [vmem:[%s246 + $0x39] sm:$0xff]
      %v3054 = vld [vmem:[%s246 + $0x41] sm:$0xff]
      %v3055 = vld [vmem:[%s246 + $0x49] sm:$0xff]
      %v3056 = vld [vmem:[%s246 + $0x51] sm:$0xff]
      %v3057 = vld [vmem:[%s246 + $0x59] sm:$0xff]
      %v3058 = vld [vmem:[%s246 + $0x61] sm:$0xff]
      %v3059 = vld [vmem:[%s246 + $0x69] sm:$0xff]
      %v3060 = vld [vmem:[%s246 + $0x71] sm:$0xff]
      %v3061 = vld [vmem:[%s246 + $0x79] sm:$0xff]
      %v3062 = vld [vmem:[%s246 + $0x81] sm:$0xff]
      %v3063 = vld [vmem:[%s246 + $0x89] sm:$0xff]
      %v3064 = vld [vmem:[%s246 + $0x91] sm:$0xff]
      %v3065 = vld [vmem:[%s246 + $0x99] sm:$0xff]
      %v3066 = vld [vmem:[%s246 + $0xa1] sm:$0xff]
      %v3067 = vld [vmem:[%s246 + $0xa9] sm:$0xff]
      %v3068 = vld [vmem:[%s246 + $0xb1] sm:$0xff]
      %v3069 = vld [vmem:[%s246 + $0xb9] sm:$0xff]
      %v3070 = vld [vmem:[%s246 + $0xc1] sm:$0xff]
      %v3071 = vld [vmem:[%s246 + $0xc9] sm:$0xff]
      %v3072 = vld [vmem:[%s246 + $0xd1] sm:$0xff]
      %v3073 = vld [vmem:[%s246 + $0xd9] sm:$0xff]
      %v3074 = vld [vmem:[%s246 + $0xe1] sm:$0xff]
      %v3075 = vld [vmem:[%s246 + $0xe9] sm:$0xff]
      %v3076 = vld [vmem:[%s246 + $0xf1] sm:$0xff]
      %v3077 = vld [vmem:[%s246 + $0xf9] sm:$0xff]
      %v3078 = vld [vmem:[%s246 + $0x101] sm:$0xff]
      %v3079 = vld [vmem:[%s246 + $0x109] sm:$0xff]
      %v3080 = vld [vmem:[%s246 + $0x111] sm:$0xff]
      %v3081 = vld [vmem:[%s246 + $0x119] sm:$0xff]
      %v3082 = vld [vmem:[%s246 + $0x121] sm:$0xff]
      %v3083 = vld [vmem:[%s246 + $0x129] sm:$0xff]
      %v3084 = vld [vmem:[%s246 + $0x131] sm:$0xff]
      %v3085 = vld [vmem:[%s246 + $0x139] sm:$0xff]
      %v3086 = vld [vmem:[%s246 + $0x141] sm:$0xff]
      %v3087 = vld [vmem:[%s246 + $0x149] sm:$0xff]
      %v3088 = vld [vmem:[%s246 + $0x151] sm:$0xff]
      %v3089 = vld [vmem:[%s246 + $0x159] sm:$0xff]
      %v3090 = vld [vmem:[%s246 + $0x161] sm:$0xff]
      %v3091 = vld [vmem:[%s246 + $0x169] sm:$0xf]
      %s3092 = scalar_lea.vmem %s2, 24
      %v3093 = vld [vmem:[%s3092] sm:$0xf]
      %v3095 = vsel %vm337, %v3051, 0
      %v3098 = vsel %vm337, %v3052, 0
      %v3101 = vsel %vm337, %v3053, 0
      %v3104 = vsel %vm337, %v3054, 0
      %v3107 = vsel %vm337, %v3055, 0
      %v3110 = vsel %vm337, %v3056, 0
      %v3113 = vsel %vm337, %v3057, 0
      %v3116 = vsel %vm337, %v3058, 0
      %v3119 = vsel %vm337, %v3059, 0
      %v3122 = vsel %vm337, %v3060, 0
      %v3125 = vsel %vm337, %v3061, 0
      %v3128 = vsel %vm337, %v3062, 0
      %v3131 = vsel %vm337, %v3063, 0
      %v3134 = vsel %vm337, %v3064, 0
      %v3137 = vsel %vm337, %v3065, 0
      %v3140 = vsel %vm337, %v3066, 0
      %v3143 = vsel %vm337, %v3067, 0
      %v3146 = vsel %vm337, %v3068, 0
      %v3149 = vsel %vm337, %v3069, 0
      %v3152 = vsel %vm337, %v3070, 0
      %v3155 = vsel %vm337, %v3071, 0
      %v3158 = vsel %vm337, %v3072, 0
      %v3161 = vsel %vm337, %v3073, 0
      %v3164 = vsel %vm337, %v3074, 0
      %v3167 = vsel %vm337, %v3075, 0
      %v3170 = vsel %vm337, %v3076, 0
      %v3173 = vsel %vm337, %v3077, 0
      %v3176 = vsel %vm337, %v3078, 0
      %v3179 = vsel %vm337, %v3079, 0
      %v3182 = vsel %vm337, %v3080, 0
      %v3185 = vsel %vm337, %v3081, 0
      %v3188 = vsel %vm337, %v3082, 0
      %v3191 = vsel %vm337, %v3083, 0
      %v3194 = vsel %vm337, %v3084, 0
      %v3197 = vsel %vm337, %v3085, 0
      %v3200 = vsel %vm337, %v3086, 0
      %v3203 = vsel %vm337, %v3087, 0
      %v3206 = vsel %vm337, %v3088, 0
      %v3209 = vsel %vm337, %v3089, 0
      %v3212 = vsel %vm337, %v3090, 0
      %v3215 = vsel %vm337, %v3091, 0
      %v3218 = vsel %vm461, %v3093, 0
      %3220 = vmatprep.subr.mxu0 0.0
      %3221 = vmatpush1.msra.mxu0 %v3218
      %3222 = vmatprep.subr.mxu0 0.0
      %3223 = vmatpush1.msra.mxu0 0.0
      %3224 = vmatprep.subr.mxu0 0.0
      %3225 = vmatpush1.msra.mxu0 0.0
      %3226 = vmatprep.subr.mxu0 0.0
      %3227 = vmatpush1.msra.mxu0 0.0
      %3228 = vmatprep.subr.mxu0 0.0
      %3229 = vmatpush1.msra.mxu0 0.0
      %3230 = vmatprep.subr.mxu0 0.0
      %3231 = vmatpush1.msra.mxu0 0.0
      %3232 = vmatprep.subr.mxu0 0.0
      %3233 = vmatpush1.msra.mxu0 0.0
      %3234 = vmatprep.subr.mxu0 0.0
      %3235 = vmatpush1.msra.mxu0 0.0
      %3236 = vmatprep.subr.mxu0 0.0
      %3237 = vmatpush1.msra.mxu0 0.0
      %3238 = vmatprep.subr.mxu0 0.0
      %3239 = vmatpush1.msra.mxu0 0.0
      %3240 = vmatprep.subr.mxu0 0.0
      %3241 = vmatpush1.msra.mxu0 0.0
      %3242 = vmatprep.subr.mxu0 0.0
      %3243 = vmatpush1.msra.mxu0 0.0
      %3244 = vmatprep.subr.mxu0 0.0
      %3245 = vmatpush1.msra.mxu0 0.0
      %3246 = vmatprep.subr.mxu0 0.0
      %3247 = vmatpush1.msra.mxu0 0.0
      %3248 = vmatprep.subr.mxu0 0.0
      %3249 = vmatpush1.msra.mxu0 0.0
      %3250 = vmatprep.subr.mxu0 0.0
      %3251 = vmatpush1.msra.mxu0 0.0
      %3252 = vmatprep.subr.mxu0 0.0
      %3253 = vmatpush1.msra.mxu0 0.0
      %3254 = vmatprep.subr.mxu0 0.0
      %3255 = vmatpush1.msra.mxu0 0.0
      %3256 = vmatprep.subr.mxu0 0.0
      %3257 = vmatpush1.msra.mxu0 0.0
      %3258 = vmatprep.subr.mxu0 0.0
      %3259 = vmatpush1.msra.mxu0 0.0
      %3260 = vmatprep.subr.mxu0 0.0
      %3261 = vmatpush1.msra.mxu0 0.0
      %3262 = vmatprep.subr.mxu0 0.0
      %3263 = vmatpush1.msra.mxu0 0.0
      %3264 = vmatprep.subr.mxu0 0.0
      %3265 = vmatpush1.msra.mxu0 0.0
      %3266 = vmatprep.subr.mxu0 0.0
      %3267 = vmatpush1.msra.mxu0 0.0
      %3268 = vmatprep.subr.mxu0 0.0
      %3269 = vmatpush1.msra.mxu0 0.0
      %3270 = vmatprep.subr.mxu0 0.0
      %3271 = vmatpush1.msra.mxu0 0.0
      %3272 = vmatprep.subr.mxu0 0.0
      %3273 = vmatpush1.msra.mxu0 0.0
      %3274 = vmatprep.subr.mxu0 0.0
      %3275 = vmatpush1.msra.mxu0 0.0
      %3276 = vmatprep.subr.mxu0 0.0
      %3277 = vmatpush1.msra.mxu0 0.0
      %3278 = vmatprep.subr.mxu0 0.0
      %3279 = vmatpush1.msra.mxu0 0.0
      %3280 = vmatprep.subr.mxu0 0.0
      %3281 = vmatpush1.msra.mxu0 0.0
      %3282 = vmatprep.subr.mxu0 0.0
      %3283 = vmatpush1.msra.mxu0 0.0
      %3284 = vmatprep.mubr.f32.mxu0 0.0
      %3285 = vmatmul.mubr.f32.gmra.mrb[0].mxu0 %v3095
      %v3286 = vpop.f32.mrb[0].mxu0
      %v3287 = vadd.f32 0.0, %v3286
      %v3288 = vpop.f32.mrb[0].mxu0
      %3289 = vmatprep.mubr.f32.mxu0 0.0
      %3290 = vmatmul.mubr.f32.gmra.mrb[0].mxu0 %v3098
      %v3291 = vpop.f32.mrb[0].mxu0
      %v3292 = vadd.f32 0.0, %v3291
      %v3293 = vpop.f32.mrb[0].mxu0
      %3294 = vmatprep.mubr.f32.mxu0 0.0
      %3295 = vmatmul.mubr.f32.gmra.mrb[0].mxu0 %v3101
      %v3296 = vpop.f32.mrb[0].mxu0
      %v3297 = vadd.f32 0.0, %v3296
      %v3298 = vpop.f32.mrb[0].mxu0
      %3299 = vmatprep.mubr.f32.mxu0 0.0
      %3300 = vmatmul.mubr.f32.gmra.mrb[0].mxu0 %v3104
      %v3301 = vpop.f32.mrb[0].mxu0
      %v3302 = vadd.f32 0.0, %v3301
      %v3303 = vpop.f32.mrb[0].mxu0
      %3304 = vmatprep.mubr.f32.mxu0 0.0
      %3305 = vmatmul.mubr.f32.gmra.mrb[0].mxu0 %v3107
      %v3306 = vpop.f32.mrb[0].mxu0
      %v3307 = vadd.f32 0.0, %v3306
      %v3308 = vpop.f32.mrb[0].mxu0
      %3309 = vmatprep.mubr.f32.mxu0 0.0
      %3310 = vmatmul.mubr.f32.gmra.mrb[0].mxu0 %v3110
      %v3311 = vpop.f32.mrb[0].mxu0
      %v3312 = vadd.f32 0.0, %v3311
      %v3313 = vpop.f32.mrb[0].mxu0
      %3314 = vmatprep.mubr.f32.mxu0 0.0
      %3315 = vmatmul.mubr.f32.gmra.mrb[0].mxu0 %v3113
      %v3316 = vpop.f32.mrb[0].mxu0
      %v3317 = vadd.f32 0.0, %v3316
      %v3318 = vpop.f32.mrb[0].mxu0
      %3319 = vmatprep.mubr.f32.mxu0 0.0
      %3320 = vmatmul.mubr.f32.gmra.mrb[0].mxu0 %v3116
      %v3321 = vpop.f32.mrb[0].mxu0
      %v3322 = vadd.f32 0.0, %v3321
      %v3323 = vpop.f32.mrb[0].mxu0
      %3324 = vmatprep.mubr.f32.mxu0 0.0
      %3325 = vmatmul.mubr.f32.gmra.mrb[0].mxu0 %v3119
      %v3326 = vpop.f32.mrb[0].mxu0
      %v3327 = vadd.f32 0.0, %v3326
      %v3328 = vpop.f32.mrb[0].mxu0
      %3329 = vmatprep.mubr.f32.mxu0 0.0
      %3330 = vmatmul.mubr.f32.gmra.mrb[0].mxu0 %v3122
      %v3331 = vpop.f32.mrb[0].mxu0
      %v3332 = vadd.f32 0.0, %v3331
      %v3333 = vpop.f32.mrb[0].mxu0
      %3334 = vmatprep.mubr.f32.mxu0 0.0
      %3335 = vmatmul.mubr.f32.gmra.mrb[0].mxu0 %v3125
      %v3336 = vpop.f32.mrb[0].mxu0
      %v3337 = vadd.f32 0.0, %v3336
      %v3338 = vpop.f32.mrb[0].mxu0
      %3339 = vmatprep.mubr.f32.mxu0 0.0
      %3340 = vmatmul.mubr.f32.gmra.mrb[0].mxu0 %v3128
      %v3341 = vpop.f32.mrb[0].mxu0
      %v3342 = vadd.f32 0.0, %v3341
      %v3343 = vpop.f32.mrb[0].mxu0
      %3344 = vmatprep.mubr.f32.mxu0 0.0
      %3345 = vmatmul.mubr.f32.gmra.mrb[0].mxu0 %v3131
      %v3346 = vpop.f32.mrb[0].mxu0
      %v3347 = vadd.f32 0.0, %v3346
      %v3348 = vpop.f32.mrb[0].mxu0
      %3349 = vmatprep.mubr.f32.mxu0 0.0
      %3350 = vmatmul.mubr.f32.gmra.mrb[0].mxu0 %v3134
      %v3351 = vpop.f32.mrb[0].mxu0
      %v3352 = vadd.f32 0.0, %v3351
      %v3353 = vpop.f32.mrb[0].mxu0
      %3354 = vmatprep.mubr.f32.mxu0 0.0
      %3355 = vmatmul.mubr.f32.gmra.mrb[0].mxu0 %v3137
      %v3356 = vpop.f32.mrb[0].mxu0
      %v3357 = vadd.f32 0.0, %v3356
      %v3358 = vpop.f32.mrb[0].mxu0
      %3359 = vmatprep.mubr.f32.mxu0 0.0
      %3360 = vmatmul.mubr.f32.gmra.mrb[0].mxu0 %v3140
      %v3361 = vpop.f32.mrb[0].mxu0
      %v3362 = vadd.f32 0.0, %v3361
      %v3363 = vpop.f32.mrb[0].mxu0
      %3364 = vmatprep.mubr.f32.mxu0 0.0
      %3365 = vmatmul.mubr.f32.gmra.mrb[0].mxu0 %v3143
      %v3366 = vpop.f32.mrb[0].mxu0
      %v3367 = vadd.f32 0.0, %v3366
      %v3368 = vpop.f32.mrb[0].mxu0
      %3369 = vmatprep.mubr.f32.mxu0 0.0
      %3370 = vmatmul.mubr.f32.gmra.mrb[0].mxu0 %v3146
      %v3371 = vpop.f32.mrb[0].mxu0
      %v3372 = vadd.f32 0.0, %v3371
      %v3373 = vpop.f32.mrb[0].mxu0
      %3374 = vmatprep.mubr.f32.mxu0 0.0
      %3375 = vmatmul.mubr.f32.gmra.mrb[0].mxu0 %v3149
      %v3376 = vpop.f32.mrb[0].mxu0
      %v3377 = vadd.f32 0.0, %v3376
      %v3378 = vpop.f32.mrb[0].mxu0
      %3379 = vmatprep.mubr.f32.mxu0 0.0
      %3380 = vmatmul.mubr.f32.gmra.mrb[0].mxu0 %v3152
      %v3381 = vpop.f32.mrb[0].mxu0
      %v3382 = vadd.f32 0.0, %v3381
      %v3383 = vpop.f32.mrb[0].mxu0
      %3384 = vmatprep.mubr.f32.mxu0 0.0
      %3385 = vmatmul.mubr.f32.gmra.mrb[0].mxu0 %v3155
      %v3386 = vpop.f32.mrb[0].mxu0
      %v3387 = vadd.f32 0.0, %v3386
      %v3388 = vpop.f32.mrb[0].mxu0
      %3389 = vmatprep.mubr.f32.mxu0 0.0
      %3390 = vmatmul.mubr.f32.gmra.mrb[0].mxu0 %v3158
      %v3391 = vpop.f32.mrb[0].mxu0
      %v3392 = vadd.f32 0.0, %v3391
      %v3393 = vpop.f32.mrb[0].mxu0
      %3394 = vmatprep.mubr.f32.mxu0 0.0
      %3395 = vmatmul.mubr.f32.gmra.mrb[0].mxu0 %v3161
      %v3396 = vpop.f32.mrb[0].mxu0
      %v3397 = vadd.f32 0.0, %v3396
      %v3398 = vpop.f32.mrb[0].mxu0
      %3399 = vmatprep.mubr.f32.mxu0 0.0
      %3400 = vmatmul.mubr.f32.gmra.mrb[0].mxu0 %v3164
      %v3401 = vpop.f32.mrb[0].mxu0
      %v3402 = vadd.f32 0.0, %v3401
      %v3403 = vpop.f32.mrb[0].mxu0
      %3404 = vmatprep.mubr.f32.mxu0 0.0
      %3405 = vmatmul.mubr.f32.gmra.mrb[0].mxu0 %v3167
      %v3406 = vpop.f32.mrb[0].mxu0
      %v3407 = vadd.f32 0.0, %v3406
      %v3408 = vpop.f32.mrb[0].mxu0
      %3409 = vmatprep.mubr.f32.mxu0 0.0
      %3410 = vmatmul.mubr.f32.gmra.mrb[0].mxu0 %v3170
      %v3411 = vpop.f32.mrb[0].mxu0
      %v3412 = vadd.f32 0.0, %v3411
      %v3413 = vpop.f32.mrb[0].mxu0
      %3414 = vmatprep.mubr.f32.mxu0 0.0
      %3415 = vmatmul.mubr.f32.gmra.mrb[0].mxu0 %v3173
      %v3416 = vpop.f32.mrb[0].mxu0
      %v3417 = vadd.f32 0.0, %v3416
      %v3418 = vpop.f32.mrb[0].mxu0
      %3419 = vmatprep.mubr.f32.mxu0 0.0
      %3420 = vmatmul.mubr.f32.gmra.mrb[0].mxu0 %v3176
      %v3421 = vpop.f32.mrb[0].mxu0
      %v3422 = vadd.f32 0.0, %v3421
      %v3423 = vpop.f32.mrb[0].mxu0
      %3424 = vmatprep.mubr.f32.mxu0 0.0
      %3425 = vmatmul.mubr.f32.gmra.mrb[0].mxu0 %v3179
      %v3426 = vpop.f32.mrb[0].mxu0
      %v3427 = vadd.f32 0.0, %v3426
      %v3428 = vpop.f32.mrb[0].mxu0
      %3429 = vmatprep.mubr.f32.mxu0 0.0
      %3430 = vmatmul.mubr.f32.gmra.mrb[0].mxu0 %v3182
      %v3431 = vpop.f32.mrb[0].mxu0
      %v3432 = vadd.f32 0.0, %v3431
      %v3433 = vpop.f32.mrb[0].mxu0
      %3434 = vmatprep.mubr.f32.mxu0 0.0
      %3435 = vmatmul.mubr.f32.gmra.mrb[0].mxu0 %v3185
      %v3436 = vpop.f32.mrb[0].mxu0
      %v3437 = vadd.f32 0.0, %v3436
      %v3438 = vpop.f32.mrb[0].mxu0
      %3439 = vmatprep.mubr.f32.mxu0 0.0
      %3440 = vmatmul.mubr.f32.gmra.mrb[0].mxu0 %v3188
      %v3441 = vpop.f32.mrb[0].mxu0
      %v3442 = vadd.f32 0.0, %v3441
      %v3443 = vpop.f32.mrb[0].mxu0
      %3444 = vmatprep.mubr.f32.mxu0 0.0
      %3445 = vmatmul.mubr.f32.gmra.mrb[0].mxu0 %v3191
      %v3446 = vpop.f32.mrb[0].mxu0
      %v3447 = vadd.f32 0.0, %v3446
      %v3448 = vpop.f32.mrb[0].mxu0
      %3449 = vmatprep.mubr.f32.mxu0 0.0
      %3450 = vmatmul.mubr.f32.gmra.mrb[0].mxu0 %v3194
      %v3451 = vpop.f32.mrb[0].mxu0
      %v3452 = vadd.f32 0.0, %v3451
      %v3453 = vpop.f32.mrb[0].mxu0
      %3454 = vmatprep.mubr.f32.mxu0 0.0
      %3455 = vmatmul.mubr.f32.gmra.mrb[0].mxu0 %v3197
      %v3456 = vpop.f32.mrb[0].mxu0
      %v3457 = vadd.f32 0.0, %v3456
      %v3458 = vpop.f32.mrb[0].mxu0
      %3459 = vmatprep.mubr.f32.mxu0 0.0
      %3460 = vmatmul.mubr.f32.gmra.mrb[0].mxu0 %v3200
      %v3461 = vpop.f32.mrb[0].mxu0
      %v3462 = vadd.f32 0.0, %v3461
      %v3463 = vpop.f32.mrb[0].mxu0
      %3464 = vmatprep.mubr.f32.mxu0 0.0
      %3465 = vmatmul.mubr.f32.gmra.mrb[0].mxu0 %v3203
      %v3466 = vpop.f32.mrb[0].mxu0
      %v3467 = vadd.f32 0.0, %v3466
      %v3468 = vpop.f32.mrb[0].mxu0
      %3469 = vmatprep.mubr.f32.mxu0 0.0
      %3470 = vmatmul.mubr.f32.gmra.mrb[0].mxu0 %v3206
      %v3471 = vpop.f32.mrb[0].mxu0
      %v3472 = vadd.f32 0.0, %v3471
      %v3473 = vpop.f32.mrb[0].mxu0
      %3474 = vmatprep.mubr.f32.mxu0 0.0
      %3475 = vmatmul.mubr.f32.gmra.mrb[0].mxu0 %v3209
      %v3476 = vpop.f32.mrb[0].mxu0
      %v3477 = vadd.f32 0.0, %v3476
      %v3478 = vpop.f32.mrb[0].mxu0
      %3479 = vmatprep.mubr.f32.mxu0 0.0
      %3480 = vmatmul.mubr.f32.gmra.mrb[0].mxu0 %v3212
      %v3481 = vpop.f32.mrb[0].mxu0
      %v3482 = vadd.f32 0.0, %v3481
      %v3483 = vpop.f32.mrb[0].mxu0
      %3484 = vmatprep.mubr.f32.mxu0 0.0
      %3485 = vmatmul.mubr.f32.gmra.mrb[0].mxu0 %v3215
      %v3486 = vpop.f32.mrb[0].mxu0
      %v3487 = vadd.f32 0.0, %v3486
      %v3488 = vpop.f32.mrb[0].mxu0
      %3489 = vdwg.mxu0
      %v3490 = vadd.f32 %v3010, %v3287
      %v3491 = vadd.f32 %v3011, %v3292
      %v3492 = vadd.f32 %v3012, %v3297
      %v3493 = vadd.f32 %v3013, %v3302
      %v3494 = vadd.f32 %v3014, %v3307
      %v3495 = vadd.f32 %v3015, %v3312
      %v3496 = vadd.f32 %v3016, %v3317
      %v3497 = vadd.f32 %v3017, %v3322
      %v3498 = vadd.f32 %v3018, %v3327
      %v3499 = vadd.f32 %v3019, %v3332
      %v3500 = vadd.f32 %v3020, %v3337
      %v3501 = vadd.f32 %v3021, %v3342
      %v3502 = vadd.f32 %v3022, %v3347
      %v3503 = vadd.f32 %v3023, %v3352
      %v3504 = vadd.f32 %v3024, %v3357
      %v3505 = vadd.f32 %v3025, %v3362
      %v3506 = vadd.f32 %v3026, %v3367
      %v3507 = vadd.f32 %v3027, %v3372
      %v3508 = vadd.f32 %v3028, %v3377
      %v3509 = vadd.f32 %v3029, %v3382
      %v3510 = vadd.f32 %v3030, %v3387
      %v3511 = vadd.f32 %v3031, %v3392
      %v3512 = vadd.f32 %v3032, %v3397
      %v3513 = vadd.f32 %v3033, %v3402
      %v3514 = vadd.f32 %v3034, %v3407
      %v3515 = vadd.f32 %v3035, %v3412
      %v3516 = vadd.f32 %v3036, %v3417
      %v3517 = vadd.f32 %v3037, %v3422
      %v3518 = vadd.f32 %v3038, %v3427
      %v3519 = vadd.f32 %v3039, %v3432
      %v3520 = vadd.f32 %v3040, %v3437
      %v3521 = vadd.f32 %v3041, %v3442
      %v3522 = vadd.f32 %v3042, %v3447
      %v3523 = vadd.f32 %v3043, %v3452
      %v3524 = vadd.f32 %v3044, %v3457
      %v3525 = vadd.f32 %v3045, %v3462
      %v3526 = vadd.f32 %v3046, %v3467
      %v3527 = vadd.f32 %v3047, %v3472
      %v3528 = vadd.f32 %v3048, %v3477
      %v3529 = vadd.f32 %v3049, %v3482
      %v3530 = vadd.f32 %v3050, %v3487
      %v3531 = vld [vmem:[%s246 + $0x2a] sm:$0xff]
      %v3532 = vld [vmem:[%s246 + $0x32] sm:$0xff]
      %v3533 = vld [vmem:[%s246 + $0x3a] sm:$0xff]
      %v3534 = vld [vmem:[%s246 + $0x42] sm:$0xff]
      %v3535 = vld [vmem:[%s246 + $0x4a] sm:$0xff]
      %v3536 = vld [vmem:[%s246 + $0x52] sm:$0xff]
      %v3537 = vld [vmem:[%s246 + $0x5a] sm:$0xff]
      %v3538 = vld [vmem:[%s246 + $0x62] sm:$0xff]
      %v3539 = vld [vmem:[%s246 + $0x6a] sm:$0xff]
      %v3540 = vld [vmem:[%s246 + $0x72] sm:$0xff]
      %v3541 = vld [vmem:[%s246 + $0x7a] sm:$0xff]
      %v3542 = vld [vmem:[%s246 + $0x82] sm:$0xff]
      %v3543 = vld [vmem:[%s246 + $0x8a] sm:$0xff]
      %v3544 = vld [vmem:[%s246 + $0x92] sm:$0xff]
      %v3545 = vld [vmem:[%s246 + $0x9a] sm:$0xff]
      %v3546 = vld [vmem:[%s246 + $0xa2] sm:$0xff]
      %v3547 = vld [vmem:[%s246 + $0xaa] sm:$0xff]
      %v3548 = vld [vmem:[%s246 + $0xb2] sm:$0xff]
      %v3549 = vld [vmem:[%s246 + $0xba] sm:$0xff]
      %v3550 = vld [vmem:[%s246 + $0xc2] sm:$0xff]
      %v3551 = vld [vmem:[%s246 + $0xca] sm:$0xff]
      %v3552 = vld [vmem:[%s246 + $0xd2] sm:$0xff]
      %v3553 = vld [vmem:[%s246 + $0xda] sm:$0xff]
      %v3554 = vld [vmem:[%s246 + $0xe2] sm:$0xff]
      %v3555 = vld [vmem:[%s246 + $0xea] sm:$0xff]
      %v3556 = vld [vmem:[%s246 + $0xf2] sm:$0xff]
      %v3557 = vld [vmem:[%s246 + $0xfa] sm:$0xff]
      %v3558 = vld [vmem:[%s246 + $0x102] sm:$0xff]
      %v3559 = vld [vmem:[%s246 + $0x10a] sm:$0xff]
      %v3560 = vld [vmem:[%s246 + $0x112] sm:$0xff]
      %v3561 = vld [vmem:[%s246 + $0x11a] sm:$0xff]
      %v3562 = vld [vmem:[%s246 + $0x122] sm:$0xff]
      %v3563 = vld [vmem:[%s246 + $0x12a] sm:$0xff]
      %v3564 = vld [vmem:[%s246 + $0x132] sm:$0xff]
      %v3565 = vld [vmem:[%s246 + $0x13a] sm:$0xff]
      %v3566 = vld [vmem:[%s246 + $0x142] sm:$0xff]
      %v3567 = vld [vmem:[%s246 + $0x14a] sm:$0xff]
      %v3568 = vld [vmem:[%s246 + $0x152] sm:$0xff]
      %v3569 = vld [vmem:[%s246 + $0x15a] sm:$0xff]
      %v3570 = vld [vmem:[%s246 + $0x162] sm:$0xff]
      %v3571 = vld [vmem:[%s246 + $0x16a] sm:$0xf]
      %s3572 = scalar_lea.vmem %s2, 28
      %v3573 = vld [vmem:[%s3572] sm:$0xf]
      %v3575 = vsel %vm337, %v3531, 0
      %v3578 = vsel %vm337, %v3532, 0
      %v3581 = vsel %vm337, %v3533, 0
      %v3584 = vsel %vm337, %v3534, 0
      %v3587 = vsel %vm337, %v3535, 0
      %v3590 = vsel %vm337, %v3536, 0
      %v3593 = vsel %vm337, %v3537, 0
      %v3596 = vsel %vm337, %v3538, 0
      %v3599 = vsel %vm337, %v3539, 0
      %v3602 = vsel %vm337, %v3540, 0
      %v3605 = vsel %vm337, %v3541, 0
      %v3608 = vsel %vm337, %v3542, 0
      %v3611 = vsel %vm337, %v3543, 0
      %v3614 = vsel %vm337, %v3544, 0
      %v3617 = vsel %vm337, %v3545, 0
      %v3620 = vsel %vm337, %v3546, 0
      %v3623 = vsel %vm337, %v3547, 0
      %v3626 = vsel %vm337, %v3548, 0
      %v3629 = vsel %vm337, %v3549, 0
      %v3632 = vsel %vm337, %v3550, 0
      %v3635 = vsel %vm337, %v3551, 0
      %v3638 = vsel %vm337, %v3552, 0
      %v3641 = vsel %vm337, %v3553, 0
      %v3644 = vsel %vm337, %v3554, 0
      %v3647 = vsel %vm337, %v3555, 0
      %v3650 = vsel %vm337, %v3556, 0
      %v3653 = vsel %vm337, %v3557, 0
      %v3656 = vsel %vm337, %v3558, 0
      %v3659 = vsel %vm337, %v3559, 0
      %v3662 = vsel %vm337, %v3560, 0
      %v3665 = vsel %vm337, %v3561, 0
      %v3668 = vsel %vm337, %v3562, 0
      %v3671 = vsel %vm337, %v3563, 0
      %v3674 = vsel %vm337, %v3564, 0
      %v3677 = vsel %vm337, %v3565, 0
      %v3680 = vsel %vm337, %v3566, 0
      %v3683 = vsel %vm337, %v3567, 0
      %v3686 = vsel %vm337, %v3568, 0
      %v3689 = vsel %vm337, %v3569, 0
      %v3692 = vsel %vm337, %v3570, 0
      %v3695 = vsel %vm337, %v3571, 0
      %v3698 = vsel %vm461, %v3573, 0
      %3700 = vmatprep.subr.mxu0 0.0
      %3701 = vmatpush1.msra.mxu0 %v3698
      %3702 = vmatprep.subr.mxu0 0.0
      %3703 = vmatpush1.msra.mxu0 0.0
      %3704 = vmatprep.subr.mxu0 0.0
      %3705 = vmatpush1.msra.mxu0 0.0
      %3706 = vmatprep.subr.mxu0 0.0
      %3707 = vmatpush1.msra.mxu0 0.0
      %3708 = vmatprep.subr.mxu0 0.0
      %3709 = vmatpush1.msra.mxu0 0.0
      %3710 = vmatprep.subr.mxu0 0.0
      %3711 = vmatpush1.msra.mxu0 0.0
      %3712 = vmatprep.subr.mxu0 0.0
      %3713 = vmatpush1.msra.mxu0 0.0
      %3714 = vmatprep.subr.mxu0 0.0
      %3715 = vmatpush1.msra.mxu0 0.0
      %3716 = vmatprep.subr.mxu0 0.0
      %3717 = vmatpush1.msra.mxu0 0.0
      %3718 = vmatprep.subr.mxu0 0.0
      %3719 = vmatpush1.msra.mxu0 0.0
      %3720 = vmatprep.subr.mxu0 0.0
      %3721 = vmatpush1.msra.mxu0 0.0
      %3722 = vmatprep.subr.mxu0 0.0
      %3723 = vmatpush1.msra.mxu0 0.0
      %3724 = vmatprep.subr.mxu0 0.0
      %3725 = vmatpush1.msra.mxu0 0.0
      %3726 = vmatprep.subr.mxu0 0.0
      %3727 = vmatpush1.msra.mxu0 0.0
      %3728 = vmatprep.subr.mxu0 0.0
      %3729 = vmatpush1.msra.mxu0 0.0
      %3730 = vmatprep.subr.mxu0 0.0
      %3731 = vmatpush1.msra.mxu0 0.0
      %3732 = vmatprep.subr.mxu0 0.0
      %3733 = vmatpush1.msra.mxu0 0.0
      %3734 = vmatprep.subr.mxu0 0.0
      %3735 = vmatpush1.msra.mxu0 0.0
      %3736 = vmatprep.subr.mxu0 0.0
      %3737 = vmatpush1.msra.mxu0 0.0
      %3738 = vmatprep.subr.mxu0 0.0
      %3739 = vmatpush1.msra.mxu0 0.0
      %3740 = vmatprep.subr.mxu0 0.0
      %3741 = vmatpush1.msra.mxu0 0.0
      %3742 = vmatprep.subr.mxu0 0.0
      %3743 = vmatpush1.msra.mxu0 0.0
      %3744 = vmatprep.subr.mxu0 0.0
      %3745 = vmatpush1.msra.mxu0 0.0
      %3746 = vmatprep.subr.mxu0 0.0
      %3747 = vmatpush1.msra.mxu0 0.0
      %3748 = vmatprep.subr.mxu0 0.0
      %3749 = vmatpush1.msra.mxu0 0.0
      %3750 = vmatprep.subr.mxu0 0.0
      %3751 = vmatpush1.msra.mxu0 0.0
      %3752 = vmatprep.subr.mxu0 0.0
      %3753 = vmatpush1.msra.mxu0 0.0
      %3754 = vmatprep.subr.mxu0 0.0
      %3755 = vmatpush1.msra.mxu0 0.0
      %3756 = vmatprep.subr.mxu0 0.0
      %3757 = vmatpush1.msra.mxu0 0.0
      %3758 = vmatprep.subr.mxu0 0.0
      %3759 = vmatpush1.msra.mxu0 0.0
      %3760 = vmatprep.subr.mxu0 0.0
      %3761 = vmatpush1.msra.mxu0 0.0
      %3762 = vmatprep.subr.mxu0 0.0
      %3763 = vmatpush1.msra.mxu0 0.0
      %3764 = vmatprep.mubr.f32.mxu0 0.0
      %3765 = vmatmul.mubr.f32.gmra.mrb[0].mxu0 %v3575
      %v3766 = vpop.f32.mrb[0].mxu0
      %v3767 = vadd.f32 0.0, %v3766
      %v3768 = vpop.f32.mrb[0].mxu0
      %3769 = vmatprep.mubr.f32.mxu0 0.0
      %3770 = vmatmul.mubr.f32.gmra.mrb[0].mxu0 %v3578
      %v3771 = vpop.f32.mrb[0].mxu0
      %v3772 = vadd.f32 0.0, %v3771
      %v3773 = vpop.f32.mrb[0].mxu0
      %3774 = vmatprep.mubr.f32.mxu0 0.0
      %3775 = vmatmul.mubr.f32.gmra.mrb[0].mxu0 %v3581
      %v3776 = vpop.f32.mrb[0].mxu0
      %v3777 = vadd.f32 0.0, %v3776
      %v3778 = vpop.f32.mrb[0].mxu0
      %3779 = vmatprep.mubr.f32.mxu0 0.0
      %3780 = vmatmul.mubr.f32.gmra.mrb[0].mxu0 %v3584
      %v3781 = vpop.f32.mrb[0].mxu0
      %v3782 = vadd.f32 0.0, %v3781
      %v3783 = vpop.f32.mrb[0].mxu0
      %3784 = vmatprep.mubr.f32.mxu0 0.0
      %3785 = vmatmul.mubr.f32.gmra.mrb[0].mxu0 %v3587
      %v3786 = vpop.f32.mrb[0].mxu0
      %v3787 = vadd.f32 0.0, %v3786
      %v3788 = vpop.f32.mrb[0].mxu0
      %3789 = vmatprep.mubr.f32.mxu0 0.0
      %3790 = vmatmul.mubr.f32.gmra.mrb[0].mxu0 %v3590
      %v3791 = vpop.f32.mrb[0].mxu0
      %v3792 = vadd.f32 0.0, %v3791
      %v3793 = vpop.f32.mrb[0].mxu0
      %3794 = vmatprep.mubr.f32.mxu0 0.0
      %3795 = vmatmul.mubr.f32.gmra.mrb[0].mxu0 %v3593
      %v3796 = vpop.f32.mrb[0].mxu0
      %v3797 = vadd.f32 0.0, %v3796
      %v3798 = vpop.f32.mrb[0].mxu0
      %3799 = vmatprep.mubr.f32.mxu0 0.0
      %3800 = vmatmul.mubr.f32.gmra.mrb[0].mxu0 %v3596
      %v3801 = vpop.f32.mrb[0].mxu0
      %v3802 = vadd.f32 0.0, %v3801
      %v3803 = vpop.f32.mrb[0].mxu0
      %3804 = vmatprep.mubr.f32.mxu0 0.0
      %3805 = vmatmul.mubr.f32.gmra.mrb[0].mxu0 %v3599
      %v3806 = vpop.f32.mrb[0].mxu0
      %v3807 = vadd.f32 0.0, %v3806
      %v3808 = vpop.f32.mrb[0].mxu0
      %3809 = vmatprep.mubr.f32.mxu0 0.0
      %3810 = vmatmul.mubr.f32.gmra.mrb[0].mxu0 %v3602
      %v3811 = vpop.f32.mrb[0].mxu0
      %v3812 = vadd.f32 0.0, %v3811
      %v3813 = vpop.f32.mrb[0].mxu0
      %3814 = vmatprep.mubr.f32.mxu0 0.0
      %3815 = vmatmul.mubr.f32.gmra.mrb[0].mxu0 %v3605
      %v3816 = vpop.f32.mrb[0].mxu0
      %v3817 = vadd.f32 0.0, %v3816
      %v3818 = vpop.f32.mrb[0].mxu0
      %3819 = vmatprep.mubr.f32.mxu0 0.0
      %3820 = vmatmul.mubr.f32.gmra.mrb[0].mxu0 %v3608
      %v3821 = vpop.f32.mrb[0].mxu0
      %v3822 = vadd.f32 0.0, %v3821
      %v3823 = vpop.f32.mrb[0].mxu0
      %3824 = vmatprep.mubr.f32.mxu0 0.0
      %3825 = vmatmul.mubr.f32.gmra.mrb[0].mxu0 %v3611
      %v3826 = vpop.f32.mrb[0].mxu0
      %v3827 = vadd.f32 0.0, %v3826
      %v3828 = vpop.f32.mrb[0].mxu0
      %3829 = vmatprep.mubr.f32.mxu0 0.0
      %3830 = vmatmul.mubr.f32.gmra.mrb[0].mxu0 %v3614
      %v3831 = vpop.f32.mrb[0].mxu0
      %v3832 = vadd.f32 0.0, %v3831
      %v3833 = vpop.f32.mrb[0].mxu0
      %3834 = vmatprep.mubr.f32.mxu0 0.0
      %3835 = vmatmul.mubr.f32.gmra.mrb[0].mxu0 %v3617
      %v3836 = vpop.f32.mrb[0].mxu0
      %v3837 = vadd.f32 0.0, %v3836
      %v3838 = vpop.f32.mrb[0].mxu0
      %3839 = vmatprep.mubr.f32.mxu0 0.0
      %3840 = vmatmul.mubr.f32.gmra.mrb[0].mxu0 %v3620
      %v3841 = vpop.f32.mrb[0].mxu0
      %v3842 = vadd.f32 0.0, %v3841
      %v3843 = vpop.f32.mrb[0].mxu0
      %3844 = vmatprep.mubr.f32.mxu0 0.0
      %3845 = vmatmul.mubr.f32.gmra.mrb[0].mxu0 %v3623
      %v3846 = vpop.f32.mrb[0].mxu0
      %v3847 = vadd.f32 0.0, %v3846
      %v3848 = vpop.f32.mrb[0].mxu0
      %3849 = vmatprep.mubr.f32.mxu0 0.0
      %3850 = vmatmul.mubr.f32.gmra.mrb[0].mxu0 %v3626
      %v3851 = vpop.f32.mrb[0].mxu0
      %v3852 = vadd.f32 0.0, %v3851
      %v3853 = vpop.f32.mrb[0].mxu0
      %3854 = vmatprep.mubr.f32.mxu0 0.0
      %3855 = vmatmul.mubr.f32.gmra.mrb[0].mxu0 %v3629
      %v3856 = vpop.f32.mrb[0].mxu0
      %v3857 = vadd.f32 0.0, %v3856
      %v3858 = vpop.f32.mrb[0].mxu0
      %3859 = vmatprep.mubr.f32.mxu0 0.0
      %3860 = vmatmul.mubr.f32.gmra.mrb[0].mxu0 %v3632
      %v3861 = vpop.f32.mrb[0].mxu0
      %v3862 = vadd.f32 0.0, %v3861
      %v3863 = vpop.f32.mrb[0].mxu0
      %3864 = vmatprep.mubr.f32.mxu0 0.0
      %3865 = vmatmul.mubr.f32.gmra.mrb[0].mxu0 %v3635
      %v3866 = vpop.f32.mrb[0].mxu0
      %v3867 = vadd.f32 0.0, %v3866
      %v3868 = vpop.f32.mrb[0].mxu0
      %3869 = vmatprep.mubr.f32.mxu0 0.0
      %3870 = vmatmul.mubr.f32.gmra.mrb[0].mxu0 %v3638
      %v3871 = vpop.f32.mrb[0].mxu0
      %v3872 = vadd.f32 0.0, %v3871
      %v3873 = vpop.f32.mrb[0].mxu0
      %3874 = vmatprep.mubr.f32.mxu0 0.0
      %3875 = vmatmul.mubr.f32.gmra.mrb[0].mxu0 %v3641
      %v3876 = vpop.f32.mrb[0].mxu0
      %v3877 = vadd.f32 0.0, %v3876
      %v3878 = vpop.f32.mrb[0].mxu0
      %3879 = vmatprep.mubr.f32.mxu0 0.0
      %3880 = vmatmul.mubr.f32.gmra.mrb[0].mxu0 %v3644
      %v3881 = vpop.f32.mrb[0].mxu0
      %v3882 = vadd.f32 0.0, %v3881
      %v3883 = vpop.f32.mrb[0].mxu0
      %3884 = vmatprep.mubr.f32.mxu0 0.0
      %3885 = vmatmul.mubr.f32.gmra.mrb[0].mxu0 %v3647
      %v3886 = vpop.f32.mrb[0].mxu0
      %v3887 = vadd.f32 0.0, %v3886
      %v3888 = vpop.f32.mrb[0].mxu0
      %3889 = vmatprep.mubr.f32.mxu0 0.0
      %3890 = vmatmul.mubr.f32.gmra.mrb[0].mxu0 %v3650
      %v3891 = vpop.f32.mrb[0].mxu0
      %v3892 = vadd.f32 0.0, %v3891
      %v3893 = vpop.f32.mrb[0].mxu0
      %3894 = vmatprep.mubr.f32.mxu0 0.0
      %3895 = vmatmul.mubr.f32.gmra.mrb[0].mxu0 %v3653
      %v3896 = vpop.f32.mrb[0].mxu0
      %v3897 = vadd.f32 0.0, %v3896
      %v3898 = vpop.f32.mrb[0].mxu0
      %3899 = vmatprep.mubr.f32.mxu0 0.0
      %3900 = vmatmul.mubr.f32.gmra.mrb[0].mxu0 %v3656
      %v3901 = vpop.f32.mrb[0].mxu0
      %v3902 = vadd.f32 0.0, %v3901
      %v3903 = vpop.f32.mrb[0].mxu0
      %3904 = vmatprep.mubr.f32.mxu0 0.0
      %3905 = vmatmul.mubr.f32.gmra.mrb[0].mxu0 %v3659
      %v3906 = vpop.f32.mrb[0].mxu0
      %v3907 = vadd.f32 0.0, %v3906
      %v3908 = vpop.f32.mrb[0].mxu0
      %3909 = vmatprep.mubr.f32.mxu0 0.0
      %3910 = vmatmul.mubr.f32.gmra.mrb[0].mxu0 %v3662
      %v3911 = vpop.f32.mrb[0].mxu0
      %v3912 = vadd.f32 0.0, %v3911
      %v3913 = vpop.f32.mrb[0].mxu0
      %3914 = vmatprep.mubr.f32.mxu0 0.0
      %3915 = vmatmul.mubr.f32.gmra.mrb[0].mxu0 %v3665
      %v3916 = vpop.f32.mrb[0].mxu0
      %v3917 = vadd.f32 0.0, %v3916
      %v3918 = vpop.f32.mrb[0].mxu0
      %3919 = vmatprep.mubr.f32.mxu0 0.0
      %3920 = vmatmul.mubr.f32.gmra.mrb[0].mxu0 %v3668
      %v3921 = vpop.f32.mrb[0].mxu0
      %v3922 = vadd.f32 0.0, %v3921
      %v3923 = vpop.f32.mrb[0].mxu0
      %3924 = vmatprep.mubr.f32.mxu0 0.0
      %3925 = vmatmul.mubr.f32.gmra.mrb[0].mxu0 %v3671
      %v3926 = vpop.f32.mrb[0].mxu0
      %v3927 = vadd.f32 0.0, %v3926
      %v3928 = vpop.f32.mrb[0].mxu0
      %3929 = vmatprep.mubr.f32.mxu0 0.0
      %3930 = vmatmul.mubr.f32.gmra.mrb[0].mxu0 %v3674
      %v3931 = vpop.f32.mrb[0].mxu0
      %v3932 = vadd.f32 0.0, %v3931
      %v3933 = vpop.f32.mrb[0].mxu0
      %3934 = vmatprep.mubr.f32.mxu0 0.0
      %3935 = vmatmul.mubr.f32.gmra.mrb[0].mxu0 %v3677
      %v3936 = vpop.f32.mrb[0].mxu0
      %v3937 = vadd.f32 0.0, %v3936
      %v3938 = vpop.f32.mrb[0].mxu0
      %3939 = vmatprep.mubr.f32.mxu0 0.0
      %3940 = vmatmul.mubr.f32.gmra.mrb[0].mxu0 %v3680
      %v3941 = vpop.f32.mrb[0].mxu0
      %v3942 = vadd.f32 0.0, %v3941
      %v3943 = vpop.f32.mrb[0].mxu0
      %3944 = vmatprep.mubr.f32.mxu0 0.0
      %3945 = vmatmul.mubr.f32.gmra.mrb[0].mxu0 %v3683
      %v3946 = vpop.f32.mrb[0].mxu0
      %v3947 = vadd.f32 0.0, %v3946
      %v3948 = vpop.f32.mrb[0].mxu0
      %3949 = vmatprep.mubr.f32.mxu0 0.0
      %3950 = vmatmul.mubr.f32.gmra.mrb[0].mxu0 %v3686
      %v3951 = vpop.f32.mrb[0].mxu0
      %v3952 = vadd.f32 0.0, %v3951
      %v3953 = vpop.f32.mrb[0].mxu0
      %3954 = vmatprep.mubr.f32.mxu0 0.0
      %3955 = vmatmul.mubr.f32.gmra.mrb[0].mxu0 %v3689
      %v3956 = vpop.f32.mrb[0].mxu0
      %v3957 = vadd.f32 0.0, %v3956
      %v3958 = vpop.f32.mrb[0].mxu0
      %3959 = vmatprep.mubr.f32.mxu0 0.0
      %3960 = vmatmul.mubr.f32.gmra.mrb[0].mxu0 %v3692
      %v3961 = vpop.f32.mrb[0].mxu0
      %v3962 = vadd.f32 0.0, %v3961
      %v3963 = vpop.f32.mrb[0].mxu0
      %3964 = vmatprep.mubr.f32.mxu0 0.0
      %3965 = vmatmul.mubr.f32.gmra.mrb[0].mxu0 %v3695
      %v3966 = vpop.f32.mrb[0].mxu0
      %v3967 = vadd.f32 0.0, %v3966
      %v3968 = vpop.f32.mrb[0].mxu0
      %3969 = vdwg.mxu0
      %v3970 = vadd.f32 %v3490, %v3767
      %v3971 = vadd.f32 %v3491, %v3772
      %v3972 = vadd.f32 %v3492, %v3777
      %v3973 = vadd.f32 %v3493, %v3782
      %v3974 = vadd.f32 %v3494, %v3787
      %v3975 = vadd.f32 %v3495, %v3792
      %v3976 = vadd.f32 %v3496, %v3797
      %v3977 = vadd.f32 %v3497, %v3802
      %v3978 = vadd.f32 %v3498, %v3807
      %v3979 = vadd.f32 %v3499, %v3812
      %v3980 = vadd.f32 %v3500, %v3817
      %v3981 = vadd.f32 %v3501, %v3822
      %v3982 = vadd.f32 %v3502, %v3827
      %v3983 = vadd.f32 %v3503, %v3832
      %v3984 = vadd.f32 %v3504, %v3837
      %v3985 = vadd.f32 %v3505, %v3842
      %v3986 = vadd.f32 %v3506, %v3847
      %v3987 = vadd.f32 %v3507, %v3852
      %v3988 = vadd.f32 %v3508, %v3857
      %v3989 = vadd.f32 %v3509, %v3862
      %v3990 = vadd.f32 %v3510, %v3867
      %v3991 = vadd.f32 %v3511, %v3872
      %v3992 = vadd.f32 %v3512, %v3877
      %v3993 = vadd.f32 %v3513, %v3882
      %v3994 = vadd.f32 %v3514, %v3887
      %v3995 = vadd.f32 %v3515, %v3892
      %v3996 = vadd.f32 %v3516, %v3897
      %v3997 = vadd.f32 %v3517, %v3902
      %v3998 = vadd.f32 %v3518, %v3907
      %v3999 = vadd.f32 %v3519, %v3912
      %v4000 = vadd.f32 %v3520, %v3917
      %v4001 = vadd.f32 %v3521, %v3922
      %v4002 = vadd.f32 %v3522, %v3927
      %v4003 = vadd.f32 %v3523, %v3932
      %v4004 = vadd.f32 %v3524, %v3937
      %v4005 = vadd.f32 %v3525, %v3942
      %v4006 = vadd.f32 %v3526, %v3947
      %v4007 = vadd.f32 %v3527, %v3952
      %v4008 = vadd.f32 %v3528, %v3957
      %v4009 = vadd.f32 %v3529, %v3962
      %v4010 = vadd.f32 %v3530, %v3967
      %v4011 = vld [vmem:[%s246 + $0x2b] sm:$0xff]
      %v4012 = vld [vmem:[%s246 + $0x33] sm:$0xff]
      %v4013 = vld [vmem:[%s246 + $0x3b] sm:$0xff]
      %v4014 = vld [vmem:[%s246 + $0x43] sm:$0xff]
      %v4015 = vld [vmem:[%s246 + $0x4b] sm:$0xff]
      %v4016 = vld [vmem:[%s246 + $0x53] sm:$0xff]
      %v4017 = vld [vmem:[%s246 + $0x5b] sm:$0xff]
      %v4018 = vld [vmem:[%s246 + $0x63] sm:$0xff]
      %v4019 = vld [vmem:[%s246 + $0x6b] sm:$0xff]
      %v4020 = vld [vmem:[%s246 + $0x73] sm:$0xff]
      %v4021 = vld [vmem:[%s246 + $0x7b] sm:$0xff]
      %v4022 = vld [vmem:[%s246 + $0x83] sm:$0xff]
      %v4023 = vld [vmem:[%s246 + $0x8b] sm:$0xff]
      %v4024 = vld [vmem:[%s246 + $0x93] sm:$0xff]
      %v4025 = vld [vmem:[%s246 + $0x9b] sm:$0xff]
      %v4026 = vld [vmem:[%s246 + $0xa3] sm:$0xff]
      %v4027 = vld [vmem:[%s246 + $0xab] sm:$0xff]
      %v4028 = vld [vmem:[%s246 + $0xb3] sm:$0xff]
      %v4029 = vld [vmem:[%s246 + $0xbb] sm:$0xff]
      %v4030 = vld [vmem:[%s246 + $0xc3] sm:$0xff]
      %v4031 = vld [vmem:[%s246 + $0xcb] sm:$0xff]
      %v4032 = vld [vmem:[%s246 + $0xd3] sm:$0xff]
      %v4033 = vld [vmem:[%s246 + $0xdb] sm:$0xff]
      %v4034 = vld [vmem:[%s246 + $0xe3] sm:$0xff]
      %v4035 = vld [vmem:[%s246 + $0xeb] sm:$0xff]
      %v4036 = vld [vmem:[%s246 + $0xf3] sm:$0xff]
      %v4037 = vld [vmem:[%s246 + $0xfb] sm:$0xff]
      %v4038 = vld [vmem:[%s246 + $0x103] sm:$0xff]
      %v4039 = vld [vmem:[%s246 + $0x10b] sm:$0xff]
      %v4040 = vld [vmem:[%s246 + $0x113] sm:$0xff]
      %v4041 = vld [vmem:[%s246 + $0x11b] sm:$0xff]
      %v4042 = vld [vmem:[%s246 + $0x123] sm:$0xff]
      %v4043 = vld [vmem:[%s246 + $0x12b] sm:$0xff]
      %v4044 = vld [vmem:[%s246 + $0x133] sm:$0xff]
      %v4045 = vld [vmem:[%s246 + $0x13b] sm:$0xff]
      %v4046 = vld [vmem:[%s246 + $0x143] sm:$0xff]
      %v4047 = vld [vmem:[%s246 + $0x14b] sm:$0xff]
      %v4048 = vld [vmem:[%s246 + $0x153] sm:$0xff]
      %v4049 = vld [vmem:[%s246 + $0x15b] sm:$0xff]
      %v4050 = vld [vmem:[%s246 + $0x163] sm:$0xff]
      %v4051 = vld [vmem:[%s246 + $0x16b] sm:$0xf]
      %s4052 = scalar_lea.vmem %s2, 32
      %v4053 = vld [vmem:[%s4052] sm:$0xf]
      %v4055 = vsel %vm337, %v4011, 0
      %v4058 = vsel %vm337, %v4012, 0
      %v4061 = vsel %vm337, %v4013, 0
      %v4064 = vsel %vm337, %v4014, 0
      %v4067 = vsel %vm337, %v4015, 0
      %v4070 = vsel %vm337, %v4016, 0
      %v4073 = vsel %vm337, %v4017, 0
      %v4076 = vsel %vm337, %v4018, 0
      %v4079 = vsel %vm337, %v4019, 0
      %v4082 = vsel %vm337, %v4020, 0
      %v4085 = vsel %vm337, %v4021, 0
      %v4088 = vsel %vm337, %v4022, 0
      %v4091 = vsel %vm337, %v4023, 0
      %v4094 = vsel %vm337, %v4024, 0
      %v4097 = vsel %vm337, %v4025, 0
      %v4100 = vsel %vm337, %v4026, 0
      %v4103 = vsel %vm337, %v4027, 0
      %v4106 = vsel %vm337, %v4028, 0
      %v4109 = vsel %vm337, %v4029, 0
      %v4112 = vsel %vm337, %v4030, 0
      %v4115 = vsel %vm337, %v4031, 0
      %v4118 = vsel %vm337, %v4032, 0
      %v4121 = vsel %vm337, %v4033, 0
      %v4124 = vsel %vm337, %v4034, 0
      %v4127 = vsel %vm337, %v4035, 0
      %v4130 = vsel %vm337, %v4036, 0
      %v4133 = vsel %vm337, %v4037, 0
      %v4136 = vsel %vm337, %v4038, 0
      %v4139 = vsel %vm337, %v4039, 0
      %v4142 = vsel %vm337, %v4040, 0
      %v4145 = vsel %vm337, %v4041, 0
      %v4148 = vsel %vm337, %v4042, 0
      %v4151 = vsel %vm337, %v4043, 0
      %v4154 = vsel %vm337, %v4044, 0
      %v4157 = vsel %vm337, %v4045, 0
      %v4160 = vsel %vm337, %v4046, 0
      %v4163 = vsel %vm337, %v4047, 0
      %v4166 = vsel %vm337, %v4048, 0
      %v4169 = vsel %vm337, %v4049, 0
      %v4172 = vsel %vm337, %v4050, 0
      %v4175 = vsel %vm337, %v4051, 0
      %v4178 = vsel %vm461, %v4053, 0
      %4180 = vmatprep.subr.mxu0 0.0
      %4181 = vmatpush1.msra.mxu0 %v4178
      %4182 = vmatprep.subr.mxu0 0.0
      %4183 = vmatpush1.msra.mxu0 0.0
      %4184 = vmatprep.subr.mxu0 0.0
      %4185 = vmatpush1.msra.mxu0 0.0
      %4186 = vmatprep.subr.mxu0 0.0
      %4187 = vmatpush1.msra.mxu0 0.0
      %4188 = vmatprep.subr.mxu0 0.0
      %4189 = vmatpush1.msra.mxu0 0.0
      %4190 = vmatprep.subr.mxu0 0.0
      %4191 = vmatpush1.msra.mxu0 0.0
      %4192 = vmatprep.subr.mxu0 0.0
      %4193 = vmatpush1.msra.mxu0 0.0
      %4194 = vmatprep.subr.mxu0 0.0
      %4195 = vmatpush1.msra.mxu0 0.0
      %4196 = vmatprep.subr.mxu0 0.0
      %4197 = vmatpush1.msra.mxu0 0.0
      %4198 = vmatprep.subr.mxu0 0.0
      %4199 = vmatpush1.msra.mxu0 0.0
      %4200 = vmatprep.subr.mxu0 0.0
      %4201 = vmatpush1.msra.mxu0 0.0
      %4202 = vmatprep.subr.mxu0 0.0
      %4203 = vmatpush1.msra.mxu0 0.0
      %4204 = vmatprep.subr.mxu0 0.0
      %4205 = vmatpush1.msra.mxu0 0.0
      %4206 = vmatprep.subr.mxu0 0.0
      %4207 = vmatpush1.msra.mxu0 0.0
      %4208 = vmatprep.subr.mxu0 0.0
      %4209 = vmatpush1.msra.mxu0 0.0
      %4210 = vmatprep.subr.mxu0 0.0
      %4211 = vmatpush1.msra.mxu0 0.0
      %4212 = vmatprep.subr.mxu0 0.0
      %4213 = vmatpush1.msra.mxu0 0.0
      %4214 = vmatprep.subr.mxu0 0.0
      %4215 = vmatpush1.msra.mxu0 0.0
      %4216 = vmatprep.subr.mxu0 0.0
      %4217 = vmatpush1.msra.mxu0 0.0
      %4218 = vmatprep.subr.mxu0 0.0
      %4219 = vmatpush1.msra.mxu0 0.0
      %4220 = vmatprep.subr.mxu0 0.0
      %4221 = vmatpush1.msra.mxu0 0.0
      %4222 = vmatprep.subr.mxu0 0.0
      %4223 = vmatpush1.msra.mxu0 0.0
      %4224 = vmatprep.subr.mxu0 0.0
      %4225 = vmatpush1.msra.mxu0 0.0
      %4226 = vmatprep.subr.mxu0 0.0
      %4227 = vmatpush1.msra.mxu0 0.0
      %4228 = vmatprep.subr.mxu0 0.0
      %4229 = vmatpush1.msra.mxu0 0.0
      %4230 = vmatprep.subr.mxu0 0.0
      %4231 = vmatpush1.msra.mxu0 0.0
      %4232 = vmatprep.subr.mxu0 0.0
      %4233 = vmatpush1.msra.mxu0 0.0
      %4234 = vmatprep.subr.mxu0 0.0
      %4235 = vmatpush1.msra.mxu0 0.0
      %4236 = vmatprep.subr.mxu0 0.0
      %4237 = vmatpush1.msra.mxu0 0.0
      %4238 = vmatprep.subr.mxu0 0.0
      %4239 = vmatpush1.msra.mxu0 0.0
      %4240 = vmatprep.subr.mxu0 0.0
      %4241 = vmatpush1.msra.mxu0 0.0
      %4242 = vmatprep.subr.mxu0 0.0
      %4243 = vmatpush1.msra.mxu0 0.0
      %4244 = vmatprep.mubr.f32.mxu0 0.0
      %4245 = vmatmul.mubr.f32.gmra.mrb[0].mxu0 %v4055
      %v4246 = vpop.f32.mrb[0].mxu0
      %v4247 = vadd.f32 0.0, %v4246
      %v4248 = vpop.f32.mrb[0].mxu0
      %4249 = vmatprep.mubr.f32.mxu0 0.0
      %4250 = vmatmul.mubr.f32.gmra.mrb[0].mxu0 %v4058
      %v4251 = vpop.f32.mrb[0].mxu0
      %v4252 = vadd.f32 0.0, %v4251
      %v4253 = vpop.f32.mrb[0].mxu0
      %4254 = vmatprep.mubr.f32.mxu0 0.0
      %4255 = vmatmul.mubr.f32.gmra.mrb[0].mxu0 %v4061
      %v4256 = vpop.f32.mrb[0].mxu0
      %v4257 = vadd.f32 0.0, %v4256
      %v4258 = vpop.f32.mrb[0].mxu0
      %4259 = vmatprep.mubr.f32.mxu0 0.0
      %4260 = vmatmul.mubr.f32.gmra.mrb[0].mxu0 %v4064
      %v4261 = vpop.f32.mrb[0].mxu0
      %v4262 = vadd.f32 0.0, %v4261
      %v4263 = vpop.f32.mrb[0].mxu0
      %4264 = vmatprep.mubr.f32.mxu0 0.0
      %4265 = vmatmul.mubr.f32.gmra.mrb[0].mxu0 %v4067
      %v4266 = vpop.f32.mrb[0].mxu0
      %v4267 = vadd.f32 0.0, %v4266
      %v4268 = vpop.f32.mrb[0].mxu0
      %4269 = vmatprep.mubr.f32.mxu0 0.0
      %4270 = vmatmul.mubr.f32.gmra.mrb[0].mxu0 %v4070
      %v4271 = vpop.f32.mrb[0].mxu0
      %v4272 = vadd.f32 0.0, %v4271
      %v4273 = vpop.f32.mrb[0].mxu0
      %4274 = vmatprep.mubr.f32.mxu0 0.0
      %4275 = vmatmul.mubr.f32.gmra.mrb[0].mxu0 %v4073
      %v4276 = vpop.f32.mrb[0].mxu0
      %v4277 = vadd.f32 0.0, %v4276
      %v4278 = vpop.f32.mrb[0].mxu0
      %4279 = vmatprep.mubr.f32.mxu0 0.0
      %4280 = vmatmul.mubr.f32.gmra.mrb[0].mxu0 %v4076
      %v4281 = vpop.f32.mrb[0].mxu0
      %v4282 = vadd.f32 0.0, %v4281
      %v4283 = vpop.f32.mrb[0].mxu0
      %4284 = vmatprep.mubr.f32.mxu0 0.0
      %4285 = vmatmul.mubr.f32.gmra.mrb[0].mxu0 %v4079
      %v4286 = vpop.f32.mrb[0].mxu0
      %v4287 = vadd.f32 0.0, %v4286
      %v4288 = vpop.f32.mrb[0].mxu0
      %4289 = vmatprep.mubr.f32.mxu0 0.0
      %4290 = vmatmul.mubr.f32.gmra.mrb[0].mxu0 %v4082
      %v4291 = vpop.f32.mrb[0].mxu0
      %v4292 = vadd.f32 0.0, %v4291
      %v4293 = vpop.f32.mrb[0].mxu0
      %4294 = vmatprep.mubr.f32.mxu0 0.0
      %4295 = vmatmul.mubr.f32.gmra.mrb[0].mxu0 %v4085
      %v4296 = vpop.f32.mrb[0].mxu0
      %v4297 = vadd.f32 0.0, %v4296
      %v4298 = vpop.f32.mrb[0].mxu0
      %4299 = vmatprep.mubr.f32.mxu0 0.0
      %4300 = vmatmul.mubr.f32.gmra.mrb[0].mxu0 %v4088
      %v4301 = vpop.f32.mrb[0].mxu0
      %v4302 = vadd.f32 0.0, %v4301
      %v4303 = vpop.f32.mrb[0].mxu0
      %4304 = vmatprep.mubr.f32.mxu0 0.0
      %4305 = vmatmul.mubr.f32.gmra.mrb[0].mxu0 %v4091
      %v4306 = vpop.f32.mrb[0].mxu0
      %v4307 = vadd.f32 0.0, %v4306
      %v4308 = vpop.f32.mrb[0].mxu0
      %4309 = vmatprep.mubr.f32.mxu0 0.0
      %4310 = vmatmul.mubr.f32.gmra.mrb[0].mxu0 %v4094
      %v4311 = vpop.f32.mrb[0].mxu0
      %v4312 = vadd.f32 0.0, %v4311
      %v4313 = vpop.f32.mrb[0].mxu0
      %4314 = vmatprep.mubr.f32.mxu0 0.0
      %4315 = vmatmul.mubr.f32.gmra.mrb[0].mxu0 %v4097
      %v4316 = vpop.f32.mrb[0].mxu0
      %v4317 = vadd.f32 0.0, %v4316
      %v4318 = vpop.f32.mrb[0].mxu0
      %4319 = vmatprep.mubr.f32.mxu0 0.0
      %4320 = vmatmul.mubr.f32.gmra.mrb[0].mxu0 %v4100
      %v4321 = vpop.f32.mrb[0].mxu0
      %v4322 = vadd.f32 0.0, %v4321
      %v4323 = vpop.f32.mrb[0].mxu0
      %4324 = vmatprep.mubr.f32.mxu0 0.0
      %4325 = vmatmul.mubr.f32.gmra.mrb[0].mxu0 %v4103
      %v4326 = vpop.f32.mrb[0].mxu0
      %v4327 = vadd.f32 0.0, %v4326
      %v4328 = vpop.f32.mrb[0].mxu0
      %4329 = vmatprep.mubr.f32.mxu0 0.0
      %4330 = vmatmul.mubr.f32.gmra.mrb[0].mxu0 %v4106
      %v4331 = vpop.f32.mrb[0].mxu0
      %v4332 = vadd.f32 0.0, %v4331
      %v4333 = vpop.f32.mrb[0].mxu0
      %4334 = vmatprep.mubr.f32.mxu0 0.0
      %4335 = vmatmul.mubr.f32.gmra.mrb[0].mxu0 %v4109
      %v4336 = vpop.f32.mrb[0].mxu0
      %v4337 = vadd.f32 0.0, %v4336
      %v4338 = vpop.f32.mrb[0].mxu0
      %4339 = vmatprep.mubr.f32.mxu0 0.0
      %4340 = vmatmul.mubr.f32.gmra.mrb[0].mxu0 %v4112
      %v4341 = vpop.f32.mrb[0].mxu0
      %v4342 = vadd.f32 0.0, %v4341
      %v4343 = vpop.f32.mrb[0].mxu0
      %4344 = vmatprep.mubr.f32.mxu0 0.0
      %4345 = vmatmul.mubr.f32.gmra.mrb[0].mxu0 %v4115
      %v4346 = vpop.f32.mrb[0].mxu0
      %v4347 = vadd.f32 0.0, %v4346
      %v4348 = vpop.f32.mrb[0].mxu0
      %4349 = vmatprep.mubr.f32.mxu0 0.0
      %4350 = vmatmul.mubr.f32.gmra.mrb[0].mxu0 %v4118
      %v4351 = vpop.f32.mrb[0].mxu0
      %v4352 = vadd.f32 0.0, %v4351
      %v4353 = vpop.f32.mrb[0].mxu0
      %4354 = vmatprep.mubr.f32.mxu0 0.0
      %4355 = vmatmul.mubr.f32.gmra.mrb[0].mxu0 %v4121
      %v4356 = vpop.f32.mrb[0].mxu0
      %v4357 = vadd.f32 0.0, %v4356
      %v4358 = vpop.f32.mrb[0].mxu0
      %4359 = vmatprep.mubr.f32.mxu0 0.0
      %4360 = vmatmul.mubr.f32.gmra.mrb[0].mxu0 %v4124
      %v4361 = vpop.f32.mrb[0].mxu0
      %v4362 = vadd.f32 0.0, %v4361
      %v4363 = vpop.f32.mrb[0].mxu0
      %4364 = vmatprep.mubr.f32.mxu0 0.0
      %4365 = vmatmul.mubr.f32.gmra.mrb[0].mxu0 %v4127
      %v4366 = vpop.f32.mrb[0].mxu0
      %v4367 = vadd.f32 0.0, %v4366
      %v4368 = vpop.f32.mrb[0].mxu0
      %4369 = vmatprep.mubr.f32.mxu0 0.0
      %4370 = vmatmul.mubr.f32.gmra.mrb[0].mxu0 %v4130
      %v4371 = vpop.f32.mrb[0].mxu0
      %v4372 = vadd.f32 0.0, %v4371
      %v4373 = vpop.f32.mrb[0].mxu0
      %4374 = vmatprep.mubr.f32.mxu0 0.0
      %4375 = vmatmul.mubr.f32.gmra.mrb[0].mxu0 %v4133
      %v4376 = vpop.f32.mrb[0].mxu0
      %v4377 = vadd.f32 0.0, %v4376
      %v4378 = vpop.f32.mrb[0].mxu0
      %4379 = vmatprep.mubr.f32.mxu0 0.0
      %4380 = vmatmul.mubr.f32.gmra.mrb[0].mxu0 %v4136
      %v4381 = vpop.f32.mrb[0].mxu0
      %v4382 = vadd.f32 0.0, %v4381
      %v4383 = vpop.f32.mrb[0].mxu0
      %4384 = vmatprep.mubr.f32.mxu0 0.0
      %4385 = vmatmul.mubr.f32.gmra.mrb[0].mxu0 %v4139
      %v4386 = vpop.f32.mrb[0].mxu0
      %v4387 = vadd.f32 0.0, %v4386
      %v4388 = vpop.f32.mrb[0].mxu0
      %4389 = vmatprep.mubr.f32.mxu0 0.0
      %4390 = vmatmul.mubr.f32.gmra.mrb[0].mxu0 %v4142
      %v4391 = vpop.f32.mrb[0].mxu0
      %v4392 = vadd.f32 0.0, %v4391
      %v4393 = vpop.f32.mrb[0].mxu0
      %4394 = vmatprep.mubr.f32.mxu0 0.0
      %4395 = vmatmul.mubr.f32.gmra.mrb[0].mxu0 %v4145
      %v4396 = vpop.f32.mrb[0].mxu0
      %v4397 = vadd.f32 0.0, %v4396
      %v4398 = vpop.f32.mrb[0].mxu0
      %4399 = vmatprep.mubr.f32.mxu0 0.0
      %4400 = vmatmul.mubr.f32.gmra.mrb[0].mxu0 %v4148
      %v4401 = vpop.f32.mrb[0].mxu0
      %v4402 = vadd.f32 0.0, %v4401
      %v4403 = vpop.f32.mrb[0].mxu0
      %4404 = vmatprep.mubr.f32.mxu0 0.0
      %4405 = vmatmul.mubr.f32.gmra.mrb[0].mxu0 %v4151
      %v4406 = vpop.f32.mrb[0].mxu0
      %v4407 = vadd.f32 0.0, %v4406
      %v4408 = vpop.f32.mrb[0].mxu0
      %4409 = vmatprep.mubr.f32.mxu0 0.0
      %4410 = vmatmul.mubr.f32.gmra.mrb[0].mxu0 %v4154
      %v4411 = vpop.f32.mrb[0].mxu0
      %v4412 = vadd.f32 0.0, %v4411
      %v4413 = vpop.f32.mrb[0].mxu0
      %4414 = vmatprep.mubr.f32.mxu0 0.0
      %4415 = vmatmul.mubr.f32.gmra.mrb[0].mxu0 %v4157
      %v4416 = vpop.f32.mrb[0].mxu0
      %v4417 = vadd.f32 0.0, %v4416
      %v4418 = vpop.f32.mrb[0].mxu0
      %4419 = vmatprep.mubr.f32.mxu0 0.0
      %4420 = vmatmul.mubr.f32.gmra.mrb[0].mxu0 %v4160
      %v4421 = vpop.f32.mrb[0].mxu0
      %v4422 = vadd.f32 0.0, %v4421
      %v4423 = vpop.f32.mrb[0].mxu0
      %4424 = vmatprep.mubr.f32.mxu0 0.0
      %4425 = vmatmul.mubr.f32.gmra.mrb[0].mxu0 %v4163
      %v4426 = vpop.f32.mrb[0].mxu0
      %v4427 = vadd.f32 0.0, %v4426
      %v4428 = vpop.f32.mrb[0].mxu0
      %4429 = vmatprep.mubr.f32.mxu0 0.0
      %4430 = vmatmul.mubr.f32.gmra.mrb[0].mxu0 %v4166
      %v4431 = vpop.f32.mrb[0].mxu0
      %v4432 = vadd.f32 0.0, %v4431
      %v4433 = vpop.f32.mrb[0].mxu0
      %4434 = vmatprep.mubr.f32.mxu0 0.0
      %4435 = vmatmul.mubr.f32.gmra.mrb[0].mxu0 %v4169
      %v4436 = vpop.f32.mrb[0].mxu0
      %v4437 = vadd.f32 0.0, %v4436
      %v4438 = vpop.f32.mrb[0].mxu0
      %4439 = vmatprep.mubr.f32.mxu0 0.0
      %4440 = vmatmul.mubr.f32.gmra.mrb[0].mxu0 %v4172
      %v4441 = vpop.f32.mrb[0].mxu0
      %v4442 = vadd.f32 0.0, %v4441
      %v4443 = vpop.f32.mrb[0].mxu0
      %4444 = vmatprep.mubr.f32.mxu0 0.0
      %4445 = vmatmul.mubr.f32.gmra.mrb[0].mxu0 %v4175
      %v4446 = vpop.f32.mrb[0].mxu0
      %v4447 = vadd.f32 0.0, %v4446
      %v4448 = vpop.f32.mrb[0].mxu0
      %4449 = vdwg.mxu0
      %v4450 = vadd.f32 %v3970, %v4247
      %v4451 = vadd.f32 %v3971, %v4252
      %v4452 = vadd.f32 %v3972, %v4257
      %v4453 = vadd.f32 %v3973, %v4262
      %v4454 = vadd.f32 %v3974, %v4267
      %v4455 = vadd.f32 %v3975, %v4272
      %v4456 = vadd.f32 %v3976, %v4277
      %v4457 = vadd.f32 %v3977, %v4282
      %v4458 = vadd.f32 %v3978, %v4287
      %v4459 = vadd.f32 %v3979, %v4292
      %v4460 = vadd.f32 %v3980, %v4297
      %v4461 = vadd.f32 %v3981, %v4302
      %v4462 = vadd.f32 %v3982, %v4307
      %v4463 = vadd.f32 %v3983, %v4312
      %v4464 = vadd.f32 %v3984, %v4317
      %v4465 = vadd.f32 %v3985, %v4322
      %v4466 = vadd.f32 %v3986, %v4327
      %v4467 = vadd.f32 %v3987, %v4332
      %v4468 = vadd.f32 %v3988, %v4337
      %v4469 = vadd.f32 %v3989, %v4342
      %v4470 = vadd.f32 %v3990, %v4347
      %v4471 = vadd.f32 %v3991, %v4352
      %v4472 = vadd.f32 %v3992, %v4357
      %v4473 = vadd.f32 %v3993, %v4362
      %v4474 = vadd.f32 %v3994, %v4367
      %v4475 = vadd.f32 %v3995, %v4372
      %v4476 = vadd.f32 %v3996, %v4377
      %v4477 = vadd.f32 %v3997, %v4382
      %v4478 = vadd.f32 %v3998, %v4387
      %v4479 = vadd.f32 %v3999, %v4392
      %v4480 = vadd.f32 %v4000, %v4397
      %v4481 = vadd.f32 %v4001, %v4402
      %v4482 = vadd.f32 %v4002, %v4407
      %v4483 = vadd.f32 %v4003, %v4412
      %v4484 = vadd.f32 %v4004, %v4417
      %v4485 = vadd.f32 %v4005, %v4422
      %v4486 = vadd.f32 %v4006, %v4427
      %v4487 = vadd.f32 %v4007, %v4432
      %v4488 = vadd.f32 %v4008, %v4437
      %v4489 = vadd.f32 %v4009, %v4442
      %v4490 = vadd.f32 %v4010, %v4447
      %v4491 = vld [vmem:[%s3] sm:$0x1]
      %v4493 = vlaneseq
      %v4494 = vshrl.u32 %v4493, 7
      %v4495 = vsub.s32 0, %v4494
      %v4496 = vrot.slane %v4491, %v4495
      %v4498 = vadd.f32 %v4450, %v4496
      %v4499 = vadd.f32 %v4451, %v4496
      %v4500 = vadd.f32 %v4452, %v4496
      %v4501 = vadd.f32 %v4453, %v4496
      %v4502 = vadd.f32 %v4454, %v4496
      %v4503 = vadd.f32 %v4455, %v4496
      %v4504 = vadd.f32 %v4456, %v4496
      %v4505 = vadd.f32 %v4457, %v4496
      %v4506 = vadd.f32 %v4458, %v4496
      %v4507 = vadd.f32 %v4459, %v4496
      %v4508 = vadd.f32 %v4460, %v4496
      %v4509 = vadd.f32 %v4461, %v4496
      %v4510 = vadd.f32 %v4462, %v4496
      %v4511 = vadd.f32 %v4463, %v4496
      %v4512 = vadd.f32 %v4464, %v4496
      %v4513 = vadd.f32 %v4465, %v4496
      %v4514 = vadd.f32 %v4466, %v4496
      %v4515 = vadd.f32 %v4467, %v4496
      %v4516 = vadd.f32 %v4468, %v4496
      %v4517 = vadd.f32 %v4469, %v4496
      %v4518 = vadd.f32 %v4470, %v4496
      %v4519 = vadd.f32 %v4471, %v4496
      %v4520 = vadd.f32 %v4472, %v4496
      %v4521 = vadd.f32 %v4473, %v4496
      %v4522 = vadd.f32 %v4474, %v4496
      %v4523 = vadd.f32 %v4475, %v4496
      %v4524 = vadd.f32 %v4476, %v4496
      %v4525 = vadd.f32 %v4477, %v4496
      %v4526 = vadd.f32 %v4478, %v4496
      %v4527 = vadd.f32 %v4479, %v4496
      %v4528 = vadd.f32 %v4480, %v4496
      %v4529 = vadd.f32 %v4481, %v4496
      %v4530 = vadd.f32 %v4482, %v4496
      %v4531 = vadd.f32 %v4483, %v4496
      %v4532 = vadd.f32 %v4484, %v4496
      %v4533 = vadd.f32 %v4485, %v4496
      %v4534 = vadd.f32 %v4486, %v4496
      %v4535 = vadd.f32 %v4487, %v4496
      %v4536 = vadd.f32 %v4488, %v4496
      %v4537 = vadd.f32 %v4489, %v4496
      %v4538 = vadd.f32 %v4490, %v4496
      %v4539 = vmax.f32 %v4498, 0.0
      %v4540 = vmax.f32 %v4499, 0.0
      %v4541 = vmax.f32 %v4500, 0.0
      %v4542 = vmax.f32 %v4501, 0.0
      %v4543 = vmax.f32 %v4502, 0.0
      %v4544 = vmax.f32 %v4503, 0.0
      %v4545 = vmax.f32 %v4504, 0.0
      %v4546 = vmax.f32 %v4505, 0.0
      %v4547 = vmax.f32 %v4506, 0.0
      %v4548 = vmax.f32 %v4507, 0.0
      %v4549 = vmax.f32 %v4508, 0.0
      %v4550 = vmax.f32 %v4509, 0.0
      %v4551 = vmax.f32 %v4510, 0.0
      %v4552 = vmax.f32 %v4511, 0.0
      %v4553 = vmax.f32 %v4512, 0.0
      %v4554 = vmax.f32 %v4513, 0.0
      %v4555 = vmax.f32 %v4514, 0.0
      %v4556 = vmax.f32 %v4515, 0.0
      %v4557 = vmax.f32 %v4516, 0.0
      %v4558 = vmax.f32 %v4517, 0.0
      %v4559 = vmax.f32 %v4518, 0.0
      %v4560 = vmax.f32 %v4519, 0.0
      %v4561 = vmax.f32 %v4520, 0.0
      %v4562 = vmax.f32 %v4521, 0.0
      %v4563 = vmax.f32 %v4522, 0.0
      %v4564 = vmax.f32 %v4523, 0.0
      %v4565 = vmax.f32 %v4524, 0.0
      %v4566 = vmax.f32 %v4525, 0.0
      %v4567 = vmax.f32 %v4526, 0.0
      %v4568 = vmax.f32 %v4527, 0.0
      %v4569 = vmax.f32 %v4528, 0.0
      %v4570 = vmax.f32 %v4529, 0.0
      %v4571 = vmax.f32 %v4530, 0.0
      %v4572 = vmax.f32 %v4531, 0.0
      %v4573 = vmax.f32 %v4532, 0.0
      %v4574 = vmax.f32 %v4533, 0.0
      %v4575 = vmax.f32 %v4534, 0.0
      %v4576 = vmax.f32 %v4535, 0.0
      %v4577 = vmax.f32 %v4536, 0.0
      %v4578 = vmax.f32 %v4537, 0.0
      %v4579 = vmax.f32 %v4538, 0.0
      %v4580 = vld [vmem:[%s1] sm:$0xff]
      %v4581 = vld [vmem:[%s1 + $0x8] sm:$0xff]
      %v4582 = vld [vmem:[%s1 + $0x10] sm:$0xff]
      %v4583 = vld [vmem:[%s1 + $0x18] sm:$0xff]
      %v4584 = vld [vmem:[%s1 + $0x20] sm:$0xff]
      %v4585 = vld [vmem:[%s1 + $0x28] sm:$0xff]
      %v4586 = vld [vmem:[%s1 + $0x30] sm:$0xff]
      %v4587 = vld [vmem:[%s1 + $0x38] sm:$0xff]
      %v4588 = vld [vmem:[%s1 + $0x40] sm:$0xff]
      %v4589 = vld [vmem:[%s1 + $0x48] sm:$0xff]
      %v4590 = vld [vmem:[%s1 + $0x50] sm:$0xff]
      %v4591 = vld [vmem:[%s1 + $0x58] sm:$0xff]
      %v4592 = vld [vmem:[%s1 + $0x60] sm:$0xff]
      %v4593 = vld [vmem:[%s1 + $0x68] sm:$0xff]
      %v4594 = vld [vmem:[%s1 + $0x70] sm:$0xff]
      %v4595 = vld [vmem:[%s1 + $0x78] sm:$0xff]
      %v4596 = vld [vmem:[%s1 + $0x80] sm:$0xff]
      %v4597 = vld [vmem:[%s1 + $0x88] sm:$0xff]
      %v4598 = vld [vmem:[%s1 + $0x90] sm:$0xff]
      %v4599 = vld [vmem:[%s1 + $0x98] sm:$0xff]
      %v4600 = vld [vmem:[%s1 + $0xa0] sm:$0xff]
      %v4601 = vld [vmem:[%s1 + $0xa8] sm:$0xff]
      %v4602 = vld [vmem:[%s1 + $0xb0] sm:$0xff]
      %v4603 = vld [vmem:[%s1 + $0xb8] sm:$0xff]
      %v4604 = vld [vmem:[%s1 + $0xc0] sm:$0xff]
      %v4605 = vld [vmem:[%s1 + $0xc8] sm:$0xff]
      %v4606 = vld [vmem:[%s1 + $0xd0] sm:$0xff]
      %v4607 = vld [vmem:[%s1 + $0xd8] sm:$0xff]
      %v4608 = vld [vmem:[%s1 + $0xe0] sm:$0xff]
      %v4609 = vld [vmem:[%s1 + $0xe8] sm:$0xff]
      %v4610 = vld [vmem:[%s1 + $0xf0] sm:$0xff]
      %v4611 = vld [vmem:[%s1 + $0xf8] sm:$0xff]
      %v4612 = vld [vmem:[%s1 + $0x100] sm:$0xff]
      %v4613 = vld [vmem:[%s1 + $0x108] sm:$0xff]
      %v4614 = vld [vmem:[%s1 + $0x110] sm:$0xff]
      %v4615 = vld [vmem:[%s1 + $0x118] sm:$0xff]
      %v4616 = vld [vmem:[%s1 + $0x120] sm:$0xff]
      %v4617 = vld [vmem:[%s1 + $0x128] sm:$0xff]
      %v4618 = vld [vmem:[%s1 + $0x130] sm:$0xff]
      %v4619 = vld [vmem:[%s1 + $0x138] sm:$0xff]
      %v4620 = vld [vmem:[%s1 + $0x140] sm:$0xf]
      %4622 = vset.pattern.permute.xlu0 0
      %4623 = vperm.xlu0 %4622, %v4580
      %v4624 = vpop.permute.xlu0 %4623
      %4627 = vset.pattern.permute.xlu0 0
      %4628 = vperm.xlu0 %4627, %v4581
      %v4629 = vpop.permute.xlu0 %4628
      %4632 = vset.pattern.permute.xlu0 0
      %4633 = vperm.xlu0 %4632, %v4582
      %v4634 = vpop.permute.xlu0 %4633
      %4637 = vset.pattern.permute.xlu0 0
      %4638 = vperm.xlu0 %4637, %v4583
      %v4639 = vpop.permute.xlu0 %4638
      %4642 = vset.pattern.permute.xlu0 0
      %4643 = vperm.xlu0 %4642, %v4584
      %v4644 = vpop.permute.xlu0 %4643
      %4647 = vset.pattern.permute.xlu0 0
      %4648 = vperm.xlu0 %4647, %v4585
      %v4649 = vpop.permute.xlu0 %4648
      %4652 = vset.pattern.permute.xlu0 0
      %4653 = vperm.xlu0 %4652, %v4586
      %v4654 = vpop.permute.xlu0 %4653
      %4657 = vset.pattern.permute.xlu0 0
      %4658 = vperm.xlu0 %4657, %v4587
      %v4659 = vpop.permute.xlu0 %4658
      %4662 = vset.pattern.permute.xlu0 0
      %4663 = vperm.xlu0 %4662, %v4588
      %v4664 = vpop.permute.xlu0 %4663
      %4667 = vset.pattern.permute.xlu0 0
      %4668 = vperm.xlu0 %4667, %v4589
      %v4669 = vpop.permute.xlu0 %4668
      %4672 = vset.pattern.permute.xlu0 0
      %4673 = vperm.xlu0 %4672, %v4590
      %v4674 = vpop.permute.xlu0 %4673
      %4677 = vset.pattern.permute.xlu0 0
      %4678 = vperm.xlu0 %4677, %v4591
      %v4679 = vpop.permute.xlu0 %4678
      %4682 = vset.pattern.permute.xlu0 0
      %4683 = vperm.xlu0 %4682, %v4592
      %v4684 = vpop.permute.xlu0 %4683
      %4687 = vset.pattern.permute.xlu0 0
      %4688 = vperm.xlu0 %4687, %v4593
      %v4689 = vpop.permute.xlu0 %4688
      %4692 = vset.pattern.permute.xlu0 0
      %4693 = vperm.xlu0 %4692, %v4594
      %v4694 = vpop.permute.xlu0 %4693
      %4697 = vset.pattern.permute.xlu0 0
      %4698 = vperm.xlu0 %4697, %v4595
      %v4699 = vpop.permute.xlu0 %4698
      %4702 = vset.pattern.permute.xlu0 0
      %4703 = vperm.xlu0 %4702, %v4596
      %v4704 = vpop.permute.xlu0 %4703
      %4707 = vset.pattern.permute.xlu0 0
      %4708 = vperm.xlu0 %4707, %v4597
      %v4709 = vpop.permute.xlu0 %4708
      %4712 = vset.pattern.permute.xlu0 0
      %4713 = vperm.xlu0 %4712, %v4598
      %v4714 = vpop.permute.xlu0 %4713
      %4717 = vset.pattern.permute.xlu0 0
      %4718 = vperm.xlu0 %4717, %v4599
      %v4719 = vpop.permute.xlu0 %4718
      %4722 = vset.pattern.permute.xlu0 0
      %4723 = vperm.xlu0 %4722, %v4600
      %v4724 = vpop.permute.xlu0 %4723
      %4727 = vset.pattern.permute.xlu0 0
      %4728 = vperm.xlu0 %4727, %v4601
      %v4729 = vpop.permute.xlu0 %4728
      %4732 = vset.pattern.permute.xlu0 0
      %4733 = vperm.xlu0 %4732, %v4602
      %v4734 = vpop.permute.xlu0 %4733
      %4737 = vset.pattern.permute.xlu0 0
      %4738 = vperm.xlu0 %4737, %v4603
      %v4739 = vpop.permute.xlu0 %4738
      %4742 = vset.pattern.permute.xlu0 0
      %4743 = vperm.xlu0 %4742, %v4604
      %v4744 = vpop.permute.xlu0 %4743
      %4747 = vset.pattern.permute.xlu0 0
      %4748 = vperm.xlu0 %4747, %v4605
      %v4749 = vpop.permute.xlu0 %4748
      %4752 = vset.pattern.permute.xlu0 0
      %4753 = vperm.xlu0 %4752, %v4606
      %v4754 = vpop.permute.xlu0 %4753
      %4757 = vset.pattern.permute.xlu0 0
      %4758 = vperm.xlu0 %4757, %v4607
      %v4759 = vpop.permute.xlu0 %4758
      %4762 = vset.pattern.permute.xlu0 0
      %4763 = vperm.xlu0 %4762, %v4608
      %v4764 = vpop.permute.xlu0 %4763
      %4767 = vset.pattern.permute.xlu0 0
      %4768 = vperm.xlu0 %4767, %v4609
      %v4769 = vpop.permute.xlu0 %4768
      %4772 = vset.pattern.permute.xlu0 0
      %4773 = vperm.xlu0 %4772, %v4610
      %v4774 = vpop.permute.xlu0 %4773
      %4777 = vset.pattern.permute.xlu0 0
      %4778 = vperm.xlu0 %4777, %v4611
      %v4779 = vpop.permute.xlu0 %4778
      %4782 = vset.pattern.permute.xlu0 0
      %4783 = vperm.xlu0 %4782, %v4612
      %v4784 = vpop.permute.xlu0 %4783
      %4787 = vset.pattern.permute.xlu0 0
      %4788 = vperm.xlu0 %4787, %v4613
      %v4789 = vpop.permute.xlu0 %4788
      %4792 = vset.pattern.permute.xlu0 0
      %4793 = vperm.xlu0 %4792, %v4614
      %v4794 = vpop.permute.xlu0 %4793
      %4797 = vset.pattern.permute.xlu0 0
      %4798 = vperm.xlu0 %4797, %v4615
      %v4799 = vpop.permute.xlu0 %4798
      %4802 = vset.pattern.permute.xlu0 0
      %4803 = vperm.xlu0 %4802, %v4616
      %v4804 = vpop.permute.xlu0 %4803
      %4807 = vset.pattern.permute.xlu0 0
      %4808 = vperm.xlu0 %4807, %v4617
      %v4809 = vpop.permute.xlu0 %4808
      %4812 = vset.pattern.permute.xlu0 0
      %4813 = vperm.xlu0 %4812, %v4618
      %v4814 = vpop.permute.xlu0 %4813
      %4817 = vset.pattern.permute.xlu0 0
      %4818 = vperm.xlu0 %4817, %v4619
      %v4819 = vpop.permute.xlu0 %4818
      %4822 = vset.pattern.permute.xlu0 0
      %4823 = vperm.xlu0 %4822, %v4620
      %v4824 = vpop.permute.xlu0 %4823
      %v4826 = vmul.f32 %v4539, %v4624
      %v4827 = vmul.f32 %v4540, %v4629
      %v4828 = vmul.f32 %v4541, %v4634
      %v4829 = vmul.f32 %v4542, %v4639
      %v4830 = vmul.f32 %v4543, %v4644
      %v4831 = vmul.f32 %v4544, %v4649
      %v4832 = vmul.f32 %v4545, %v4654
      %v4833 = vmul.f32 %v4546, %v4659
      %v4834 = vmul.f32 %v4547, %v4664
      %v4835 = vmul.f32 %v4548, %v4669
      %v4836 = vmul.f32 %v4549, %v4674
      %v4837 = vmul.f32 %v4550, %v4679
      %v4838 = vmul.f32 %v4551, %v4684
      %v4839 = vmul.f32 %v4552, %v4689
      %v4840 = vmul.f32 %v4553, %v4694
      %v4841 = vmul.f32 %v4554, %v4699
      %v4842 = vmul.f32 %v4555, %v4704
      %v4843 = vmul.f32 %v4556, %v4709
      %v4844 = vmul.f32 %v4557, %v4714
      %v4845 = vmul.f32 %v4558, %v4719
      %v4846 = vmul.f32 %v4559, %v4724
      %v4847 = vmul.f32 %v4560, %v4729
      %v4848 = vmul.f32 %v4561, %v4734
      %v4849 = vmul.f32 %v4562, %v4739
      %v4850 = vmul.f32 %v4563, %v4744
      %v4851 = vmul.f32 %v4564, %v4749
      %v4852 = vmul.f32 %v4565, %v4754
      %v4853 = vmul.f32 %v4566, %v4759
      %v4854 = vmul.f32 %v4567, %v4764
      %v4855 = vmul.f32 %v4568, %v4769
      %v4856 = vmul.f32 %v4569, %v4774
      %v4857 = vmul.f32 %v4570, %v4779
      %v4858 = vmul.f32 %v4571, %v4784
      %v4859 = vmul.f32 %v4572, %v4789
      %v4860 = vmul.f32 %v4573, %v4794
      %v4861 = vmul.f32 %v4574, %v4799
      %v4862 = vmul.f32 %v4575, %v4804
      %v4863 = vmul.f32 %v4576, %v4809
      %v4864 = vmul.f32 %v4577, %v4814
      %v4865 = vmul.f32 %v4578, %v4819
      %v4866 = vmul.f32 %v4579, %v4824
      %vm4867 = vcmask 64512
      %4868 = vst.msk [vmem:[#allocation2] sm:$0xff] %vm4867, 0.0
      %4869 = vst.msk [vmem:[#allocation2 + $0x8] sm:$0xff] %vm4867, 0.0
      %4870 = vst.msk [vmem:[#allocation2 + $0x10] sm:$0xff] %vm4867, 0.0
      %4871 = vst.msk [vmem:[#allocation2 + $0x18] sm:$0xff] %vm4867, 0.0
      %4872 = vst.msk [vmem:[#allocation2 + $0x20] sm:$0xff] %vm4867, 0.0
      %4873 = vst.msk [vmem:[#allocation2 + $0x28] sm:$0xff] %vm4867, 0.0
      %4874 = vst.msk [vmem:[#allocation2 + $0x30] sm:$0xff] %vm4867, 0.0
      %4875 = vst.msk [vmem:[#allocation2 + $0x38] sm:$0xff] %vm4867, 0.0
      %4876 = vst.msk [vmem:[#allocation2 + $0x40] sm:$0xff] %vm4867, 0.0
      %4877 = vst.msk [vmem:[#allocation2 + $0x48] sm:$0xff] %vm4867, 0.0
      %4878 = vst.msk [vmem:[#allocation2 + $0x50] sm:$0xff] %vm4867, 0.0
      %4879 = vst.msk [vmem:[#allocation2 + $0x58] sm:$0xff] %vm4867, 0.0
      %4880 = vst.msk [vmem:[#allocation2 + $0x60] sm:$0xff] %vm4867, 0.0
      %4881 = vst.msk [vmem:[#allocation2 + $0x68] sm:$0xff] %vm4867, 0.0
      %4882 = vst.msk [vmem:[#allocation2 + $0x70] sm:$0xff] %vm4867, 0.0
      %4883 = vst.msk [vmem:[#allocation2 + $0x78] sm:$0xff] %vm4867, 0.0
      %4884 = vst.msk [vmem:[#allocation2 + $0x80] sm:$0xff] %vm4867, 0.0
      %4885 = vst.msk [vmem:[#allocation2 + $0x88] sm:$0xff] %vm4867, 0.0
      %4886 = vst.msk [vmem:[#allocation2 + $0x90] sm:$0xff] %vm4867, 0.0
      %4887 = vst.msk [vmem:[#allocation2 + $0x98] sm:$0xff] %vm4867, 0.0
      %4888 = vst.msk [vmem:[#allocation2 + $0xa0] sm:$0xff] %vm4867, 0.0
      %4889 = vst.msk [vmem:[#allocation2 + $0xa8] sm:$0xff] %vm4867, 0.0
      %4890 = vst.msk [vmem:[#allocation2 + $0xb0] sm:$0xff] %vm4867, 0.0
      %4891 = vst.msk [vmem:[#allocation2 + $0xb8] sm:$0xff] %vm4867, 0.0
      %4892 = vst.msk [vmem:[#allocation2 + $0xc0] sm:$0xff] %vm4867, 0.0
      %4893 = vst.msk [vmem:[#allocation2 + $0xc8] sm:$0xff] %vm4867, 0.0
      %4894 = vst.msk [vmem:[#allocation2 + $0xd0] sm:$0xff] %vm4867, 0.0
      %4895 = vst.msk [vmem:[#allocation2 + $0xd8] sm:$0xff] %vm4867, 0.0
      %4896 = vst.msk [vmem:[#allocation2 + $0xe0] sm:$0xff] %vm4867, 0.0
      %4897 = vst.msk [vmem:[#allocation2 + $0xe8] sm:$0xff] %vm4867, 0.0
      %4898 = vst.msk [vmem:[#allocation2 + $0xf0] sm:$0xff] %vm4867, 0.0
      %4899 = vst.msk [vmem:[#allocation2 + $0xf8] sm:$0xff] %vm4867, 0.0
      %4900 = vst.msk [vmem:[#allocation2 + $0x100] sm:$0xff] %vm4867, 0.0
      %4901 = vst.msk [vmem:[#allocation2 + $0x108] sm:$0xff] %vm4867, 0.0
      %4902 = vst.msk [vmem:[#allocation2 + $0x110] sm:$0xff] %vm4867, 0.0
      %4903 = vst.msk [vmem:[#allocation2 + $0x118] sm:$0xff] %vm4867, 0.0
      %4904 = vst.msk [vmem:[#allocation2 + $0x120] sm:$0xff] %vm4867, 0.0
      %4905 = vst.msk [vmem:[#allocation2 + $0x128] sm:$0xff] %vm4867, 0.0
      %4906 = vst.msk [vmem:[#allocation2 + $0x130] sm:$0xff] %vm4867, 0.0
      %4907 = vst.msk [vmem:[#allocation2 + $0x138] sm:$0xff] %vm4867, 0.0
      %4908 = vst.msk [vmem:[#allocation2 + $0x140] sm:$0xff] %vm4867, 0.0
      %4909 = vst.msk [vmem:[#allocation2 + $0x148] sm:$0xff] %vm4867, 0.0
      %4910 = vst.msk [vmem:[#allocation2 + $0x150] sm:$0xff] %vm4867, 0.0
      %4911 = vst.msk [vmem:[#allocation2 + $0x158] sm:$0xff] %vm4867, 0.0
      %4912 = vst.msk [vmem:[#allocation2 + $0x160] sm:$0xff] %vm4867, 0.0
      %4913 = vst.msk [vmem:[#allocation2 + $0x168] sm:$0xff] %vm4867, 0.0
      %vm4914 = vcmask 60416
      %4915 = vst.msk [vmem:[#allocation2 + $0x170] sm:$0xf] %vm4914, 0.0
      %4916 = vst.msk [vmem:[#allocation2 + $0x18] sm:$0xff] %vm4867, %v4826
      %4917 = vst.msk [vmem:[#allocation2 + $0x20] sm:$0xff] %vm4867, %v4827
      %4918 = vst.msk [vmem:[#allocation2 + $0x28] sm:$0xff] %vm4867, %v4828
      %4919 = vst.msk [vmem:[#allocation2 + $0x30] sm:$0xff] %vm4867, %v4829
      %4920 = vst.msk [vmem:[#allocation2 + $0x38] sm:$0xff] %vm4867, %v4830
      %4921 = vst.msk [vmem:[#allocation2 + $0x40] sm:$0xff] %vm4867, %v4831
      %4922 = vst.msk [vmem:[#allocation2 + $0x48] sm:$0xff] %vm4867, %v4832
      %4923 = vst.msk [vmem:[#allocation2 + $0x50] sm:$0xff] %vm4867, %v4833
      %4924 = vst.msk [vmem:[#allocation2 + $0x58] sm:$0xff] %vm4867, %v4834
      %4925 = vst.msk [vmem:[#allocation2 + $0x60] sm:$0xff] %vm4867, %v4835
      %4926 = vst.msk [vmem:[#allocation2 + $0x68] sm:$0xff] %vm4867, %v4836
      %4927 = vst.msk [vmem:[#allocation2 + $0x70] sm:$0xff] %vm4867, %v4837
      %4928 = vst.msk [vmem:[#allocation2 + $0x78] sm:$0xff] %vm4867, %v4838
      %4929 = vst.msk [vmem:[#allocation2 + $0x80] sm:$0xff] %vm4867, %v4839
      %4930 = vst.msk [vmem:[#allocation2 + $0x88] sm:$0xff] %vm4867, %v4840
      %4931 = vst.msk [vmem:[#allocation2 + $0x90] sm:$0xff] %vm4867, %v4841
      %4932 = vst.msk [vmem:[#allocation2 + $0x98] sm:$0xff] %vm4867, %v4842
      %4933 = vst.msk [vmem:[#allocation2 + $0xa0] sm:$0xff] %vm4867, %v4843
      %4934 = vst.msk [vmem:[#allocation2 + $0xa8] sm:$0xff] %vm4867, %v4844
      %4935 = vst.msk [vmem:[#allocation2 + $0xb0] sm:$0xff] %vm4867, %v4845
      %4936 = vst.msk [vmem:[#allocation2 + $0xb8] sm:$0xff] %vm4867, %v4846
      %4937 = vst.msk [vmem:[#allocation2 + $0xc0] sm:$0xff] %vm4867, %v4847
      %4938 = vst.msk [vmem:[#allocation2 + $0xc8] sm:$0xff] %vm4867, %v4848
      %4939 = vst.msk [vmem:[#allocation2 + $0xd0] sm:$0xff] %vm4867, %v4849
      %4940 = vst.msk [vmem:[#allocation2 + $0xd8] sm:$0xff] %vm4867, %v4850
      %4941 = vst.msk [vmem:[#allocation2 + $0xe0] sm:$0xff] %vm4867, %v4851
      %4942 = vst.msk [vmem:[#allocation2 + $0xe8] sm:$0xff] %vm4867, %v4852
      %4943 = vst.msk [vmem:[#allocation2 + $0xf0] sm:$0xff] %vm4867, %v4853
      %4944 = vst.msk [vmem:[#allocation2 + $0xf8] sm:$0xff] %vm4867, %v4854
      %4945 = vst.msk [vmem:[#allocation2 + $0x100] sm:$0xff] %vm4867, %v4855
      %4946 = vst.msk [vmem:[#allocation2 + $0x108] sm:$0xff] %vm4867, %v4856
      %4947 = vst.msk [vmem:[#allocation2 + $0x110] sm:$0xff] %vm4867, %v4857
      %4948 = vst.msk [vmem:[#allocation2 + $0x118] sm:$0xff] %vm4867, %v4858
      %4949 = vst.msk [vmem:[#allocation2 + $0x120] sm:$0xff] %vm4867, %v4859
      %4950 = vst.msk [vmem:[#allocation2 + $0x128] sm:$0xff] %vm4867, %v4860
      %4951 = vst.msk [vmem:[#allocation2 + $0x130] sm:$0xff] %vm4867, %v4861
      %4952 = vst.msk [vmem:[#allocation2 + $0x138] sm:$0xff] %vm4867, %v4862
      %4953 = vst.msk [vmem:[#allocation2 + $0x140] sm:$0xff] %vm4867, %v4863
      %4954 = vst.msk [vmem:[#allocation2 + $0x148] sm:$0xff] %vm4867, %v4864
      %4955 = vst.msk [vmem:[#allocation2 + $0x150] sm:$0xff] %vm4867, %v4865
      %4956 = vst.msk [vmem:[#allocation2 + $0x158] sm:$0xf] %vm4914, %v4866
      %v4957 = vld [vmem:[#allocation2 + $0x17] sm:$0xff]
      %v4958 = vld [vmem:[#allocation2 + $0x1f] sm:$0xff]
      %v4959 = vld [vmem:[#allocation2 + $0x27] sm:$0xff]
      %v4960 = vld [vmem:[#allocation2 + $0x2f] sm:$0xff]
      %v4961 = vld [vmem:[#allocation2 + $0x37] sm:$0xff]
      %v4962 = vld [vmem:[#allocation2 + $0x3f] sm:$0xff]
      %v4963 = vld [vmem:[#allocation2 + $0x47] sm:$0xff]
      %v4964 = vld [vmem:[#allocation2 + $0x4f] sm:$0xff]
      %v4965 = vld [vmem:[#allocation2 + $0x57] sm:$0xff]
      %v4966 = vld [vmem:[#allocation2 + $0x5f] sm:$0xff]
      %v4967 = vld [vmem:[#allocation2 + $0x67] sm:$0xff]
      %v4968 = vld [vmem:[#allocation2 + $0x6f] sm:$0xff]
      %v4969 = vld [vmem:[#allocation2 + $0x77] sm:$0xff]
      %v4970 = vld [vmem:[#allocation2 + $0x7f] sm:$0xff]
      %v4971 = vld [vmem:[#allocation2 + $0x87] sm:$0xff]
      %v4972 = vld [vmem:[#allocation2 + $0x8f] sm:$0xff]
      %v4973 = vld [vmem:[#allocation2 + $0x97] sm:$0xff]
      %v4974 = vld [vmem:[#allocation2 + $0x9f] sm:$0xff]
      %v4975 = vld [vmem:[#allocation2 + $0xa7] sm:$0xff]
      %v4976 = vld [vmem:[#allocation2 + $0xaf] sm:$0xff]
      %v4977 = vld [vmem:[#allocation2 + $0xb7] sm:$0xff]
      %v4978 = vld [vmem:[#allocation2 + $0xbf] sm:$0xff]
      %v4979 = vld [vmem:[#allocation2 + $0xc7] sm:$0xff]
      %v4980 = vld [vmem:[#allocation2 + $0xcf] sm:$0xff]
      %v4981 = vld [vmem:[#allocation2 + $0xd7] sm:$0xff]
      %v4982 = vld [vmem:[#allocation2 + $0xdf] sm:$0xff]
      %v4983 = vld [vmem:[#allocation2 + $0xe7] sm:$0xff]
      %v4984 = vld [vmem:[#allocation2 + $0xef] sm:$0xff]
      %v4985 = vld [vmem:[#allocation2 + $0xf7] sm:$0xff]
      %v4986 = vld [vmem:[#allocation2 + $0xff] sm:$0xff]
      %v4987 = vld [vmem:[#allocation2 + $0x107] sm:$0xff]
      %v4988 = vld [vmem:[#allocation2 + $0x10f] sm:$0xff]
      %v4989 = vld [vmem:[#allocation2 + $0x117] sm:$0xff]
      %v4990 = vld [vmem:[#allocation2 + $0x11f] sm:$0xff]
      %v4991 = vld [vmem:[#allocation2 + $0x127] sm:$0xff]
      %v4992 = vld [vmem:[#allocation2 + $0x12f] sm:$0xff]
      %v4993 = vld [vmem:[%s4] sm:$0xff]
      %v4994 = vld [vmem:[#allocation2 + $0x18] sm:$0xff]
      %v4995 = vld [vmem:[#allocation2 + $0x20] sm:$0xff]
      %v4996 = vld [vmem:[#allocation2 + $0x28] sm:$0xff]
      %v4997 = vld [vmem:[#allocation2 + $0x30] sm:$0xff]
      %v4998 = vld [vmem:[#allocation2 + $0x38] sm:$0xff]
      %v4999 = vld [vmem:[#allocation2 + $0x40] sm:$0xff]
      %v5000 = vld [vmem:[#allocation2 + $0x48] sm:$0xff]
      %v5001 = vld [vmem:[#allocation2 + $0x50] sm:$0xff]
      %v5002 = vld [vmem:[#allocation2 + $0x58] sm:$0xff]
      %v5003 = vld [vmem:[#allocation2 + $0x60] sm:$0xff]
      %v5004 = vld [vmem:[#allocation2 + $0x68] sm:$0xff]
      %v5005 = vld [vmem:[#allocation2 + $0x70] sm:$0xff]
      %v5006 = vld [vmem:[#allocation2 + $0x78] sm:$0xff]
      %v5007 = vld [vmem:[#allocation2 + $0x80] sm:$0xff]
      %v5008 = vld [vmem:[#allocation2 + $0x88] sm:$0xff]
      %v5009 = vld [vmem:[#allocation2 + $0x90] sm:$0xff]
      %v5010 = vld [vmem:[#allocation2 + $0x98] sm:$0xff]
      %v5011 = vld [vmem:[#allocation2 + $0xa0] sm:$0xff]
      %v5012 = vld [vmem:[#allocation2 + $0xa8] sm:$0xff]
      %v5013 = vld [vmem:[#allocation2 + $0xb0] sm:$0xff]
      %v5014 = vld [vmem:[#allocation2 + $0xb8] sm:$0xff]
      %v5015 = vld [vmem:[#allocation2 + $0xc0] sm:$0xff]
      %v5016 = vld [vmem:[#allocation2 + $0xc8] sm:$0xff]
      %v5017 = vld [vmem:[#allocation2 + $0xd0] sm:$0xff]
      %v5018 = vld [vmem:[#allocation2 + $0xd8] sm:$0xff]
      %v5019 = vld [vmem:[#allocation2 + $0xe0] sm:$0xff]
      %v5020 = vld [vmem:[#allocation2 + $0xe8] sm:$0xff]
      %v5021 = vld [vmem:[#allocation2 + $0xf0] sm:$0xff]
      %v5022 = vld [vmem:[#allocation2 + $0xf8] sm:$0xff]
      %v5023 = vld [vmem:[#allocation2 + $0x100] sm:$0xff]
      %v5024 = vld [vmem:[#allocation2 + $0x108] sm:$0xff]
      %v5025 = vld [vmem:[#allocation2 + $0x110] sm:$0xff]
      %v5026 = vld [vmem:[#allocation2 + $0x118] sm:$0xff]
      %v5027 = vld [vmem:[#allocation2 + $0x120] sm:$0xff]
      %v5028 = vld [vmem:[#allocation2 + $0x128] sm:$0xff]
      %v5029 = vld [vmem:[#allocation2 + $0x130] sm:$0xff]
      %s5030 = scalar_lea.vmem %s4, 8
      %v5031 = vld [vmem:[%s5030] sm:$0xff]
      %v5033 = vsel %vm4867, %v4994, 0
      %v5036 = vsel %vm4867, %v4995, 0
      %v5039 = vsel %vm4867, %v4996, 0
      %v5042 = vsel %vm4867, %v4997, 0
      %v5045 = vsel %vm4867, %v4998, 0
      %v5048 = vsel %vm4867, %v4999, 0
      %v5051 = vsel %vm4867, %v5000, 0
      %v5054 = vsel %vm4867, %v5001, 0
      %v5057 = vsel %vm4867, %v5002, 0
      %v5060 = vsel %vm4867, %v5003, 0
      %v5063 = vsel %vm4867, %v5004, 0
      %v5066 = vsel %vm4867, %v5005, 0
      %v5069 = vsel %vm4867, %v5006, 0
      %v5072 = vsel %vm4867, %v5007, 0
      %v5075 = vsel %vm4867, %v5008, 0
      %v5078 = vsel %vm4867, %v5009, 0
      %v5081 = vsel %vm4867, %v5010, 0
      %v5084 = vsel %vm4867, %v5011, 0
      %v5087 = vsel %vm4867, %v5012, 0
      %v5090 = vsel %vm4867, %v5013, 0
      %v5093 = vsel %vm4867, %v5014, 0
      %v5096 = vsel %vm4867, %v5015, 0
      %v5099 = vsel %vm4867, %v5016, 0
      %v5102 = vsel %vm4867, %v5017, 0
      %v5105 = vsel %vm4867, %v5018, 0
      %v5108 = vsel %vm4867, %v5019, 0
      %v5111 = vsel %vm4867, %v5020, 0
      %v5114 = vsel %vm4867, %v5021, 0
      %v5117 = vsel %vm4867, %v5022, 0
      %v5120 = vsel %vm4867, %v5023, 0
      %v5123 = vsel %vm4867, %v5024, 0
      %v5126 = vsel %vm4867, %v5025, 0
      %v5129 = vsel %vm4867, %v5026, 0
      %v5132 = vsel %vm4867, %v5027, 0
      %v5135 = vsel %vm4867, %v5028, 0
      %v5138 = vsel %vm4867, %v5029, 0
      %5140 = vmatprep.subr.mxu0 0.0
      %5141 = vmatpush1.msra.mxu0 %v5031
      %5142 = vmatprep.subr.mxu0 0.0
      %5143 = vmatpush1.msra.mxu0 0.0
      %5144 = vmatprep.subr.mxu0 0.0
      %5145 = vmatpush1.msra.mxu0 0.0
      %5146 = vmatprep.subr.mxu0 0.0
      %5147 = vmatpush1.msra.mxu0 0.0
      %5148 = vmatprep.subr.mxu0 0.0
      %5149 = vmatpush1.msra.mxu0 0.0
      %5150 = vmatprep.subr.mxu0 0.0
      %5151 = vmatpush1.msra.mxu0 0.0
      %5152 = vmatprep.subr.mxu0 0.0
      %5153 = vmatpush1.msra.mxu0 0.0
      %5154 = vmatprep.subr.mxu0 0.0
      %5155 = vmatpush1.msra.mxu0 0.0
      %5156 = vmatprep.subr.mxu0 0.0
      %5157 = vmatpush1.msra.mxu0 0.0
      %5158 = vmatprep.subr.mxu0 0.0
      %5159 = vmatpush1.msra.mxu0 0.0
      %5160 = vmatprep.subr.mxu0 0.0
      %5161 = vmatpush1.msra.mxu0 0.0
      %5162 = vmatprep.subr.mxu0 0.0
      %5163 = vmatpush1.msra.mxu0 0.0
      %5164 = vmatprep.subr.mxu0 0.0
      %5165 = vmatpush1.msra.mxu0 0.0
      %5166 = vmatprep.subr.mxu0 0.0
      %5167 = vmatpush1.msra.mxu0 0.0
      %5168 = vmatprep.subr.mxu0 0.0
      %5169 = vmatpush1.msra.mxu0 0.0
      %5170 = vmatprep.subr.mxu0 0.0
      %5171 = vmatpush1.msra.mxu0 0.0
      %5172 = vmatprep.subr.mxu0 0.0
      %5173 = vmatpush1.msra.mxu0 0.0
      %5174 = vmatprep.subr.mxu0 0.0
      %5175 = vmatpush1.msra.mxu0 0.0
      %5176 = vmatprep.subr.mxu0 0.0
      %5177 = vmatpush1.msra.mxu0 0.0
      %5178 = vmatprep.subr.mxu0 0.0
      %5179 = vmatpush1.msra.mxu0 0.0
      %5180 = vmatprep.subr.mxu0 0.0
      %5181 = vmatpush1.msra.mxu0 0.0
      %5182 = vmatprep.subr.mxu0 0.0
      %5183 = vmatpush1.msra.mxu0 0.0
      %5184 = vmatprep.subr.mxu0 0.0
      %5185 = vmatpush1.msra.mxu0 0.0
      %5186 = vmatprep.subr.mxu0 0.0
      %5187 = vmatpush1.msra.mxu0 0.0
      %5188 = vmatprep.subr.mxu0 0.0
      %5189 = vmatpush1.msra.mxu0 0.0
      %5190 = vmatprep.subr.mxu0 0.0
      %5191 = vmatpush1.msra.mxu0 0.0
      %5192 = vmatprep.subr.mxu0 0.0
      %5193 = vmatpush1.msra.mxu0 0.0
      %5194 = vmatprep.subr.mxu0 0.0
      %5195 = vmatpush1.msra.mxu0 0.0
      %5196 = vmatprep.subr.mxu0 0.0
      %5197 = vmatpush1.msra.mxu0 0.0
      %5198 = vmatprep.subr.mxu0 0.0
      %5199 = vmatpush1.msra.mxu0 0.0
      %5200 = vmatprep.subr.mxu0 0.0
      %5201 = vmatpush1.msra.mxu0 0.0
      %5202 = vmatprep.subr.mxu0 0.0
      %5203 = vmatpush1.msra.mxu0 0.0
      %5204 = vmatprep.mubr.f32.mxu0 0.0
      %5205 = vmatmul.mubr.f32.gmra.mrb[0].mxu0 %v5033
      %v5206 = vpop.f32.mrb[0].mxu0
      %v5207 = vadd.f32 0.0, %v5206
      %v5208 = vpop.f32.mrb[0].mxu0
      %5209 = vmatprep.mubr.f32.mxu0 0.0
      %5210 = vmatmul.mubr.f32.gmra.mrb[0].mxu0 %v5036
      %v5211 = vpop.f32.mrb[0].mxu0
      %v5212 = vadd.f32 0.0, %v5211
      %v5213 = vpop.f32.mrb[0].mxu0
      %5214 = vmatprep.mubr.f32.mxu0 0.0
      %5215 = vmatmul.mubr.f32.gmra.mrb[0].mxu0 %v5039
      %v5216 = vpop.f32.mrb[0].mxu0
      %v5217 = vadd.f32 0.0, %v5216
      %v5218 = vpop.f32.mrb[0].mxu0
      %5219 = vmatprep.mubr.f32.mxu0 0.0
      %5220 = vmatmul.mubr.f32.gmra.mrb[0].mxu0 %v5042
      %v5221 = vpop.f32.mrb[0].mxu0
      %v5222 = vadd.f32 0.0, %v5221
      %v5223 = vpop.f32.mrb[0].mxu0
      %5224 = vmatprep.mubr.f32.mxu0 0.0
      %5225 = vmatmul.mubr.f32.gmra.mrb[0].mxu0 %v5045
      %v5226 = vpop.f32.mrb[0].mxu0
      %v5227 = vadd.f32 0.0, %v5226
      %v5228 = vpop.f32.mrb[0].mxu0
      %5229 = vmatprep.mubr.f32.mxu0 0.0
      %5230 = vmatmul.mubr.f32.gmra.mrb[0].mxu0 %v5048
      %v5231 = vpop.f32.mrb[0].mxu0
      %v5232 = vadd.f32 0.0, %v5231
      %v5233 = vpop.f32.mrb[0].mxu0
      %5234 = vmatprep.mubr.f32.mxu0 0.0
      %5235 = vmatmul.mubr.f32.gmra.mrb[0].mxu0 %v5051
      %v5236 = vpop.f32.mrb[0].mxu0
      %v5237 = vadd.f32 0.0, %v5236
      %v5238 = vpop.f32.mrb[0].mxu0
      %5239 = vmatprep.mubr.f32.mxu0 0.0
      %5240 = vmatmul.mubr.f32.gmra.mrb[0].mxu0 %v5054
      %v5241 = vpop.f32.mrb[0].mxu0
      %v5242 = vadd.f32 0.0, %v5241
      %v5243 = vpop.f32.mrb[0].mxu0
      %5244 = vmatprep.mubr.f32.mxu0 0.0
      %5245 = vmatmul.mubr.f32.gmra.mrb[0].mxu0 %v5057
      %v5246 = vpop.f32.mrb[0].mxu0
      %v5247 = vadd.f32 0.0, %v5246
      %v5248 = vpop.f32.mrb[0].mxu0
      %5249 = vmatprep.mubr.f32.mxu0 0.0
      %5250 = vmatmul.mubr.f32.gmra.mrb[0].mxu0 %v5060
      %v5251 = vpop.f32.mrb[0].mxu0
      %v5252 = vadd.f32 0.0, %v5251
      %v5253 = vpop.f32.mrb[0].mxu0
      %5254 = vmatprep.mubr.f32.mxu0 0.0
      %5255 = vmatmul.mubr.f32.gmra.mrb[0].mxu0 %v5063
      %v5256 = vpop.f32.mrb[0].mxu0
      %v5257 = vadd.f32 0.0, %v5256
      %v5258 = vpop.f32.mrb[0].mxu0
      %5259 = vmatprep.mubr.f32.mxu0 0.0
      %5260 = vmatmul.mubr.f32.gmra.mrb[0].mxu0 %v5066
      %v5261 = vpop.f32.mrb[0].mxu0
      %v5262 = vadd.f32 0.0, %v5261
      %v5263 = vpop.f32.mrb[0].mxu0
      %5264 = vmatprep.mubr.f32.mxu0 0.0
      %5265 = vmatmul.mubr.f32.gmra.mrb[0].mxu0 %v5069
      %v5266 = vpop.f32.mrb[0].mxu0
      %v5267 = vadd.f32 0.0, %v5266
      %v5268 = vpop.f32.mrb[0].mxu0
      %5269 = vmatprep.mubr.f32.mxu0 0.0
      %5270 = vmatmul.mubr.f32.gmra.mrb[0].mxu0 %v5072
      %v5271 = vpop.f32.mrb[0].mxu0
      %v5272 = vadd.f32 0.0, %v5271
      %v5273 = vpop.f32.mrb[0].mxu0
      %5274 = vmatprep.mubr.f32.mxu0 0.0
      %5275 = vmatmul.mubr.f32.gmra.mrb[0].mxu0 %v5075
      %v5276 = vpop.f32.mrb[0].mxu0
      %v5277 = vadd.f32 0.0, %v5276
      %v5278 = vpop.f32.mrb[0].mxu0
      %5279 = vmatprep.mubr.f32.mxu0 0.0
      %5280 = vmatmul.mubr.f32.gmra.mrb[0].mxu0 %v5078
      %v5281 = vpop.f32.mrb[0].mxu0
      %v5282 = vadd.f32 0.0, %v5281
      %v5283 = vpop.f32.mrb[0].mxu0
      %5284 = vmatprep.mubr.f32.mxu0 0.0
      %5285 = vmatmul.mubr.f32.gmra.mrb[0].mxu0 %v5081
      %v5286 = vpop.f32.mrb[0].mxu0
      %v5287 = vadd.f32 0.0, %v5286
      %v5288 = vpop.f32.mrb[0].mxu0
      %5289 = vmatprep.mubr.f32.mxu0 0.0
      %5290 = vmatmul.mubr.f32.gmra.mrb[0].mxu0 %v5084
      %v5291 = vpop.f32.mrb[0].mxu0
      %v5292 = vadd.f32 0.0, %v5291
      %v5293 = vpop.f32.mrb[0].mxu0
      %5294 = vmatprep.mubr.f32.mxu0 0.0
      %5295 = vmatmul.mubr.f32.gmra.mrb[0].mxu0 %v5087
      %v5296 = vpop.f32.mrb[0].mxu0
      %v5297 = vadd.f32 0.0, %v5296
      %v5298 = vpop.f32.mrb[0].mxu0
      %5299 = vmatprep.mubr.f32.mxu0 0.0
      %5300 = vmatmul.mubr.f32.gmra.mrb[0].mxu0 %v5090
      %v5301 = vpop.f32.mrb[0].mxu0
      %v5302 = vadd.f32 0.0, %v5301
      %v5303 = vpop.f32.mrb[0].mxu0
      %5304 = vmatprep.mubr.f32.mxu0 0.0
      %5305 = vmatmul.mubr.f32.gmra.mrb[0].mxu0 %v5093
      %v5306 = vpop.f32.mrb[0].mxu0
      %v5307 = vadd.f32 0.0, %v5306
      %v5308 = vpop.f32.mrb[0].mxu0
      %5309 = vmatprep.mubr.f32.mxu0 0.0
      %5310 = vmatmul.mubr.f32.gmra.mrb[0].mxu0 %v5096
      %v5311 = vpop.f32.mrb[0].mxu0
      %v5312 = vadd.f32 0.0, %v5311
      %v5313 = vpop.f32.mrb[0].mxu0
      %5314 = vmatprep.mubr.f32.mxu0 0.0
      %5315 = vmatmul.mubr.f32.gmra.mrb[0].mxu0 %v5099
      %v5316 = vpop.f32.mrb[0].mxu0
      %v5317 = vadd.f32 0.0, %v5316
      %v5318 = vpop.f32.mrb[0].mxu0
      %5319 = vmatprep.mubr.f32.mxu0 0.0
      %5320 = vmatmul.mubr.f32.gmra.mrb[0].mxu0 %v5102
      %v5321 = vpop.f32.mrb[0].mxu0
      %v5322 = vadd.f32 0.0, %v5321
      %v5323 = vpop.f32.mrb[0].mxu0
      %5324 = vmatprep.mubr.f32.mxu0 0.0
      %5325 = vmatmul.mubr.f32.gmra.mrb[0].mxu0 %v5105
      %v5326 = vpop.f32.mrb[0].mxu0
      %v5327 = vadd.f32 0.0, %v5326
      %v5328 = vpop.f32.mrb[0].mxu0
      %5329 = vmatprep.mubr.f32.mxu0 0.0
      %5330 = vmatmul.mubr.f32.gmra.mrb[0].mxu0 %v5108
      %v5331 = vpop.f32.mrb[0].mxu0
      %v5332 = vadd.f32 0.0, %v5331
      %v5333 = vpop.f32.mrb[0].mxu0
      %5334 = vmatprep.mubr.f32.mxu0 0.0
      %5335 = vmatmul.mubr.f32.gmra.mrb[0].mxu0 %v5111
      %v5336 = vpop.f32.mrb[0].mxu0
      %v5337 = vadd.f32 0.0, %v5336
      %v5338 = vpop.f32.mrb[0].mxu0
      %5339 = vmatprep.mubr.f32.mxu0 0.0
      %5340 = vmatmul.mubr.f32.gmra.mrb[0].mxu0 %v5114
      %v5341 = vpop.f32.mrb[0].mxu0
      %v5342 = vadd.f32 0.0, %v5341
      %v5343 = vpop.f32.mrb[0].mxu0
      %5344 = vmatprep.mubr.f32.mxu0 0.0
      %5345 = vmatmul.mubr.f32.gmra.mrb[0].mxu0 %v5117
      %v5346 = vpop.f32.mrb[0].mxu0
      %v5347 = vadd.f32 0.0, %v5346
      %v5348 = vpop.f32.mrb[0].mxu0
      %5349 = vmatprep.mubr.f32.mxu0 0.0
      %5350 = vmatmul.mubr.f32.gmra.mrb[0].mxu0 %v5120
      %v5351 = vpop.f32.mrb[0].mxu0
      %v5352 = vadd.f32 0.0, %v5351
      %v5353 = vpop.f32.mrb[0].mxu0
      %5354 = vmatprep.mubr.f32.mxu0 0.0
      %5355 = vmatmul.mubr.f32.gmra.mrb[0].mxu0 %v5123
      %v5356 = vpop.f32.mrb[0].mxu0
      %v5357 = vadd.f32 0.0, %v5356
      %v5358 = vpop.f32.mrb[0].mxu0
      %5359 = vmatprep.mubr.f32.mxu0 0.0
      %5360 = vmatmul.mubr.f32.gmra.mrb[0].mxu0 %v5126
      %v5361 = vpop.f32.mrb[0].mxu0
      %v5362 = vadd.f32 0.0, %v5361
      %v5363 = vpop.f32.mrb[0].mxu0
      %5364 = vmatprep.mubr.f32.mxu0 0.0
      %5365 = vmatmul.mubr.f32.gmra.mrb[0].mxu0 %v5129
      %v5366 = vpop.f32.mrb[0].mxu0
      %v5367 = vadd.f32 0.0, %v5366
      %v5368 = vpop.f32.mrb[0].mxu0
      %5369 = vmatprep.mubr.f32.mxu0 0.0
      %5370 = vmatmul.mubr.f32.gmra.mrb[0].mxu0 %v5132
      %v5371 = vpop.f32.mrb[0].mxu0
      %v5372 = vadd.f32 0.0, %v5371
      %v5373 = vpop.f32.mrb[0].mxu0
      %5374 = vmatprep.mubr.f32.mxu0 0.0
      %5375 = vmatmul.mubr.f32.gmra.mrb[0].mxu0 %v5135
      %v5376 = vpop.f32.mrb[0].mxu0
      %v5377 = vadd.f32 0.0, %v5376
      %v5378 = vpop.f32.mrb[0].mxu0
      %5379 = vmatprep.mubr.f32.mxu0 0.0
      %5380 = vmatmul.mubr.f32.gmra.mrb[0].mxu0 %v5138
      %v5381 = vpop.f32.mrb[0].mxu0
      %v5382 = vadd.f32 0.0, %v5381
      %v5383 = vpop.f32.mrb[0].mxu0
      %5384 = vdwg.mxu0
      %v5386 = vsel %vm4867, %v4957, 0
      %v5389 = vsel %vm4867, %v4958, 0
      %v5392 = vsel %vm4867, %v4959, 0
      %v5395 = vsel %vm4867, %v4960, 0
      %v5398 = vsel %vm4867, %v4961, 0
      %v5401 = vsel %vm4867, %v4962, 0
      %v5404 = vsel %vm4867, %v4963, 0
      %v5407 = vsel %vm4867, %v4964, 0
      %v5410 = vsel %vm4867, %v4965, 0
      %v5413 = vsel %vm4867, %v4966, 0
      %v5416 = vsel %vm4867, %v4967, 0
      %v5419 = vsel %vm4867, %v4968, 0
      %v5422 = vsel %vm4867, %v4969, 0
      %v5425 = vsel %vm4867, %v4970, 0
      %v5428 = vsel %vm4867, %v4971, 0
      %v5431 = vsel %vm4867, %v4972, 0
      %v5434 = vsel %vm4867, %v4973, 0
      %v5437 = vsel %vm4867, %v4974, 0
      %v5440 = vsel %vm4867, %v4975, 0
      %v5443 = vsel %vm4867, %v4976, 0
      %v5446 = vsel %vm4867, %v4977, 0
      %v5449 = vsel %vm4867, %v4978, 0
      %v5452 = vsel %vm4867, %v4979, 0
      %v5455 = vsel %vm4867, %v4980, 0
      %v5458 = vsel %vm4867, %v4981, 0
      %v5461 = vsel %vm4867, %v4982, 0
      %v5464 = vsel %vm4867, %v4983, 0
      %v5467 = vsel %vm4867, %v4984, 0
      %v5470 = vsel %vm4867, %v4985, 0
      %v5473 = vsel %vm4867, %v4986, 0
      %v5476 = vsel %vm4867, %v4987, 0
      %v5479 = vsel %vm4867, %v4988, 0
      %v5482 = vsel %vm4867, %v4989, 0
      %v5485 = vsel %vm4867, %v4990, 0
      %v5488 = vsel %vm4867, %v4991, 0
      %v5491 = vsel %vm4867, %v4992, 0
      %5493 = vmatprep.subr.mxu0 0.0
      %5494 = vmatpush1.msra.mxu0 %v4993
      %5495 = vmatprep.subr.mxu0 0.0
      %5496 = vmatpush1.msra.mxu0 0.0
      %5497 = vmatprep.subr.mxu0 0.0
      %5498 = vmatpush1.msra.mxu0 0.0
      %5499 = vmatprep.subr.mxu0 0.0
      %5500 = vmatpush1.msra.mxu0 0.0
      %5501 = vmatprep.subr.mxu0 0.0
      %5502 = vmatpush1.msra.mxu0 0.0
      %5503 = vmatprep.subr.mxu0 0.0
      %5504 = vmatpush1.msra.mxu0 0.0
      %5505 = vmatprep.subr.mxu0 0.0
      %5506 = vmatpush1.msra.mxu0 0.0
      %5507 = vmatprep.subr.mxu0 0.0
      %5508 = vmatpush1.msra.mxu0 0.0
      %5509 = vmatprep.subr.mxu0 0.0
      %5510 = vmatpush1.msra.mxu0 0.0
      %5511 = vmatprep.subr.mxu0 0.0
      %5512 = vmatpush1.msra.mxu0 0.0
      %5513 = vmatprep.subr.mxu0 0.0
      %5514 = vmatpush1.msra.mxu0 0.0
      %5515 = vmatprep.subr.mxu0 0.0
      %5516 = vmatpush1.msra.mxu0 0.0
      %5517 = vmatprep.subr.mxu0 0.0
      %5518 = vmatpush1.msra.mxu0 0.0
      %5519 = vmatprep.subr.mxu0 0.0
      %5520 = vmatpush1.msra.mxu0 0.0
      %5521 = vmatprep.subr.mxu0 0.0
      %5522 = vmatpush1.msra.mxu0 0.0
      %5523 = vmatprep.subr.mxu0 0.0
      %5524 = vmatpush1.msra.mxu0 0.0
      %5525 = vmatprep.subr.mxu0 0.0
      %5526 = vmatpush1.msra.mxu0 0.0
      %5527 = vmatprep.subr.mxu0 0.0
      %5528 = vmatpush1.msra.mxu0 0.0
      %5529 = vmatprep.subr.mxu0 0.0
      %5530 = vmatpush1.msra.mxu0 0.0
      %5531 = vmatprep.subr.mxu0 0.0
      %5532 = vmatpush1.msra.mxu0 0.0
      %5533 = vmatprep.subr.mxu0 0.0
      %5534 = vmatpush1.msra.mxu0 0.0
      %5535 = vmatprep.subr.mxu0 0.0
      %5536 = vmatpush1.msra.mxu0 0.0
      %5537 = vmatprep.subr.mxu0 0.0
      %5538 = vmatpush1.msra.mxu0 0.0
      %5539 = vmatprep.subr.mxu0 0.0
      %5540 = vmatpush1.msra.mxu0 0.0
      %5541 = vmatprep.subr.mxu0 0.0
      %5542 = vmatpush1.msra.mxu0 0.0
      %5543 = vmatprep.subr.mxu0 0.0
      %5544 = vmatpush1.msra.mxu0 0.0
      %5545 = vmatprep.subr.mxu0 0.0
      %5546 = vmatpush1.msra.mxu0 0.0
      %5547 = vmatprep.subr.mxu0 0.0
      %5548 = vmatpush1.msra.mxu0 0.0
      %5549 = vmatprep.subr.mxu0 0.0
      %5550 = vmatpush1.msra.mxu0 0.0
      %5551 = vmatprep.subr.mxu0 0.0
      %5552 = vmatpush1.msra.mxu0 0.0
      %5553 = vmatprep.subr.mxu0 0.0
      %5554 = vmatpush1.msra.mxu0 0.0
      %5555 = vmatprep.subr.mxu0 0.0
      %5556 = vmatpush1.msra.mxu0 0.0
      %5557 = vmatprep.mubr.f32.mxu0 0.0
      %5558 = vmatmul.mubr.f32.gmra.mrb[0].mxu0 %v5386
      %v5559 = vpop.f32.mrb[0].mxu0
      %v5560 = vadd.f32 %v5207, %v5559
      %v5561 = vpop.f32.mrb[0].mxu0
      %5562 = vmatprep.mubr.f32.mxu0 0.0
      %5563 = vmatmul.mubr.f32.gmra.mrb[0].mxu0 %v5389
      %v5564 = vpop.f32.mrb[0].mxu0
      %v5565 = vadd.f32 %v5212, %v5564
      %v5566 = vpop.f32.mrb[0].mxu0
      %5567 = vmatprep.mubr.f32.mxu0 0.0
      %5568 = vmatmul.mubr.f32.gmra.mrb[0].mxu0 %v5392
      %v5569 = vpop.f32.mrb[0].mxu0
      %v5570 = vadd.f32 %v5217, %v5569
      %v5571 = vpop.f32.mrb[0].mxu0
      %5572 = vmatprep.mubr.f32.mxu0 0.0
      %5573 = vmatmul.mubr.f32.gmra.mrb[0].mxu0 %v5395
      %v5574 = vpop.f32.mrb[0].mxu0
      %v5575 = vadd.f32 %v5222, %v5574
      %v5576 = vpop.f32.mrb[0].mxu0
      %5577 = vmatprep.mubr.f32.mxu0 0.0
      %5578 = vmatmul.mubr.f32.gmra.mrb[0].mxu0 %v5398
      %v5579 = vpop.f32.mrb[0].mxu0
      %v5580 = vadd.f32 %v5227, %v5579
      %v5581 = vpop.f32.mrb[0].mxu0
      %5582 = vmatprep.mubr.f32.mxu0 0.0
      %5583 = vmatmul.mubr.f32.gmra.mrb[0].mxu0 %v5401
      %v5584 = vpop.f32.mrb[0].mxu0
      %v5585 = vadd.f32 %v5232, %v5584
      %v5586 = vpop.f32.mrb[0].mxu0
      %5587 = vmatprep.mubr.f32.mxu0 0.0
      %5588 = vmatmul.mubr.f32.gmra.mrb[0].mxu0 %v5404
      %v5589 = vpop.f32.mrb[0].mxu0
      %v5590 = vadd.f32 %v5237, %v5589
      %v5591 = vpop.f32.mrb[0].mxu0
      %5592 = vmatprep.mubr.f32.mxu0 0.0
      %5593 = vmatmul.mubr.f32.gmra.mrb[0].mxu0 %v5407
      %v5594 = vpop.f32.mrb[0].mxu0
      %v5595 = vadd.f32 %v5242, %v5594
      %v5596 = vpop.f32.mrb[0].mxu0
      %5597 = vmatprep.mubr.f32.mxu0 0.0
      %5598 = vmatmul.mubr.f32.gmra.mrb[0].mxu0 %v5410
      %v5599 = vpop.f32.mrb[0].mxu0
      %v5600 = vadd.f32 %v5247, %v5599
      %v5601 = vpop.f32.mrb[0].mxu0
      %5602 = vmatprep.mubr.f32.mxu0 0.0
      %5603 = vmatmul.mubr.f32.gmra.mrb[0].mxu0 %v5413
      %v5604 = vpop.f32.mrb[0].mxu0
      %v5605 = vadd.f32 %v5252, %v5604
      %v5606 = vpop.f32.mrb[0].mxu0
      %5607 = vmatprep.mubr.f32.mxu0 0.0
      %5608 = vmatmul.mubr.f32.gmra.mrb[0].mxu0 %v5416
      %v5609 = vpop.f32.mrb[0].mxu0
      %v5610 = vadd.f32 %v5257, %v5609
      %v5611 = vpop.f32.mrb[0].mxu0
      %5612 = vmatprep.mubr.f32.mxu0 0.0
      %5613 = vmatmul.mubr.f32.gmra.mrb[0].mxu0 %v5419
      %v5614 = vpop.f32.mrb[0].mxu0
      %v5615 = vadd.f32 %v5262, %v5614
      %v5616 = vpop.f32.mrb[0].mxu0
      %5617 = vmatprep.mubr.f32.mxu0 0.0
      %5618 = vmatmul.mubr.f32.gmra.mrb[0].mxu0 %v5422
      %v5619 = vpop.f32.mrb[0].mxu0
      %v5620 = vadd.f32 %v5267, %v5619
      %v5621 = vpop.f32.mrb[0].mxu0
      %5622 = vmatprep.mubr.f32.mxu0 0.0
      %5623 = vmatmul.mubr.f32.gmra.mrb[0].mxu0 %v5425
      %v5624 = vpop.f32.mrb[0].mxu0
      %v5625 = vadd.f32 %v5272, %v5624
      %v5626 = vpop.f32.mrb[0].mxu0
      %5627 = vmatprep.mubr.f32.mxu0 0.0
      %5628 = vmatmul.mubr.f32.gmra.mrb[0].mxu0 %v5428
      %v5629 = vpop.f32.mrb[0].mxu0
      %v5630 = vadd.f32 %v5277, %v5629
      %v5631 = vpop.f32.mrb[0].mxu0
      %5632 = vmatprep.mubr.f32.mxu0 0.0
      %5633 = vmatmul.mubr.f32.gmra.mrb[0].mxu0 %v5431
      %v5634 = vpop.f32.mrb[0].mxu0
      %v5635 = vadd.f32 %v5282, %v5634
      %v5636 = vpop.f32.mrb[0].mxu0
      %5637 = vmatprep.mubr.f32.mxu0 0.0
      %5638 = vmatmul.mubr.f32.gmra.mrb[0].mxu0 %v5434
      %v5639 = vpop.f32.mrb[0].mxu0
      %v5640 = vadd.f32 %v5287, %v5639
      %v5641 = vpop.f32.mrb[0].mxu0
      %5642 = vmatprep.mubr.f32.mxu0 0.0
      %5643 = vmatmul.mubr.f32.gmra.mrb[0].mxu0 %v5437
      %v5644 = vpop.f32.mrb[0].mxu0
      %v5645 = vadd.f32 %v5292, %v5644
      %v5646 = vpop.f32.mrb[0].mxu0
      %5647 = vmatprep.mubr.f32.mxu0 0.0
      %5648 = vmatmul.mubr.f32.gmra.mrb[0].mxu0 %v5440
      %v5649 = vpop.f32.mrb[0].mxu0
      %v5650 = vadd.f32 %v5297, %v5649
      %v5651 = vpop.f32.mrb[0].mxu0
      %5652 = vmatprep.mubr.f32.mxu0 0.0
      %5653 = vmatmul.mubr.f32.gmra.mrb[0].mxu0 %v5443
      %v5654 = vpop.f32.mrb[0].mxu0
      %v5655 = vadd.f32 %v5302, %v5654
      %v5656 = vpop.f32.mrb[0].mxu0
      %5657 = vmatprep.mubr.f32.mxu0 0.0
      %5658 = vmatmul.mubr.f32.gmra.mrb[0].mxu0 %v5446
      %v5659 = vpop.f32.mrb[0].mxu0
      %v5660 = vadd.f32 %v5307, %v5659
      %v5661 = vpop.f32.mrb[0].mxu0
      %5662 = vmatprep.mubr.f32.mxu0 0.0
      %5663 = vmatmul.mubr.f32.gmra.mrb[0].mxu0 %v5449
      %v5664 = vpop.f32.mrb[0].mxu0
      %v5665 = vadd.f32 %v5312, %v5664
      %v5666 = vpop.f32.mrb[0].mxu0
      %5667 = vmatprep.mubr.f32.mxu0 0.0
      %5668 = vmatmul.mubr.f32.gmra.mrb[0].mxu0 %v5452
      %v5669 = vpop.f32.mrb[0].mxu0
      %v5670 = vadd.f32 %v5317, %v5669
      %v5671 = vpop.f32.mrb[0].mxu0
      %5672 = vmatprep.mubr.f32.mxu0 0.0
      %5673 = vmatmul.mubr.f32.gmra.mrb[0].mxu0 %v5455
      %v5674 = vpop.f32.mrb[0].mxu0
      %v5675 = vadd.f32 %v5322, %v5674
      %v5676 = vpop.f32.mrb[0].mxu0
      %5677 = vmatprep.mubr.f32.mxu0 0.0
      %5678 = vmatmul.mubr.f32.gmra.mrb[0].mxu0 %v5458
      %v5679 = vpop.f32.mrb[0].mxu0
      %v5680 = vadd.f32 %v5327, %v5679
      %v5681 = vpop.f32.mrb[0].mxu0
      %5682 = vmatprep.mubr.f32.mxu0 0.0
      %5683 = vmatmul.mubr.f32.gmra.mrb[0].mxu0 %v5461
      %v5684 = vpop.f32.mrb[0].mxu0
      %v5685 = vadd.f32 %v5332, %v5684
      %v5686 = vpop.f32.mrb[0].mxu0
      %5687 = vmatprep.mubr.f32.mxu0 0.0
      %5688 = vmatmul.mubr.f32.gmra.mrb[0].mxu0 %v5464
      %v5689 = vpop.f32.mrb[0].mxu0
      %v5690 = vadd.f32 %v5337, %v5689
      %v5691 = vpop.f32.mrb[0].mxu0
      %5692 = vmatprep.mubr.f32.mxu0 0.0
      %5693 = vmatmul.mubr.f32.gmra.mrb[0].mxu0 %v5467
      %v5694 = vpop.f32.mrb[0].mxu0
      %v5695 = vadd.f32 %v5342, %v5694
      %v5696 = vpop.f32.mrb[0].mxu0
      %5697 = vmatprep.mubr.f32.mxu0 0.0
      %5698 = vmatmul.mubr.f32.gmra.mrb[0].mxu0 %v5470
      %v5699 = vpop.f32.mrb[0].mxu0
      %v5700 = vadd.f32 %v5347, %v5699
      %v5701 = vpop.f32.mrb[0].mxu0
      %5702 = vmatprep.mubr.f32.mxu0 0.0
      %5703 = vmatmul.mubr.f32.gmra.mrb[0].mxu0 %v5473
      %v5704 = vpop.f32.mrb[0].mxu0
      %v5705 = vadd.f32 %v5352, %v5704
      %v5706 = vpop.f32.mrb[0].mxu0
      %5707 = vmatprep.mubr.f32.mxu0 0.0
      %5708 = vmatmul.mubr.f32.gmra.mrb[0].mxu0 %v5476
      %v5709 = vpop.f32.mrb[0].mxu0
      %v5710 = vadd.f32 %v5357, %v5709
      %v5711 = vpop.f32.mrb[0].mxu0
      %5712 = vmatprep.mubr.f32.mxu0 0.0
      %5713 = vmatmul.mubr.f32.gmra.mrb[0].mxu0 %v5479
      %v5714 = vpop.f32.mrb[0].mxu0
      %v5715 = vadd.f32 %v5362, %v5714
      %v5716 = vpop.f32.mrb[0].mxu0
      %5717 = vmatprep.mubr.f32.mxu0 0.0
      %5718 = vmatmul.mubr.f32.gmra.mrb[0].mxu0 %v5482
      %v5719 = vpop.f32.mrb[0].mxu0
      %v5720 = vadd.f32 %v5367, %v5719
      %v5721 = vpop.f32.mrb[0].mxu0
      %5722 = vmatprep.mubr.f32.mxu0 0.0
      %5723 = vmatmul.mubr.f32.gmra.mrb[0].mxu0 %v5485
      %v5724 = vpop.f32.mrb[0].mxu0
      %v5725 = vadd.f32 %v5372, %v5724
      %v5726 = vpop.f32.mrb[0].mxu0
      %5727 = vmatprep.mubr.f32.mxu0 0.0
      %5728 = vmatmul.mubr.f32.gmra.mrb[0].mxu0 %v5488
      %v5729 = vpop.f32.mrb[0].mxu0
      %v5730 = vadd.f32 %v5377, %v5729
      %v5731 = vpop.f32.mrb[0].mxu0
      %5732 = vmatprep.mubr.f32.mxu0 0.0
      %5733 = vmatmul.mubr.f32.gmra.mrb[0].mxu0 %v5491
      %v5734 = vpop.f32.mrb[0].mxu0
      %v5735 = vadd.f32 %v5382, %v5734
      %v5736 = vpop.f32.mrb[0].mxu0
      %5737 = vdwg.mxu0
      %v5738 = vld [vmem:[#allocation2 + $0x19] sm:$0xff]
      %v5739 = vld [vmem:[#allocation2 + $0x21] sm:$0xff]
      %v5740 = vld [vmem:[#allocation2 + $0x29] sm:$0xff]
      %v5741 = vld [vmem:[#allocation2 + $0x31] sm:$0xff]
      %v5742 = vld [vmem:[#allocation2 + $0x39] sm:$0xff]
      %v5743 = vld [vmem:[#allocation2 + $0x41] sm:$0xff]
      %v5744 = vld [vmem:[#allocation2 + $0x49] sm:$0xff]
      %v5745 = vld [vmem:[#allocation2 + $0x51] sm:$0xff]
      %v5746 = vld [vmem:[#allocation2 + $0x59] sm:$0xff]
      %v5747 = vld [vmem:[#allocation2 + $0x61] sm:$0xff]
      %v5748 = vld [vmem:[#allocation2 + $0x69] sm:$0xff]
      %v5749 = vld [vmem:[#allocation2 + $0x71] sm:$0xff]
      %v5750 = vld [vmem:[#allocation2 + $0x79] sm:$0xff]
      %v5751 = vld [vmem:[#allocation2 + $0x81] sm:$0xff]
      %v5752 = vld [vmem:[#allocation2 + $0x89] sm:$0xff]
      %v5753 = vld [vmem:[#allocation2 + $0x91] sm:$0xff]
      %v5754 = vld [vmem:[#allocation2 + $0x99] sm:$0xff]
      %v5755 = vld [vmem:[#allocation2 + $0xa1] sm:$0xff]
      %v5756 = vld [vmem:[#allocation2 + $0xa9] sm:$0xff]
      %v5757 = vld [vmem:[#allocation2 + $0xb1] sm:$0xff]
      %v5758 = vld [vmem:[#allocation2 + $0xb9] sm:$0xff]
      %v5759 = vld [vmem:[#allocation2 + $0xc1] sm:$0xff]
      %v5760 = vld [vmem:[#allocation2 + $0xc9] sm:$0xff]
      %v5761 = vld [vmem:[#allocation2 + $0xd1] sm:$0xff]
      %v5762 = vld [vmem:[#allocation2 + $0xd9] sm:$0xff]
      %v5763 = vld [vmem:[#allocation2 + $0xe1] sm:$0xff]
      %v5764 = vld [vmem:[#allocation2 + $0xe9] sm:$0xff]
      %v5765 = vld [vmem:[#allocation2 + $0xf1] sm:$0xff]
      %v5766 = vld [vmem:[#allocation2 + $0xf9] sm:$0xff]
      %v5767 = vld [vmem:[#allocation2 + $0x101] sm:$0xff]
      %v5768 = vld [vmem:[#allocation2 + $0x109] sm:$0xff]
      %v5769 = vld [vmem:[#allocation2 + $0x111] sm:$0xff]
      %v5770 = vld [vmem:[#allocation2 + $0x119] sm:$0xff]
      %v5771 = vld [vmem:[#allocation2 + $0x121] sm:$0xff]
      %v5772 = vld [vmem:[#allocation2 + $0x129] sm:$0xff]
      %v5773 = vld [vmem:[#allocation2 + $0x131] sm:$0xff]
      %s5774 = scalar_lea.vmem %s4, 16
      %v5775 = vld [vmem:[%s5774] sm:$0xff]
      %v5777 = vsel %vm4867, %v5738, 0
      %v5780 = vsel %vm4867, %v5739, 0
      %v5783 = vsel %vm4867, %v5740, 0
      %v5786 = vsel %vm4867, %v5741, 0
      %v5789 = vsel %vm4867, %v5742, 0
      %v5792 = vsel %vm4867, %v5743, 0
      %v5795 = vsel %vm4867, %v5744, 0
      %v5798 = vsel %vm4867, %v5745, 0
      %v5801 = vsel %vm4867, %v5746, 0
      %v5804 = vsel %vm4867, %v5747, 0
      %v5807 = vsel %vm4867, %v5748, 0
      %v5810 = vsel %vm4867, %v5749, 0
      %v5813 = vsel %vm4867, %v5750, 0
      %v5816 = vsel %vm4867, %v5751, 0
      %v5819 = vsel %vm4867, %v5752, 0
      %v5822 = vsel %vm4867, %v5753, 0
      %v5825 = vsel %vm4867, %v5754, 0
      %v5828 = vsel %vm4867, %v5755, 0
      %v5831 = vsel %vm4867, %v5756, 0
      %v5834 = vsel %vm4867, %v5757, 0
      %v5837 = vsel %vm4867, %v5758, 0
      %v5840 = vsel %vm4867, %v5759, 0
      %v5843 = vsel %vm4867, %v5760, 0
      %v5846 = vsel %vm4867, %v5761, 0
      %v5849 = vsel %vm4867, %v5762, 0
      %v5852 = vsel %vm4867, %v5763, 0
      %v5855 = vsel %vm4867, %v5764, 0
      %v5858 = vsel %vm4867, %v5765, 0
      %v5861 = vsel %vm4867, %v5766, 0
      %v5864 = vsel %vm4867, %v5767, 0
      %v5867 = vsel %vm4867, %v5768, 0
      %v5870 = vsel %vm4867, %v5769, 0
      %v5873 = vsel %vm4867, %v5770, 0
      %v5876 = vsel %vm4867, %v5771, 0
      %v5879 = vsel %vm4867, %v5772, 0
      %v5882 = vsel %vm4867, %v5773, 0
      %5884 = vmatprep.subr.mxu0 0.0
      %5885 = vmatpush1.msra.mxu0 %v5775
      %5886 = vmatprep.subr.mxu0 0.0
      %5887 = vmatpush1.msra.mxu0 0.0
      %5888 = vmatprep.subr.mxu0 0.0
      %5889 = vmatpush1.msra.mxu0 0.0
      %5890 = vmatprep.subr.mxu0 0.0
      %5891 = vmatpush1.msra.mxu0 0.0
      %5892 = vmatprep.subr.mxu0 0.0
      %5893 = vmatpush1.msra.mxu0 0.0
      %5894 = vmatprep.subr.mxu0 0.0
      %5895 = vmatpush1.msra.mxu0 0.0
      %5896 = vmatprep.subr.mxu0 0.0
      %5897 = vmatpush1.msra.mxu0 0.0
      %5898 = vmatprep.subr.mxu0 0.0
      %5899 = vmatpush1.msra.mxu0 0.0
      %5900 = vmatprep.subr.mxu0 0.0
      %5901 = vmatpush1.msra.mxu0 0.0
      %5902 = vmatprep.subr.mxu0 0.0
      %5903 = vmatpush1.msra.mxu0 0.0
      %5904 = vmatprep.subr.mxu0 0.0
      %5905 = vmatpush1.msra.mxu0 0.0
      %5906 = vmatprep.subr.mxu0 0.0
      %5907 = vmatpush1.msra.mxu0 0.0
      %5908 = vmatprep.subr.mxu0 0.0
      %5909 = vmatpush1.msra.mxu0 0.0
      %5910 = vmatprep.subr.mxu0 0.0
      %5911 = vmatpush1.msra.mxu0 0.0
      %5912 = vmatprep.subr.mxu0 0.0
      %5913 = vmatpush1.msra.mxu0 0.0
      %5914 = vmatprep.subr.mxu0 0.0
      %5915 = vmatpush1.msra.mxu0 0.0
      %5916 = vmatprep.subr.mxu0 0.0
      %5917 = vmatpush1.msra.mxu0 0.0
      %5918 = vmatprep.subr.mxu0 0.0
      %5919 = vmatpush1.msra.mxu0 0.0
      %5920 = vmatprep.subr.mxu0 0.0
      %5921 = vmatpush1.msra.mxu0 0.0
      %5922 = vmatprep.subr.mxu0 0.0
      %5923 = vmatpush1.msra.mxu0 0.0
      %5924 = vmatprep.subr.mxu0 0.0
      %5925 = vmatpush1.msra.mxu0 0.0
      %5926 = vmatprep.subr.mxu0 0.0
      %5927 = vmatpush1.msra.mxu0 0.0
      %5928 = vmatprep.subr.mxu0 0.0
      %5929 = vmatpush1.msra.mxu0 0.0
      %5930 = vmatprep.subr.mxu0 0.0
      %5931 = vmatpush1.msra.mxu0 0.0
      %5932 = vmatprep.subr.mxu0 0.0
      %5933 = vmatpush1.msra.mxu0 0.0
      %5934 = vmatprep.subr.mxu0 0.0
      %5935 = vmatpush1.msra.mxu0 0.0
      %5936 = vmatprep.subr.mxu0 0.0
      %5937 = vmatpush1.msra.mxu0 0.0
      %5938 = vmatprep.subr.mxu0 0.0
      %5939 = vmatpush1.msra.mxu0 0.0
      %5940 = vmatprep.subr.mxu0 0.0
      %5941 = vmatpush1.msra.mxu0 0.0
      %5942 = vmatprep.subr.mxu0 0.0
      %5943 = vmatpush1.msra.mxu0 0.0
      %5944 = vmatprep.subr.mxu0 0.0
      %5945 = vmatpush1.msra.mxu0 0.0
      %5946 = vmatprep.subr.mxu0 0.0
      %5947 = vmatpush1.msra.mxu0 0.0
      %5948 = vmatprep.mubr.f32.mxu0 0.0
      %5949 = vmatmul.mubr.f32.gmra.mrb[0].mxu0 %v5777
      %v5950 = vpop.f32.mrb[0].mxu0
      %v5951 = vadd.f32 0.0, %v5950
      %v5952 = vpop.f32.mrb[0].mxu0
      %5953 = vmatprep.mubr.f32.mxu0 0.0
      %5954 = vmatmul.mubr.f32.gmra.mrb[0].mxu0 %v5780
      %v5955 = vpop.f32.mrb[0].mxu0
      %v5956 = vadd.f32 0.0, %v5955
      %v5957 = vpop.f32.mrb[0].mxu0
      %5958 = vmatprep.mubr.f32.mxu0 0.0
      %5959 = vmatmul.mubr.f32.gmra.mrb[0].mxu0 %v5783
      %v5960 = vpop.f32.mrb[0].mxu0
      %v5961 = vadd.f32 0.0, %v5960
      %v5962 = vpop.f32.mrb[0].mxu0
      %5963 = vmatprep.mubr.f32.mxu0 0.0
      %5964 = vmatmul.mubr.f32.gmra.mrb[0].mxu0 %v5786
      %v5965 = vpop.f32.mrb[0].mxu0
      %v5966 = vadd.f32 0.0, %v5965
      %v5967 = vpop.f32.mrb[0].mxu0
      %5968 = vmatprep.mubr.f32.mxu0 0.0
      %5969 = vmatmul.mubr.f32.gmra.mrb[0].mxu0 %v5789
      %v5970 = vpop.f32.mrb[0].mxu0
      %v5971 = vadd.f32 0.0, %v5970
      %v5972 = vpop.f32.mrb[0].mxu0
      %5973 = vmatprep.mubr.f32.mxu0 0.0
      %5974 = vmatmul.mubr.f32.gmra.mrb[0].mxu0 %v5792
      %v5975 = vpop.f32.mrb[0].mxu0
      %v5976 = vadd.f32 0.0, %v5975
      %v5977 = vpop.f32.mrb[0].mxu0
      %5978 = vmatprep.mubr.f32.mxu0 0.0
      %5979 = vmatmul.mubr.f32.gmra.mrb[0].mxu0 %v5795
      %v5980 = vpop.f32.mrb[0].mxu0
      %v5981 = vadd.f32 0.0, %v5980
      %v5982 = vpop.f32.mrb[0].mxu0
      %5983 = vmatprep.mubr.f32.mxu0 0.0
      %5984 = vmatmul.mubr.f32.gmra.mrb[0].mxu0 %v5798
      %v5985 = vpop.f32.mrb[0].mxu0
      %v5986 = vadd.f32 0.0, %v5985
      %v5987 = vpop.f32.mrb[0].mxu0
      %5988 = vmatprep.mubr.f32.mxu0 0.0
      %5989 = vmatmul.mubr.f32.gmra.mrb[0].mxu0 %v5801
      %v5990 = vpop.f32.mrb[0].mxu0
      %v5991 = vadd.f32 0.0, %v5990
      %v5992 = vpop.f32.mrb[0].mxu0
      %5993 = vmatprep.mubr.f32.mxu0 0.0
      %5994 = vmatmul.mubr.f32.gmra.mrb[0].mxu0 %v5804
      %v5995 = vpop.f32.mrb[0].mxu0
      %v5996 = vadd.f32 0.0, %v5995
      %v5997 = vpop.f32.mrb[0].mxu0
      %5998 = vmatprep.mubr.f32.mxu0 0.0
      %5999 = vmatmul.mubr.f32.gmra.mrb[0].mxu0 %v5807
      %v6000 = vpop.f32.mrb[0].mxu0
      %v6001 = vadd.f32 0.0, %v6000
      %v6002 = vpop.f32.mrb[0].mxu0
      %6003 = vmatprep.mubr.f32.mxu0 0.0
      %6004 = vmatmul.mubr.f32.gmra.mrb[0].mxu0 %v5810
      %v6005 = vpop.f32.mrb[0].mxu0
      %v6006 = vadd.f32 0.0, %v6005
      %v6007 = vpop.f32.mrb[0].mxu0
      %6008 = vmatprep.mubr.f32.mxu0 0.0
      %6009 = vmatmul.mubr.f32.gmra.mrb[0].mxu0 %v5813
      %v6010 = vpop.f32.mrb[0].mxu0
      %v6011 = vadd.f32 0.0, %v6010
      %v6012 = vpop.f32.mrb[0].mxu0
      %6013 = vmatprep.mubr.f32.mxu0 0.0
      %6014 = vmatmul.mubr.f32.gmra.mrb[0].mxu0 %v5816
      %v6015 = vpop.f32.mrb[0].mxu0
      %v6016 = vadd.f32 0.0, %v6015
      %v6017 = vpop.f32.mrb[0].mxu0
      %6018 = vmatprep.mubr.f32.mxu0 0.0
      %6019 = vmatmul.mubr.f32.gmra.mrb[0].mxu0 %v5819
      %v6020 = vpop.f32.mrb[0].mxu0
      %v6021 = vadd.f32 0.0, %v6020
      %v6022 = vpop.f32.mrb[0].mxu0
      %6023 = vmatprep.mubr.f32.mxu0 0.0
      %6024 = vmatmul.mubr.f32.gmra.mrb[0].mxu0 %v5822
      %v6025 = vpop.f32.mrb[0].mxu0
      %v6026 = vadd.f32 0.0, %v6025
      %v6027 = vpop.f32.mrb[0].mxu0
      %6028 = vmatprep.mubr.f32.mxu0 0.0
      %6029 = vmatmul.mubr.f32.gmra.mrb[0].mxu0 %v5825
      %v6030 = vpop.f32.mrb[0].mxu0
      %v6031 = vadd.f32 0.0, %v6030
      %v6032 = vpop.f32.mrb[0].mxu0
      %6033 = vmatprep.mubr.f32.mxu0 0.0
      %6034 = vmatmul.mubr.f32.gmra.mrb[0].mxu0 %v5828
      %v6035 = vpop.f32.mrb[0].mxu0
      %v6036 = vadd.f32 0.0, %v6035
      %v6037 = vpop.f32.mrb[0].mxu0
      %6038 = vmatprep.mubr.f32.mxu0 0.0
      %6039 = vmatmul.mubr.f32.gmra.mrb[0].mxu0 %v5831
      %v6040 = vpop.f32.mrb[0].mxu0
      %v6041 = vadd.f32 0.0, %v6040
      %v6042 = vpop.f32.mrb[0].mxu0
      %6043 = vmatprep.mubr.f32.mxu0 0.0
      %6044 = vmatmul.mubr.f32.gmra.mrb[0].mxu0 %v5834
      %v6045 = vpop.f32.mrb[0].mxu0
      %v6046 = vadd.f32 0.0, %v6045
      %v6047 = vpop.f32.mrb[0].mxu0
      %6048 = vmatprep.mubr.f32.mxu0 0.0
      %6049 = vmatmul.mubr.f32.gmra.mrb[0].mxu0 %v5837
      %v6050 = vpop.f32.mrb[0].mxu0
      %v6051 = vadd.f32 0.0, %v6050
      %v6052 = vpop.f32.mrb[0].mxu0
      %6053 = vmatprep.mubr.f32.mxu0 0.0
      %6054 = vmatmul.mubr.f32.gmra.mrb[0].mxu0 %v5840
      %v6055 = vpop.f32.mrb[0].mxu0
      %v6056 = vadd.f32 0.0, %v6055
      %v6057 = vpop.f32.mrb[0].mxu0
      %6058 = vmatprep.mubr.f32.mxu0 0.0
      %6059 = vmatmul.mubr.f32.gmra.mrb[0].mxu0 %v5843
      %v6060 = vpop.f32.mrb[0].mxu0
      %v6061 = vadd.f32 0.0, %v6060
      %v6062 = vpop.f32.mrb[0].mxu0
      %6063 = vmatprep.mubr.f32.mxu0 0.0
      %6064 = vmatmul.mubr.f32.gmra.mrb[0].mxu0 %v5846
      %v6065 = vpop.f32.mrb[0].mxu0
      %v6066 = vadd.f32 0.0, %v6065
      %v6067 = vpop.f32.mrb[0].mxu0
      %6068 = vmatprep.mubr.f32.mxu0 0.0
      %6069 = vmatmul.mubr.f32.gmra.mrb[0].mxu0 %v5849
      %v6070 = vpop.f32.mrb[0].mxu0
      %v6071 = vadd.f32 0.0, %v6070
      %v6072 = vpop.f32.mrb[0].mxu0
      %6073 = vmatprep.mubr.f32.mxu0 0.0
      %6074 = vmatmul.mubr.f32.gmra.mrb[0].mxu0 %v5852
      %v6075 = vpop.f32.mrb[0].mxu0
      %v6076 = vadd.f32 0.0, %v6075
      %v6077 = vpop.f32.mrb[0].mxu0
      %6078 = vmatprep.mubr.f32.mxu0 0.0
      %6079 = vmatmul.mubr.f32.gmra.mrb[0].mxu0 %v5855
      %v6080 = vpop.f32.mrb[0].mxu0
      %v6081 = vadd.f32 0.0, %v6080
      %v6082 = vpop.f32.mrb[0].mxu0
      %6083 = vmatprep.mubr.f32.mxu0 0.0
      %6084 = vmatmul.mubr.f32.gmra.mrb[0].mxu0 %v5858
      %v6085 = vpop.f32.mrb[0].mxu0
      %v6086 = vadd.f32 0.0, %v6085
      %v6087 = vpop.f32.mrb[0].mxu0
      %6088 = vmatprep.mubr.f32.mxu0 0.0
      %6089 = vmatmul.mubr.f32.gmra.mrb[0].mxu0 %v5861
      %v6090 = vpop.f32.mrb[0].mxu0
      %v6091 = vadd.f32 0.0, %v6090
      %v6092 = vpop.f32.mrb[0].mxu0
      %6093 = vmatprep.mubr.f32.mxu0 0.0
      %6094 = vmatmul.mubr.f32.gmra.mrb[0].mxu0 %v5864
      %v6095 = vpop.f32.mrb[0].mxu0
      %v6096 = vadd.f32 0.0, %v6095
      %v6097 = vpop.f32.mrb[0].mxu0
      %6098 = vmatprep.mubr.f32.mxu0 0.0
      %6099 = vmatmul.mubr.f32.gmra.mrb[0].mxu0 %v5867
      %v6100 = vpop.f32.mrb[0].mxu0
      %v6101 = vadd.f32 0.0, %v6100
      %v6102 = vpop.f32.mrb[0].mxu0
      %6103 = vmatprep.mubr.f32.mxu0 0.0
      %6104 = vmatmul.mubr.f32.gmra.mrb[0].mxu0 %v5870
      %v6105 = vpop.f32.mrb[0].mxu0
      %v6106 = vadd.f32 0.0, %v6105
      %v6107 = vpop.f32.mrb[0].mxu0
      %6108 = vmatprep.mubr.f32.mxu0 0.0
      %6109 = vmatmul.mubr.f32.gmra.mrb[0].mxu0 %v5873
      %v6110 = vpop.f32.mrb[0].mxu0
      %v6111 = vadd.f32 0.0, %v6110
      %v6112 = vpop.f32.mrb[0].mxu0
      %6113 = vmatprep.mubr.f32.mxu0 0.0
      %6114 = vmatmul.mubr.f32.gmra.mrb[0].mxu0 %v5876
      %v6115 = vpop.f32.mrb[0].mxu0
      %v6116 = vadd.f32 0.0, %v6115
      %v6117 = vpop.f32.mrb[0].mxu0
      %6118 = vmatprep.mubr.f32.mxu0 0.0
      %6119 = vmatmul.mubr.f32.gmra.mrb[0].mxu0 %v5879
      %v6120 = vpop.f32.mrb[0].mxu0
      %v6121 = vadd.f32 0.0, %v6120
      %v6122 = vpop.f32.mrb[0].mxu0
      %6123 = vmatprep.mubr.f32.mxu0 0.0
      %6124 = vmatmul.mubr.f32.gmra.mrb[0].mxu0 %v5882
      %v6125 = vpop.f32.mrb[0].mxu0
      %v6126 = vadd.f32 0.0, %v6125
      %v6127 = vpop.f32.mrb[0].mxu0
      %6128 = vdwg.mxu0
      %v6129 = vadd.f32 %v5560, %v5951
      %v6130 = vadd.f32 %v5565, %v5956
      %v6131 = vadd.f32 %v5570, %v5961
      %v6132 = vadd.f32 %v5575, %v5966
      %v6133 = vadd.f32 %v5580, %v5971
      %v6134 = vadd.f32 %v5585, %v5976
      %v6135 = vadd.f32 %v5590, %v5981
      %v6136 = vadd.f32 %v5595, %v5986
      %v6137 = vadd.f32 %v5600, %v5991
      %v6138 = vadd.f32 %v5605, %v5996
      %v6139 = vadd.f32 %v5610, %v6001
      %v6140 = vadd.f32 %v5615, %v6006
      %v6141 = vadd.f32 %v5620, %v6011
      %v6142 = vadd.f32 %v5625, %v6016
      %v6143 = vadd.f32 %v5630, %v6021
      %v6144 = vadd.f32 %v5635, %v6026
      %v6145 = vadd.f32 %v5640, %v6031
      %v6146 = vadd.f32 %v5645, %v6036
      %v6147 = vadd.f32 %v5650, %v6041
      %v6148 = vadd.f32 %v5655, %v6046
      %v6149 = vadd.f32 %v5660, %v6051
      %v6150 = vadd.f32 %v5665, %v6056
      %v6151 = vadd.f32 %v5670, %v6061
      %v6152 = vadd.f32 %v5675, %v6066
      %v6153 = vadd.f32 %v5680, %v6071
      %v6154 = vadd.f32 %v5685, %v6076
      %v6155 = vadd.f32 %v5690, %v6081
      %v6156 = vadd.f32 %v5695, %v6086
      %v6157 = vadd.f32 %v5700, %v6091
      %v6158 = vadd.f32 %v5705, %v6096
      %v6159 = vadd.f32 %v5710, %v6101
      %v6160 = vadd.f32 %v5715, %v6106
      %v6161 = vadd.f32 %v5720, %v6111
      %v6162 = vadd.f32 %v5725, %v6116
      %v6163 = vadd.f32 %v5730, %v6121
      %v6164 = vadd.f32 %v5735, %v6126
      %v6165 = vld [vmem:[#allocation2 + $0x29] sm:$0xff]
      %v6166 = vld [vmem:[#allocation2 + $0x31] sm:$0xff]
      %v6167 = vld [vmem:[#allocation2 + $0x39] sm:$0xff]
      %v6168 = vld [vmem:[#allocation2 + $0x41] sm:$0xff]
      %v6169 = vld [vmem:[#allocation2 + $0x49] sm:$0xff]
      %v6170 = vld [vmem:[#allocation2 + $0x51] sm:$0xff]
      %v6171 = vld [vmem:[#allocation2 + $0x59] sm:$0xff]
      %v6172 = vld [vmem:[#allocation2 + $0x61] sm:$0xff]
      %v6173 = vld [vmem:[#allocation2 + $0x69] sm:$0xff]
      %v6174 = vld [vmem:[#allocation2 + $0x71] sm:$0xff]
      %v6175 = vld [vmem:[#allocation2 + $0x79] sm:$0xff]
      %v6176 = vld [vmem:[#allocation2 + $0x81] sm:$0xff]
      %v6177 = vld [vmem:[#allocation2 + $0x89] sm:$0xff]
      %v6178 = vld [vmem:[#allocation2 + $0x91] sm:$0xff]
      %v6179 = vld [vmem:[#allocation2 + $0x99] sm:$0xff]
      %v6180 = vld [vmem:[#allocation2 + $0xa1] sm:$0xff]
      %v6181 = vld [vmem:[#allocation2 + $0xa9] sm:$0xff]
      %v6182 = vld [vmem:[#allocation2 + $0xb1] sm:$0xff]
      %v6183 = vld [vmem:[#allocation2 + $0xb9] sm:$0xff]
      %v6184 = vld [vmem:[#allocation2 + $0xc1] sm:$0xff]
      %v6185 = vld [vmem:[#allocation2 + $0xc9] sm:$0xff]
      %v6186 = vld [vmem:[#allocation2 + $0xd1] sm:$0xff]
      %v6187 = vld [vmem:[#allocation2 + $0xd9] sm:$0xff]
      %v6188 = vld [vmem:[#allocation2 + $0xe1] sm:$0xff]
      %v6189 = vld [vmem:[#allocation2 + $0xe9] sm:$0xff]
      %v6190 = vld [vmem:[#allocation2 + $0xf1] sm:$0xff]
      %v6191 = vld [vmem:[#allocation2 + $0xf9] sm:$0xff]
      %v6192 = vld [vmem:[#allocation2 + $0x101] sm:$0xff]
      %v6193 = vld [vmem:[#allocation2 + $0x109] sm:$0xff]
      %v6194 = vld [vmem:[#allocation2 + $0x111] sm:$0xff]
      %v6195 = vld [vmem:[#allocation2 + $0x119] sm:$0xff]
      %v6196 = vld [vmem:[#allocation2 + $0x121] sm:$0xff]
      %v6197 = vld [vmem:[#allocation2 + $0x129] sm:$0xff]
      %v6198 = vld [vmem:[#allocation2 + $0x131] sm:$0xff]
      %v6199 = vld [vmem:[#allocation2 + $0x139] sm:$0xff]
      %v6200 = vld [vmem:[#allocation2 + $0x141] sm:$0xff]
      %s6201 = scalar_lea.vmem %s4, 24
      %v6202 = vld [vmem:[%s6201] sm:$0xff]
      %v6204 = vsel %vm4867, %v6165, 0
      %v6207 = vsel %vm4867, %v6166, 0
      %v6210 = vsel %vm4867, %v6167, 0
      %v6213 = vsel %vm4867, %v6168, 0
      %v6216 = vsel %vm4867, %v6169, 0
      %v6219 = vsel %vm4867, %v6170, 0
      %v6222 = vsel %vm4867, %v6171, 0
      %v6225 = vsel %vm4867, %v6172, 0
      %v6228 = vsel %vm4867, %v6173, 0
      %v6231 = vsel %vm4867, %v6174, 0
      %v6234 = vsel %vm4867, %v6175, 0
      %v6237 = vsel %vm4867, %v6176, 0
      %v6240 = vsel %vm4867, %v6177, 0
      %v6243 = vsel %vm4867, %v6178, 0
      %v6246 = vsel %vm4867, %v6179, 0
      %v6249 = vsel %vm4867, %v6180, 0
      %v6252 = vsel %vm4867, %v6181, 0
      %v6255 = vsel %vm4867, %v6182, 0
      %v6258 = vsel %vm4867, %v6183, 0
      %v6261 = vsel %vm4867, %v6184, 0
      %v6264 = vsel %vm4867, %v6185, 0
      %v6267 = vsel %vm4867, %v6186, 0
      %v6270 = vsel %vm4867, %v6187, 0
      %v6273 = vsel %vm4867, %v6188, 0
      %v6276 = vsel %vm4867, %v6189, 0
      %v6279 = vsel %vm4867, %v6190, 0
      %v6282 = vsel %vm4867, %v6191, 0
      %v6285 = vsel %vm4867, %v6192, 0
      %v6288 = vsel %vm4867, %v6193, 0
      %v6291 = vsel %vm4867, %v6194, 0
      %v6294 = vsel %vm4867, %v6195, 0
      %v6297 = vsel %vm4867, %v6196, 0
      %v6300 = vsel %vm4867, %v6197, 0
      %v6303 = vsel %vm4867, %v6198, 0
      %v6306 = vsel %vm4867, %v6199, 0
      %v6309 = vsel %vm4867, %v6200, 0
      %6311 = vmatprep.subr.mxu0 0.0
      %6312 = vmatpush1.msra.mxu0 %v6202
      %6313 = vmatprep.subr.mxu0 0.0
      %6314 = vmatpush1.msra.mxu0 0.0
      %6315 = vmatprep.subr.mxu0 0.0
      %6316 = vmatpush1.msra.mxu0 0.0
      %6317 = vmatprep.subr.mxu0 0.0
      %6318 = vmatpush1.msra.mxu0 0.0
      %6319 = vmatprep.subr.mxu0 0.0
      %6320 = vmatpush1.msra.mxu0 0.0
      %6321 = vmatprep.subr.mxu0 0.0
      %6322 = vmatpush1.msra.mxu0 0.0
      %6323 = vmatprep.subr.mxu0 0.0
      %6324 = vmatpush1.msra.mxu0 0.0
      %6325 = vmatprep.subr.mxu0 0.0
      %6326 = vmatpush1.msra.mxu0 0.0
      %6327 = vmatprep.subr.mxu0 0.0
      %6328 = vmatpush1.msra.mxu0 0.0
      %6329 = vmatprep.subr.mxu0 0.0
      %6330 = vmatpush1.msra.mxu0 0.0
      %6331 = vmatprep.subr.mxu0 0.0
      %6332 = vmatpush1.msra.mxu0 0.0
      %6333 = vmatprep.subr.mxu0 0.0
      %6334 = vmatpush1.msra.mxu0 0.0
      %6335 = vmatprep.subr.mxu0 0.0
      %6336 = vmatpush1.msra.mxu0 0.0
      %6337 = vmatprep.subr.mxu0 0.0
      %6338 = vmatpush1.msra.mxu0 0.0
      %6339 = vmatprep.subr.mxu0 0.0
      %6340 = vmatpush1.msra.mxu0 0.0
      %6341 = vmatprep.subr.mxu0 0.0
      %6342 = vmatpush1.msra.mxu0 0.0
      %6343 = vmatprep.subr.mxu0 0.0
      %6344 = vmatpush1.msra.mxu0 0.0
      %6345 = vmatprep.subr.mxu0 0.0
      %6346 = vmatpush1.msra.mxu0 0.0
      %6347 = vmatprep.subr.mxu0 0.0
      %6348 = vmatpush1.msra.mxu0 0.0
      %6349 = vmatprep.subr.mxu0 0.0
      %6350 = vmatpush1.msra.mxu0 0.0
      %6351 = vmatprep.subr.mxu0 0.0
      %6352 = vmatpush1.msra.mxu0 0.0
      %6353 = vmatprep.subr.mxu0 0.0
      %6354 = vmatpush1.msra.mxu0 0.0
      %6355 = vmatprep.subr.mxu0 0.0
      %6356 = vmatpush1.msra.mxu0 0.0
      %6357 = vmatprep.subr.mxu0 0.0
      %6358 = vmatpush1.msra.mxu0 0.0
      %6359 = vmatprep.subr.mxu0 0.0
      %6360 = vmatpush1.msra.mxu0 0.0
      %6361 = vmatprep.subr.mxu0 0.0
      %6362 = vmatpush1.msra.mxu0 0.0
      %6363 = vmatprep.subr.mxu0 0.0
      %6364 = vmatpush1.msra.mxu0 0.0
      %6365 = vmatprep.subr.mxu0 0.0
      %6366 = vmatpush1.msra.mxu0 0.0
      %6367 = vmatprep.subr.mxu0 0.0
      %6368 = vmatpush1.msra.mxu0 0.0
      %6369 = vmatprep.subr.mxu0 0.0
      %6370 = vmatpush1.msra.mxu0 0.0
      %6371 = vmatprep.subr.mxu0 0.0
      %6372 = vmatpush1.msra.mxu0 0.0
      %6373 = vmatprep.subr.mxu0 0.0
      %6374 = vmatpush1.msra.mxu0 0.0
      %6375 = vmatprep.mubr.f32.mxu0 0.0
      %6376 = vmatmul.mubr.f32.gmra.mrb[0].mxu0 %v6204
      %v6377 = vpop.f32.mrb[0].mxu0
      %v6378 = vadd.f32 0.0, %v6377
      %v6379 = vpop.f32.mrb[0].mxu0
      %6380 = vmatprep.mubr.f32.mxu0 0.0
      %6381 = vmatmul.mubr.f32.gmra.mrb[0].mxu0 %v6207
      %v6382 = vpop.f32.mrb[0].mxu0
      %v6383 = vadd.f32 0.0, %v6382
      %v6384 = vpop.f32.mrb[0].mxu0
      %6385 = vmatprep.mubr.f32.mxu0 0.0
      %6386 = vmatmul.mubr.f32.gmra.mrb[0].mxu0 %v6210
      %v6387 = vpop.f32.mrb[0].mxu0
      %v6388 = vadd.f32 0.0, %v6387
      %v6389 = vpop.f32.mrb[0].mxu0
      %6390 = vmatprep.mubr.f32.mxu0 0.0
      %6391 = vmatmul.mubr.f32.gmra.mrb[0].mxu0 %v6213
      %v6392 = vpop.f32.mrb[0].mxu0
      %v6393 = vadd.f32 0.0, %v6392
      %v6394 = vpop.f32.mrb[0].mxu0
      %6395 = vmatprep.mubr.f32.mxu0 0.0
      %6396 = vmatmul.mubr.f32.gmra.mrb[0].mxu0 %v6216
      %v6397 = vpop.f32.mrb[0].mxu0
      %v6398 = vadd.f32 0.0, %v6397
      %v6399 = vpop.f32.mrb[0].mxu0
      %6400 = vmatprep.mubr.f32.mxu0 0.0
      %6401 = vmatmul.mubr.f32.gmra.mrb[0].mxu0 %v6219
      %v6402 = vpop.f32.mrb[0].mxu0
      %v6403 = vadd.f32 0.0, %v6402
      %v6404 = vpop.f32.mrb[0].mxu0
      %6405 = vmatprep.mubr.f32.mxu0 0.0
      %6406 = vmatmul.mubr.f32.gmra.mrb[0].mxu0 %v6222
      %v6407 = vpop.f32.mrb[0].mxu0
      %v6408 = vadd.f32 0.0, %v6407
      %v6409 = vpop.f32.mrb[0].mxu0
      %6410 = vmatprep.mubr.f32.mxu0 0.0
      %6411 = vmatmul.mubr.f32.gmra.mrb[0].mxu0 %v6225
      %v6412 = vpop.f32.mrb[0].mxu0
      %v6413 = vadd.f32 0.0, %v6412
      %v6414 = vpop.f32.mrb[0].mxu0
      %6415 = vmatprep.mubr.f32.mxu0 0.0
      %6416 = vmatmul.mubr.f32.gmra.mrb[0].mxu0 %v6228
      %v6417 = vpop.f32.mrb[0].mxu0
      %v6418 = vadd.f32 0.0, %v6417
      %v6419 = vpop.f32.mrb[0].mxu0
      %6420 = vmatprep.mubr.f32.mxu0 0.0
      %6421 = vmatmul.mubr.f32.gmra.mrb[0].mxu0 %v6231
      %v6422 = vpop.f32.mrb[0].mxu0
      %v6423 = vadd.f32 0.0, %v6422
      %v6424 = vpop.f32.mrb[0].mxu0
      %6425 = vmatprep.mubr.f32.mxu0 0.0
      %6426 = vmatmul.mubr.f32.gmra.mrb[0].mxu0 %v6234
      %v6427 = vpop.f32.mrb[0].mxu0
      %v6428 = vadd.f32 0.0, %v6427
      %v6429 = vpop.f32.mrb[0].mxu0
      %6430 = vmatprep.mubr.f32.mxu0 0.0
      %6431 = vmatmul.mubr.f32.gmra.mrb[0].mxu0 %v6237
      %v6432 = vpop.f32.mrb[0].mxu0
      %v6433 = vadd.f32 0.0, %v6432
      %v6434 = vpop.f32.mrb[0].mxu0
      %6435 = vmatprep.mubr.f32.mxu0 0.0
      %6436 = vmatmul.mubr.f32.gmra.mrb[0].mxu0 %v6240
      %v6437 = vpop.f32.mrb[0].mxu0
      %v6438 = vadd.f32 0.0, %v6437
      %v6439 = vpop.f32.mrb[0].mxu0
      %6440 = vmatprep.mubr.f32.mxu0 0.0
      %6441 = vmatmul.mubr.f32.gmra.mrb[0].mxu0 %v6243
      %v6442 = vpop.f32.mrb[0].mxu0
      %v6443 = vadd.f32 0.0, %v6442
      %v6444 = vpop.f32.mrb[0].mxu0
      %6445 = vmatprep.mubr.f32.mxu0 0.0
      %6446 = vmatmul.mubr.f32.gmra.mrb[0].mxu0 %v6246
      %v6447 = vpop.f32.mrb[0].mxu0
      %v6448 = vadd.f32 0.0, %v6447
      %v6449 = vpop.f32.mrb[0].mxu0
      %6450 = vmatprep.mubr.f32.mxu0 0.0
      %6451 = vmatmul.mubr.f32.gmra.mrb[0].mxu0 %v6249
      %v6452 = vpop.f32.mrb[0].mxu0
      %v6453 = vadd.f32 0.0, %v6452
      %v6454 = vpop.f32.mrb[0].mxu0
      %6455 = vmatprep.mubr.f32.mxu0 0.0
      %6456 = vmatmul.mubr.f32.gmra.mrb[0].mxu0 %v6252
      %v6457 = vpop.f32.mrb[0].mxu0
      %v6458 = vadd.f32 0.0, %v6457
      %v6459 = vpop.f32.mrb[0].mxu0
      %6460 = vmatprep.mubr.f32.mxu0 0.0
      %6461 = vmatmul.mubr.f32.gmra.mrb[0].mxu0 %v6255
      %v6462 = vpop.f32.mrb[0].mxu0
      %v6463 = vadd.f32 0.0, %v6462
      %v6464 = vpop.f32.mrb[0].mxu0
      %6465 = vmatprep.mubr.f32.mxu0 0.0
      %6466 = vmatmul.mubr.f32.gmra.mrb[0].mxu0 %v6258
      %v6467 = vpop.f32.mrb[0].mxu0
      %v6468 = vadd.f32 0.0, %v6467
      %v6469 = vpop.f32.mrb[0].mxu0
      %6470 = vmatprep.mubr.f32.mxu0 0.0
      %6471 = vmatmul.mubr.f32.gmra.mrb[0].mxu0 %v6261
      %v6472 = vpop.f32.mrb[0].mxu0
      %v6473 = vadd.f32 0.0, %v6472
      %v6474 = vpop.f32.mrb[0].mxu0
      %6475 = vmatprep.mubr.f32.mxu0 0.0
      %6476 = vmatmul.mubr.f32.gmra.mrb[0].mxu0 %v6264
      %v6477 = vpop.f32.mrb[0].mxu0
      %v6478 = vadd.f32 0.0, %v6477
      %v6479 = vpop.f32.mrb[0].mxu0
      %6480 = vmatprep.mubr.f32.mxu0 0.0
      %6481 = vmatmul.mubr.f32.gmra.mrb[0].mxu0 %v6267
      %v6482 = vpop.f32.mrb[0].mxu0
      %v6483 = vadd.f32 0.0, %v6482
      %v6484 = vpop.f32.mrb[0].mxu0
      %6485 = vmatprep.mubr.f32.mxu0 0.0
      %6486 = vmatmul.mubr.f32.gmra.mrb[0].mxu0 %v6270
      %v6487 = vpop.f32.mrb[0].mxu0
      %v6488 = vadd.f32 0.0, %v6487
      %v6489 = vpop.f32.mrb[0].mxu0
      %6490 = vmatprep.mubr.f32.mxu0 0.0
      %6491 = vmatmul.mubr.f32.gmra.mrb[0].mxu0 %v6273
      %v6492 = vpop.f32.mrb[0].mxu0
      %v6493 = vadd.f32 0.0, %v6492
      %v6494 = vpop.f32.mrb[0].mxu0
      %6495 = vmatprep.mubr.f32.mxu0 0.0
      %6496 = vmatmul.mubr.f32.gmra.mrb[0].mxu0 %v6276
      %v6497 = vpop.f32.mrb[0].mxu0
      %v6498 = vadd.f32 0.0, %v6497
      %v6499 = vpop.f32.mrb[0].mxu0
      %6500 = vmatprep.mubr.f32.mxu0 0.0
      %6501 = vmatmul.mubr.f32.gmra.mrb[0].mxu0 %v6279
      %v6502 = vpop.f32.mrb[0].mxu0
      %v6503 = vadd.f32 0.0, %v6502
      %v6504 = vpop.f32.mrb[0].mxu0
      %6505 = vmatprep.mubr.f32.mxu0 0.0
      %6506 = vmatmul.mubr.f32.gmra.mrb[0].mxu0 %v6282
      %v6507 = vpop.f32.mrb[0].mxu0
      %v6508 = vadd.f32 0.0, %v6507
      %v6509 = vpop.f32.mrb[0].mxu0
      %6510 = vmatprep.mubr.f32.mxu0 0.0
      %6511 = vmatmul.mubr.f32.gmra.mrb[0].mxu0 %v6285
      %v6512 = vpop.f32.mrb[0].mxu0
      %v6513 = vadd.f32 0.0, %v6512
      %v6514 = vpop.f32.mrb[0].mxu0
      %6515 = vmatprep.mubr.f32.mxu0 0.0
      %6516 = vmatmul.mubr.f32.gmra.mrb[0].mxu0 %v6288
      %v6517 = vpop.f32.mrb[0].mxu0
      %v6518 = vadd.f32 0.0, %v6517
      %v6519 = vpop.f32.mrb[0].mxu0
      %6520 = vmatprep.mubr.f32.mxu0 0.0
      %6521 = vmatmul.mubr.f32.gmra.mrb[0].mxu0 %v6291
      %v6522 = vpop.f32.mrb[0].mxu0
      %v6523 = vadd.f32 0.0, %v6522
      %v6524 = vpop.f32.mrb[0].mxu0
      %6525 = vmatprep.mubr.f32.mxu0 0.0
      %6526 = vmatmul.mubr.f32.gmra.mrb[0].mxu0 %v6294
      %v6527 = vpop.f32.mrb[0].mxu0
      %v6528 = vadd.f32 0.0, %v6527
      %v6529 = vpop.f32.mrb[0].mxu0
      %6530 = vmatprep.mubr.f32.mxu0 0.0
      %6531 = vmatmul.mubr.f32.gmra.mrb[0].mxu0 %v6297
      %v6532 = vpop.f32.mrb[0].mxu0
      %v6533 = vadd.f32 0.0, %v6532
      %v6534 = vpop.f32.mrb[0].mxu0
      %6535 = vmatprep.mubr.f32.mxu0 0.0
      %6536 = vmatmul.mubr.f32.gmra.mrb[0].mxu0 %v6300
      %v6537 = vpop.f32.mrb[0].mxu0
      %v6538 = vadd.f32 0.0, %v6537
      %v6539 = vpop.f32.mrb[0].mxu0
      %6540 = vmatprep.mubr.f32.mxu0 0.0
      %6541 = vmatmul.mubr.f32.gmra.mrb[0].mxu0 %v6303
      %v6542 = vpop.f32.mrb[0].mxu0
      %v6543 = vadd.f32 0.0, %v6542
      %v6544 = vpop.f32.mrb[0].mxu0
      %6545 = vmatprep.mubr.f32.mxu0 0.0
      %6546 = vmatmul.mubr.f32.gmra.mrb[0].mxu0 %v6306
      %v6547 = vpop.f32.mrb[0].mxu0
      %v6548 = vadd.f32 0.0, %v6547
      %v6549 = vpop.f32.mrb[0].mxu0
      %6550 = vmatprep.mubr.f32.mxu0 0.0
      %6551 = vmatmul.mubr.f32.gmra.mrb[0].mxu0 %v6309
      %v6552 = vpop.f32.mrb[0].mxu0
      %v6553 = vadd.f32 0.0, %v6552
      %v6554 = vpop.f32.mrb[0].mxu0
      %6555 = vdwg.mxu0
      %v6556 = vadd.f32 %v6129, %v6378
      %v6557 = vadd.f32 %v6130, %v6383
      %v6558 = vadd.f32 %v6131, %v6388
      %v6559 = vadd.f32 %v6132, %v6393
      %v6560 = vadd.f32 %v6133, %v6398
      %v6561 = vadd.f32 %v6134, %v6403
      %v6562 = vadd.f32 %v6135, %v6408
      %v6563 = vadd.f32 %v6136, %v6413
      %v6564 = vadd.f32 %v6137, %v6418
      %v6565 = vadd.f32 %v6138, %v6423
      %v6566 = vadd.f32 %v6139, %v6428
      %v6567 = vadd.f32 %v6140, %v6433
      %v6568 = vadd.f32 %v6141, %v6438
      %v6569 = vadd.f32 %v6142, %v6443
      %v6570 = vadd.f32 %v6143, %v6448
      %v6571 = vadd.f32 %v6144, %v6453
      %v6572 = vadd.f32 %v6145, %v6458
      %v6573 = vadd.f32 %v6146, %v6463
      %v6574 = vadd.f32 %v6147, %v6468
      %v6575 = vadd.f32 %v6148, %v6473
      %v6576 = vadd.f32 %v6149, %v6478
      %v6577 = vadd.f32 %v6150, %v6483
      %v6578 = vadd.f32 %v6151, %v6488
      %v6579 = vadd.f32 %v6152, %v6493
      %v6580 = vadd.f32 %v6153, %v6498
      %v6581 = vadd.f32 %v6154, %v6503
      %v6582 = vadd.f32 %v6155, %v6508
      %v6583 = vadd.f32 %v6156, %v6513
      %v6584 = vadd.f32 %v6157, %v6518
      %v6585 = vadd.f32 %v6158, %v6523
      %v6586 = vadd.f32 %v6159, %v6528
      %v6587 = vadd.f32 %v6160, %v6533
      %v6588 = vadd.f32 %v6161, %v6538
      %v6589 = vadd.f32 %v6162, %v6543
      %v6590 = vadd.f32 %v6163, %v6548
      %v6591 = vadd.f32 %v6164, %v6553
      %v6592 = vld [vmem:[#allocation2 + $0x2a] sm:$0xff]
      %v6593 = vld [vmem:[#allocation2 + $0x32] sm:$0xff]
      %v6594 = vld [vmem:[#allocation2 + $0x3a] sm:$0xff]
      %v6595 = vld [vmem:[#allocation2 + $0x42] sm:$0xff]
      %v6596 = vld [vmem:[#allocation2 + $0x4a] sm:$0xff]
      %v6597 = vld [vmem:[#allocation2 + $0x52] sm:$0xff]
      %v6598 = vld [vmem:[#allocation2 + $0x5a] sm:$0xff]
      %v6599 = vld [vmem:[#allocation2 + $0x62] sm:$0xff]
      %v6600 = vld [vmem:[#allocation2 + $0x6a] sm:$0xff]
      %v6601 = vld [vmem:[#allocation2 + $0x72] sm:$0xff]
      %v6602 = vld [vmem:[#allocation2 + $0x7a] sm:$0xff]
      %v6603 = vld [vmem:[#allocation2 + $0x82] sm:$0xff]
      %v6604 = vld [vmem:[#allocation2 + $0x8a] sm:$0xff]
      %v6605 = vld [vmem:[#allocation2 + $0x92] sm:$0xff]
      %v6606 = vld [vmem:[#allocation2 + $0x9a] sm:$0xff]
      %v6607 = vld [vmem:[#allocation2 + $0xa2] sm:$0xff]
      %v6608 = vld [vmem:[#allocation2 + $0xaa] sm:$0xff]
      %v6609 = vld [vmem:[#allocation2 + $0xb2] sm:$0xff]
      %v6610 = vld [vmem:[#allocation2 + $0xba] sm:$0xff]
      %v6611 = vld [vmem:[#allocation2 + $0xc2] sm:$0xff]
      %v6612 = vld [vmem:[#allocation2 + $0xca] sm:$0xff]
      %v6613 = vld [vmem:[#allocation2 + $0xd2] sm:$0xff]
      %v6614 = vld [vmem:[#allocation2 + $0xda] sm:$0xff]
      %v6615 = vld [vmem:[#allocation2 + $0xe2] sm:$0xff]
      %v6616 = vld [vmem:[#allocation2 + $0xea] sm:$0xff]
      %v6617 = vld [vmem:[#allocation2 + $0xf2] sm:$0xff]
      %v6618 = vld [vmem:[#allocation2 + $0xfa] sm:$0xff]
      %v6619 = vld [vmem:[#allocation2 + $0x102] sm:$0xff]
      %v6620 = vld [vmem:[#allocation2 + $0x10a] sm:$0xff]
      %v6621 = vld [vmem:[#allocation2 + $0x112] sm:$0xff]
      %v6622 = vld [vmem:[#allocation2 + $0x11a] sm:$0xff]
      %v6623 = vld [vmem:[#allocation2 + $0x122] sm:$0xff]
      %v6624 = vld [vmem:[#allocation2 + $0x12a] sm:$0xff]
      %v6625 = vld [vmem:[#allocation2 + $0x132] sm:$0xff]
      %v6626 = vld [vmem:[#allocation2 + $0x13a] sm:$0xff]
      %v6627 = vld [vmem:[#allocation2 + $0x142] sm:$0xff]
      %s6628 = scalar_lea.vmem %s4, 32
      %v6629 = vld [vmem:[%s6628] sm:$0xff]
      %v6631 = vsel %vm4867, %v6592, 0
      %v6634 = vsel %vm4867, %v6593, 0
      %v6637 = vsel %vm4867, %v6594, 0
      %v6640 = vsel %vm4867, %v6595, 0
      %v6643 = vsel %vm4867, %v6596, 0
      %v6646 = vsel %vm4867, %v6597, 0
      %v6649 = vsel %vm4867, %v6598, 0
      %v6652 = vsel %vm4867, %v6599, 0
      %v6655 = vsel %vm4867, %v6600, 0
      %v6658 = vsel %vm4867, %v6601, 0
      %v6661 = vsel %vm4867, %v6602, 0
      %v6664 = vsel %vm4867, %v6603, 0
      %v6667 = vsel %vm4867, %v6604, 0
      %v6670 = vsel %vm4867, %v6605, 0
      %v6673 = vsel %vm4867, %v6606, 0
      %v6676 = vsel %vm4867, %v6607, 0
      %v6679 = vsel %vm4867, %v6608, 0
      %v6682 = vsel %vm4867, %v6609, 0
      %v6685 = vsel %vm4867, %v6610, 0
      %v6688 = vsel %vm4867, %v6611, 0
      %v6691 = vsel %vm4867, %v6612, 0
      %v6694 = vsel %vm4867, %v6613, 0
      %v6697 = vsel %vm4867, %v6614, 0
      %v6700 = vsel %vm4867, %v6615, 0
      %v6703 = vsel %vm4867, %v6616, 0
      %v6706 = vsel %vm4867, %v6617, 0
      %v6709 = vsel %vm4867, %v6618, 0
      %v6712 = vsel %vm4867, %v6619, 0
      %v6715 = vsel %vm4867, %v6620, 0
      %v6718 = vsel %vm4867, %v6621, 0
      %v6721 = vsel %vm4867, %v6622, 0
      %v6724 = vsel %vm4867, %v6623, 0
      %v6727 = vsel %vm4867, %v6624, 0
      %v6730 = vsel %vm4867, %v6625, 0
      %v6733 = vsel %vm4867, %v6626, 0
      %v6736 = vsel %vm4867, %v6627, 0
      %6738 = vmatprep.subr.mxu0 0.0
      %6739 = vmatpush1.msra.mxu0 %v6629
      %6740 = vmatprep.subr.mxu0 0.0
      %6741 = vmatpush1.msra.mxu0 0.0
      %6742 = vmatprep.subr.mxu0 0.0
      %6743 = vmatpush1.msra.mxu0 0.0
      %6744 = vmatprep.subr.mxu0 0.0
      %6745 = vmatpush1.msra.mxu0 0.0
      %6746 = vmatprep.subr.mxu0 0.0
      %6747 = vmatpush1.msra.mxu0 0.0
      %6748 = vmatprep.subr.mxu0 0.0
      %6749 = vmatpush1.msra.mxu0 0.0
      %6750 = vmatprep.subr.mxu0 0.0
      %6751 = vmatpush1.msra.mxu0 0.0
      %6752 = vmatprep.subr.mxu0 0.0
      %6753 = vmatpush1.msra.mxu0 0.0
      %6754 = vmatprep.subr.mxu0 0.0
      %6755 = vmatpush1.msra.mxu0 0.0
      %6756 = vmatprep.subr.mxu0 0.0
      %6757 = vmatpush1.msra.mxu0 0.0
      %6758 = vmatprep.subr.mxu0 0.0
      %6759 = vmatpush1.msra.mxu0 0.0
      %6760 = vmatprep.subr.mxu0 0.0
      %6761 = vmatpush1.msra.mxu0 0.0
      %6762 = vmatprep.subr.mxu0 0.0
      %6763 = vmatpush1.msra.mxu0 0.0
      %6764 = vmatprep.subr.mxu0 0.0
      %6765 = vmatpush1.msra.mxu0 0.0
      %6766 = vmatprep.subr.mxu0 0.0
      %6767 = vmatpush1.msra.mxu0 0.0
      %6768 = vmatprep.subr.mxu0 0.0
      %6769 = vmatpush1.msra.mxu0 0.0
      %6770 = vmatprep.subr.mxu0 0.0
      %6771 = vmatpush1.msra.mxu0 0.0
      %6772 = vmatprep.subr.mxu0 0.0
      %6773 = vmatpush1.msra.mxu0 0.0
      %6774 = vmatprep.subr.mxu0 0.0
      %6775 = vmatpush1.msra.mxu0 0.0
      %6776 = vmatprep.subr.mxu0 0.0
      %6777 = vmatpush1.msra.mxu0 0.0
      %6778 = vmatprep.subr.mxu0 0.0
      %6779 = vmatpush1.msra.mxu0 0.0
      %6780 = vmatprep.subr.mxu0 0.0
      %6781 = vmatpush1.msra.mxu0 0.0
      %6782 = vmatprep.subr.mxu0 0.0
      %6783 = vmatpush1.msra.mxu0 0.0
      %6784 = vmatprep.subr.mxu0 0.0
      %6785 = vmatpush1.msra.mxu0 0.0
      %6786 = vmatprep.subr.mxu0 0.0
      %6787 = vmatpush1.msra.mxu0 0.0
      %6788 = vmatprep.subr.mxu0 0.0
      %6789 = vmatpush1.msra.mxu0 0.0
      %6790 = vmatprep.subr.mxu0 0.0
      %6791 = vmatpush1.msra.mxu0 0.0
      %6792 = vmatprep.subr.mxu0 0.0
      %6793 = vmatpush1.msra.mxu0 0.0
      %6794 = vmatprep.subr.mxu0 0.0
      %6795 = vmatpush1.msra.mxu0 0.0
      %6796 = vmatprep.subr.mxu0 0.0
      %6797 = vmatpush1.msra.mxu0 0.0
      %6798 = vmatprep.subr.mxu0 0.0
      %6799 = vmatpush1.msra.mxu0 0.0
      %6800 = vmatprep.subr.mxu0 0.0
      %6801 = vmatpush1.msra.mxu0 0.0
      %6802 = vmatprep.mubr.f32.mxu0 0.0
      %6803 = vmatmul.mubr.f32.gmra.mrb[0].mxu0 %v6631
      %v6804 = vpop.f32.mrb[0].mxu0
      %v6805 = vadd.f32 0.0, %v6804
      %v6806 = vpop.f32.mrb[0].mxu0
      %6807 = vmatprep.mubr.f32.mxu0 0.0
      %6808 = vmatmul.mubr.f32.gmra.mrb[0].mxu0 %v6634
      %v6809 = vpop.f32.mrb[0].mxu0
      %v6810 = vadd.f32 0.0, %v6809
      %v6811 = vpop.f32.mrb[0].mxu0
      %6812 = vmatprep.mubr.f32.mxu0 0.0
      %6813 = vmatmul.mubr.f32.gmra.mrb[0].mxu0 %v6637
      %v6814 = vpop.f32.mrb[0].mxu0
      %v6815 = vadd.f32 0.0, %v6814
      %v6816 = vpop.f32.mrb[0].mxu0
      %6817 = vmatprep.mubr.f32.mxu0 0.0
      %6818 = vmatmul.mubr.f32.gmra.mrb[0].mxu0 %v6640
      %v6819 = vpop.f32.mrb[0].mxu0
      %v6820 = vadd.f32 0.0, %v6819
      %v6821 = vpop.f32.mrb[0].mxu0
      %6822 = vmatprep.mubr.f32.mxu0 0.0
      %6823 = vmatmul.mubr.f32.gmra.mrb[0].mxu0 %v6643
      %v6824 = vpop.f32.mrb[0].mxu0
      %v6825 = vadd.f32 0.0, %v6824
      %v6826 = vpop.f32.mrb[0].mxu0
      %6827 = vmatprep.mubr.f32.mxu0 0.0
      %6828 = vmatmul.mubr.f32.gmra.mrb[0].mxu0 %v6646
      %v6829 = vpop.f32.mrb[0].mxu0
      %v6830 = vadd.f32 0.0, %v6829
      %v6831 = vpop.f32.mrb[0].mxu0
      %6832 = vmatprep.mubr.f32.mxu0 0.0
      %6833 = vmatmul.mubr.f32.gmra.mrb[0].mxu0 %v6649
      %v6834 = vpop.f32.mrb[0].mxu0
      %v6835 = vadd.f32 0.0, %v6834
      %v6836 = vpop.f32.mrb[0].mxu0
      %6837 = vmatprep.mubr.f32.mxu0 0.0
      %6838 = vmatmul.mubr.f32.gmra.mrb[0].mxu0 %v6652
      %v6839 = vpop.f32.mrb[0].mxu0
      %v6840 = vadd.f32 0.0, %v6839
      %v6841 = vpop.f32.mrb[0].mxu0
      %6842 = vmatprep.mubr.f32.mxu0 0.0
      %6843 = vmatmul.mubr.f32.gmra.mrb[0].mxu0 %v6655
      %v6844 = vpop.f32.mrb[0].mxu0
      %v6845 = vadd.f32 0.0, %v6844
      %v6846 = vpop.f32.mrb[0].mxu0
      %6847 = vmatprep.mubr.f32.mxu0 0.0
      %6848 = vmatmul.mubr.f32.gmra.mrb[0].mxu0 %v6658
      %v6849 = vpop.f32.mrb[0].mxu0
      %v6850 = vadd.f32 0.0, %v6849
      %v6851 = vpop.f32.mrb[0].mxu0
      %6852 = vmatprep.mubr.f32.mxu0 0.0
      %6853 = vmatmul.mubr.f32.gmra.mrb[0].mxu0 %v6661
      %v6854 = vpop.f32.mrb[0].mxu0
      %v6855 = vadd.f32 0.0, %v6854
      %v6856 = vpop.f32.mrb[0].mxu0
      %6857 = vmatprep.mubr.f32.mxu0 0.0
      %6858 = vmatmul.mubr.f32.gmra.mrb[0].mxu0 %v6664
      %v6859 = vpop.f32.mrb[0].mxu0
      %v6860 = vadd.f32 0.0, %v6859
      %v6861 = vpop.f32.mrb[0].mxu0
      %6862 = vmatprep.mubr.f32.mxu0 0.0
      %6863 = vmatmul.mubr.f32.gmra.mrb[0].mxu0 %v6667
      %v6864 = vpop.f32.mrb[0].mxu0
      %v6865 = vadd.f32 0.0, %v6864
      %v6866 = vpop.f32.mrb[0].mxu0
      %6867 = vmatprep.mubr.f32.mxu0 0.0
      %6868 = vmatmul.mubr.f32.gmra.mrb[0].mxu0 %v6670
      %v6869 = vpop.f32.mrb[0].mxu0
      %v6870 = vadd.f32 0.0, %v6869
      %v6871 = vpop.f32.mrb[0].mxu0
      %6872 = vmatprep.mubr.f32.mxu0 0.0
      %6873 = vmatmul.mubr.f32.gmra.mrb[0].mxu0 %v6673
      %v6874 = vpop.f32.mrb[0].mxu0
      %v6875 = vadd.f32 0.0, %v6874
      %v6876 = vpop.f32.mrb[0].mxu0
      %6877 = vmatprep.mubr.f32.mxu0 0.0
      %6878 = vmatmul.mubr.f32.gmra.mrb[0].mxu0 %v6676
      %v6879 = vpop.f32.mrb[0].mxu0
      %v6880 = vadd.f32 0.0, %v6879
      %v6881 = vpop.f32.mrb[0].mxu0
      %6882 = vmatprep.mubr.f32.mxu0 0.0
      %6883 = vmatmul.mubr.f32.gmra.mrb[0].mxu0 %v6679
      %v6884 = vpop.f32.mrb[0].mxu0
      %v6885 = vadd.f32 0.0, %v6884
      %v6886 = vpop.f32.mrb[0].mxu0
      %6887 = vmatprep.mubr.f32.mxu0 0.0
      %6888 = vmatmul.mubr.f32.gmra.mrb[0].mxu0 %v6682
      %v6889 = vpop.f32.mrb[0].mxu0
      %v6890 = vadd.f32 0.0, %v6889
      %v6891 = vpop.f32.mrb[0].mxu0
      %6892 = vmatprep.mubr.f32.mxu0 0.0
      %6893 = vmatmul.mubr.f32.gmra.mrb[0].mxu0 %v6685
      %v6894 = vpop.f32.mrb[0].mxu0
      %v6895 = vadd.f32 0.0, %v6894
      %v6896 = vpop.f32.mrb[0].mxu0
      %6897 = vmatprep.mubr.f32.mxu0 0.0
      %6898 = vmatmul.mubr.f32.gmra.mrb[0].mxu0 %v6688
      %v6899 = vpop.f32.mrb[0].mxu0
      %v6900 = vadd.f32 0.0, %v6899
      %v6901 = vpop.f32.mrb[0].mxu0
      %6902 = vmatprep.mubr.f32.mxu0 0.0
      %6903 = vmatmul.mubr.f32.gmra.mrb[0].mxu0 %v6691
      %v6904 = vpop.f32.mrb[0].mxu0
      %v6905 = vadd.f32 0.0, %v6904
      %v6906 = vpop.f32.mrb[0].mxu0
      %6907 = vmatprep.mubr.f32.mxu0 0.0
      %6908 = vmatmul.mubr.f32.gmra.mrb[0].mxu0 %v6694
      %v6909 = vpop.f32.mrb[0].mxu0
      %v6910 = vadd.f32 0.0, %v6909
      %v6911 = vpop.f32.mrb[0].mxu0
      %6912 = vmatprep.mubr.f32.mxu0 0.0
      %6913 = vmatmul.mubr.f32.gmra.mrb[0].mxu0 %v6697
      %v6914 = vpop.f32.mrb[0].mxu0
      %v6915 = vadd.f32 0.0, %v6914
      %v6916 = vpop.f32.mrb[0].mxu0
      %6917 = vmatprep.mubr.f32.mxu0 0.0
      %6918 = vmatmul.mubr.f32.gmra.mrb[0].mxu0 %v6700
      %v6919 = vpop.f32.mrb[0].mxu0
      %v6920 = vadd.f32 0.0, %v6919
      %v6921 = vpop.f32.mrb[0].mxu0
      %6922 = vmatprep.mubr.f32.mxu0 0.0
      %6923 = vmatmul.mubr.f32.gmra.mrb[0].mxu0 %v6703
      %v6924 = vpop.f32.mrb[0].mxu0
      %v6925 = vadd.f32 0.0, %v6924
      %v6926 = vpop.f32.mrb[0].mxu0
      %6927 = vmatprep.mubr.f32.mxu0 0.0
      %6928 = vmatmul.mubr.f32.gmra.mrb[0].mxu0 %v6706
      %v6929 = vpop.f32.mrb[0].mxu0
      %v6930 = vadd.f32 0.0, %v6929
      %v6931 = vpop.f32.mrb[0].mxu0
      %6932 = vmatprep.mubr.f32.mxu0 0.0
      %6933 = vmatmul.mubr.f32.gmra.mrb[0].mxu0 %v6709
      %v6934 = vpop.f32.mrb[0].mxu0
      %v6935 = vadd.f32 0.0, %v6934
      %v6936 = vpop.f32.mrb[0].mxu0
      %6937 = vmatprep.mubr.f32.mxu0 0.0
      %6938 = vmatmul.mubr.f32.gmra.mrb[0].mxu0 %v6712
      %v6939 = vpop.f32.mrb[0].mxu0
      %v6940 = vadd.f32 0.0, %v6939
      %v6941 = vpop.f32.mrb[0].mxu0
      %6942 = vmatprep.mubr.f32.mxu0 0.0
      %6943 = vmatmul.mubr.f32.gmra.mrb[0].mxu0 %v6715
      %v6944 = vpop.f32.mrb[0].mxu0
      %v6945 = vadd.f32 0.0, %v6944
      %v6946 = vpop.f32.mrb[0].mxu0
      %6947 = vmatprep.mubr.f32.mxu0 0.0
      %6948 = vmatmul.mubr.f32.gmra.mrb[0].mxu0 %v6718
      %v6949 = vpop.f32.mrb[0].mxu0
      %v6950 = vadd.f32 0.0, %v6949
      %v6951 = vpop.f32.mrb[0].mxu0
      %6952 = vmatprep.mubr.f32.mxu0 0.0
      %6953 = vmatmul.mubr.f32.gmra.mrb[0].mxu0 %v6721
      %v6954 = vpop.f32.mrb[0].mxu0
      %v6955 = vadd.f32 0.0, %v6954
      %v6956 = vpop.f32.mrb[0].mxu0
      %6957 = vmatprep.mubr.f32.mxu0 0.0
      %6958 = vmatmul.mubr.f32.gmra.mrb[0].mxu0 %v6724
      %v6959 = vpop.f32.mrb[0].mxu0
      %v6960 = vadd.f32 0.0, %v6959
      %v6961 = vpop.f32.mrb[0].mxu0
      %6962 = vmatprep.mubr.f32.mxu0 0.0
      %6963 = vmatmul.mubr.f32.gmra.mrb[0].mxu0 %v6727
      %v6964 = vpop.f32.mrb[0].mxu0
      %v6965 = vadd.f32 0.0, %v6964
      %v6966 = vpop.f32.mrb[0].mxu0
      %6967 = vmatprep.mubr.f32.mxu0 0.0
      %6968 = vmatmul.mubr.f32.gmra.mrb[0].mxu0 %v6730
      %v6969 = vpop.f32.mrb[0].mxu0
      %v6970 = vadd.f32 0.0, %v6969
      %v6971 = vpop.f32.mrb[0].mxu0
      %6972 = vmatprep.mubr.f32.mxu0 0.0
      %6973 = vmatmul.mubr.f32.gmra.mrb[0].mxu0 %v6733
      %v6974 = vpop.f32.mrb[0].mxu0
      %v6975 = vadd.f32 0.0, %v6974
      %v6976 = vpop.f32.mrb[0].mxu0
      %6977 = vmatprep.mubr.f32.mxu0 0.0
      %6978 = vmatmul.mubr.f32.gmra.mrb[0].mxu0 %v6736
      %v6979 = vpop.f32.mrb[0].mxu0
      %v6980 = vadd.f32 0.0, %v6979
      %v6981 = vpop.f32.mrb[0].mxu0
      %6982 = vdwg.mxu0
      %v6983 = vadd.f32 %v6556, %v6805
      %v6984 = vadd.f32 %v6557, %v6810
      %v6985 = vadd.f32 %v6558, %v6815
      %v6986 = vadd.f32 %v6559, %v6820
      %v6987 = vadd.f32 %v6560, %v6825
      %v6988 = vadd.f32 %v6561, %v6830
      %v6989 = vadd.f32 %v6562, %v6835
      %v6990 = vadd.f32 %v6563, %v6840
      %v6991 = vadd.f32 %v6564, %v6845
      %v6992 = vadd.f32 %v6565, %v6850
      %v6993 = vadd.f32 %v6566, %v6855
      %v6994 = vadd.f32 %v6567, %v6860
      %v6995 = vadd.f32 %v6568, %v6865
      %v6996 = vadd.f32 %v6569, %v6870
      %v6997 = vadd.f32 %v6570, %v6875
      %v6998 = vadd.f32 %v6571, %v6880
      %v6999 = vadd.f32 %v6572, %v6885
      %v7000 = vadd.f32 %v6573, %v6890
      %v7001 = vadd.f32 %v6574, %v6895
      %v7002 = vadd.f32 %v6575, %v6900
      %v7003 = vadd.f32 %v6576, %v6905
      %v7004 = vadd.f32 %v6577, %v6910
      %v7005 = vadd.f32 %v6578, %v6915
      %v7006 = vadd.f32 %v6579, %v6920
      %v7007 = vadd.f32 %v6580, %v6925
      %v7008 = vadd.f32 %v6581, %v6930
      %v7009 = vadd.f32 %v6582, %v6935
      %v7010 = vadd.f32 %v6583, %v6940
      %v7011 = vadd.f32 %v6584, %v6945
      %v7012 = vadd.f32 %v6585, %v6950
      %v7013 = vadd.f32 %v6586, %v6955
      %v7014 = vadd.f32 %v6587, %v6960
      %v7015 = vadd.f32 %v6588, %v6965
      %v7016 = vadd.f32 %v6589, %v6970
      %v7017 = vadd.f32 %v6590, %v6975
      %v7018 = vadd.f32 %v6591, %v6980
      %v7019 = vld [vmem:[#allocation2 + $0x2b] sm:$0xff]
      %v7020 = vld [vmem:[#allocation2 + $0x33] sm:$0xff]
      %v7021 = vld [vmem:[#allocation2 + $0x3b] sm:$0xff]
      %v7022 = vld [vmem:[#allocation2 + $0x43] sm:$0xff]
      %v7023 = vld [vmem:[#allocation2 + $0x4b] sm:$0xff]
      %v7024 = vld [vmem:[#allocation2 + $0x53] sm:$0xff]
      %v7025 = vld [vmem:[#allocation2 + $0x5b] sm:$0xff]
      %v7026 = vld [vmem:[#allocation2 + $0x63] sm:$0xff]
      %v7027 = vld [vmem:[#allocation2 + $0x6b] sm:$0xff]
      %v7028 = vld [vmem:[#allocation2 + $0x73] sm:$0xff]
      %v7029 = vld [vmem:[#allocation2 + $0x7b] sm:$0xff]
      %v7030 = vld [vmem:[#allocation2 + $0x83] sm:$0xff]
      %v7031 = vld [vmem:[#allocation2 + $0x8b] sm:$0xff]
      %v7032 = vld [vmem:[#allocation2 + $0x93] sm:$0xff]
      %v7033 = vld [vmem:[#allocation2 + $0x9b] sm:$0xff]
      %v7034 = vld [vmem:[#allocation2 + $0xa3] sm:$0xff]
      %v7035 = vld [vmem:[#allocation2 + $0xab] sm:$0xff]
      %v7036 = vld [vmem:[#allocation2 + $0xb3] sm:$0xff]
      %v7037 = vld [vmem:[#allocation2 + $0xbb] sm:$0xff]
      %v7038 = vld [vmem:[#allocation2 + $0xc3] sm:$0xff]
      %v7039 = vld [vmem:[#allocation2 + $0xcb] sm:$0xff]
      %v7040 = vld [vmem:[#allocation2 + $0xd3] sm:$0xff]
      %v7041 = vld [vmem:[#allocation2 + $0xdb] sm:$0xff]
      %v7042 = vld [vmem:[#allocation2 + $0xe3] sm:$0xff]
      %v7043 = vld [vmem:[#allocation2 + $0xeb] sm:$0xff]
      %v7044 = vld [vmem:[#allocation2 + $0xf3] sm:$0xff]
      %v7045 = vld [vmem:[#allocation2 + $0xfb] sm:$0xff]
      %v7046 = vld [vmem:[#allocation2 + $0x103] sm:$0xff]
      %v7047 = vld [vmem:[#allocation2 + $0x10b] sm:$0xff]
      %v7048 = vld [vmem:[#allocation2 + $0x113] sm:$0xff]
      %v7049 = vld [vmem:[#allocation2 + $0x11b] sm:$0xff]
      %v7050 = vld [vmem:[#allocation2 + $0x123] sm:$0xff]
      %v7051 = vld [vmem:[#allocation2 + $0x12b] sm:$0xff]
      %v7052 = vld [vmem:[#allocation2 + $0x133] sm:$0xff]
      %v7053 = vld [vmem:[#allocation2 + $0x13b] sm:$0xff]
      %v7054 = vld [vmem:[#allocation2 + $0x143] sm:$0xff]
      %s7055 = scalar_lea.vmem %s4, 40
      %v7056 = vld [vmem:[%s7055] sm:$0xff]
      %v7058 = vsel %vm4867, %v7019, 0
      %v7061 = vsel %vm4867, %v7020, 0
      %v7064 = vsel %vm4867, %v7021, 0
      %v7067 = vsel %vm4867, %v7022, 0
      %v7070 = vsel %vm4867, %v7023, 0
      %v7073 = vsel %vm4867, %v7024, 0
      %v7076 = vsel %vm4867, %v7025, 0
      %v7079 = vsel %vm4867, %v7026, 0
      %v7082 = vsel %vm4867, %v7027, 0
      %v7085 = vsel %vm4867, %v7028, 0
      %v7088 = vsel %vm4867, %v7029, 0
      %v7091 = vsel %vm4867, %v7030, 0
      %v7094 = vsel %vm4867, %v7031, 0
      %v7097 = vsel %vm4867, %v7032, 0
      %v7100 = vsel %vm4867, %v7033, 0
      %v7103 = vsel %vm4867, %v7034, 0
      %v7106 = vsel %vm4867, %v7035, 0
      %v7109 = vsel %vm4867, %v7036, 0
      %v7112 = vsel %vm4867, %v7037, 0
      %v7115 = vsel %vm4867, %v7038, 0
      %v7118 = vsel %vm4867, %v7039, 0
      %v7121 = vsel %vm4867, %v7040, 0
      %v7124 = vsel %vm4867, %v7041, 0
      %v7127 = vsel %vm4867, %v7042, 0
      %v7130 = vsel %vm4867, %v7043, 0
      %v7133 = vsel %vm4867, %v7044, 0
      %v7136 = vsel %vm4867, %v7045, 0
      %v7139 = vsel %vm4867, %v7046, 0
      %v7142 = vsel %vm4867, %v7047, 0
      %v7145 = vsel %vm4867, %v7048, 0
      %v7148 = vsel %vm4867, %v7049, 0
      %v7151 = vsel %vm4867, %v7050, 0
      %v7154 = vsel %vm4867, %v7051, 0
      %v7157 = vsel %vm4867, %v7052, 0
      %v7160 = vsel %vm4867, %v7053, 0
      %v7163 = vsel %vm4867, %v7054, 0
      %7165 = vmatprep.subr.mxu0 0.0
      %7166 = vmatpush1.msra.mxu0 %v7056
      %7167 = vmatprep.subr.mxu0 0.0
      %7168 = vmatpush1.msra.mxu0 0.0
      %7169 = vmatprep.subr.mxu0 0.0
      %7170 = vmatpush1.msra.mxu0 0.0
      %7171 = vmatprep.subr.mxu0 0.0
      %7172 = vmatpush1.msra.mxu0 0.0
      %7173 = vmatprep.subr.mxu0 0.0
      %7174 = vmatpush1.msra.mxu0 0.0
      %7175 = vmatprep.subr.mxu0 0.0
      %7176 = vmatpush1.msra.mxu0 0.0
      %7177 = vmatprep.subr.mxu0 0.0
      %7178 = vmatpush1.msra.mxu0 0.0
      %7179 = vmatprep.subr.mxu0 0.0
      %7180 = vmatpush1.msra.mxu0 0.0
      %7181 = vmatprep.subr.mxu0 0.0
      %7182 = vmatpush1.msra.mxu0 0.0
      %7183 = vmatprep.subr.mxu0 0.0
      %7184 = vmatpush1.msra.mxu0 0.0
      %7185 = vmatprep.subr.mxu0 0.0
      %7186 = vmatpush1.msra.mxu0 0.0
      %7187 = vmatprep.subr.mxu0 0.0
      %7188 = vmatpush1.msra.mxu0 0.0
      %7189 = vmatprep.subr.mxu0 0.0
      %7190 = vmatpush1.msra.mxu0 0.0
      %7191 = vmatprep.subr.mxu0 0.0
      %7192 = vmatpush1.msra.mxu0 0.0
      %7193 = vmatprep.subr.mxu0 0.0
      %7194 = vmatpush1.msra.mxu0 0.0
      %7195 = vmatprep.subr.mxu0 0.0
      %7196 = vmatpush1.msra.mxu0 0.0
      %7197 = vmatprep.subr.mxu0 0.0
      %7198 = vmatpush1.msra.mxu0 0.0
      %7199 = vmatprep.subr.mxu0 0.0
      %7200 = vmatpush1.msra.mxu0 0.0
      %7201 = vmatprep.subr.mxu0 0.0
      %7202 = vmatpush1.msra.mxu0 0.0
      %7203 = vmatprep.subr.mxu0 0.0
      %7204 = vmatpush1.msra.mxu0 0.0
      %7205 = vmatprep.subr.mxu0 0.0
      %7206 = vmatpush1.msra.mxu0 0.0
      %7207 = vmatprep.subr.mxu0 0.0
      %7208 = vmatpush1.msra.mxu0 0.0
      %7209 = vmatprep.subr.mxu0 0.0
      %7210 = vmatpush1.msra.mxu0 0.0
      %7211 = vmatprep.subr.mxu0 0.0
      %7212 = vmatpush1.msra.mxu0 0.0
      %7213 = vmatprep.subr.mxu0 0.0
      %7214 = vmatpush1.msra.mxu0 0.0
      %7215 = vmatprep.subr.mxu0 0.0
      %7216 = vmatpush1.msra.mxu0 0.0
      %7217 = vmatprep.subr.mxu0 0.0
      %7218 = vmatpush1.msra.mxu0 0.0
      %7219 = vmatprep.subr.mxu0 0.0
      %7220 = vmatpush1.msra.mxu0 0.0
      %7221 = vmatprep.subr.mxu0 0.0
      %7222 = vmatpush1.msra.mxu0 0.0
      %7223 = vmatprep.subr.mxu0 0.0
      %7224 = vmatpush1.msra.mxu0 0.0
      %7225 = vmatprep.subr.mxu0 0.0
      %7226 = vmatpush1.msra.mxu0 0.0
      %7227 = vmatprep.subr.mxu0 0.0
      %7228 = vmatpush1.msra.mxu0 0.0
      %7229 = vmatprep.mubr.f32.mxu0 0.0
      %7230 = vmatmul.mubr.f32.gmra.mrb[0].mxu0 %v7058
      %v7231 = vpop.f32.mrb[0].mxu0
      %v7232 = vadd.f32 0.0, %v7231
      %v7233 = vpop.f32.mrb[0].mxu0
      %7234 = vmatprep.mubr.f32.mxu0 0.0
      %7235 = vmatmul.mubr.f32.gmra.mrb[0].mxu0 %v7061
      %v7236 = vpop.f32.mrb[0].mxu0
      %v7237 = vadd.f32 0.0, %v7236
      %v7238 = vpop.f32.mrb[0].mxu0
      %7239 = vmatprep.mubr.f32.mxu0 0.0
      %7240 = vmatmul.mubr.f32.gmra.mrb[0].mxu0 %v7064
      %v7241 = vpop.f32.mrb[0].mxu0
      %v7242 = vadd.f32 0.0, %v7241
      %v7243 = vpop.f32.mrb[0].mxu0
      %7244 = vmatprep.mubr.f32.mxu0 0.0
      %7245 = vmatmul.mubr.f32.gmra.mrb[0].mxu0 %v7067
      %v7246 = vpop.f32.mrb[0].mxu0
      %v7247 = vadd.f32 0.0, %v7246
      %v7248 = vpop.f32.mrb[0].mxu0
      %7249 = vmatprep.mubr.f32.mxu0 0.0
      %7250 = vmatmul.mubr.f32.gmra.mrb[0].mxu0 %v7070
      %v7251 = vpop.f32.mrb[0].mxu0
      %v7252 = vadd.f32 0.0, %v7251
      %v7253 = vpop.f32.mrb[0].mxu0
      %7254 = vmatprep.mubr.f32.mxu0 0.0
      %7255 = vmatmul.mubr.f32.gmra.mrb[0].mxu0 %v7073
      %v7256 = vpop.f32.mrb[0].mxu0
      %v7257 = vadd.f32 0.0, %v7256
      %v7258 = vpop.f32.mrb[0].mxu0
      %7259 = vmatprep.mubr.f32.mxu0 0.0
      %7260 = vmatmul.mubr.f32.gmra.mrb[0].mxu0 %v7076
      %v7261 = vpop.f32.mrb[0].mxu0
      %v7262 = vadd.f32 0.0, %v7261
      %v7263 = vpop.f32.mrb[0].mxu0
      %7264 = vmatprep.mubr.f32.mxu0 0.0
      %7265 = vmatmul.mubr.f32.gmra.mrb[0].mxu0 %v7079
      %v7266 = vpop.f32.mrb[0].mxu0
      %v7267 = vadd.f32 0.0, %v7266
      %v7268 = vpop.f32.mrb[0].mxu0
      %7269 = vmatprep.mubr.f32.mxu0 0.0
      %7270 = vmatmul.mubr.f32.gmra.mrb[0].mxu0 %v7082
      %v7271 = vpop.f32.mrb[0].mxu0
      %v7272 = vadd.f32 0.0, %v7271
      %v7273 = vpop.f32.mrb[0].mxu0
      %7274 = vmatprep.mubr.f32.mxu0 0.0
      %7275 = vmatmul.mubr.f32.gmra.mrb[0].mxu0 %v7085
      %v7276 = vpop.f32.mrb[0].mxu0
      %v7277 = vadd.f32 0.0, %v7276
      %v7278 = vpop.f32.mrb[0].mxu0
      %7279 = vmatprep.mubr.f32.mxu0 0.0
      %7280 = vmatmul.mubr.f32.gmra.mrb[0].mxu0 %v7088
      %v7281 = vpop.f32.mrb[0].mxu0
      %v7282 = vadd.f32 0.0, %v7281
      %v7283 = vpop.f32.mrb[0].mxu0
      %7284 = vmatprep.mubr.f32.mxu0 0.0
      %7285 = vmatmul.mubr.f32.gmra.mrb[0].mxu0 %v7091
      %v7286 = vpop.f32.mrb[0].mxu0
      %v7287 = vadd.f32 0.0, %v7286
      %v7288 = vpop.f32.mrb[0].mxu0
      %7289 = vmatprep.mubr.f32.mxu0 0.0
      %7290 = vmatmul.mubr.f32.gmra.mrb[0].mxu0 %v7094
      %v7291 = vpop.f32.mrb[0].mxu0
      %v7292 = vadd.f32 0.0, %v7291
      %v7293 = vpop.f32.mrb[0].mxu0
      %7294 = vmatprep.mubr.f32.mxu0 0.0
      %7295 = vmatmul.mubr.f32.gmra.mrb[0].mxu0 %v7097
      %v7296 = vpop.f32.mrb[0].mxu0
      %v7297 = vadd.f32 0.0, %v7296
      %v7298 = vpop.f32.mrb[0].mxu0
      %7299 = vmatprep.mubr.f32.mxu0 0.0
      %7300 = vmatmul.mubr.f32.gmra.mrb[0].mxu0 %v7100
      %v7301 = vpop.f32.mrb[0].mxu0
      %v7302 = vadd.f32 0.0, %v7301
      %v7303 = vpop.f32.mrb[0].mxu0
      %7304 = vmatprep.mubr.f32.mxu0 0.0
      %7305 = vmatmul.mubr.f32.gmra.mrb[0].mxu0 %v7103
      %v7306 = vpop.f32.mrb[0].mxu0
      %v7307 = vadd.f32 0.0, %v7306
      %v7308 = vpop.f32.mrb[0].mxu0
      %7309 = vmatprep.mubr.f32.mxu0 0.0
      %7310 = vmatmul.mubr.f32.gmra.mrb[0].mxu0 %v7106
      %v7311 = vpop.f32.mrb[0].mxu0
      %v7312 = vadd.f32 0.0, %v7311
      %v7313 = vpop.f32.mrb[0].mxu0
      %7314 = vmatprep.mubr.f32.mxu0 0.0
      %7315 = vmatmul.mubr.f32.gmra.mrb[0].mxu0 %v7109
      %v7316 = vpop.f32.mrb[0].mxu0
      %v7317 = vadd.f32 0.0, %v7316
      %v7318 = vpop.f32.mrb[0].mxu0
      %7319 = vmatprep.mubr.f32.mxu0 0.0
      %7320 = vmatmul.mubr.f32.gmra.mrb[0].mxu0 %v7112
      %v7321 = vpop.f32.mrb[0].mxu0
      %v7322 = vadd.f32 0.0, %v7321
      %v7323 = vpop.f32.mrb[0].mxu0
      %7324 = vmatprep.mubr.f32.mxu0 0.0
      %7325 = vmatmul.mubr.f32.gmra.mrb[0].mxu0 %v7115
      %v7326 = vpop.f32.mrb[0].mxu0
      %v7327 = vadd.f32 0.0, %v7326
      %v7328 = vpop.f32.mrb[0].mxu0
      %7329 = vmatprep.mubr.f32.mxu0 0.0
      %7330 = vmatmul.mubr.f32.gmra.mrb[0].mxu0 %v7118
      %v7331 = vpop.f32.mrb[0].mxu0
      %v7332 = vadd.f32 0.0, %v7331
      %v7333 = vpop.f32.mrb[0].mxu0
      %7334 = vmatprep.mubr.f32.mxu0 0.0
      %7335 = vmatmul.mubr.f32.gmra.mrb[0].mxu0 %v7121
      %v7336 = vpop.f32.mrb[0].mxu0
      %v7337 = vadd.f32 0.0, %v7336
      %v7338 = vpop.f32.mrb[0].mxu0
      %7339 = vmatprep.mubr.f32.mxu0 0.0
      %7340 = vmatmul.mubr.f32.gmra.mrb[0].mxu0 %v7124
      %v7341 = vpop.f32.mrb[0].mxu0
      %v7342 = vadd.f32 0.0, %v7341
      %v7343 = vpop.f32.mrb[0].mxu0
      %7344 = vmatprep.mubr.f32.mxu0 0.0
      %7345 = vmatmul.mubr.f32.gmra.mrb[0].mxu0 %v7127
      %v7346 = vpop.f32.mrb[0].mxu0
      %v7347 = vadd.f32 0.0, %v7346
      %v7348 = vpop.f32.mrb[0].mxu0
      %7349 = vmatprep.mubr.f32.mxu0 0.0
      %7350 = vmatmul.mubr.f32.gmra.mrb[0].mxu0 %v7130
      %v7351 = vpop.f32.mrb[0].mxu0
      %v7352 = vadd.f32 0.0, %v7351
      %v7353 = vpop.f32.mrb[0].mxu0
      %7354 = vmatprep.mubr.f32.mxu0 0.0
      %7355 = vmatmul.mubr.f32.gmra.mrb[0].mxu0 %v7133
      %v7356 = vpop.f32.mrb[0].mxu0
      %v7357 = vadd.f32 0.0, %v7356
      %v7358 = vpop.f32.mrb[0].mxu0
      %7359 = vmatprep.mubr.f32.mxu0 0.0
      %7360 = vmatmul.mubr.f32.gmra.mrb[0].mxu0 %v7136
      %v7361 = vpop.f32.mrb[0].mxu0
      %v7362 = vadd.f32 0.0, %v7361
      %v7363 = vpop.f32.mrb[0].mxu0
      %7364 = vmatprep.mubr.f32.mxu0 0.0
      %7365 = vmatmul.mubr.f32.gmra.mrb[0].mxu0 %v7139
      %v7366 = vpop.f32.mrb[0].mxu0
      %v7367 = vadd.f32 0.0, %v7366
      %v7368 = vpop.f32.mrb[0].mxu0
      %7369 = vmatprep.mubr.f32.mxu0 0.0
      %7370 = vmatmul.mubr.f32.gmra.mrb[0].mxu0 %v7142
      %v7371 = vpop.f32.mrb[0].mxu0
      %v7372 = vadd.f32 0.0, %v7371
      %v7373 = vpop.f32.mrb[0].mxu0
      %7374 = vmatprep.mubr.f32.mxu0 0.0
      %7375 = vmatmul.mubr.f32.gmra.mrb[0].mxu0 %v7145
      %v7376 = vpop.f32.mrb[0].mxu0
      %v7377 = vadd.f32 0.0, %v7376
      %v7378 = vpop.f32.mrb[0].mxu0
      %7379 = vmatprep.mubr.f32.mxu0 0.0
      %7380 = vmatmul.mubr.f32.gmra.mrb[0].mxu0 %v7148
      %v7381 = vpop.f32.mrb[0].mxu0
      %v7382 = vadd.f32 0.0, %v7381
      %v7383 = vpop.f32.mrb[0].mxu0
      %7384 = vmatprep.mubr.f32.mxu0 0.0
      %7385 = vmatmul.mubr.f32.gmra.mrb[0].mxu0 %v7151
      %v7386 = vpop.f32.mrb[0].mxu0
      %v7387 = vadd.f32 0.0, %v7386
      %v7388 = vpop.f32.mrb[0].mxu0
      %7389 = vmatprep.mubr.f32.mxu0 0.0
      %7390 = vmatmul.mubr.f32.gmra.mrb[0].mxu0 %v7154
      %v7391 = vpop.f32.mrb[0].mxu0
      %v7392 = vadd.f32 0.0, %v7391
      %v7393 = vpop.f32.mrb[0].mxu0
      %7394 = vmatprep.mubr.f32.mxu0 0.0
      %7395 = vmatmul.mubr.f32.gmra.mrb[0].mxu0 %v7157
      %v7396 = vpop.f32.mrb[0].mxu0
      %v7397 = vadd.f32 0.0, %v7396
      %v7398 = vpop.f32.mrb[0].mxu0
      %7399 = vmatprep.mubr.f32.mxu0 0.0
      %7400 = vmatmul.mubr.f32.gmra.mrb[0].mxu0 %v7160
      %v7401 = vpop.f32.mrb[0].mxu0
      %v7402 = vadd.f32 0.0, %v7401
      %v7403 = vpop.f32.mrb[0].mxu0
      %7404 = vmatprep.mubr.f32.mxu0 0.0
      %7405 = vmatmul.mubr.f32.gmra.mrb[0].mxu0 %v7163
      %v7406 = vpop.f32.mrb[0].mxu0
      %v7407 = vadd.f32 0.0, %v7406
      %v7408 = vpop.f32.mrb[0].mxu0
      %7409 = vdwg.mxu0
      %v7410 = vadd.f32 %v6983, %v7232
      %v7411 = vadd.f32 %v6984, %v7237
      %v7412 = vadd.f32 %v6985, %v7242
      %v7413 = vadd.f32 %v6986, %v7247
      %v7414 = vadd.f32 %v6987, %v7252
      %v7415 = vadd.f32 %v6988, %v7257
      %v7416 = vadd.f32 %v6989, %v7262
      %v7417 = vadd.f32 %v6990, %v7267
      %v7418 = vadd.f32 %v6991, %v7272
      %v7419 = vadd.f32 %v6992, %v7277
      %v7420 = vadd.f32 %v6993, %v7282
      %v7421 = vadd.f32 %v6994, %v7287
      %v7422 = vadd.f32 %v6995, %v7292
      %v7423 = vadd.f32 %v6996, %v7297
      %v7424 = vadd.f32 %v6997, %v7302
      %v7425 = vadd.f32 %v6998, %v7307
      %v7426 = vadd.f32 %v6999, %v7312
      %v7427 = vadd.f32 %v7000, %v7317
      %v7428 = vadd.f32 %v7001, %v7322
      %v7429 = vadd.f32 %v7002, %v7327
      %v7430 = vadd.f32 %v7003, %v7332
      %v7431 = vadd.f32 %v7004, %v7337
      %v7432 = vadd.f32 %v7005, %v7342
      %v7433 = vadd.f32 %v7006, %v7347
      %v7434 = vadd.f32 %v7007, %v7352
      %v7435 = vadd.f32 %v7008, %v7357
      %v7436 = vadd.f32 %v7009, %v7362
      %v7437 = vadd.f32 %v7010, %v7367
      %v7438 = vadd.f32 %v7011, %v7372
      %v7439 = vadd.f32 %v7012, %v7377
      %v7440 = vadd.f32 %v7013, %v7382
      %v7441 = vadd.f32 %v7014, %v7387
      %v7442 = vadd.f32 %v7015, %v7392
      %v7443 = vadd.f32 %v7016, %v7397
      %v7444 = vadd.f32 %v7017, %v7402
      %v7445 = vadd.f32 %v7018, %v7407
      %v7446 = vld [vmem:[#allocation2 + $0x3b] sm:$0xff]
      %v7447 = vld [vmem:[#allocation2 + $0x43] sm:$0xff]
      %v7448 = vld [vmem:[#allocation2 + $0x4b] sm:$0xff]
      %v7449 = vld [vmem:[#allocation2 + $0x53] sm:$0xff]
      %v7450 = vld [vmem:[#allocation2 + $0x5b] sm:$0xff]
      %v7451 = vld [vmem:[#allocation2 + $0x63] sm:$0xff]
      %v7452 = vld [vmem:[#allocation2 + $0x6b] sm:$0xff]
      %v7453 = vld [vmem:[#allocation2 + $0x73] sm:$0xff]
      %v7454 = vld [vmem:[#allocation2 + $0x7b] sm:$0xff]
      %v7455 = vld [vmem:[#allocation2 + $0x83] sm:$0xff]
      %v7456 = vld [vmem:[#allocation2 + $0x8b] sm:$0xff]
      %v7457 = vld [vmem:[#allocation2 + $0x93] sm:$0xff]
      %v7458 = vld [vmem:[#allocation2 + $0x9b] sm:$0xff]
      %v7459 = vld [vmem:[#allocation2 + $0xa3] sm:$0xff]
      %v7460 = vld [vmem:[#allocation2 + $0xab] sm:$0xff]
      %v7461 = vld [vmem:[#allocation2 + $0xb3] sm:$0xff]
      %v7462 = vld [vmem:[#allocation2 + $0xbb] sm:$0xff]
      %v7463 = vld [vmem:[#allocation2 + $0xc3] sm:$0xff]
      %v7464 = vld [vmem:[#allocation2 + $0xcb] sm:$0xff]
      %v7465 = vld [vmem:[#allocation2 + $0xd3] sm:$0xff]
      %v7466 = vld [vmem:[#allocation2 + $0xdb] sm:$0xff]
      %v7467 = vld [vmem:[#allocation2 + $0xe3] sm:$0xff]
      %v7468 = vld [vmem:[#allocation2 + $0xeb] sm:$0xff]
      %v7469 = vld [vmem:[#allocation2 + $0xf3] sm:$0xff]
      %v7470 = vld [vmem:[#allocation2 + $0xfb] sm:$0xff]
      %v7471 = vld [vmem:[#allocation2 + $0x103] sm:$0xff]
      %v7472 = vld [vmem:[#allocation2 + $0x10b] sm:$0xff]
      %v7473 = vld [vmem:[#allocation2 + $0x113] sm:$0xff]
      %v7474 = vld [vmem:[#allocation2 + $0x11b] sm:$0xff]
      %v7475 = vld [vmem:[#allocation2 + $0x123] sm:$0xff]
      %v7476 = vld [vmem:[#allocation2 + $0x12b] sm:$0xff]
      %v7477 = vld [vmem:[#allocation2 + $0x133] sm:$0xff]
      %v7478 = vld [vmem:[#allocation2 + $0x13b] sm:$0xff]
      %v7479 = vld [vmem:[#allocation2 + $0x143] sm:$0xff]
      %v7480 = vld [vmem:[#allocation2 + $0x14b] sm:$0xff]
      %v7481 = vld [vmem:[#allocation2 + $0x153] sm:$0xff]
      %s7482 = scalar_lea.vmem %s4, 48
      %v7483 = vld [vmem:[%s7482] sm:$0xff]
      %v7485 = vsel %vm4867, %v7446, 0
      %v7488 = vsel %vm4867, %v7447, 0
      %v7491 = vsel %vm4867, %v7448, 0
      %v7494 = vsel %vm4867, %v7449, 0
      %v7497 = vsel %vm4867, %v7450, 0
      %v7500 = vsel %vm4867, %v7451, 0
      %v7503 = vsel %vm4867, %v7452, 0
      %v7506 = vsel %vm4867, %v7453, 0
      %v7509 = vsel %vm4867, %v7454, 0
      %v7512 = vsel %vm4867, %v7455, 0
      %v7515 = vsel %vm4867, %v7456, 0
      %v7518 = vsel %vm4867, %v7457, 0
      %v7521 = vsel %vm4867, %v7458, 0
      %v7524 = vsel %vm4867, %v7459, 0
      %v7527 = vsel %vm4867, %v7460, 0
      %v7530 = vsel %vm4867, %v7461, 0
      %v7533 = vsel %vm4867, %v7462, 0
      %v7536 = vsel %vm4867, %v7463, 0
      %v7539 = vsel %vm4867, %v7464, 0
      %v7542 = vsel %vm4867, %v7465, 0
      %v7545 = vsel %vm4867, %v7466, 0
      %v7548 = vsel %vm4867, %v7467, 0
      %v7551 = vsel %vm4867, %v7468, 0
      %v7554 = vsel %vm4867, %v7469, 0
      %v7557 = vsel %vm4867, %v7470, 0
      %v7560 = vsel %vm4867, %v7471, 0
      %v7563 = vsel %vm4867, %v7472, 0
      %v7566 = vsel %vm4867, %v7473, 0
      %v7569 = vsel %vm4867, %v7474, 0
      %v7572 = vsel %vm4867, %v7475, 0
      %v7575 = vsel %vm4867, %v7476, 0
      %v7578 = vsel %vm4867, %v7477, 0
      %v7581 = vsel %vm4867, %v7478, 0
      %v7584 = vsel %vm4867, %v7479, 0
      %v7587 = vsel %vm4867, %v7480, 0
      %v7590 = vsel %vm4867, %v7481, 0
      %7592 = vmatprep.subr.mxu0 0.0
      %7593 = vmatpush1.msra.mxu0 %v7483
      %7594 = vmatprep.subr.mxu0 0.0
      %7595 = vmatpush1.msra.mxu0 0.0
      %7596 = vmatprep.subr.mxu0 0.0
      %7597 = vmatpush1.msra.mxu0 0.0
      %7598 = vmatprep.subr.mxu0 0.0
      %7599 = vmatpush1.msra.mxu0 0.0
      %7600 = vmatprep.subr.mxu0 0.0
      %7601 = vmatpush1.msra.mxu0 0.0
      %7602 = vmatprep.subr.mxu0 0.0
      %7603 = vmatpush1.msra.mxu0 0.0
      %7604 = vmatprep.subr.mxu0 0.0
      %7605 = vmatpush1.msra.mxu0 0.0
      %7606 = vmatprep.subr.mxu0 0.0
      %7607 = vmatpush1.msra.mxu0 0.0
      %7608 = vmatprep.subr.mxu0 0.0
      %7609 = vmatpush1.msra.mxu0 0.0
      %7610 = vmatprep.subr.mxu0 0.0
      %7611 = vmatpush1.msra.mxu0 0.0
      %7612 = vmatprep.subr.mxu0 0.0
      %7613 = vmatpush1.msra.mxu0 0.0
      %7614 = vmatprep.subr.mxu0 0.0
      %7615 = vmatpush1.msra.mxu0 0.0
      %7616 = vmatprep.subr.mxu0 0.0
      %7617 = vmatpush1.msra.mxu0 0.0
      %7618 = vmatprep.subr.mxu0 0.0
      %7619 = vmatpush1.msra.mxu0 0.0
      %7620 = vmatprep.subr.mxu0 0.0
      %7621 = vmatpush1.msra.mxu0 0.0
      %7622 = vmatprep.subr.mxu0 0.0
      %7623 = vmatpush1.msra.mxu0 0.0
      %7624 = vmatprep.subr.mxu0 0.0
      %7625 = vmatpush1.msra.mxu0 0.0
      %7626 = vmatprep.subr.mxu0 0.0
      %7627 = vmatpush1.msra.mxu0 0.0
      %7628 = vmatprep.subr.mxu0 0.0
      %7629 = vmatpush1.msra.mxu0 0.0
      %7630 = vmatprep.subr.mxu0 0.0
      %7631 = vmatpush1.msra.mxu0 0.0
      %7632 = vmatprep.subr.mxu0 0.0
      %7633 = vmatpush1.msra.mxu0 0.0
      %7634 = vmatprep.subr.mxu0 0.0
      %7635 = vmatpush1.msra.mxu0 0.0
      %7636 = vmatprep.subr.mxu0 0.0
      %7637 = vmatpush1.msra.mxu0 0.0
      %7638 = vmatprep.subr.mxu0 0.0
      %7639 = vmatpush1.msra.mxu0 0.0
      %7640 = vmatprep.subr.mxu0 0.0
      %7641 = vmatpush1.msra.mxu0 0.0
      %7642 = vmatprep.subr.mxu0 0.0
      %7643 = vmatpush1.msra.mxu0 0.0
      %7644 = vmatprep.subr.mxu0 0.0
      %7645 = vmatpush1.msra.mxu0 0.0
      %7646 = vmatprep.subr.mxu0 0.0
      %7647 = vmatpush1.msra.mxu0 0.0
      %7648 = vmatprep.subr.mxu0 0.0
      %7649 = vmatpush1.msra.mxu0 0.0
      %7650 = vmatprep.subr.mxu0 0.0
      %7651 = vmatpush1.msra.mxu0 0.0
      %7652 = vmatprep.subr.mxu0 0.0
      %7653 = vmatpush1.msra.mxu0 0.0
      %7654 = vmatprep.subr.mxu0 0.0
      %7655 = vmatpush1.msra.mxu0 0.0
      %7656 = vmatprep.mubr.f32.mxu0 0.0
      %7657 = vmatmul.mubr.f32.gmra.mrb[0].mxu0 %v7485
      %v7658 = vpop.f32.mrb[0].mxu0
      %v7659 = vadd.f32 0.0, %v7658
      %v7660 = vpop.f32.mrb[0].mxu0
      %7661 = vmatprep.mubr.f32.mxu0 0.0
      %7662 = vmatmul.mubr.f32.gmra.mrb[0].mxu0 %v7488
      %v7663 = vpop.f32.mrb[0].mxu0
      %v7664 = vadd.f32 0.0, %v7663
      %v7665 = vpop.f32.mrb[0].mxu0
      %7666 = vmatprep.mubr.f32.mxu0 0.0
      %7667 = vmatmul.mubr.f32.gmra.mrb[0].mxu0 %v7491
      %v7668 = vpop.f32.mrb[0].mxu0
      %v7669 = vadd.f32 0.0, %v7668
      %v7670 = vpop.f32.mrb[0].mxu0
      %7671 = vmatprep.mubr.f32.mxu0 0.0
      %7672 = vmatmul.mubr.f32.gmra.mrb[0].mxu0 %v7494
      %v7673 = vpop.f32.mrb[0].mxu0
      %v7674 = vadd.f32 0.0, %v7673
      %v7675 = vpop.f32.mrb[0].mxu0
      %7676 = vmatprep.mubr.f32.mxu0 0.0
      %7677 = vmatmul.mubr.f32.gmra.mrb[0].mxu0 %v7497
      %v7678 = vpop.f32.mrb[0].mxu0
      %v7679 = vadd.f32 0.0, %v7678
      %v7680 = vpop.f32.mrb[0].mxu0
      %7681 = vmatprep.mubr.f32.mxu0 0.0
      %7682 = vmatmul.mubr.f32.gmra.mrb[0].mxu0 %v7500
      %v7683 = vpop.f32.mrb[0].mxu0
      %v7684 = vadd.f32 0.0, %v7683
      %v7685 = vpop.f32.mrb[0].mxu0
      %7686 = vmatprep.mubr.f32.mxu0 0.0
      %7687 = vmatmul.mubr.f32.gmra.mrb[0].mxu0 %v7503
      %v7688 = vpop.f32.mrb[0].mxu0
      %v7689 = vadd.f32 0.0, %v7688
      %v7690 = vpop.f32.mrb[0].mxu0
      %7691 = vmatprep.mubr.f32.mxu0 0.0
      %7692 = vmatmul.mubr.f32.gmra.mrb[0].mxu0 %v7506
      %v7693 = vpop.f32.mrb[0].mxu0
      %v7694 = vadd.f32 0.0, %v7693
      %v7695 = vpop.f32.mrb[0].mxu0
      %7696 = vmatprep.mubr.f32.mxu0 0.0
      %7697 = vmatmul.mubr.f32.gmra.mrb[0].mxu0 %v7509
      %v7698 = vpop.f32.mrb[0].mxu0
      %v7699 = vadd.f32 0.0, %v7698
      %v7700 = vpop.f32.mrb[0].mxu0
      %7701 = vmatprep.mubr.f32.mxu0 0.0
      %7702 = vmatmul.mubr.f32.gmra.mrb[0].mxu0 %v7512
      %v7703 = vpop.f32.mrb[0].mxu0
      %v7704 = vadd.f32 0.0, %v7703
      %v7705 = vpop.f32.mrb[0].mxu0
      %7706 = vmatprep.mubr.f32.mxu0 0.0
      %7707 = vmatmul.mubr.f32.gmra.mrb[0].mxu0 %v7515
      %v7708 = vpop.f32.mrb[0].mxu0
      %v7709 = vadd.f32 0.0, %v7708
      %v7710 = vpop.f32.mrb[0].mxu0
      %7711 = vmatprep.mubr.f32.mxu0 0.0
      %7712 = vmatmul.mubr.f32.gmra.mrb[0].mxu0 %v7518
      %v7713 = vpop.f32.mrb[0].mxu0
      %v7714 = vadd.f32 0.0, %v7713
      %v7715 = vpop.f32.mrb[0].mxu0
      %7716 = vmatprep.mubr.f32.mxu0 0.0
      %7717 = vmatmul.mubr.f32.gmra.mrb[0].mxu0 %v7521
      %v7718 = vpop.f32.mrb[0].mxu0
      %v7719 = vadd.f32 0.0, %v7718
      %v7720 = vpop.f32.mrb[0].mxu0
      %7721 = vmatprep.mubr.f32.mxu0 0.0
      %7722 = vmatmul.mubr.f32.gmra.mrb[0].mxu0 %v7524
      %v7723 = vpop.f32.mrb[0].mxu0
      %v7724 = vadd.f32 0.0, %v7723
      %v7725 = vpop.f32.mrb[0].mxu0
      %7726 = vmatprep.mubr.f32.mxu0 0.0
      %7727 = vmatmul.mubr.f32.gmra.mrb[0].mxu0 %v7527
      %v7728 = vpop.f32.mrb[0].mxu0
      %v7729 = vadd.f32 0.0, %v7728
      %v7730 = vpop.f32.mrb[0].mxu0
      %7731 = vmatprep.mubr.f32.mxu0 0.0
      %7732 = vmatmul.mubr.f32.gmra.mrb[0].mxu0 %v7530
      %v7733 = vpop.f32.mrb[0].mxu0
      %v7734 = vadd.f32 0.0, %v7733
      %v7735 = vpop.f32.mrb[0].mxu0
      %7736 = vmatprep.mubr.f32.mxu0 0.0
      %7737 = vmatmul.mubr.f32.gmra.mrb[0].mxu0 %v7533
      %v7738 = vpop.f32.mrb[0].mxu0
      %v7739 = vadd.f32 0.0, %v7738
      %v7740 = vpop.f32.mrb[0].mxu0
      %7741 = vmatprep.mubr.f32.mxu0 0.0
      %7742 = vmatmul.mubr.f32.gmra.mrb[0].mxu0 %v7536
      %v7743 = vpop.f32.mrb[0].mxu0
      %v7744 = vadd.f32 0.0, %v7743
      %v7745 = vpop.f32.mrb[0].mxu0
      %7746 = vmatprep.mubr.f32.mxu0 0.0
      %7747 = vmatmul.mubr.f32.gmra.mrb[0].mxu0 %v7539
      %v7748 = vpop.f32.mrb[0].mxu0
      %v7749 = vadd.f32 0.0, %v7748
      %v7750 = vpop.f32.mrb[0].mxu0
      %7751 = vmatprep.mubr.f32.mxu0 0.0
      %7752 = vmatmul.mubr.f32.gmra.mrb[0].mxu0 %v7542
      %v7753 = vpop.f32.mrb[0].mxu0
      %v7754 = vadd.f32 0.0, %v7753
      %v7755 = vpop.f32.mrb[0].mxu0
      %7756 = vmatprep.mubr.f32.mxu0 0.0
      %7757 = vmatmul.mubr.f32.gmra.mrb[0].mxu0 %v7545
      %v7758 = vpop.f32.mrb[0].mxu0
      %v7759 = vadd.f32 0.0, %v7758
      %v7760 = vpop.f32.mrb[0].mxu0
      %7761 = vmatprep.mubr.f32.mxu0 0.0
      %7762 = vmatmul.mubr.f32.gmra.mrb[0].mxu0 %v7548
      %v7763 = vpop.f32.mrb[0].mxu0
      %v7764 = vadd.f32 0.0, %v7763
      %v7765 = vpop.f32.mrb[0].mxu0
      %7766 = vmatprep.mubr.f32.mxu0 0.0
      %7767 = vmatmul.mubr.f32.gmra.mrb[0].mxu0 %v7551
      %v7768 = vpop.f32.mrb[0].mxu0
      %v7769 = vadd.f32 0.0, %v7768
      %v7770 = vpop.f32.mrb[0].mxu0
      %7771 = vmatprep.mubr.f32.mxu0 0.0
      %7772 = vmatmul.mubr.f32.gmra.mrb[0].mxu0 %v7554
      %v7773 = vpop.f32.mrb[0].mxu0
      %v7774 = vadd.f32 0.0, %v7773
      %v7775 = vpop.f32.mrb[0].mxu0
      %7776 = vmatprep.mubr.f32.mxu0 0.0
      %7777 = vmatmul.mubr.f32.gmra.mrb[0].mxu0 %v7557
      %v7778 = vpop.f32.mrb[0].mxu0
      %v7779 = vadd.f32 0.0, %v7778
      %v7780 = vpop.f32.mrb[0].mxu0
      %7781 = vmatprep.mubr.f32.mxu0 0.0
      %7782 = vmatmul.mubr.f32.gmra.mrb[0].mxu0 %v7560
      %v7783 = vpop.f32.mrb[0].mxu0
      %v7784 = vadd.f32 0.0, %v7783
      %v7785 = vpop.f32.mrb[0].mxu0
      %7786 = vmatprep.mubr.f32.mxu0 0.0
      %7787 = vmatmul.mubr.f32.gmra.mrb[0].mxu0 %v7563
      %v7788 = vpop.f32.mrb[0].mxu0
      %v7789 = vadd.f32 0.0, %v7788
      %v7790 = vpop.f32.mrb[0].mxu0
      %7791 = vmatprep.mubr.f32.mxu0 0.0
      %7792 = vmatmul.mubr.f32.gmra.mrb[0].mxu0 %v7566
      %v7793 = vpop.f32.mrb[0].mxu0
      %v7794 = vadd.f32 0.0, %v7793
      %v7795 = vpop.f32.mrb[0].mxu0
      %7796 = vmatprep.mubr.f32.mxu0 0.0
      %7797 = vmatmul.mubr.f32.gmra.mrb[0].mxu0 %v7569
      %v7798 = vpop.f32.mrb[0].mxu0
      %v7799 = vadd.f32 0.0, %v7798
      %v7800 = vpop.f32.mrb[0].mxu0
      %7801 = vmatprep.mubr.f32.mxu0 0.0
      %7802 = vmatmul.mubr.f32.gmra.mrb[0].mxu0 %v7572
      %v7803 = vpop.f32.mrb[0].mxu0
      %v7804 = vadd.f32 0.0, %v7803
      %v7805 = vpop.f32.mrb[0].mxu0
      %7806 = vmatprep.mubr.f32.mxu0 0.0
      %7807 = vmatmul.mubr.f32.gmra.mrb[0].mxu0 %v7575
      %v7808 = vpop.f32.mrb[0].mxu0
      %v7809 = vadd.f32 0.0, %v7808
      %v7810 = vpop.f32.mrb[0].mxu0
      %7811 = vmatprep.mubr.f32.mxu0 0.0
      %7812 = vmatmul.mubr.f32.gmra.mrb[0].mxu0 %v7578
      %v7813 = vpop.f32.mrb[0].mxu0
      %v7814 = vadd.f32 0.0, %v7813
      %v7815 = vpop.f32.mrb[0].mxu0
      %7816 = vmatprep.mubr.f32.mxu0 0.0
      %7817 = vmatmul.mubr.f32.gmra.mrb[0].mxu0 %v7581
      %v7818 = vpop.f32.mrb[0].mxu0
      %v7819 = vadd.f32 0.0, %v7818
      %v7820 = vpop.f32.mrb[0].mxu0
      %7821 = vmatprep.mubr.f32.mxu0 0.0
      %7822 = vmatmul.mubr.f32.gmra.mrb[0].mxu0 %v7584
      %v7823 = vpop.f32.mrb[0].mxu0
      %v7824 = vadd.f32 0.0, %v7823
      %v7825 = vpop.f32.mrb[0].mxu0
      %7826 = vmatprep.mubr.f32.mxu0 0.0
      %7827 = vmatmul.mubr.f32.gmra.mrb[0].mxu0 %v7587
      %v7828 = vpop.f32.mrb[0].mxu0
      %v7829 = vadd.f32 0.0, %v7828
      %v7830 = vpop.f32.mrb[0].mxu0
      %7831 = vmatprep.mubr.f32.mxu0 0.0
      %7832 = vmatmul.mubr.f32.gmra.mrb[0].mxu0 %v7590
      %v7833 = vpop.f32.mrb[0].mxu0
      %v7834 = vadd.f32 0.0, %v7833
      %v7835 = vpop.f32.mrb[0].mxu0
      %7836 = vdwg.mxu0
      %v7837 = vadd.f32 %v7410, %v7659
      %v7838 = vadd.f32 %v7411, %v7664
      %v7839 = vadd.f32 %v7412, %v7669
      %v7840 = vadd.f32 %v7413, %v7674
      %v7841 = vadd.f32 %v7414, %v7679
      %v7842 = vadd.f32 %v7415, %v7684
      %v7843 = vadd.f32 %v7416, %v7689
      %v7844 = vadd.f32 %v7417, %v7694
      %v7845 = vadd.f32 %v7418, %v7699
      %v7846 = vadd.f32 %v7419, %v7704
      %v7847 = vadd.f32 %v7420, %v7709
      %v7848 = vadd.f32 %v7421, %v7714
      %v7849 = vadd.f32 %v7422, %v7719
      %v7850 = vadd.f32 %v7423, %v7724
      %v7851 = vadd.f32 %v7424, %v7729
      %v7852 = vadd.f32 %v7425, %v7734
      %v7853 = vadd.f32 %v7426, %v7739
      %v7854 = vadd.f32 %v7427, %v7744
      %v7855 = vadd.f32 %v7428, %v7749
      %v7856 = vadd.f32 %v7429, %v7754
      %v7857 = vadd.f32 %v7430, %v7759
      %v7858 = vadd.f32 %v7431, %v7764
      %v7859 = vadd.f32 %v7432, %v7769
      %v7860 = vadd.f32 %v7433, %v7774
      %v7861 = vadd.f32 %v7434, %v7779
      %v7862 = vadd.f32 %v7435, %v7784
      %v7863 = vadd.f32 %v7436, %v7789
      %v7864 = vadd.f32 %v7437, %v7794
      %v7865 = vadd.f32 %v7438, %v7799
      %v7866 = vadd.f32 %v7439, %v7804
      %v7867 = vadd.f32 %v7440, %v7809
      %v7868 = vadd.f32 %v7441, %v7814
      %v7869 = vadd.f32 %v7442, %v7819
      %v7870 = vadd.f32 %v7443, %v7824
      %v7871 = vadd.f32 %v7444, %v7829
      %v7872 = vadd.f32 %v7445, %v7834
      %v7873 = vld [vmem:[#allocation2 + $0x3c] sm:$0xff]
      %v7874 = vld [vmem:[#allocation2 + $0x44] sm:$0xff]
      %v7875 = vld [vmem:[#allocation2 + $0x4c] sm:$0xff]
      %v7876 = vld [vmem:[#allocation2 + $0x54] sm:$0xff]
      %v7877 = vld [vmem:[#allocation2 + $0x5c] sm:$0xff]
      %v7878 = vld [vmem:[#allocation2 + $0x64] sm:$0xff]
      %v7879 = vld [vmem:[#allocation2 + $0x6c] sm:$0xff]
      %v7880 = vld [vmem:[#allocation2 + $0x74] sm:$0xff]
      %v7881 = vld [vmem:[#allocation2 + $0x7c] sm:$0xff]
      %v7882 = vld [vmem:[#allocation2 + $0x84] sm:$0xff]
      %v7883 = vld [vmem:[#allocation2 + $0x8c] sm:$0xff]
      %v7884 = vld [vmem:[#allocation2 + $0x94] sm:$0xff]
      %v7885 = vld [vmem:[#allocation2 + $0x9c] sm:$0xff]
      %v7886 = vld [vmem:[#allocation2 + $0xa4] sm:$0xff]
      %v7887 = vld [vmem:[#allocation2 + $0xac] sm:$0xff]
      %v7888 = vld [vmem:[#allocation2 + $0xb4] sm:$0xff]
      %v7889 = vld [vmem:[#allocation2 + $0xbc] sm:$0xff]
      %v7890 = vld [vmem:[#allocation2 + $0xc4] sm:$0xff]
      %v7891 = vld [vmem:[#allocation2 + $0xcc] sm:$0xff]
      %v7892 = vld [vmem:[#allocation2 + $0xd4] sm:$0xff]
      %v7893 = vld [vmem:[#allocation2 + $0xdc] sm:$0xff]
      %v7894 = vld [vmem:[#allocation2 + $0xe4] sm:$0xff]
      %v7895 = vld [vmem:[#allocation2 + $0xec] sm:$0xff]
      %v7896 = vld [vmem:[#allocation2 + $0xf4] sm:$0xff]
      %v7897 = vld [vmem:[#allocation2 + $0xfc] sm:$0xff]
      %v7898 = vld [vmem:[#allocation2 + $0x104] sm:$0xff]
      %v7899 = vld [vmem:[#allocation2 + $0x10c] sm:$0xff]
      %v7900 = vld [vmem:[#allocation2 + $0x114] sm:$0xff]
      %v7901 = vld [vmem:[#allocation2 + $0x11c] sm:$0xff]
      %v7902 = vld [vmem:[#allocation2 + $0x124] sm:$0xff]
      %v7903 = vld [vmem:[#allocation2 + $0x12c] sm:$0xff]
      %v7904 = vld [vmem:[#allocation2 + $0x134] sm:$0xff]
      %v7905 = vld [vmem:[#allocation2 + $0x13c] sm:$0xff]
      %v7906 = vld [vmem:[#allocation2 + $0x144] sm:$0xff]
      %v7907 = vld [vmem:[#allocation2 + $0x14c] sm:$0xff]
      %v7908 = vld [vmem:[#allocation2 + $0x154] sm:$0xff]
      %s7909 = scalar_lea.vmem %s4, 56
      %v7910 = vld [vmem:[%s7909] sm:$0xff]
      %v7912 = vsel %vm4867, %v7873, 0
      %v7915 = vsel %vm4867, %v7874, 0
      %v7918 = vsel %vm4867, %v7875, 0
      %v7921 = vsel %vm4867, %v7876, 0
      %v7924 = vsel %vm4867, %v7877, 0
      %v7927 = vsel %vm4867, %v7878, 0
      %v7930 = vsel %vm4867, %v7879, 0
      %v7933 = vsel %vm4867, %v7880, 0
      %v7936 = vsel %vm4867, %v7881, 0
      %v7939 = vsel %vm4867, %v7882, 0
      %v7942 = vsel %vm4867, %v7883, 0
      %v7945 = vsel %vm4867, %v7884, 0
      %v7948 = vsel %vm4867, %v7885, 0
      %v7951 = vsel %vm4867, %v7886, 0
      %v7954 = vsel %vm4867, %v7887, 0
      %v7957 = vsel %vm4867, %v7888, 0
      %v7960 = vsel %vm4867, %v7889, 0
      %v7963 = vsel %vm4867, %v7890, 0
      %v7966 = vsel %vm4867, %v7891, 0
      %v7969 = vsel %vm4867, %v7892, 0
      %v7972 = vsel %vm4867, %v7893, 0
      %v7975 = vsel %vm4867, %v7894, 0
      %v7978 = vsel %vm4867, %v7895, 0
      %v7981 = vsel %vm4867, %v7896, 0
      %v7984 = vsel %vm4867, %v7897, 0
      %v7987 = vsel %vm4867, %v7898, 0
      %v7990 = vsel %vm4867, %v7899, 0
      %v7993 = vsel %vm4867, %v7900, 0
      %v7996 = vsel %vm4867, %v7901, 0
      %v7999 = vsel %vm4867, %v7902, 0
      %v8002 = vsel %vm4867, %v7903, 0
      %v8005 = vsel %vm4867, %v7904, 0
      %v8008 = vsel %vm4867, %v7905, 0
      %v8011 = vsel %vm4867, %v7906, 0
      %v8014 = vsel %vm4867, %v7907, 0
      %v8017 = vsel %vm4867, %v7908, 0
      %8019 = vmatprep.subr.mxu0 0.0
      %8020 = vmatpush1.msra.mxu0 %v7910
      %8021 = vmatprep.subr.mxu0 0.0
      %8022 = vmatpush1.msra.mxu0 0.0
      %8023 = vmatprep.subr.mxu0 0.0
      %8024 = vmatpush1.msra.mxu0 0.0
      %8025 = vmatprep.subr.mxu0 0.0
      %8026 = vmatpush1.msra.mxu0 0.0
      %8027 = vmatprep.subr.mxu0 0.0
      %8028 = vmatpush1.msra.mxu0 0.0
      %8029 = vmatprep.subr.mxu0 0.0
      %8030 = vmatpush1.msra.mxu0 0.0
      %8031 = vmatprep.subr.mxu0 0.0
      %8032 = vmatpush1.msra.mxu0 0.0
      %8033 = vmatprep.subr.mxu0 0.0
      %8034 = vmatpush1.msra.mxu0 0.0
      %8035 = vmatprep.subr.mxu0 0.0
      %8036 = vmatpush1.msra.mxu0 0.0
      %8037 = vmatprep.subr.mxu0 0.0
      %8038 = vmatpush1.msra.mxu0 0.0
      %8039 = vmatprep.subr.mxu0 0.0
      %8040 = vmatpush1.msra.mxu0 0.0
      %8041 = vmatprep.subr.mxu0 0.0
      %8042 = vmatpush1.msra.mxu0 0.0
      %8043 = vmatprep.subr.mxu0 0.0
      %8044 = vmatpush1.msra.mxu0 0.0
      %8045 = vmatprep.subr.mxu0 0.0
      %8046 = vmatpush1.msra.mxu0 0.0
      %8047 = vmatprep.subr.mxu0 0.0
      %8048 = vmatpush1.msra.mxu0 0.0
      %8049 = vmatprep.subr.mxu0 0.0
      %8050 = vmatpush1.msra.mxu0 0.0
      %8051 = vmatprep.subr.mxu0 0.0
      %8052 = vmatpush1.msra.mxu0 0.0
      %8053 = vmatprep.subr.mxu0 0.0
      %8054 = vmatpush1.msra.mxu0 0.0
      %8055 = vmatprep.subr.mxu0 0.0
      %8056 = vmatpush1.msra.mxu0 0.0
      %8057 = vmatprep.subr.mxu0 0.0
      %8058 = vmatpush1.msra.mxu0 0.0
      %8059 = vmatprep.subr.mxu0 0.0
      %8060 = vmatpush1.msra.mxu0 0.0
      %8061 = vmatprep.subr.mxu0 0.0
      %8062 = vmatpush1.msra.mxu0 0.0
      %8063 = vmatprep.subr.mxu0 0.0
      %8064 = vmatpush1.msra.mxu0 0.0
      %8065 = vmatprep.subr.mxu0 0.0
      %8066 = vmatpush1.msra.mxu0 0.0
      %8067 = vmatprep.subr.mxu0 0.0
      %8068 = vmatpush1.msra.mxu0 0.0
      %8069 = vmatprep.subr.mxu0 0.0
      %8070 = vmatpush1.msra.mxu0 0.0
      %8071 = vmatprep.subr.mxu0 0.0
      %8072 = vmatpush1.msra.mxu0 0.0
      %8073 = vmatprep.subr.mxu0 0.0
      %8074 = vmatpush1.msra.mxu0 0.0
      %8075 = vmatprep.subr.mxu0 0.0
      %8076 = vmatpush1.msra.mxu0 0.0
      %8077 = vmatprep.subr.mxu0 0.0
      %8078 = vmatpush1.msra.mxu0 0.0
      %8079 = vmatprep.subr.mxu0 0.0
      %8080 = vmatpush1.msra.mxu0 0.0
      %8081 = vmatprep.subr.mxu0 0.0
      %8082 = vmatpush1.msra.mxu0 0.0
      %8083 = vmatprep.mubr.f32.mxu0 0.0
      %8084 = vmatmul.mubr.f32.gmra.mrb[0].mxu0 %v7912
      %v8085 = vpop.f32.mrb[0].mxu0
      %v8086 = vadd.f32 0.0, %v8085
      %v8087 = vpop.f32.mrb[0].mxu0
      %8088 = vmatprep.mubr.f32.mxu0 0.0
      %8089 = vmatmul.mubr.f32.gmra.mrb[0].mxu0 %v7915
      %v8090 = vpop.f32.mrb[0].mxu0
      %v8091 = vadd.f32 0.0, %v8090
      %v8092 = vpop.f32.mrb[0].mxu0
      %8093 = vmatprep.mubr.f32.mxu0 0.0
      %8094 = vmatmul.mubr.f32.gmra.mrb[0].mxu0 %v7918
      %v8095 = vpop.f32.mrb[0].mxu0
      %v8096 = vadd.f32 0.0, %v8095
      %v8097 = vpop.f32.mrb[0].mxu0
      %8098 = vmatprep.mubr.f32.mxu0 0.0
      %8099 = vmatmul.mubr.f32.gmra.mrb[0].mxu0 %v7921
      %v8100 = vpop.f32.mrb[0].mxu0
      %v8101 = vadd.f32 0.0, %v8100
      %v8102 = vpop.f32.mrb[0].mxu0
      %8103 = vmatprep.mubr.f32.mxu0 0.0
      %8104 = vmatmul.mubr.f32.gmra.mrb[0].mxu0 %v7924
      %v8105 = vpop.f32.mrb[0].mxu0
      %v8106 = vadd.f32 0.0, %v8105
      %v8107 = vpop.f32.mrb[0].mxu0
      %8108 = vmatprep.mubr.f32.mxu0 0.0
      %8109 = vmatmul.mubr.f32.gmra.mrb[0].mxu0 %v7927
      %v8110 = vpop.f32.mrb[0].mxu0
      %v8111 = vadd.f32 0.0, %v8110
      %v8112 = vpop.f32.mrb[0].mxu0
      %8113 = vmatprep.mubr.f32.mxu0 0.0
      %8114 = vmatmul.mubr.f32.gmra.mrb[0].mxu0 %v7930
      %v8115 = vpop.f32.mrb[0].mxu0
      %v8116 = vadd.f32 0.0, %v8115
      %v8117 = vpop.f32.mrb[0].mxu0
      %8118 = vmatprep.mubr.f32.mxu0 0.0
      %8119 = vmatmul.mubr.f32.gmra.mrb[0].mxu0 %v7933
      %v8120 = vpop.f32.mrb[0].mxu0
      %v8121 = vadd.f32 0.0, %v8120
      %v8122 = vpop.f32.mrb[0].mxu0
      %8123 = vmatprep.mubr.f32.mxu0 0.0
      %8124 = vmatmul.mubr.f32.gmra.mrb[0].mxu0 %v7936
      %v8125 = vpop.f32.mrb[0].mxu0
      %v8126 = vadd.f32 0.0, %v8125
      %v8127 = vpop.f32.mrb[0].mxu0
      %8128 = vmatprep.mubr.f32.mxu0 0.0
      %8129 = vmatmul.mubr.f32.gmra.mrb[0].mxu0 %v7939
      %v8130 = vpop.f32.mrb[0].mxu0
      %v8131 = vadd.f32 0.0, %v8130
      %v8132 = vpop.f32.mrb[0].mxu0
      %8133 = vmatprep.mubr.f32.mxu0 0.0
      %8134 = vmatmul.mubr.f32.gmra.mrb[0].mxu0 %v7942
      %v8135 = vpop.f32.mrb[0].mxu0
      %v8136 = vadd.f32 0.0, %v8135
      %v8137 = vpop.f32.mrb[0].mxu0
      %8138 = vmatprep.mubr.f32.mxu0 0.0
      %8139 = vmatmul.mubr.f32.gmra.mrb[0].mxu0 %v7945
      %v8140 = vpop.f32.mrb[0].mxu0
      %v8141 = vadd.f32 0.0, %v8140
      %v8142 = vpop.f32.mrb[0].mxu0
      %8143 = vmatprep.mubr.f32.mxu0 0.0
      %8144 = vmatmul.mubr.f32.gmra.mrb[0].mxu0 %v7948
      %v8145 = vpop.f32.mrb[0].mxu0
      %v8146 = vadd.f32 0.0, %v8145
      %v8147 = vpop.f32.mrb[0].mxu0
      %8148 = vmatprep.mubr.f32.mxu0 0.0
      %8149 = vmatmul.mubr.f32.gmra.mrb[0].mxu0 %v7951
      %v8150 = vpop.f32.mrb[0].mxu0
      %v8151 = vadd.f32 0.0, %v8150
      %v8152 = vpop.f32.mrb[0].mxu0
      %8153 = vmatprep.mubr.f32.mxu0 0.0
      %8154 = vmatmul.mubr.f32.gmra.mrb[0].mxu0 %v7954
      %v8155 = vpop.f32.mrb[0].mxu0
      %v8156 = vadd.f32 0.0, %v8155
      %v8157 = vpop.f32.mrb[0].mxu0
      %8158 = vmatprep.mubr.f32.mxu0 0.0
      %8159 = vmatmul.mubr.f32.gmra.mrb[0].mxu0 %v7957
      %v8160 = vpop.f32.mrb[0].mxu0
      %v8161 = vadd.f32 0.0, %v8160
      %v8162 = vpop.f32.mrb[0].mxu0
      %8163 = vmatprep.mubr.f32.mxu0 0.0
      %8164 = vmatmul.mubr.f32.gmra.mrb[0].mxu0 %v7960
      %v8165 = vpop.f32.mrb[0].mxu0
      %v8166 = vadd.f32 0.0, %v8165
      %v8167 = vpop.f32.mrb[0].mxu0
      %8168 = vmatprep.mubr.f32.mxu0 0.0
      %8169 = vmatmul.mubr.f32.gmra.mrb[0].mxu0 %v7963
      %v8170 = vpop.f32.mrb[0].mxu0
      %v8171 = vadd.f32 0.0, %v8170
      %v8172 = vpop.f32.mrb[0].mxu0
      %8173 = vmatprep.mubr.f32.mxu0 0.0
      %8174 = vmatmul.mubr.f32.gmra.mrb[0].mxu0 %v7966
      %v8175 = vpop.f32.mrb[0].mxu0
      %v8176 = vadd.f32 0.0, %v8175
      %v8177 = vpop.f32.mrb[0].mxu0
      %8178 = vmatprep.mubr.f32.mxu0 0.0
      %8179 = vmatmul.mubr.f32.gmra.mrb[0].mxu0 %v7969
      %v8180 = vpop.f32.mrb[0].mxu0
      %v8181 = vadd.f32 0.0, %v8180
      %v8182 = vpop.f32.mrb[0].mxu0
      %8183 = vmatprep.mubr.f32.mxu0 0.0
      %8184 = vmatmul.mubr.f32.gmra.mrb[0].mxu0 %v7972
      %v8185 = vpop.f32.mrb[0].mxu0
      %v8186 = vadd.f32 0.0, %v8185
      %v8187 = vpop.f32.mrb[0].mxu0
      %8188 = vmatprep.mubr.f32.mxu0 0.0
      %8189 = vmatmul.mubr.f32.gmra.mrb[0].mxu0 %v7975
      %v8190 = vpop.f32.mrb[0].mxu0
      %v8191 = vadd.f32 0.0, %v8190
      %v8192 = vpop.f32.mrb[0].mxu0
      %8193 = vmatprep.mubr.f32.mxu0 0.0
      %8194 = vmatmul.mubr.f32.gmra.mrb[0].mxu0 %v7978
      %v8195 = vpop.f32.mrb[0].mxu0
      %v8196 = vadd.f32 0.0, %v8195
      %v8197 = vpop.f32.mrb[0].mxu0
      %8198 = vmatprep.mubr.f32.mxu0 0.0
      %8199 = vmatmul.mubr.f32.gmra.mrb[0].mxu0 %v7981
      %v8200 = vpop.f32.mrb[0].mxu0
      %v8201 = vadd.f32 0.0, %v8200
      %v8202 = vpop.f32.mrb[0].mxu0
      %8203 = vmatprep.mubr.f32.mxu0 0.0
      %8204 = vmatmul.mubr.f32.gmra.mrb[0].mxu0 %v7984
      %v8205 = vpop.f32.mrb[0].mxu0
      %v8206 = vadd.f32 0.0, %v8205
      %v8207 = vpop.f32.mrb[0].mxu0
      %8208 = vmatprep.mubr.f32.mxu0 0.0
      %8209 = vmatmul.mubr.f32.gmra.mrb[0].mxu0 %v7987
      %v8210 = vpop.f32.mrb[0].mxu0
      %v8211 = vadd.f32 0.0, %v8210
      %v8212 = vpop.f32.mrb[0].mxu0
      %8213 = vmatprep.mubr.f32.mxu0 0.0
      %8214 = vmatmul.mubr.f32.gmra.mrb[0].mxu0 %v7990
      %v8215 = vpop.f32.mrb[0].mxu0
      %v8216 = vadd.f32 0.0, %v8215
      %v8217 = vpop.f32.mrb[0].mxu0
      %8218 = vmatprep.mubr.f32.mxu0 0.0
      %8219 = vmatmul.mubr.f32.gmra.mrb[0].mxu0 %v7993
      %v8220 = vpop.f32.mrb[0].mxu0
      %v8221 = vadd.f32 0.0, %v8220
      %v8222 = vpop.f32.mrb[0].mxu0
      %8223 = vmatprep.mubr.f32.mxu0 0.0
      %8224 = vmatmul.mubr.f32.gmra.mrb[0].mxu0 %v7996
      %v8225 = vpop.f32.mrb[0].mxu0
      %v8226 = vadd.f32 0.0, %v8225
      %v8227 = vpop.f32.mrb[0].mxu0
      %8228 = vmatprep.mubr.f32.mxu0 0.0
      %8229 = vmatmul.mubr.f32.gmra.mrb[0].mxu0 %v7999
      %v8230 = vpop.f32.mrb[0].mxu0
      %v8231 = vadd.f32 0.0, %v8230
      %v8232 = vpop.f32.mrb[0].mxu0
      %8233 = vmatprep.mubr.f32.mxu0 0.0
      %8234 = vmatmul.mubr.f32.gmra.mrb[0].mxu0 %v8002
      %v8235 = vpop.f32.mrb[0].mxu0
      %v8236 = vadd.f32 0.0, %v8235
      %v8237 = vpop.f32.mrb[0].mxu0
      %8238 = vmatprep.mubr.f32.mxu0 0.0
      %8239 = vmatmul.mubr.f32.gmra.mrb[0].mxu0 %v8005
      %v8240 = vpop.f32.mrb[0].mxu0
      %v8241 = vadd.f32 0.0, %v8240
      %v8242 = vpop.f32.mrb[0].mxu0
      %8243 = vmatprep.mubr.f32.mxu0 0.0
      %8244 = vmatmul.mubr.f32.gmra.mrb[0].mxu0 %v8008
      %v8245 = vpop.f32.mrb[0].mxu0
      %v8246 = vadd.f32 0.0, %v8245
      %v8247 = vpop.f32.mrb[0].mxu0
      %8248 = vmatprep.mubr.f32.mxu0 0.0
      %8249 = vmatmul.mubr.f32.gmra.mrb[0].mxu0 %v8011
      %v8250 = vpop.f32.mrb[0].mxu0
      %v8251 = vadd.f32 0.0, %v8250
      %v8252 = vpop.f32.mrb[0].mxu0
      %8253 = vmatprep.mubr.f32.mxu0 0.0
      %8254 = vmatmul.mubr.f32.gmra.mrb[0].mxu0 %v8014
      %v8255 = vpop.f32.mrb[0].mxu0
      %v8256 = vadd.f32 0.0, %v8255
      %v8257 = vpop.f32.mrb[0].mxu0
      %8258 = vmatprep.mubr.f32.mxu0 0.0
      %8259 = vmatmul.mubr.f32.gmra.mrb[0].mxu0 %v8017
      %v8260 = vpop.f32.mrb[0].mxu0
      %v8261 = vadd.f32 0.0, %v8260
      %v8262 = vpop.f32.mrb[0].mxu0
      %8263 = vdwg.mxu0
      %v8264 = vadd.f32 %v7837, %v8086
      %v8265 = vadd.f32 %v7838, %v8091
      %v8266 = vadd.f32 %v7839, %v8096
      %v8267 = vadd.f32 %v7840, %v8101
      %v8268 = vadd.f32 %v7841, %v8106
      %v8269 = vadd.f32 %v7842, %v8111
      %v8270 = vadd.f32 %v7843, %v8116
      %v8271 = vadd.f32 %v7844, %v8121
      %v8272 = vadd.f32 %v7845, %v8126
      %v8273 = vadd.f32 %v7846, %v8131
      %v8274 = vadd.f32 %v7847, %v8136
      %v8275 = vadd.f32 %v7848, %v8141
      %v8276 = vadd.f32 %v7849, %v8146
      %v8277 = vadd.f32 %v7850, %v8151
      %v8278 = vadd.f32 %v7851, %v8156
      %v8279 = vadd.f32 %v7852, %v8161
      %v8280 = vadd.f32 %v7853, %v8166
      %v8281 = vadd.f32 %v7854, %v8171
      %v8282 = vadd.f32 %v7855, %v8176
      %v8283 = vadd.f32 %v7856, %v8181
      %v8284 = vadd.f32 %v7857, %v8186
      %v8285 = vadd.f32 %v7858, %v8191
      %v8286 = vadd.f32 %v7859, %v8196
      %v8287 = vadd.f32 %v7860, %v8201
      %v8288 = vadd.f32 %v7861, %v8206
      %v8289 = vadd.f32 %v7862, %v8211
      %v8290 = vadd.f32 %v7863, %v8216
      %v8291 = vadd.f32 %v7864, %v8221
      %v8292 = vadd.f32 %v7865, %v8226
      %v8293 = vadd.f32 %v7866, %v8231
      %v8294 = vadd.f32 %v7867, %v8236
      %v8295 = vadd.f32 %v7868, %v8241
      %v8296 = vadd.f32 %v7869, %v8246
      %v8297 = vadd.f32 %v7870, %v8251
      %v8298 = vadd.f32 %v7871, %v8256
      %v8299 = vadd.f32 %v7872, %v8261
      %v8300 = vld [vmem:[#allocation2 + $0x3d] sm:$0xff]
      %v8301 = vld [vmem:[#allocation2 + $0x45] sm:$0xff]
      %v8302 = vld [vmem:[#allocation2 + $0x4d] sm:$0xff]
      %v8303 = vld [vmem:[#allocation2 + $0x55] sm:$0xff]
      %v8304 = vld [vmem:[#allocation2 + $0x5d] sm:$0xff]
      %v8305 = vld [vmem:[#allocation2 + $0x65] sm:$0xff]
      %v8306 = vld [vmem:[#allocation2 + $0x6d] sm:$0xff]
      %v8307 = vld [vmem:[#allocation2 + $0x75] sm:$0xff]
      %v8308 = vld [vmem:[#allocation2 + $0x7d] sm:$0xff]
      %v8309 = vld [vmem:[#allocation2 + $0x85] sm:$0xff]
      %v8310 = vld [vmem:[#allocation2 + $0x8d] sm:$0xff]
      %v8311 = vld [vmem:[#allocation2 + $0x95] sm:$0xff]
      %v8312 = vld [vmem:[#allocation2 + $0x9d] sm:$0xff]
      %v8313 = vld [vmem:[#allocation2 + $0xa5] sm:$0xff]
      %v8314 = vld [vmem:[#allocation2 + $0xad] sm:$0xff]
      %v8315 = vld [vmem:[#allocation2 + $0xb5] sm:$0xff]
      %v8316 = vld [vmem:[#allocation2 + $0xbd] sm:$0xff]
      %v8317 = vld [vmem:[#allocation2 + $0xc5] sm:$0xff]
      %v8318 = vld [vmem:[#allocation2 + $0xcd] sm:$0xff]
      %v8319 = vld [vmem:[#allocation2 + $0xd5] sm:$0xff]
      %v8320 = vld [vmem:[#allocation2 + $0xdd] sm:$0xff]
      %v8321 = vld [vmem:[#allocation2 + $0xe5] sm:$0xff]
      %v8322 = vld [vmem:[#allocation2 + $0xed] sm:$0xff]
      %v8323 = vld [vmem:[#allocation2 + $0xf5] sm:$0xff]
      %v8324 = vld [vmem:[#allocation2 + $0xfd] sm:$0xff]
      %v8325 = vld [vmem:[#allocation2 + $0x105] sm:$0xff]
      %v8326 = vld [vmem:[#allocation2 + $0x10d] sm:$0xff]
      %v8327 = vld [vmem:[#allocation2 + $0x115] sm:$0xff]
      %v8328 = vld [vmem:[#allocation2 + $0x11d] sm:$0xff]
      %v8329 = vld [vmem:[#allocation2 + $0x125] sm:$0xff]
      %v8330 = vld [vmem:[#allocation2 + $0x12d] sm:$0xff]
      %v8331 = vld [vmem:[#allocation2 + $0x135] sm:$0xff]
      %v8332 = vld [vmem:[#allocation2 + $0x13d] sm:$0xff]
      %v8333 = vld [vmem:[#allocation2 + $0x145] sm:$0xff]
      %v8334 = vld [vmem:[#allocation2 + $0x14d] sm:$0xff]
      %v8335 = vld [vmem:[#allocation2 + $0x155] sm:$0xff]
      %s8336 = scalar_lea.vmem %s4, 64
      %v8337 = vld [vmem:[%s8336] sm:$0xff]
      %v8339 = vsel %vm4867, %v8300, 0
      %v8342 = vsel %vm4867, %v8301, 0
      %v8345 = vsel %vm4867, %v8302, 0
      %v8348 = vsel %vm4867, %v8303, 0
      %v8351 = vsel %vm4867, %v8304, 0
      %v8354 = vsel %vm4867, %v8305, 0
      %v8357 = vsel %vm4867, %v8306, 0
      %v8360 = vsel %vm4867, %v8307, 0
      %v8363 = vsel %vm4867, %v8308, 0
      %v8366 = vsel %vm4867, %v8309, 0
      %v8369 = vsel %vm4867, %v8310, 0
      %v8372 = vsel %vm4867, %v8311, 0
      %v8375 = vsel %vm4867, %v8312, 0
      %v8378 = vsel %vm4867, %v8313, 0
      %v8381 = vsel %vm4867, %v8314, 0
      %v8384 = vsel %vm4867, %v8315, 0
      %v8387 = vsel %vm4867, %v8316, 0
      %v8390 = vsel %vm4867, %v8317, 0
      %v8393 = vsel %vm4867, %v8318, 0
      %v8396 = vsel %vm4867, %v8319, 0
      %v8399 = vsel %vm4867, %v8320, 0
      %v8402 = vsel %vm4867, %v8321, 0
      %v8405 = vsel %vm4867, %v8322, 0
      %v8408 = vsel %vm4867, %v8323, 0
      %v8411 = vsel %vm4867, %v8324, 0
      %v8414 = vsel %vm4867, %v8325, 0
      %v8417 = vsel %vm4867, %v8326, 0
      %v8420 = vsel %vm4867, %v8327, 0
      %v8423 = vsel %vm4867, %v8328, 0
      %v8426 = vsel %vm4867, %v8329, 0
      %v8429 = vsel %vm4867, %v8330, 0
      %v8432 = vsel %vm4867, %v8331, 0
      %v8435 = vsel %vm4867, %v8332, 0
      %v8438 = vsel %vm4867, %v8333, 0
      %v8441 = vsel %vm4867, %v8334, 0
      %v8444 = vsel %vm4867, %v8335, 0
      %8446 = vmatprep.subr.mxu0 0.0
      %8447 = vmatpush1.msra.mxu0 %v8337
      %8448 = vmatprep.subr.mxu0 0.0
      %8449 = vmatpush1.msra.mxu0 0.0
      %8450 = vmatprep.subr.mxu0 0.0
      %8451 = vmatpush1.msra.mxu0 0.0
      %8452 = vmatprep.subr.mxu0 0.0
      %8453 = vmatpush1.msra.mxu0 0.0
      %8454 = vmatprep.subr.mxu0 0.0
      %8455 = vmatpush1.msra.mxu0 0.0
      %8456 = vmatprep.subr.mxu0 0.0
      %8457 = vmatpush1.msra.mxu0 0.0
      %8458 = vmatprep.subr.mxu0 0.0
      %8459 = vmatpush1.msra.mxu0 0.0
      %8460 = vmatprep.subr.mxu0 0.0
      %8461 = vmatpush1.msra.mxu0 0.0
      %8462 = vmatprep.subr.mxu0 0.0
      %8463 = vmatpush1.msra.mxu0 0.0
      %8464 = vmatprep.subr.mxu0 0.0
      %8465 = vmatpush1.msra.mxu0 0.0
      %8466 = vmatprep.subr.mxu0 0.0
      %8467 = vmatpush1.msra.mxu0 0.0
      %8468 = vmatprep.subr.mxu0 0.0
      %8469 = vmatpush1.msra.mxu0 0.0
      %8470 = vmatprep.subr.mxu0 0.0
      %8471 = vmatpush1.msra.mxu0 0.0
      %8472 = vmatprep.subr.mxu0 0.0
      %8473 = vmatpush1.msra.mxu0 0.0
      %8474 = vmatprep.subr.mxu0 0.0
      %8475 = vmatpush1.msra.mxu0 0.0
      %8476 = vmatprep.subr.mxu0 0.0
      %8477 = vmatpush1.msra.mxu0 0.0
      %8478 = vmatprep.subr.mxu0 0.0
      %8479 = vmatpush1.msra.mxu0 0.0
      %8480 = vmatprep.subr.mxu0 0.0
      %8481 = vmatpush1.msra.mxu0 0.0
      %8482 = vmatprep.subr.mxu0 0.0
      %8483 = vmatpush1.msra.mxu0 0.0
      %8484 = vmatprep.subr.mxu0 0.0
      %8485 = vmatpush1.msra.mxu0 0.0
      %8486 = vmatprep.subr.mxu0 0.0
      %8487 = vmatpush1.msra.mxu0 0.0
      %8488 = vmatprep.subr.mxu0 0.0
      %8489 = vmatpush1.msra.mxu0 0.0
      %8490 = vmatprep.subr.mxu0 0.0
      %8491 = vmatpush1.msra.mxu0 0.0
      %8492 = vmatprep.subr.mxu0 0.0
      %8493 = vmatpush1.msra.mxu0 0.0
      %8494 = vmatprep.subr.mxu0 0.0
      %8495 = vmatpush1.msra.mxu0 0.0
      %8496 = vmatprep.subr.mxu0 0.0
      %8497 = vmatpush1.msra.mxu0 0.0
      %8498 = vmatprep.subr.mxu0 0.0
      %8499 = vmatpush1.msra.mxu0 0.0
      %8500 = vmatprep.subr.mxu0 0.0
      %8501 = vmatpush1.msra.mxu0 0.0
      %8502 = vmatprep.subr.mxu0 0.0
      %8503 = vmatpush1.msra.mxu0 0.0
      %8504 = vmatprep.subr.mxu0 0.0
      %8505 = vmatpush1.msra.mxu0 0.0
      %8506 = vmatprep.subr.mxu0 0.0
      %8507 = vmatpush1.msra.mxu0 0.0
      %8508 = vmatprep.subr.mxu0 0.0
      %8509 = vmatpush1.msra.mxu0 0.0
      %8510 = vmatprep.mubr.f32.mxu0 0.0
      %8511 = vmatmul.mubr.f32.gmra.mrb[0].mxu0 %v8339
      %v8512 = vpop.f32.mrb[0].mxu0
      %v8513 = vadd.f32 0.0, %v8512
      %v8514 = vpop.f32.mrb[0].mxu0
      %8515 = vmatprep.mubr.f32.mxu0 0.0
      %8516 = vmatmul.mubr.f32.gmra.mrb[0].mxu0 %v8342
      %v8517 = vpop.f32.mrb[0].mxu0
      %v8518 = vadd.f32 0.0, %v8517
      %v8519 = vpop.f32.mrb[0].mxu0
      %8520 = vmatprep.mubr.f32.mxu0 0.0
      %8521 = vmatmul.mubr.f32.gmra.mrb[0].mxu0 %v8345
      %v8522 = vpop.f32.mrb[0].mxu0
      %v8523 = vadd.f32 0.0, %v8522
      %v8524 = vpop.f32.mrb[0].mxu0
      %8525 = vmatprep.mubr.f32.mxu0 0.0
      %8526 = vmatmul.mubr.f32.gmra.mrb[0].mxu0 %v8348
      %v8527 = vpop.f32.mrb[0].mxu0
      %v8528 = vadd.f32 0.0, %v8527
      %v8529 = vpop.f32.mrb[0].mxu0
      %8530 = vmatprep.mubr.f32.mxu0 0.0
      %8531 = vmatmul.mubr.f32.gmra.mrb[0].mxu0 %v8351
      %v8532 = vpop.f32.mrb[0].mxu0
      %v8533 = vadd.f32 0.0, %v8532
      %v8534 = vpop.f32.mrb[0].mxu0
      %8535 = vmatprep.mubr.f32.mxu0 0.0
      %8536 = vmatmul.mubr.f32.gmra.mrb[0].mxu0 %v8354
      %v8537 = vpop.f32.mrb[0].mxu0
      %v8538 = vadd.f32 0.0, %v8537
      %v8539 = vpop.f32.mrb[0].mxu0
      %8540 = vmatprep.mubr.f32.mxu0 0.0
      %8541 = vmatmul.mubr.f32.gmra.mrb[0].mxu0 %v8357
      %v8542 = vpop.f32.mrb[0].mxu0
      %v8543 = vadd.f32 0.0, %v8542
      %v8544 = vpop.f32.mrb[0].mxu0
      %8545 = vmatprep.mubr.f32.mxu0 0.0
      %8546 = vmatmul.mubr.f32.gmra.mrb[0].mxu0 %v8360
      %v8547 = vpop.f32.mrb[0].mxu0
      %v8548 = vadd.f32 0.0, %v8547
      %v8549 = vpop.f32.mrb[0].mxu0
      %8550 = vmatprep.mubr.f32.mxu0 0.0
      %8551 = vmatmul.mubr.f32.gmra.mrb[0].mxu0 %v8363
      %v8552 = vpop.f32.mrb[0].mxu0
      %v8553 = vadd.f32 0.0, %v8552
      %v8554 = vpop.f32.mrb[0].mxu0
      %8555 = vmatprep.mubr.f32.mxu0 0.0
      %8556 = vmatmul.mubr.f32.gmra.mrb[0].mxu0 %v8366
      %v8557 = vpop.f32.mrb[0].mxu0
      %v8558 = vadd.f32 0.0, %v8557
      %v8559 = vpop.f32.mrb[0].mxu0
      %8560 = vmatprep.mubr.f32.mxu0 0.0
      %8561 = vmatmul.mubr.f32.gmra.mrb[0].mxu0 %v8369
      %v8562 = vpop.f32.mrb[0].mxu0
      %v8563 = vadd.f32 0.0, %v8562
      %v8564 = vpop.f32.mrb[0].mxu0
      %8565 = vmatprep.mubr.f32.mxu0 0.0
      %8566 = vmatmul.mubr.f32.gmra.mrb[0].mxu0 %v8372
      %v8567 = vpop.f32.mrb[0].mxu0
      %v8568 = vadd.f32 0.0, %v8567
      %v8569 = vpop.f32.mrb[0].mxu0
      %8570 = vmatprep.mubr.f32.mxu0 0.0
      %8571 = vmatmul.mubr.f32.gmra.mrb[0].mxu0 %v8375
      %v8572 = vpop.f32.mrb[0].mxu0
      %v8573 = vadd.f32 0.0, %v8572
      %v8574 = vpop.f32.mrb[0].mxu0
      %8575 = vmatprep.mubr.f32.mxu0 0.0
      %8576 = vmatmul.mubr.f32.gmra.mrb[0].mxu0 %v8378
      %v8577 = vpop.f32.mrb[0].mxu0
      %v8578 = vadd.f32 0.0, %v8577
      %v8579 = vpop.f32.mrb[0].mxu0
      %8580 = vmatprep.mubr.f32.mxu0 0.0
      %8581 = vmatmul.mubr.f32.gmra.mrb[0].mxu0 %v8381
      %v8582 = vpop.f32.mrb[0].mxu0
      %v8583 = vadd.f32 0.0, %v8582
      %v8584 = vpop.f32.mrb[0].mxu0
      %8585 = vmatprep.mubr.f32.mxu0 0.0
      %8586 = vmatmul.mubr.f32.gmra.mrb[0].mxu0 %v8384
      %v8587 = vpop.f32.mrb[0].mxu0
      %v8588 = vadd.f32 0.0, %v8587
      %v8589 = vpop.f32.mrb[0].mxu0
      %8590 = vmatprep.mubr.f32.mxu0 0.0
      %8591 = vmatmul.mubr.f32.gmra.mrb[0].mxu0 %v8387
      %v8592 = vpop.f32.mrb[0].mxu0
      %v8593 = vadd.f32 0.0, %v8592
      %v8594 = vpop.f32.mrb[0].mxu0
      %8595 = vmatprep.mubr.f32.mxu0 0.0
      %8596 = vmatmul.mubr.f32.gmra.mrb[0].mxu0 %v8390
      %v8597 = vpop.f32.mrb[0].mxu0
      %v8598 = vadd.f32 0.0, %v8597
      %v8599 = vpop.f32.mrb[0].mxu0
      %8600 = vmatprep.mubr.f32.mxu0 0.0
      %8601 = vmatmul.mubr.f32.gmra.mrb[0].mxu0 %v8393
      %v8602 = vpop.f32.mrb[0].mxu0
      %v8603 = vadd.f32 0.0, %v8602
      %v8604 = vpop.f32.mrb[0].mxu0
      %8605 = vmatprep.mubr.f32.mxu0 0.0
      %8606 = vmatmul.mubr.f32.gmra.mrb[0].mxu0 %v8396
      %v8607 = vpop.f32.mrb[0].mxu0
      %v8608 = vadd.f32 0.0, %v8607
      %v8609 = vpop.f32.mrb[0].mxu0
      %8610 = vmatprep.mubr.f32.mxu0 0.0
      %8611 = vmatmul.mubr.f32.gmra.mrb[0].mxu0 %v8399
      %v8612 = vpop.f32.mrb[0].mxu0
      %v8613 = vadd.f32 0.0, %v8612
      %v8614 = vpop.f32.mrb[0].mxu0
      %8615 = vmatprep.mubr.f32.mxu0 0.0
      %8616 = vmatmul.mubr.f32.gmra.mrb[0].mxu0 %v8402
      %v8617 = vpop.f32.mrb[0].mxu0
      %v8618 = vadd.f32 0.0, %v8617
      %v8619 = vpop.f32.mrb[0].mxu0
      %8620 = vmatprep.mubr.f32.mxu0 0.0
      %8621 = vmatmul.mubr.f32.gmra.mrb[0].mxu0 %v8405
      %v8622 = vpop.f32.mrb[0].mxu0
      %v8623 = vadd.f32 0.0, %v8622
      %v8624 = vpop.f32.mrb[0].mxu0
      %8625 = vmatprep.mubr.f32.mxu0 0.0
      %8626 = vmatmul.mubr.f32.gmra.mrb[0].mxu0 %v8408
      %v8627 = vpop.f32.mrb[0].mxu0
      %v8628 = vadd.f32 0.0, %v8627
      %v8629 = vpop.f32.mrb[0].mxu0
      %8630 = vmatprep.mubr.f32.mxu0 0.0
      %8631 = vmatmul.mubr.f32.gmra.mrb[0].mxu0 %v8411
      %v8632 = vpop.f32.mrb[0].mxu0
      %v8633 = vadd.f32 0.0, %v8632
      %v8634 = vpop.f32.mrb[0].mxu0
      %8635 = vmatprep.mubr.f32.mxu0 0.0
      %8636 = vmatmul.mubr.f32.gmra.mrb[0].mxu0 %v8414
      %v8637 = vpop.f32.mrb[0].mxu0
      %v8638 = vadd.f32 0.0, %v8637
      %v8639 = vpop.f32.mrb[0].mxu0
      %8640 = vmatprep.mubr.f32.mxu0 0.0
      %8641 = vmatmul.mubr.f32.gmra.mrb[0].mxu0 %v8417
      %v8642 = vpop.f32.mrb[0].mxu0
      %v8643 = vadd.f32 0.0, %v8642
      %v8644 = vpop.f32.mrb[0].mxu0
      %8645 = vmatprep.mubr.f32.mxu0 0.0
      %8646 = vmatmul.mubr.f32.gmra.mrb[0].mxu0 %v8420
      %v8647 = vpop.f32.mrb[0].mxu0
      %v8648 = vadd.f32 0.0, %v8647
      %v8649 = vpop.f32.mrb[0].mxu0
      %8650 = vmatprep.mubr.f32.mxu0 0.0
      %8651 = vmatmul.mubr.f32.gmra.mrb[0].mxu0 %v8423
      %v8652 = vpop.f32.mrb[0].mxu0
      %v8653 = vadd.f32 0.0, %v8652
      %v8654 = vpop.f32.mrb[0].mxu0
      %8655 = vmatprep.mubr.f32.mxu0 0.0
      %8656 = vmatmul.mubr.f32.gmra.mrb[0].mxu0 %v8426
      %v8657 = vpop.f32.mrb[0].mxu0
      %v8658 = vadd.f32 0.0, %v8657
      %v8659 = vpop.f32.mrb[0].mxu0
      %8660 = vmatprep.mubr.f32.mxu0 0.0
      %8661 = vmatmul.mubr.f32.gmra.mrb[0].mxu0 %v8429
      %v8662 = vpop.f32.mrb[0].mxu0
      %v8663 = vadd.f32 0.0, %v8662
      %v8664 = vpop.f32.mrb[0].mxu0
      %8665 = vmatprep.mubr.f32.mxu0 0.0
      %8666 = vmatmul.mubr.f32.gmra.mrb[0].mxu0 %v8432
      %v8667 = vpop.f32.mrb[0].mxu0
      %v8668 = vadd.f32 0.0, %v8667
      %v8669 = vpop.f32.mrb[0].mxu0
      %8670 = vmatprep.mubr.f32.mxu0 0.0
      %8671 = vmatmul.mubr.f32.gmra.mrb[0].mxu0 %v8435
      %v8672 = vpop.f32.mrb[0].mxu0
      %v8673 = vadd.f32 0.0, %v8672
      %v8674 = vpop.f32.mrb[0].mxu0
      %8675 = vmatprep.mubr.f32.mxu0 0.0
      %8676 = vmatmul.mubr.f32.gmra.mrb[0].mxu0 %v8438
      %v8677 = vpop.f32.mrb[0].mxu0
      %v8678 = vadd.f32 0.0, %v8677
      %v8679 = vpop.f32.mrb[0].mxu0
      %8680 = vmatprep.mubr.f32.mxu0 0.0
      %8681 = vmatmul.mubr.f32.gmra.mrb[0].mxu0 %v8441
      %v8682 = vpop.f32.mrb[0].mxu0
      %v8683 = vadd.f32 0.0, %v8682
      %v8684 = vpop.f32.mrb[0].mxu0
      %8685 = vmatprep.mubr.f32.mxu0 0.0
      %8686 = vmatmul.mubr.f32.gmra.mrb[0].mxu0 %v8444
      %v8687 = vpop.f32.mrb[0].mxu0
      %v8688 = vadd.f32 0.0, %v8687
      %v8689 = vpop.f32.mrb[0].mxu0
      %8690 = vdwg.mxu0
      %v8691 = vadd.f32 %v8264, %v8513
      %v8692 = vadd.f32 %v8265, %v8518
      %v8693 = vadd.f32 %v8266, %v8523
      %v8694 = vadd.f32 %v8267, %v8528
      %v8695 = vadd.f32 %v8268, %v8533
      %v8696 = vadd.f32 %v8269, %v8538
      %v8697 = vadd.f32 %v8270, %v8543
      %v8698 = vadd.f32 %v8271, %v8548
      %v8699 = vadd.f32 %v8272, %v8553
      %v8700 = vadd.f32 %v8273, %v8558
      %v8701 = vadd.f32 %v8274, %v8563
      %v8702 = vadd.f32 %v8275, %v8568
      %v8703 = vadd.f32 %v8276, %v8573
      %v8704 = vadd.f32 %v8277, %v8578
      %v8705 = vadd.f32 %v8278, %v8583
      %v8706 = vadd.f32 %v8279, %v8588
      %v8707 = vadd.f32 %v8280, %v8593
      %v8708 = vadd.f32 %v8281, %v8598
      %v8709 = vadd.f32 %v8282, %v8603
      %v8710 = vadd.f32 %v8283, %v8608
      %v8711 = vadd.f32 %v8284, %v8613
      %v8712 = vadd.f32 %v8285, %v8618
      %v8713 = vadd.f32 %v8286, %v8623
      %v8714 = vadd.f32 %v8287, %v8628
      %v8715 = vadd.f32 %v8288, %v8633
      %v8716 = vadd.f32 %v8289, %v8638
      %v8717 = vadd.f32 %v8290, %v8643
      %v8718 = vadd.f32 %v8291, %v8648
      %v8719 = vadd.f32 %v8292, %v8653
      %v8720 = vadd.f32 %v8293, %v8658
      %v8721 = vadd.f32 %v8294, %v8663
      %v8722 = vadd.f32 %v8295, %v8668
      %v8723 = vadd.f32 %v8296, %v8673
      %v8724 = vadd.f32 %v8297, %v8678
      %v8725 = vadd.f32 %v8298, %v8683
      %v8726 = vadd.f32 %v8299, %v8688
      %v8727 = vld [vmem:[%s5] sm:$0x1]
      %v8729 = vlaneseq
      %v8730 = vshrl.u32 %v8729, 7
      %v8731 = vsub.s32 0, %v8730
      %v8732 = vrot.slane %v8727, %v8731
      %v8734 = vadd.f32 %v8691, %v8732
      %v8735 = vadd.f32 %v8692, %v8732
      %v8736 = vadd.f32 %v8693, %v8732
      %v8737 = vadd.f32 %v8694, %v8732
      %v8738 = vadd.f32 %v8695, %v8732
      %v8739 = vadd.f32 %v8696, %v8732
      %v8740 = vadd.f32 %v8697, %v8732
      %v8741 = vadd.f32 %v8698, %v8732
      %v8742 = vadd.f32 %v8699, %v8732
      %v8743 = vadd.f32 %v8700, %v8732
      %v8744 = vadd.f32 %v8701, %v8732
      %v8745 = vadd.f32 %v8702, %v8732
      %v8746 = vadd.f32 %v8703, %v8732
      %v8747 = vadd.f32 %v8704, %v8732
      %v8748 = vadd.f32 %v8705, %v8732
      %v8749 = vadd.f32 %v8706, %v8732
      %v8750 = vadd.f32 %v8707, %v8732
      %v8751 = vadd.f32 %v8708, %v8732
      %v8752 = vadd.f32 %v8709, %v8732
      %v8753 = vadd.f32 %v8710, %v8732
      %v8754 = vadd.f32 %v8711, %v8732
      %v8755 = vadd.f32 %v8712, %v8732
      %v8756 = vadd.f32 %v8713, %v8732
      %v8757 = vadd.f32 %v8714, %v8732
      %v8758 = vadd.f32 %v8715, %v8732
      %v8759 = vadd.f32 %v8716, %v8732
      %v8760 = vadd.f32 %v8717, %v8732
      %v8761 = vadd.f32 %v8718, %v8732
      %v8762 = vadd.f32 %v8719, %v8732
      %v8763 = vadd.f32 %v8720, %v8732
      %v8764 = vadd.f32 %v8721, %v8732
      %v8765 = vadd.f32 %v8722, %v8732
      %v8766 = vadd.f32 %v8723, %v8732
      %v8767 = vadd.f32 %v8724, %v8732
      %v8768 = vadd.f32 %v8725, %v8732
      %v8769 = vadd.f32 %v8726, %v8732
      %v8770 = vmax.f32 %v8734, 0.0
      %v8771 = vmax.f32 %v8735, 0.0
      %v8772 = vmax.f32 %v8736, 0.0
      %v8773 = vmax.f32 %v8737, 0.0
      %v8774 = vmax.f32 %v8738, 0.0
      %v8775 = vmax.f32 %v8739, 0.0
      %v8776 = vmax.f32 %v8740, 0.0
      %v8777 = vmax.f32 %v8741, 0.0
      %v8778 = vmax.f32 %v8742, 0.0
      %v8779 = vmax.f32 %v8743, 0.0
      %v8780 = vmax.f32 %v8744, 0.0
      %v8781 = vmax.f32 %v8745, 0.0
      %v8782 = vmax.f32 %v8746, 0.0
      %v8783 = vmax.f32 %v8747, 0.0
      %v8784 = vmax.f32 %v8748, 0.0
      %v8785 = vmax.f32 %v8749, 0.0
      %v8786 = vmax.f32 %v8750, 0.0
      %v8787 = vmax.f32 %v8751, 0.0
      %v8788 = vmax.f32 %v8752, 0.0
      %v8789 = vmax.f32 %v8753, 0.0
      %v8790 = vmax.f32 %v8754, 0.0
      %v8791 = vmax.f32 %v8755, 0.0
      %v8792 = vmax.f32 %v8756, 0.0
      %v8793 = vmax.f32 %v8757, 0.0
      %v8794 = vmax.f32 %v8758, 0.0
      %v8795 = vmax.f32 %v8759, 0.0
      %v8796 = vmax.f32 %v8760, 0.0
      %v8797 = vmax.f32 %v8761, 0.0
      %v8798 = vmax.f32 %v8762, 0.0
      %v8799 = vmax.f32 %v8763, 0.0
      %v8800 = vmax.f32 %v8764, 0.0
      %v8801 = vmax.f32 %v8765, 0.0
      %v8802 = vmax.f32 %v8766, 0.0
      %v8803 = vmax.f32 %v8767, 0.0
      %v8804 = vmax.f32 %v8768, 0.0
      %v8805 = vmax.f32 %v8769, 0.0
      %8806 = vst.msk [vmem:[%s251] sm:$0xff] %vm4867, %v8770
      %8807 = vst.msk [vmem:[%s251 + $0x8] sm:$0xff] %vm4867, %v8771
      %8808 = vst.msk [vmem:[%s251 + $0x10] sm:$0xff] %vm4867, %v8772
      %8809 = vst.msk [vmem:[%s251 + $0x18] sm:$0xff] %vm4867, %v8773
      %8810 = vst.msk [vmem:[%s251 + $0x20] sm:$0xff] %vm4867, %v8774
      %8811 = vst.msk [vmem:[%s251 + $0x28] sm:$0xff] %vm4867, %v8775
      %8812 = vst.msk [vmem:[%s251 + $0x30] sm:$0xff] %vm4867, %v8776
      %8813 = vst.msk [vmem:[%s251 + $0x38] sm:$0xff] %vm4867, %v8777
      %8814 = vst.msk [vmem:[%s251 + $0x40] sm:$0xff] %vm4867, %v8778
      %8815 = vst.msk [vmem:[%s251 + $0x48] sm:$0xff] %vm4867, %v8779
      %8816 = vst.msk [vmem:[%s251 + $0x50] sm:$0xff] %vm4867, %v8780
      %8817 = vst.msk [vmem:[%s251 + $0x58] sm:$0xff] %vm4867, %v8781
      %8818 = vst.msk [vmem:[%s251 + $0x60] sm:$0xff] %vm4867, %v8782
      %8819 = vst.msk [vmem:[%s251 + $0x68] sm:$0xff] %vm4867, %v8783
      %8820 = vst.msk [vmem:[%s251 + $0x70] sm:$0xff] %vm4867, %v8784
      %8821 = vst.msk [vmem:[%s251 + $0x78] sm:$0xff] %vm4867, %v8785
      %8822 = vst.msk [vmem:[%s251 + $0x80] sm:$0xff] %vm4867, %v8786
      %8823 = vst.msk [vmem:[%s251 + $0x88] sm:$0xff] %vm4867, %v8787
      %8824 = vst.msk [vmem:[%s251 + $0x90] sm:$0xff] %vm4867, %v8788
      %8825 = vst.msk [vmem:[%s251 + $0x98] sm:$0xff] %vm4867, %v8789
      %8826 = vst.msk [vmem:[%s251 + $0xa0] sm:$0xff] %vm4867, %v8790
      %8827 = vst.msk [vmem:[%s251 + $0xa8] sm:$0xff] %vm4867, %v8791
      %8828 = vst.msk [vmem:[%s251 + $0xb0] sm:$0xff] %vm4867, %v8792
      %8829 = vst.msk [vmem:[%s251 + $0xb8] sm:$0xff] %vm4867, %v8793
      %8830 = vst.msk [vmem:[%s251 + $0xc0] sm:$0xff] %vm4867, %v8794
      %8831 = vst.msk [vmem:[%s251 + $0xc8] sm:$0xff] %vm4867, %v8795
      %8832 = vst.msk [vmem:[%s251 + $0xd0] sm:$0xff] %vm4867, %v8796
      %8833 = vst.msk [vmem:[%s251 + $0xd8] sm:$0xff] %vm4867, %v8797
      %8834 = vst.msk [vmem:[%s251 + $0xe0] sm:$0xff] %vm4867, %v8798
      %8835 = vst.msk [vmem:[%s251 + $0xe8] sm:$0xff] %vm4867, %v8799
      %8836 = vst.msk [vmem:[%s251 + $0xf0] sm:$0xff] %vm4867, %v8800
      %8837 = vst.msk [vmem:[%s251 + $0xf8] sm:$0xff] %vm4867, %v8801
      %8838 = vst.msk [vmem:[%s251 + $0x100] sm:$0xff] %vm4867, %v8802
      %8839 = vst.msk [vmem:[%s251 + $0x108] sm:$0xff] %vm4867, %v8803
      %8840 = vst.msk [vmem:[%s251 + $0x110] sm:$0xff] %vm4867, %v8804
      %8841 = vst.msk [vmem:[%s251 + $0x118] sm:$0xff] %vm4867, %v8805
      %p8842 = scmp.lt.s32.totalorder %s17, 1
      %s8843 = scalar_select %p8842, %s17, 1
      %s8844 = smul.addr %s8843, 36
      %s8845 = smul.addr %s8844, 8
      %s8846 = scalar_lea.vmem %s6, %s8845
      // Predicated region
      $region45: #{tpu_custom_call.1} parent=43 // pred_check
        %p8847 = pneg %p166
      $region46: #{tpu_custom_call.1} parent=43 // pred_check_branch
        %8849 = sbr.rel (%p8847) target = $region48
      $region47: #{tpu_custom_call.1} parent=43 // pred_region
        _
      $region48: #{tpu_custom_call.1} parent=43 // pred_fallthru
        _
    $region44: #{tpu_custom_call.1} parent=5 // pred_fallthru
      _
    %p8850 = scmp.le.s32.totalorder 2, %s12
    // Predicated region
    $region49: #{tpu_custom_call.1} parent=5 // pred_check
      %p8851 = pneg %p8850
    $region50: #{tpu_custom_call.1} parent=5 // pred_check_branch
      %8853 = sbr.rel (%p8851) target = $region52
    $region51: #{tpu_custom_call.1} parent=5 // pred_region
      %s8854 = ssub.s32 %s12, 2
      // Predicated region
      $region53: #{tpu_custom_call.1} parent=51 // pred_check
        %p8855 = pneg %p172
      $region54: #{tpu_custom_call.1} parent=51 // pred_check_branch
        %8857 = sbr.rel (%p8855) target = $region56
      $region55: #{tpu_custom_call.1} parent=51 // pred_region
        %p8858 = scmp.lt.s32.totalorder %s18, 1
        %s8859 = scalar_select %p8858, %s18, 1
        %s8860 = smul.addr %s8859, 36
        %s8861 = smul.addr %s8860, 8
        %s8862 = scalar_lea.vmem %s6, %s8861
      $region56: #{tpu_custom_call.1} parent=51 // pred_fallthru
        _
    $region52: #{tpu_custom_call.1} parent=5 // pred_fallthru
      _
  $region6: #{tpu_custom_call.1} parent=0 // loop_footer
    %s16 = sadd.s32 1, %s12
  $region7: #{tpu_custom_call.1} parent=0 // loop_footer_branch
    %11 = sbr.rel target = $region3
  $region8: #{tpu_custom_call.1} parent=0 // loop_exit
    _

</llo_original>
